<compile_context>
chip_gen: v6e
topology: v6e:2x2x1
jax: 0.10.0
libtpu: 0.0.40
codegen_flags: <defaults>
</compile_context>

<pallas_src>
import functools

import jax
import jax.numpy as jnp
from jax.experimental import pallas as pl
from jax.experimental.pallas import tpu as pltpu


def _round_up(x, m):
    return ((x + m - 1) // m) * m


def _pad_to(x, axis, target):
    pad = target - x.shape[axis]
    if pad == 0:
        return x
    widths = [(0, 0)] * x.ndim
    widths[axis] = (0, pad)
    return jnp.pad(x, widths)


def _pad_gate_dim(w, h, h_pad):
    """Pad a trailing 4*h gate dim to 4*h_pad, padding each of the [i,f,g,o]
    gate blocks independently (PyTorch LSTM gate order), with zeros."""
    if h == h_pad:
        return w
    lead = w.shape[:-1]
    w4 = w.reshape(lead + (4, h))
    w4 = jnp.pad(w4, [(0, 0)] * len(lead) + [(0, 0), (0, h_pad - h)])
    return w4.reshape(lead + (4 * h_pad,))


# ---------------------------------------------------------------------------
# Recurrent core: each grid step = TIME_BLOCK target timesteps for one batch tile.
# ---------------------------------------------------------------------------
def _decoder_step_kernel(
    gx_ref,       # (TB, Bt, 4Hp)  precomputed x_t @ W_x + b  (f32)
    srcatt_ref,   # (Bt, Hp, Lp)   attention keys (transposed, H on sublanes)
    srcv_ref,     # (Bt, Lp, Hp)   src_enc @ Wv_ctx (ctx half of att_vec_linear)
    w_ah_ref,     # (2Hp, 4Hp)     fused [W_att ; W_hh] recurrent weight
    wvh_ref,      # (Hp, Hp)       att_vec_linear rows for h_t
    h0_ref,       # (Bt, Hp)       init hidden state
    c0_ref,       # (Bt, Hp)       init cell state
    att_out_ref,  # (TB, Bt, Hp)   att_t per step (readout applied outside)
    state_scr,    # (Bt, 2Hp)      [att_{t-1} | h_{t-1}]  (persists over time)
    c_scr,        # (Bt, Hp)       c_{t-1}
    *,
    hidden_pad,   # Hp (multiple of 128)
    l_valid,      # true source length (<= Lp)
    time_block,   # TB
    matmul_dtype,
):
    Hp = hidden_pad

    @pl.when(pl.program_id(1) == 0)       # start of this batch tile's recurrence
    def _init():
        state_scr[:, :Hp] = jnp.zeros_like(h0_ref[...])   # att_{-1} = 0
        state_scr[:, Hp:] = h0_ref[...]
        c_scr[...] = c0_ref[...]

    # Time-invariant operands (cast once per grid step, reused for TB steps).
    src_att = srcatt_ref[...].astype(jnp.float32)          # (Bt, Hp, Lp)
    src_v = srcv_ref[...].astype(jnp.float32)              # (Bt, Lp, Hp)

    lp = srcatt_ref.shape[-1]
    if l_valid < lp:   # mask padded source positions (compile-time constant)
        l_mask = jax.lax.broadcasted_iota(jnp.int32, (1, lp), 1) < l_valid
    else:
        l_mask = None

    for k in range(time_block):            # short, fully unrolled inner loop
        state = state_scr[...]              # (Bt, 2Hp)  [att_{t-1} | h_{t-1}]
        c_prev = c_scr[...]

        # ---- fused LSTM cell: gates = gx_t + [att, h] @ [W_a ; W_h] ----
        gates = gx_ref[k] + jnp.dot(
            state.astype(matmul_dtype), w_ah_ref[...],
            preferred_element_type=jnp.float32)             # (Bt, 4Hp)
        # Hp is a multiple of 128 -> these are vreg-aligned free views.
        i_g = jax.nn.sigmoid(gates[:, 0 * Hp:1 * Hp])
        f_g = jax.nn.sigmoid(gates[:, 1 * Hp:2 * Hp])
        g_g = jnp.tanh(gates[:, 2 * Hp:3 * Hp])
        o_g = jax.nn.sigmoid(gates[:, 3 * Hp:4 * Hp])
        c_t = f_g * c_prev + i_g * g_g
        h_t = o_g * jnp.tanh(c_t)
        # TODO(synk): self.dropout(h_t) -- identity (drop_out = 0.0 / eval mode).

        # ---- dot_prod_attention: lane-dense over L, contraction on sublanes ----
        # scores[b, l] = sum_h h_t[b, h] * src_att[b, h, l]
        scores = jnp.sum(src_att * h_t[:, :, None], axis=1)    # (Bt, Lp)
        if l_mask is not None:
            scores = jnp.where(l_mask, scores, -1e30)
        scores = jnp.exp(scores - jnp.max(scores, axis=1, keepdims=True))
        att_w = scores * pl.reciprocal(
            jnp.sum(scores, axis=1, keepdims=True), approx=True)

        # ctx_v[b, h] = sum_l att_w[b, l] * src_v[b, l, h]   (lane-dense over H)
        ctx_v = jnp.sum(src_v * att_w[:, :, None], axis=1)      # (Bt, Hp)

        # ---- att_t = tanh(att_vec_linear([h_t, ctx])) (ctx half precomputed) ----
        att_t = jnp.tanh(
            jnp.dot(h_t.astype(matmul_dtype), wvh_ref[...],
                    preferred_element_type=jnp.float32) + ctx_v)

        att_out_ref[k] = att_t.astype(att_out_ref.dtype)

        # carry state to the next timestep
        state_scr[:, :Hp] = att_t
        state_scr[:, Hp:] = h_t
        c_scr[...] = c_t


# ---------------------------------------------------------------------------
# Hoisted vocab readout: (T*B, Hp) @ (Hp, V), fully parallel lane-dense grid.
# ---------------------------------------------------------------------------
def _readout_kernel(a_ref, w_ref, o_ref, *, matmul_dtype):
    o_ref[...] = jnp.dot(a_ref[...].astype(matmul_dtype),
                         w_ref[...].astype(matmul_dtype),
                         preferred_element_type=jnp.float32)


def _readout_matmul(a, w, *, tm=256, tn=512, matmul_dtype=jnp.float32):
    M, K = a.shape
    N = w.shape[1]
    tm = min(tm, _round_up(M, 8))
    tn = min(tn, _round_up(N, 128))          # keep the output lane-dense
    Mp, Np = _round_up(M, tm), _round_up(N, tn)
    a = _pad_to(a, 0, Mp)
    w = _pad_to(w, 1, Np)
    out = pl.pallas_call(
        functools.partial(_readout_kernel, matmul_dtype=matmul_dtype),
        out_shape=jax.ShapeDtypeStruct((Mp, Np), jnp.float32),
        grid_spec=pltpu.PrefetchScalarGridSpec(
            num_scalar_prefetch=0,
            grid=(Mp // tm, Np // tn),
            in_specs=[pl.BlockSpec((tm, K), lambda i, j: (i, 0)),
                      pl.BlockSpec((K, tn), lambda i, j: (0, j))],
            out_specs=pl.BlockSpec((tm, tn), lambda i, j: (i, j)),
        ),
        compiler_params=pltpu.CompilerParams(
            dimension_semantics=("parallel", "parallel"),
            vmem_limit_bytes=64 * 1024 * 1024),
    )(a, w)
    return out[:M, :N]


# ---------------------------------------------------------------------------
# Wrapper mirroring Decoder.forward
# ---------------------------------------------------------------------------
def decoder_forward(src_encoding, dec_init_vec, tgt_sents, params, *,
                    time_block=4, batch_tile=8, matmul_dtype=jnp.float32):
    """src_encoding: (L, B, 2H); dec_init_vec: (h0, c0) each (1, B, H);
    tgt_sents: (T, B) int32.  Returns scores: (T, B, V) float32."""
    hi = "highest"
    h0 = dec_init_vec[0][0]                               # (B, H)
    c0 = dec_init_vec[1][0]                               # (B, H)
    src_enc = jnp.transpose(src_encoding, (1, 0, 2))      # (B, L, 2H)

    tgt_emb = jnp.take(params["emb"], tgt_sents, axis=0)  # (T, B, E)
    T, B, E = tgt_emb.shape
    L = src_enc.shape[1]
    H = h0.shape[-1]
    V = params["w_read"].shape[-1]

    att_out_dtype = matmul_dtype            # bf16 halves HBM traffic to readout

    Hp = _round_up(H, 128)                  # lane-aligned hidden size
    Lp = _round_up(L, 128)                  # lane-dense attention scores
    TB = time_block
    Bt = batch_tile
    Bp = _round_up(B, Bt)
    Tp = _round_up(T, TB)

    # ---- time-invariant precomputes (hoisted out of the recurrence) ----
    gx = jnp.dot(tgt_emb.reshape(T * B, E), params["w_x"],
                 precision=hi) + params["b"]                         # (T*B, 4H)
    gx = _pad_gate_dim(gx, H, Hp).reshape(T, B, 4 * Hp)
    src_att = jnp.einsum("ble,eh->bhl", src_enc, params["w_src"],
                         precision=hi)                               # (B, H, L)
    src_v = jnp.einsum("ble,eh->blh", src_enc, params["wv_c"],
                       precision=hi)                                 # (B, L, H)

    # padding (zero-padded weights/state => exact math, results sliced off)
    gx = _pad_to(_pad_to(gx, 1, Bp), 0, Tp)                          # (Tp,Bp,4Hp)
    src_att = _pad_to(_pad_to(_pad_to(src_att, 1, Hp), 2, Lp), 0, Bp)
    src_v = _pad_to(_pad_to(_pad_to(src_v, 1, Lp), 2, Hp), 0, Bp)
    h0p = _pad_to(_pad_to(h0, 1, Hp), 0, Bp)
    c0p = _pad_to(_pad_to(c0, 1, Hp), 0, Bp)

    # fused recurrent weight [W_att ; W_hh] : (2Hp, 4Hp)
    w_a = _pad_to(_pad_gate_dim(params["w_a"], H, Hp), 0, Hp)
    w_h = _pad_to(_pad_gate_dim(params["w_h"], H, Hp), 0, Hp)
    w_ah = jnp.concatenate([w_a, w_h], axis=0)
    wv_h = _pad_to(_pad_to(params["wv_h"], 0, Hp), 1, Hp)

    # bf16 MXU operands (accumulation stays f32, elementwise math stays f32)
    src_att = src_att.astype(matmul_dtype)
    src_v = src_v.astype(matmul_dtype)
    w_ah = w_ah.astype(matmul_dtype)
    wv_h = wv_h.astype(matmul_dtype)

    nB, nT = Bp // Bt, Tp // TB

    # explicit scoped-VMEM request sized from the actual residency
    mm_b = jnp.dtype(matmul_dtype).itemsize
    out_b = jnp.dtype(att_out_dtype).itemsize
    resident = (2 * Bt * Hp * Lp * mm_b * 2            # src_att + src_v (x2 bufs)
                + (2 * Hp * 4 * Hp + Hp * Hp) * mm_b * 2
                + TB * Bt * 4 * Hp * 4 * 2              # gx blocks
                + TB * Bt * Hp * out_b * 2              # out blocks
                + 2 * Bt * Hp * 4 * 2                   # h0/c0 blocks
                + 3 * Bt * Hp * 4)                      # state/c scratch
    vmem_limit = int(min(96 * 2**20, max(16 * 2**20, 2 * resident)))

    full = lambda shape: pl.BlockSpec(shape, lambda b, t: (0,) * len(shape))

    grid_spec = pltpu.PrefetchScalarGridSpec(
        num_scalar_prefetch=0,
        grid=(nB, nT),                                   # (batch tiles, time blocks)
        in_specs=[
            pl.BlockSpec((TB, Bt, 4 * Hp), lambda b, t: (t, b, 0)),  # gx
            pl.BlockSpec((Bt, Hp, Lp), lambda b, t: (b, 0, 0)),      # src_att
            pl.BlockSpec((Bt, Lp, Hp), lambda b, t: (b, 0, 0)),      # src_v
            full((2 * Hp, 4 * Hp)),                                  # w_ah
            full((Hp, Hp)),                                          # wv_h
            pl.BlockSpec((Bt, Hp), lambda b, t: (b, 0)),             # h0
            pl.BlockSpec((Bt, Hp), lambda b, t: (b, 0)),             # c0
        ],
        out_specs=pl.BlockSpec((TB, Bt, Hp), lambda b, t: (t, b, 0)),
        scratch_shapes=[pltpu.VMEM((Bt, 2 * Hp), jnp.float32),   # [att | h]
                        pltpu.VMEM((Bt, Hp), jnp.float32)],      # c
    )

    kernel = functools.partial(
        _decoder_step_kernel, hidden_pad=Hp, l_valid=L,
        time_block=TB, matmul_dtype=matmul_dtype)

    att_all = pl.pallas_call(
        kernel,
        out_shape=jax.ShapeDtypeStruct((Tp, Bp, Hp), att_out_dtype),
        grid_spec=grid_spec,
        compiler_params=pltpu.CompilerParams(
            dimension_semantics=("parallel", "arbitrary"),   # batch || , time seq
            vmem_limit_bytes=vmem_limit),
    )(gx, src_att, src_v, w_ah, wv_h, h0p, c0p)

    att_all = att_all[:T, :B]                           # drop padded time/batch

    # ---- hoisted vocab readout (fully parallel, lane-dense tiles) ----
    w_read = _pad_to(params["w_read"], 0, Hp)           # zero rows for padded H
    scores = _readout_matmul(att_all.reshape(T * B, Hp), w_read,
                             matmul_dtype=matmul_dtype)
    return scores.reshape(T, B, V)


# ---------------------------------------------------------------------------
# Pure-JAX reference with identical semantics (verification)
# ---------------------------------------------------------------------------
def decoder_reference(src_encoding, dec_init_vec, tgt_sents, params):
    hi = "highest"
    h = dec_init_vec[0][0]
    c = dec_init_vec[1][0]
    src_enc = jnp.transpose(src_encoding, (1, 0, 2))          # (B, L, 2H)
    src_att = jnp.einsum("ble,eh->blh", src_enc, params["w_src"], precision=hi)
    tgt_emb = jnp.take(params["emb"], tgt_sents, axis=0)
    B, H = h.shape
    att_prev = jnp.zeros((B, H), jnp.float32)
    outs = []
    for t in range(tgt_emb.shape[0]):
        x = tgt_emb[t]
        gates = (jnp.dot(x, params["w_x"], precision=hi)
                 + jnp.dot(att_prev, params["w_a"], precision=hi)
                 + jnp.dot(h, params["w_h"], precision=hi) + params["b"])
        i_g = jax.nn.sigmoid(gates[:, 0 * H:1 * H])
        f_g = jax.nn.sigmoid(gates[:, 1 * H:2 * H])
        g_g = jnp.tanh(gates[:, 2 * H:3 * H])
        o_g = jax.nn.sigmoid(gates[:, 3 * H:4 * H])
        c = f_g * c + i_g * g_g
        h = o_g * jnp.tanh(c)
        aw = jnp.einsum("blh,bh->bl", src_att, h, precision=hi)
        aw = jnp.exp(aw - jnp.max(aw, axis=1, keepdims=True))
        aw = aw / jnp.sum(aw, axis=1, keepdims=True)
        ctx = jnp.einsum("bl,ble->be", aw, src_enc, precision=hi)
        att = jnp.tanh(jnp.dot(h, params["wv_h"], precision=hi)
                       + jnp.dot(ctx, params["wv_c"], precision=hi))
        outs.append(jnp.dot(att, params["w_read"], precision=hi))
        att_prev = att
    return jnp.stack(outs)


if __name__ == "__main__":
    # args: embedding_size=32, hidden_size=32, layer_size=1, cn_vocab_size=100,
    #       drop_out=0.0.  Shapes chosen to exercise the padding/masking paths
    #       (B not a multiple of the batch tile, L not a multiple of 128,
    #        T not a multiple of the time block, V not a multiple of 128).
    E, H, V = 32, 32, 100
    B, L, T = 6, 10, 6

    key = jax.random.PRNGKey(0)
    ks = jax.random.split(key, 12)
    s = 0.1  # weight scale keeps activations in a well-conditioned range

    params = dict(
        emb=jax.random.normal(ks[0], (V, E), jnp.float32) * s,
        w_src=jax.random.normal(ks[1], (2 * H, H), jnp.float32) * s,
        w_x=jax.random.normal(ks[2], (E, 4 * H), jnp.float32) * s,
        w_a=jax.random.normal(ks[3], (H, 4 * H), jnp.float32) * s,
        w_h=jax.random.normal(ks[4], (H, 4 * H), jnp.float32) * s,
        b=jax.random.normal(ks[5], (1, 4 * H), jnp.float32) * s,
        wv_h=jax.random.normal(ks[6], (H, H), jnp.float32) * s,
        wv_c=jax.random.normal(ks[7], (2 * H, H), jnp.float32) * s,
        w_read=jax.random.normal(ks[8], (H, V), jnp.float32) * s,
    )

    src_encoding = jax.random.normal(ks[9], (L, B, 2 * H), jnp.float32)
    h0 = jax.random.normal(ks[10], (1, B, H), jnp.float32) * s
    c0 = jax.random.normal(ks[11], (1, B, H), jnp.float32) * s
    tgt_sents = jax.random.randint(jax.random.PRNGKey(1), (T, B), 0, V, jnp.int32)

    ref = decoder_reference(src_encoding, (h0, c0), tgt_sents, params)

    # f32 matmul path: tight parity with the reference
    scores = decoder_forward(src_encoding, (h0, c0), tgt_sents, params,
                             matmul_dtype=jnp.float32)
    scores = jax.block_until_ready(scores)
    assert scores.shape == (T, B, V)
    err_f32 = float(jnp.max(jnp.abs(scores - ref)))
    assert err_f32 < 1e-2, f"f32 max abs err {err_f32}"

    # bf16 MXU-operand path (production config): looser tolerance
    scores_bf16 = decoder_forward(src_encoding, (h0, c0), tgt_sents, params,
                                  matmul_dtype=jnp.bfloat16)
    scores_bf16 = jax.block_until_ready(scores_bf16)
    assert bool(jnp.all(jnp.isfinite(scores_bf16)))
    err_bf16 = float(jnp.max(jnp.abs(scores_bf16 - ref)))
    assert err_bf16 < 2e-1, f"bf16 max abs err {err_bf16}"

    print("KERNEL_OK")
</pallas_src>

<mosaic_0001>
module attributes {stable_mosaic.version = 11 : i64} {
  func.func @_decoder_step_kernel(%arg0: i32, %arg1: i32, %arg2: memref<4x8x512xf32, #tpu.memory_space<vmem>>, %arg3: memref<8x128x128xf32, #tpu.memory_space<vmem>>, %arg4: memref<8x128x128xf32, #tpu.memory_space<vmem>>, %arg5: memref<256x512xf32, #tpu.memory_space<vmem>>, %arg6: memref<128x128xf32, #tpu.memory_space<vmem>>, %arg7: memref<8x128xf32, #tpu.memory_space<vmem>>, %arg8: memref<8x128xf32, #tpu.memory_space<vmem>>, %arg9: memref<4x8x128xf32, #tpu.memory_space<vmem>>, %arg10: memref<8x256xf32, #tpu.memory_space<vmem>>, %arg11: memref<8x128xf32, #tpu.memory_space<vmem>>) attributes {dimension_semantics = [#tpu.dimension_semantics<parallel>, #tpu.dimension_semantics<arbitrary>], iteration_bounds = array<i64: 1, 2>, scalar_prefetch = 0 : i64, scratch_operands = 2 : i64, tpu.core_type = #tpu.core_type<tc>, window_params = [{transform_indices = @transform_0, window_bounds = array<i64: 4, 8, 512>}, {transform_indices = @transform_1, window_bounds = array<i64: 8, 128, 128>}, {transform_indices = @transform_2, window_bounds = array<i64: 8, 128, 128>}, {pipeline_mode = #tpu.pipeline_mode<synchronous>, transform_indices = @transform_3, window_bounds = array<i64: 256, 512>}, {pipeline_mode = #tpu.pipeline_mode<synchronous>, transform_indices = @transform_4, window_bounds = array<i64: 128, 128>}, {transform_indices = @transform_5, window_bounds = array<i64: 8, 128>}, {transform_indices = @transform_6, window_bounds = array<i64: 8, 128>}, {transform_indices = @transform_7, window_bounds = array<i64: 4, 8, 128>}]} {
    %c0_i32 = arith.constant 0 : i32
    %0 = arith.cmpi eq, %arg1, %c0_i32 : i32
    %1 = arith.extui %0 : i1 to i32
    %c0_i32_0 = arith.constant 0 : i32
    %2 = arith.cmpi ne, %1, %c0_i32_0 : i32
    scf.if %2 {
      %cst_121 = arith.constant 0.000000e+00 : f32
      %264 = vector.broadcast %cst_121 : f32 to vector<8x128xf32>
      %c0_122 = arith.constant 0 : index
      %c0_123 = arith.constant 0 : index
      %265 = vector.load %arg10[%c0_122, %c0_123] : memref<8x256xf32, #tpu.memory_space<vmem>>, vector<8x128xf32>
      tpu.vector_store %arg10[%c0_122, %c0_123], %264 {strides = array<i32>} : memref<8x256xf32, #tpu.memory_space<vmem>>, vector<8x128xf32>,
      %c0_124 = arith.constant 0 : index
      %c0_125 = arith.constant 0 : index
      %266 = vector.load %arg7[%c0_124, %c0_125] : memref<8x128xf32, #tpu.memory_space<vmem>>, vector<8x128xf32>
      %c0_126 = arith.constant 0 : index
      %c128_127 = arith.constant 128 : index
      %267 = vector.load %arg10[%c0_126, %c128_127] : memref<8x256xf32, #tpu.memory_space<vmem>>, vector<8x128xf32>
      tpu.vector_store %arg10[%c0_126, %c128_127], %266 {strides = array<i32>} : memref<8x256xf32, #tpu.memory_space<vmem>>, vector<8x128xf32>,
      %c0_128 = arith.constant 0 : index
      %c0_129 = arith.constant 0 : index
      %268 = vector.load %arg8[%c0_128, %c0_129] : memref<8x128xf32, #tpu.memory_space<vmem>>, vector<8x128xf32>
      %c0_130 = arith.constant 0 : index
      %c0_131 = arith.constant 0 : index
      %269 = vector.load %arg11[%c0_130, %c0_131] : memref<8x128xf32, #tpu.memory_space<vmem>>, vector<8x128xf32>
      tpu.vector_store %arg11[%c0_130, %c0_131], %268 {strides = array<i32>} : memref<8x128xf32, #tpu.memory_space<vmem>>, vector<8x128xf32>,
    } else {
    }
    %c0 = arith.constant 0 : index
    %c0_1 = arith.constant 0 : index
    %c0_2 = arith.constant 0 : index
    %3 = vector.load %arg3[%c0, %c0_1, %c0_2] : memref<8x128x128xf32, #tpu.memory_space<vmem>>, vector<8x128x128xf32>
    %c0_3 = arith.constant 0 : index
    %c0_4 = arith.constant 0 : index
    %c0_5 = arith.constant 0 : index
    %4 = vector.load %arg4[%c0_3, %c0_4, %c0_5] : memref<8x128x128xf32, #tpu.memory_space<vmem>>, vector<8x128x128xf32>
    %5 = tpu.iota {dimensions = array<i32: 1>} : vector<1x128xi32>
    %c10_i32 = arith.constant 10 : i32
    %6 = vector.broadcast %c10_i32 : i32 to vector<1x128xi32>
    %7 = arith.cmpi slt, %5, %6 : vector<1x128xi32>
    %c0_6 = arith.constant 0 : index
    %c0_7 = arith.constant 0 : index
    %8 = vector.load %arg10[%c0_6, %c0_7] : memref<8x256xf32, #tpu.memory_space<vmem>>, vector<8x256xf32>
    %c0_8 = arith.constant 0 : index
    %c0_9 = arith.constant 0 : index
    %9 = vector.load %arg11[%c0_8, %c0_9] : memref<8x128xf32, #tpu.memory_space<vmem>>, vector<8x128xf32>
    %c0_10 = arith.constant 0 : index
    %c0_11 = arith.constant 0 : index
    %c0_12 = arith.constant 0 : index
    %10 = vector.load %arg2[%c0_10, %c0_11, %c0_12] : memref<4x8x512xf32, #tpu.memory_space<vmem>>, vector<1x8x512xf32>
    %11 = vector.shape_cast %10 : vector<1x8x512xf32> to vector<8x512xf32>
    %c0_13 = arith.constant 0 : index
    %c0_14 = arith.constant 0 : index
    %12 = vector.load %arg5[%c0_13, %c0_14] : memref<256x512xf32, #tpu.memory_space<vmem>>, vector<256x512xf32>
    %cst = arith.constant dense<0.000000e+00> : vector<8x512xf32>
    %13 = tpu.matmul %8, %12, %cst {dimension_numbers = #tpu.dot_dimension_numbers<[1], [0], [0], [1], [0, 0, 1, 1], [], []>} : vector<8x256xf32>, vector<256x512xf32>, vector<8x512xf32> -> vector<8x512xf32>
    %14 = arith.addf %11, %13 : vector<8x512xf32>
    %15 = vector.extract_strided_slice %14 {offsets = [0, 0], sizes = [8, 128], strides = [1, 1]} : vector<8x512xf32> to vector<8x128xf32>
    %16 = arith.negf %15 : vector<8x128xf32>
    %17 = math.exp %16 : vector<8x128xf32>
    %cst_15 = arith.constant 1.000000e+00 : f32
    %18 = vector.broadcast %cst_15 : f32 to vector<8x128xf32>
    %19 = arith.addf %18, %17 : vector<8x128xf32>
    %20 = arith.divf %18, %19 : vector<8x128xf32>
    %21 = vector.extract_strided_slice %14 {offsets = [0, 128], sizes = [8, 128], strides = [1, 1]} : vector<8x512xf32> to vector<8x128xf32>
    %22 = arith.negf %21 : vector<8x128xf32>
    %23 = math.exp %22 : vector<8x128xf32>
    %cst_16 = arith.constant 1.000000e+00 : f32
    %24 = vector.broadcast %cst_16 : f32 to vector<8x128xf32>
    %25 = arith.addf %24, %23 : vector<8x128xf32>
    %26 = arith.divf %24, %25 : vector<8x128xf32>
    %27 = vector.extract_strided_slice %14 {offsets = [0, 256], sizes = [8, 128], strides = [1, 1]} : vector<8x512xf32> to vector<8x128xf32>
    %28 = math.tanh %27 : vector<8x128xf32>
    %29 = vector.extract_strided_slice %14 {offsets = [0, 384], sizes = [8, 128], strides = [1, 1]} : vector<8x512xf32> to vector<8x128xf32>
    %30 = arith.negf %29 : vector<8x128xf32>
    %31 = math.exp %30 : vector<8x128xf32>
    %cst_17 = arith.constant 1.000000e+00 : f32
    %32 = vector.broadcast %cst_17 : f32 to vector<8x128xf32>
    %33 = arith.addf %32, %31 : vector<8x128xf32>
    %34 = arith.divf %32, %33 : vector<8x128xf32>
    %35 = arith.mulf %26, %9 : vector<8x128xf32>
    %36 = arith.mulf %20, %28 : vector<8x128xf32>
    %37 = arith.addf %35, %36 : vector<8x128xf32>
    %38 = math.tanh %37 : vector<8x128xf32>
    %39 = arith.mulf %34, %38 : vector<8x128xf32>
    %40 = vector.shape_cast %39 : vector<8x128xf32> to vector<8x128x1xf32>
    %41 = vector.broadcast %40 : vector<8x128x1xf32> to vector<8x128x128xf32>
    %42 = arith.mulf %3, %41 : vector<8x128x128xf32>
    %cst_18 = arith.constant dense<0.000000e+00> : vector<8x128xf32>
    %43 = vector.multi_reduction <add>, %42, %cst_18 [1] : vector<8x128x128xf32> to vector<8x128xf32>
    %cst_19 = arith.constant -1.000000e+30 : f32
    %44 = vector.shape_cast %7 : vector<1x128xi1> to vector<1x128xi1>
    %45 = vector.broadcast %44 : vector<1x128xi1> to vector<8x128xi1>
    %46 = vector.broadcast %cst_19 : f32 to vector<8x128xf32>
    %47 = arith.select %45, %43, %46 : vector<8x128xi1>, vector<8x128xf32>
    %cst_20 = arith.constant dense<0xFF800000> : vector<8xf32>
    %48 = vector.multi_reduction <maximumf>, %47, %cst_20 [1] : vector<8x128xf32> to vector<8xf32>
    %49 = vector.shape_cast %48 : vector<8xf32> to vector<8x1xf32>
    %50 = vector.broadcast %49 : vector<8x1xf32> to vector<8x128xf32>
    %51 = arith.subf %47, %50 : vector<8x128xf32>
    %52 = math.exp %51 : vector<8x128xf32>
    %cst_21 = arith.constant dense<0.000000e+00> : vector<8xf32>
    %53 = vector.multi_reduction <add>, %52, %cst_21 [1] : vector<8x128xf32> to vector<8xf32>
    %54 = vector.shape_cast %53 : vector<8xf32> to vector<8x1xf32>
    %55 = tpu.reciprocal %54 {approx = true} : vector<8x1xf32> -> vector<8x1xf32>
    %56 = vector.broadcast %55 : vector<8x1xf32> to vector<8x128xf32>
    %57 = arith.mulf %52, %56 : vector<8x128xf32>
    %58 = vector.shape_cast %57 : vector<8x128xf32> to vector<8x128x1xf32>
    %59 = vector.broadcast %58 : vector<8x128x1xf32> to vector<8x128x128xf32>
    %60 = arith.mulf %4, %59 : vector<8x128x128xf32>
    %cst_22 = arith.constant dense<0.000000e+00> : vector<8x128xf32>
    %61 = vector.multi_reduction <add>, %60, %cst_22 [1] : vector<8x128x128xf32> to vector<8x128xf32>
    %c0_23 = arith.constant 0 : index
    %c0_24 = arith.constant 0 : index
    %62 = vector.load %arg6[%c0_23, %c0_24] : memref<128x128xf32, #tpu.memory_space<vmem>>, vector<128x128xf32>
    %cst_25 = arith.constant dense<0.000000e+00> : vector<8x128xf32>
    %63 = tpu.matmul %39, %62, %cst_25 {dimension_numbers = #tpu.dot_dimension_numbers<[1], [0], [0], [1], [0, 0, 1, 1], [], []>} : vector<8x128xf32>, vector<128x128xf32>, vector<8x128xf32> -> vector<8x128xf32>
    %64 = arith.addf %63, %61 : vector<8x128xf32>
    %65 = math.tanh %64 : vector<8x128xf32>
    %c0_26 = arith.constant 0 : index
    %c0_27 = arith.constant 0 : index
    %c0_28 = arith.constant 0 : index
    %66 = vector.load %arg9[%c0_26, %c0_27, %c0_28] : memref<4x8x128xf32, #tpu.memory_space<vmem>>, vector<1x8x128xf32>
    %67 = vector.shape_cast %66 : vector<1x8x128xf32> to vector<8x128xf32>
    %68 = vector.shape_cast %65 : vector<8x128xf32> to vector<1x8x128xf32>
    tpu.vector_store %arg9[%c0_26, %c0_27, %c0_28], %68 {strides = array<i32>} : memref<4x8x128xf32, #tpu.memory_space<vmem>>, vector<1x8x128xf32>,
    %c0_29 = arith.constant 0 : index
    %c0_30 = arith.constant 0 : index
    %69 = vector.load %arg10[%c0_29, %c0_30] : memref<8x256xf32, #tpu.memory_space<vmem>>, vector<8x128xf32>
    tpu.vector_store %arg10[%c0_29, %c0_30], %65 {strides = array<i32>} : memref<8x256xf32, #tpu.memory_space<vmem>>, vector<8x128xf32>,
    %c0_31 = arith.constant 0 : index
    %c128 = arith.constant 128 : index
    %70 = vector.load %arg10[%c0_31, %c128] : memref<8x256xf32, #tpu.memory_space<vmem>>, vector<8x128xf32>
    tpu.vector_store %arg10[%c0_31, %c128], %39 {strides = array<i32>} : memref<8x256xf32, #tpu.memory_space<vmem>>, vector<8x128xf32>,
    %c0_32 = arith.constant 0 : index
    %c0_33 = arith.constant 0 : index
    %71 = vector.load %arg11[%c0_32, %c0_33] : memref<8x128xf32, #tpu.memory_space<vmem>>, vector<8x128xf32>
    tpu.vector_store %arg11[%c0_32, %c0_33], %37 {strides = array<i32>} : memref<8x128xf32, #tpu.memory_space<vmem>>, vector<8x128xf32>,
    %c0_34 = arith.constant 0 : index
    %c0_35 = arith.constant 0 : index
    %72 = vector.load %arg10[%c0_34, %c0_35] : memref<8x256xf32, #tpu.memory_space<vmem>>, vector<8x256xf32>
    %c0_36 = arith.constant 0 : index
    %c0_37 = arith.constant 0 : index
    %73 = vector.load %arg11[%c0_36, %c0_37] : memref<8x128xf32, #tpu.memory_space<vmem>>, vector<8x128xf32>
    %c1 = arith.constant 1 : index
    %c0_38 = arith.constant 0 : index
    %c0_39 = arith.constant 0 : index
    %74 = vector.load %arg2[%c1, %c0_38, %c0_39] : memref<4x8x512xf32, #tpu.memory_space<vmem>>, vector<1x8x512xf32>
    %75 = vector.shape_cast %74 : vector<1x8x512xf32> to vector<8x512xf32>
    %c0_40 = arith.constant 0 : index
    %c0_41 = arith.constant 0 : index
    %76 = vector.load %arg5[%c0_40, %c0_41] : memref<256x512xf32, #tpu.memory_space<vmem>>, vector<256x512xf32>
    %cst_42 = arith.constant dense<0.000000e+00> : vector<8x512xf32>
    %77 = tpu.matmul %72, %76, %cst_42 {dimension_numbers = #tpu.dot_dimension_numbers<[1], [0], [0], [1], [0, 0, 1, 1], [], []>} : vector<8x256xf32>, vector<256x512xf32>, vector<8x512xf32> -> vector<8x512xf32>
    %78 = arith.addf %75, %77 : vector<8x512xf32>
    %79 = vector.extract_strided_slice %78 {offsets = [0, 0], sizes = [8, 128], strides = [1, 1]} : vector<8x512xf32> to vector<8x128xf32>
    %80 = arith.negf %79 : vector<8x128xf32>
    %81 = math.exp %80 : vector<8x128xf32>
    %cst_43 = arith.constant 1.000000e+00 : f32
    %82 = vector.broadcast %cst_43 : f32 to vector<8x128xf32>
    %83 = arith.addf %82, %81 : vector<8x128xf32>
    %84 = arith.divf %82, %83 : vector<8x128xf32>
    %85 = vector.extract_strided_slice %78 {offsets = [0, 128], sizes = [8, 128], strides = [1, 1]} : vector<8x512xf32> to vector<8x128xf32>
    %86 = arith.negf %85 : vector<8x128xf32>
    %87 = math.exp %86 : vector<8x128xf32>
    %cst_44 = arith.constant 1.000000e+00 : f32
    %88 = vector.broadcast %cst_44 : f32 to vector<8x128xf32>
    %89 = arith.addf %88, %87 : vector<8x128xf32>
    %90 = arith.divf %88, %89 : vector<8x128xf32>
    %91 = vector.extract_strided_slice %78 {offsets = [0, 256], sizes = [8, 128], strides = [1, 1]} : vector<8x512xf32> to vector<8x128xf32>
    %92 = math.tanh %91 : vector<8x128xf32>
    %93 = vector.extract_strided_slice %78 {offsets = [0, 384], sizes = [8, 128], strides = [1, 1]} : vector<8x512xf32> to vector<8x128xf32>
    %94 = arith.negf %93 : vector<8x128xf32>
    %95 = math.exp %94 : vector<8x128xf32>
    %cst_45 = arith.constant 1.000000e+00 : f32
    %96 = vector.broadcast %cst_45 : f32 to vector<8x128xf32>
    %97 = arith.addf %96, %95 : vector<8x128xf32>
    %98 = arith.divf %96, %97 : vector<8x128xf32>
    %99 = arith.mulf %90, %73 : vector<8x128xf32>
    %100 = arith.mulf %84, %92 : vector<8x128xf32>
    %101 = arith.addf %99, %100 : vector<8x128xf32>
    %102 = math.tanh %101 : vector<8x128xf32>
    %103 = arith.mulf %98, %102 : vector<8x128xf32>
    %104 = vector.shape_cast %103 : vector<8x128xf32> to vector<8x128x1xf32>
    %105 = vector.broadcast %104 : vector<8x128x1xf32> to vector<8x128x128xf32>
    %106 = arith.mulf %3, %105 : vector<8x128x128xf32>
    %cst_46 = arith.constant dense<0.000000e+00> : vector<8x128xf32>
    %107 = vector.multi_reduction <add>, %106, %cst_46 [1] : vector<8x128x128xf32> to vector<8x128xf32>
    %cst_47 = arith.constant -1.000000e+30 : f32
    %108 = vector.shape_cast %7 : vector<1x128xi1> to vector<1x128xi1>
    %109 = vector.broadcast %108 : vector<1x128xi1> to vector<8x128xi1>
    %110 = vector.broadcast %cst_47 : f32 to vector<8x128xf32>
    %111 = arith.select %109, %107, %110 : vector<8x128xi1>, vector<8x128xf32>
    %cst_48 = arith.constant dense<0xFF800000> : vector<8xf32>
    %112 = vector.multi_reduction <maximumf>, %111, %cst_48 [1] : vector<8x128xf32> to vector<8xf32>
    %113 = vector.shape_cast %112 : vector<8xf32> to vector<8x1xf32>
    %114 = vector.broadcast %113 : vector<8x1xf32> to vector<8x128xf32>
    %115 = arith.subf %111, %114 : vector<8x128xf32>
    %116 = math.exp %115 : vector<8x128xf32>
    %cst_49 = arith.constant dense<0.000000e+00> : vector<8xf32>
    %117 = vector.multi_reduction <add>, %116, %cst_49 [1] : vector<8x128xf32> to vector<8xf32>
    %118 = vector.shape_cast %117 : vector<8xf32> to vector<8x1xf32>
    %119 = tpu.reciprocal %118 {approx = true} : vector<8x1xf32> -> vector<8x1xf32>
    %120 = vector.broadcast %119 : vector<8x1xf32> to vector<8x128xf32>
    %121 = arith.mulf %116, %120 : vector<8x128xf32>
    %122 = vector.shape_cast %121 : vector<8x128xf32> to vector<8x128x1xf32>
    %123 = vector.broadcast %122 : vector<8x128x1xf32> to vector<8x128x128xf32>
    %124 = arith.mulf %4, %123 : vector<8x128x128xf32>
    %cst_50 = arith.constant dense<0.000000e+00> : vector<8x128xf32>
    %125 = vector.multi_reduction <add>, %124, %cst_50 [1] : vector<8x128x128xf32> to vector<8x128xf32>
    %c0_51 = arith.constant 0 : index
    %c0_52 = arith.constant 0 : index
    %126 = vector.load %arg6[%c0_51, %c0_52] : memref<128x128xf32, #tpu.memory_space<vmem>>, vector<128x128xf32>
    %cst_53 = arith.constant dense<0.000000e+00> : vector<8x128xf32>
    %127 = tpu.matmul %103, %126, %cst_53 {dimension_numbers = #tpu.dot_dimension_numbers<[1], [0], [0], [1], [0, 0, 1, 1], [], []>} : vector<8x128xf32>, vector<128x128xf32>, vector<8x128xf32> -> vector<8x128xf32>
    %128 = arith.addf %127, %125 : vector<8x128xf32>
    %129 = math.tanh %128 : vector<8x128xf32>
    %c1_54 = arith.constant 1 : index
    %c0_55 = arith.constant 0 : index
    %c0_56 = arith.constant 0 : index
    %130 = vector.load %arg9[%c1_54, %c0_55, %c0_56] : memref<4x8x128xf32, #tpu.memory_space<vmem>>, vector<1x8x128xf32>
    %131 = vector.shape_cast %130 : vector<1x8x128xf32> to vector<8x128xf32>
    %132 = vector.shape_cast %129 : vector<8x128xf32> to vector<1x8x128xf32>
    tpu.vector_store %arg9[%c1_54, %c0_55, %c0_56], %132 {strides = array<i32>} : memref<4x8x128xf32, #tpu.memory_space<vmem>>, vector<1x8x128xf32>,
    %c0_57 = arith.constant 0 : index
    %c0_58 = arith.constant 0 : index
    %133 = vector.load %arg10[%c0_57, %c0_58] : memref<8x256xf32, #tpu.memory_space<vmem>>, vector<8x128xf32>
    tpu.vector_store %arg10[%c0_57, %c0_58], %129 {strides = array<i32>} : memref<8x256xf32, #tpu.memory_space<vmem>>, vector<8x128xf32>,
    %c0_59 = arith.constant 0 : index
    %c128_60 = arith.constant 128 : index
    %134 = vector.load %arg10[%c0_59, %c128_60] : memref<8x256xf32, #tpu.memory_space<vmem>>, vector<8x128xf32>
    tpu.vector_store %arg10[%c0_59, %c128_60], %103 {strides = array<i32>} : memref<8x256xf32, #tpu.memory_space<vmem>>, vector<8x128xf32>,
    %c0_61 = arith.constant 0 : index
    %c0_62 = arith.constant 0 : index
    %135 = vector.load %arg11[%c0_61, %c0_62] : memref<8x128xf32, #tpu.memory_space<vmem>>, vector<8x128xf32>
    tpu.vector_store %arg11[%c0_61, %c0_62], %101 {strides = array<i32>} : memref<8x128xf32, #tpu.memory_space<vmem>>, vector<8x128xf32>,
    %c0_63 = arith.constant 0 : index
    %c0_64 = arith.constant 0 : index
    %136 = vector.load %arg10[%c0_63, %c0_64] : memref<8x256xf32, #tpu.memory_space<vmem>>, vector<8x256xf32>
    %c0_65 = arith.constant 0 : index
    %c0_66 = arith.constant 0 : index
    %137 = vector.load %arg11[%c0_65, %c0_66] : memref<8x128xf32, #tpu.memory_space<vmem>>, vector<8x128xf32>
    %c2 = arith.constant 2 : index
    %c0_67 = arith.constant 0 : index
    %c0_68 = arith.constant 0 : index
    %138 = vector.load %arg2[%c2, %c0_67, %c0_68] : memref<4x8x512xf32, #tpu.memory_space<vmem>>, vector<1x8x512xf32>
    %139 = vector.shape_cast %138 : vector<1x8x512xf32> to vector<8x512xf32>
    %c0_69 = arith.constant 0 : index
    %c0_70 = arith.constant 0 : index
    %140 = vector.load %arg5[%c0_69, %c0_70] : memref<256x512xf32, #tpu.memory_space<vmem>>, vector<256x512xf32>
    %cst_71 = arith.constant dense<0.000000e+00> : vector<8x512xf32>
    %141 = tpu.matmul %136, %140, %cst_71 {dimension_numbers = #tpu.dot_dimension_numbers<[1], [0], [0], [1], [0, 0, 1, 1], [], []>} : vector<8x256xf32>, vector<256x512xf32>, vector<8x512xf32> -> vector<8x512xf32>
    %142 = arith.addf %139, %141 : vector<8x512xf32>
    %143 = vector.extract_strided_slice %142 {offsets = [0, 0], sizes = [8, 128], strides = [1, 1]} : vector<8x512xf32> to vector<8x128xf32>
    %144 = arith.negf %143 : vector<8x128xf32>
    %145 = math.exp %144 : vector<8x128xf32>
    %cst_72 = arith.constant 1.000000e+00 : f32
    %146 = vector.broadcast %cst_72 : f32 to vector<8x128xf32>
    %147 = arith.addf %146, %145 : vector<8x128xf32>
    %148 = arith.divf %146, %147 : vector<8x128xf32>
    %149 = vector.extract_strided_slice %142 {offsets = [0, 128], sizes = [8, 128], strides = [1, 1]} : vector<8x512xf32> to vector<8x128xf32>
    %150 = arith.negf %149 : vector<8x128xf32>
    %151 = math.exp %150 : vector<8x128xf32>
    %cst_73 = arith.constant 1.000000e+00 : f32
    %152 = vector.broadcast %cst_73 : f32 to vector<8x128xf32>
    %153 = arith.addf %152, %151 : vector<8x128xf32>
    %154 = arith.divf %152, %153 : vector<8x128xf32>
    %155 = vector.extract_strided_slice %142 {offsets = [0, 256], sizes = [8, 128], strides = [1, 1]} : vector<8x512xf32> to vector<8x128xf32>
    %156 = math.tanh %155 : vector<8x128xf32>
    %157 = vector.extract_strided_slice %142 {offsets = [0, 384], sizes = [8, 128], strides = [1, 1]} : vector<8x512xf32> to vector<8x128xf32>
    %158 = arith.negf %157 : vector<8x128xf32>
    %159 = math.exp %158 : vector<8x128xf32>
    %cst_74 = arith.constant 1.000000e+00 : f32
    %160 = vector.broadcast %cst_74 : f32 to vector<8x128xf32>
    %161 = arith.addf %160, %159 : vector<8x128xf32>
    %162 = arith.divf %160, %161 : vector<8x128xf32>
    %163 = arith.mulf %154, %137 : vector<8x128xf32>
    %164 = arith.mulf %148, %156 : vector<8x128xf32>
    %165 = arith.addf %163, %164 : vector<8x128xf32>
    %166 = math.tanh %165 : vector<8x128xf32>
    %167 = arith.mulf %162, %166 : vector<8x128xf32>
    %168 = vector.shape_cast %167 : vector<8x128xf32> to vector<8x128x1xf32>
    %169 = vector.broadcast %168 : vector<8x128x1xf32> to vector<8x128x128xf32>
    %170 = arith.mulf %3, %169 : vector<8x128x128xf32>
    %cst_75 = arith.constant dense<0.000000e+00> : vector<8x128xf32>
    %171 = vector.multi_reduction <add>, %170, %cst_75 [1] : vector<8x128x128xf32> to vector<8x128xf32>
    %cst_76 = arith.constant -1.000000e+30 : f32
    %172 = vector.shape_cast %7 : vector<1x128xi1> to vector<1x128xi1>
    %173 = vector.broadcast %172 : vector<1x128xi1> to vector<8x128xi1>
    %174 = vector.broadcast %cst_76 : f32 to vector<8x128xf32>
    %175 = arith.select %173, %171, %174 : vector<8x128xi1>, vector<8x128xf32>
    %cst_77 = arith.constant dense<0xFF800000> : vector<8xf32>
    %176 = vector.multi_reduction <maximumf>, %175, %cst_77 [1] : vector<8x128xf32> to vector<8xf32>
    %177 = vector.shape_cast %176 : vector<8xf32> to vector<8x1xf32>
    %178 = vector.broadcast %177 : vector<8x1xf32> to vector<8x128xf32>
    %179 = arith.subf %175, %178 : vector<8x128xf32>
    %180 = math.exp %179 : vector<8x128xf32>
    %cst_78 = arith.constant dense<0.000000e+00> : vector<8xf32>
    %181 = vector.multi_reduction <add>, %180, %cst_78 [1] : vector<8x128xf32> to vector<8xf32>
    %182 = vector.shape_cast %181 : vector<8xf32> to vector<8x1xf32>
    %183 = tpu.reciprocal %182 {approx = true} : vector<8x1xf32> -> vector<8x1xf32>
    %184 = vector.broadcast %183 : vector<8x1xf32> to vector<8x128xf32>
    %185 = arith.mulf %180, %184 : vector<8x128xf32>
    %186 = vector.shape_cast %185 : vector<8x128xf32> to vector<8x128x1xf32>
    %187 = vector.broadcast %186 : vector<8x128x1xf32> to vector<8x128x128xf32>
    %188 = arith.mulf %4, %187 : vector<8x128x128xf32>
    %cst_79 = arith.constant dense<0.000000e+00> : vector<8x128xf32>
    %189 = vector.multi_reduction <add>, %188, %cst_79 [1] : vector<8x128x128xf32> to vector<8x128xf32>
    %c0_80 = arith.constant 0 : index
    %c0_81 = arith.constant 0 : index
    %190 = vector.load %arg6[%c0_80, %c0_81] : memref<128x128xf32, #tpu.memory_space<vmem>>, vector<128x128xf32>
    %cst_82 = arith.constant dense<0.000000e+00> : vector<8x128xf32>
    %191 = tpu.matmul %167, %190, %cst_82 {dimension_numbers = #tpu.dot_dimension_numbers<[1], [0], [0], [1], [0, 0, 1, 1], [], []>} : vector<8x128xf32>, vector<128x128xf32>, vector<8x128xf32> -> vector<8x128xf32>
    %192 = arith.addf %191, %189 : vector<8x128xf32>
    %193 = math.tanh %192 : vector<8x128xf32>
    %c2_83 = arith.constant 2 : index
    %c0_84 = arith.constant 0 : index
    %c0_85 = arith.constant 0 : index
    %194 = vector.load %arg9[%c2_83, %c0_84, %c0_85] : memref<4x8x128xf32, #tpu.memory_space<vmem>>, vector<1x8x128xf32>
    %195 = vector.shape_cast %194 : vector<1x8x128xf32> to vector<8x128xf32>
    %196 = vector.shape_cast %193 : vector<8x128xf32> to vector<1x8x128xf32>
    tpu.vector_store %arg9[%c2_83, %c0_84, %c0_85], %196 {strides = array<i32>} : memref<4x8x128xf32, #tpu.memory_space<vmem>>, vector<1x8x128xf32>,
    %c0_86 = arith.constant 0 : index
    %c0_87 = arith.constant 0 : index
    %197 = vector.load %arg10[%c0_86, %c0_87] : memref<8x256xf32, #tpu.memory_space<vmem>>, vector<8x128xf32>
    tpu.vector_store %arg10[%c0_86, %c0_87], %193 {strides = array<i32>} : memref<8x256xf32, #tpu.memory_space<vmem>>, vector<8x128xf32>,
    %c0_88 = arith.constant 0 : index
    %c128_89 = arith.constant 128 : index
    %198 = vector.load %arg10[%c0_88, %c128_89] : memref<8x256xf32, #tpu.memory_space<vmem>>, vector<8x128xf32>
    tpu.vector_store %arg10[%c0_88, %c128_89], %167 {strides = array<i32>} : memref<8x256xf32, #tpu.memory_space<vmem>>, vector<8x128xf32>,
    %c0_90 = arith.constant 0 : index
    %c0_91 = arith.constant 0 : index
    %199 = vector.load %arg11[%c0_90, %c0_91] : memref<8x128xf32, #tpu.memory_space<vmem>>, vector<8x128xf32>
    tpu.vector_store %arg11[%c0_90, %c0_91], %165 {strides = array<i32>} : memref<8x128xf32, #tpu.memory_space<vmem>>, vector<8x128xf32>,
    %c0_92 = arith.constant 0 : index
    %c0_93 = arith.constant 0 : index
    %200 = vector.load %arg10[%c0_92, %c0_93] : memref<8x256xf32, #tpu.memory_space<vmem>>, vector<8x256xf32>
    %c0_94 = arith.constant 0 : index
    %c0_95 = arith.constant 0 : index
    %201 = vector.load %arg11[%c0_94, %c0_95] : memref<8x128xf32, #tpu.memory_space<vmem>>, vector<8x128xf32>
    %c3 = arith.constant 3 : index
    %c0_96 = arith.constant 0 : index
    %c0_97 = arith.constant 0 : index
    %202 = vector.load %arg2[%c3, %c0_96, %c0_97] : memref<4x8x512xf32, #tpu.memory_space<vmem>>, vector<1x8x512xf32>
    %203 = vector.shape_cast %202 : vector<1x8x512xf32> to vector<8x512xf32>
    %c0_98 = arith.constant 0 : index
    %c0_99 = arith.constant 0 : index
    %204 = vector.load %arg5[%c0_98, %c0_99] : memref<256x512xf32, #tpu.memory_space<vmem>>, vector<256x512xf32>
    %cst_100 = arith.constant dense<0.000000e+00> : vector<8x512xf32>
    %205 = tpu.matmul %200, %204, %cst_100 {dimension_numbers = #tpu.dot_dimension_numbers<[1], [0], [0], [1], [0, 0, 1, 1], [], []>} : vector<8x256xf32>, vector<256x512xf32>, vector<8x512xf32> -> vector<8x512xf32>
    %206 = arith.addf %203, %205 : vector<8x512xf32>
    %207 = vector.extract_strided_slice %206 {offsets = [0, 0], sizes = [8, 128], strides = [1, 1]} : vector<8x512xf32> to vector<8x128xf32>
    %208 = arith.negf %207 : vector<8x128xf32>
    %209 = math.exp %208 : vector<8x128xf32>
    %cst_101 = arith.constant 1.000000e+00 : f32
    %210 = vector.broadcast %cst_101 : f32 to vector<8x128xf32>
    %211 = arith.addf %210, %209 : vector<8x128xf32>
    %212 = arith.divf %210, %211 : vector<8x128xf32>
    %213 = vector.extract_strided_slice %206 {offsets = [0, 128], sizes = [8, 128], strides = [1, 1]} : vector<8x512xf32> to vector<8x128xf32>
    %214 = arith.negf %213 : vector<8x128xf32>
    %215 = math.exp %214 : vector<8x128xf32>
    %cst_102 = arith.constant 1.000000e+00 : f32
    %216 = vector.broadcast %cst_102 : f32 to vector<8x128xf32>
    %217 = arith.addf %216, %215 : vector<8x128xf32>
    %218 = arith.divf %216, %217 : vector<8x128xf32>
    %219 = vector.extract_strided_slice %206 {offsets = [0, 256], sizes = [8, 128], strides = [1, 1]} : vector<8x512xf32> to vector<8x128xf32>
    %220 = math.tanh %219 : vector<8x128xf32>
    %221 = vector.extract_strided_slice %206 {offsets = [0, 384], sizes = [8, 128], strides = [1, 1]} : vector<8x512xf32> to vector<8x128xf32>
    %222 = arith.negf %221 : vector<8x128xf32>
    %223 = math.exp %222 : vector<8x128xf32>
    %cst_103 = arith.constant 1.000000e+00 : f32
    %224 = vector.broadcast %cst_103 : f32 to vector<8x128xf32>
    %225 = arith.addf %224, %223 : vector<8x128xf32>
    %226 = arith.divf %224, %225 : vector<8x128xf32>
    %227 = arith.mulf %218, %201 : vector<8x128xf32>
    %228 = arith.mulf %212, %220 : vector<8x128xf32>
    %229 = arith.addf %227, %228 : vector<8x128xf32>
    %230 = math.tanh %229 : vector<8x128xf32>
    %231 = arith.mulf %226, %230 : vector<8x128xf32>
    %232 = vector.shape_cast %231 : vector<8x128xf32> to vector<8x128x1xf32>
    %233 = vector.broadcast %232 : vector<8x128x1xf32> to vector<8x128x128xf32>
    %234 = arith.mulf %3, %233 : vector<8x128x128xf32>
    %cst_104 = arith.constant dense<0.000000e+00> : vector<8x128xf32>
    %235 = vector.multi_reduction <add>, %234, %cst_104 [1] : vector<8x128x128xf32> to vector<8x128xf32>
    %cst_105 = arith.constant -1.000000e+30 : f32
    %236 = vector.shape_cast %7 : vector<1x128xi1> to vector<1x128xi1>
    %237 = vector.broadcast %236 : vector<1x128xi1> to vector<8x128xi1>
    %238 = vector.broadcast %cst_105 : f32 to vector<8x128xf32>
    %239 = arith.select %237, %235, %238 : vector<8x128xi1>, vector<8x128xf32>
    %cst_106 = arith.constant dense<0xFF800000> : vector<8xf32>
    %240 = vector.multi_reduction <maximumf>, %239, %cst_106 [1] : vector<8x128xf32> to vector<8xf32>
    %241 = vector.shape_cast %240 : vector<8xf32> to vector<8x1xf32>
    %242 = vector.broadcast %241 : vector<8x1xf32> to vector<8x128xf32>
    %243 = arith.subf %239, %242 : vector<8x128xf32>
    %244 = math.exp %243 : vector<8x128xf32>
    %cst_107 = arith.constant dense<0.000000e+00> : vector<8xf32>
    %245 = vector.multi_reduction <add>, %244, %cst_107 [1] : vector<8x128xf32> to vector<8xf32>
    %246 = vector.shape_cast %245 : vector<8xf32> to vector<8x1xf32>
    %247 = tpu.reciprocal %246 {approx = true} : vector<8x1xf32> -> vector<8x1xf32>
    %248 = vector.broadcast %247 : vector<8x1xf32> to vector<8x128xf32>
    %249 = arith.mulf %244, %248 : vector<8x128xf32>
    %250 = vector.shape_cast %249 : vector<8x128xf32> to vector<8x128x1xf32>
    %251 = vector.broadcast %250 : vector<8x128x1xf32> to vector<8x128x128xf32>
    %252 = arith.mulf %4, %251 : vector<8x128x128xf32>
    %cst_108 = arith.constant dense<0.000000e+00> : vector<8x128xf32>
    %253 = vector.multi_reduction <add>, %252, %cst_108 [1] : vector<8x128x128xf32> to vector<8x128xf32>
    %c0_109 = arith.constant 0 : index
    %c0_110 = arith.constant 0 : index
    %254 = vector.load %arg6[%c0_109, %c0_110] : memref<128x128xf32, #tpu.memory_space<vmem>>, vector<128x128xf32>
    %cst_111 = arith.constant dense<0.000000e+00> : vector<8x128xf32>
    %255 = tpu.matmul %231, %254, %cst_111 {dimension_numbers = #tpu.dot_dimension_numbers<[1], [0], [0], [1], [0, 0, 1, 1], [], []>} : vector<8x128xf32>, vector<128x128xf32>, vector<8x128xf32> -> vector<8x128xf32>
    %256 = arith.addf %255, %253 : vector<8x128xf32>
    %257 = math.tanh %256 : vector<8x128xf32>
    %c3_112 = arith.constant 3 : index
    %c0_113 = arith.constant 0 : index
    %c0_114 = arith.constant 0 : index
    %258 = vector.load %arg9[%c3_112, %c0_113, %c0_114] : memref<4x8x128xf32, #tpu.memory_space<vmem>>, vector<1x8x128xf32>
    %259 = vector.shape_cast %258 : vector<1x8x128xf32> to vector<8x128xf32>
    %260 = vector.shape_cast %257 : vector<8x128xf32> to vector<1x8x128xf32>
    tpu.vector_store %arg9[%c3_112, %c0_113, %c0_114], %260 {strides = array<i32>} : memref<4x8x128xf32, #tpu.memory_space<vmem>>, vector<1x8x128xf32>,
    %c0_115 = arith.constant 0 : index
    %c0_116 = arith.constant 0 : index
    %261 = vector.load %arg10[%c0_115, %c0_116] : memref<8x256xf32, #tpu.memory_space<vmem>>, vector<8x128xf32>
    tpu.vector_store %arg10[%c0_115, %c0_116], %257 {strides = array<i32>} : memref<8x256xf32, #tpu.memory_space<vmem>>, vector<8x128xf32>,
    %c0_117 = arith.constant 0 : index
    %c128_118 = arith.constant 128 : index
    %262 = vector.load %arg10[%c0_117, %c128_118] : memref<8x256xf32, #tpu.memory_space<vmem>>, vector<8x128xf32>
    tpu.vector_store %arg10[%c0_117, %c128_118], %231 {strides = array<i32>} : memref<8x256xf32, #tpu.memory_space<vmem>>, vector<8x128xf32>,
    %c0_119 = arith.constant 0 : index
    %c0_120 = arith.constant 0 : index
    %263 = vector.load %arg11[%c0_119, %c0_120] : memref<8x128xf32, #tpu.memory_space<vmem>>, vector<8x128xf32>
    tpu.vector_store %arg11[%c0_119, %c0_120], %229 {strides = array<i32>} : memref<8x128xf32, #tpu.memory_space<vmem>>, vector<8x128xf32>,
    return
  }
  func.func @transform_0(%arg0: i32, %arg1: i32) -> (i32, i32, i32) {
    %c0_i32 = arith.constant 0 : i32
    %c0_i32_0 = arith.constant 0 : i32
    return %arg1, %arg0, %c0_i32 : i32, i32, i32
  }
  func.func @transform_1(%arg0: i32, %arg1: i32) -> (i32, i32, i32) {
    %c0_i32 = arith.constant 0 : i32
    %c0_i32_0 = arith.constant 0 : i32
    %c0_i32_1 = arith.constant 0 : i32
    return %arg0, %c0_i32, %c0_i32_0 : i32, i32, i32
  }
  func.func @transform_2(%arg0: i32, %arg1: i32) -> (i32, i32, i32) {
    %c0_i32 = arith.constant 0 : i32
    %c0_i32_0 = arith.constant 0 : i32
    %c0_i32_1 = arith.constant 0 : i32
    return %arg0, %c0_i32, %c0_i32_0 : i32, i32, i32
  }
  func.func @transform_3(%arg0: i32, %arg1: i32) -> (i32, i32) {
    %c0_i32 = arith.constant 0 : i32
    %c0_i32_0 = arith.constant 0 : i32
    %c0_i32_1 = arith.constant 0 : i32
    return %c0_i32, %c0_i32_0 : i32, i32
  }
  func.func @transform_4(%arg0: i32, %arg1: i32) -> (i32, i32) {
    %c0_i32 = arith.constant 0 : i32
    %c0_i32_0 = arith.constant 0 : i32
    %c0_i32_1 = arith.constant 0 : i32
    return %c0_i32, %c0_i32_0 : i32, i32
  }
  func.func @transform_5(%arg0: i32, %arg1: i32) -> (i32, i32) {
    %c0_i32 = arith.constant 0 : i32
    %c0_i32_0 = arith.constant 0 : i32
    return %arg0, %c0_i32 : i32, i32
  }
  func.func @transform_6(%arg0: i32, %arg1: i32) -> (i32, i32) {
    %c0_i32 = arith.constant 0 : i32
    %c0_i32_0 = arith.constant 0 : i32
    return %arg0, %c0_i32 : i32, i32
  }
  func.func @transform_7(%arg0: i32, %arg1: i32) -> (i32, i32, i32) {
    %c0_i32 = arith.constant 0 : i32
    %c0_i32_0 = arith.constant 0 : i32
    return %arg1, %arg0, %c0_i32 : i32, i32, i32
  }
}

</mosaic_0001>

<llo_original>
// kernel: tpu_custom_call.1
$region0: #{tpu_custom_call.1}
  #allocation0 [shape = 'u32[]', space=smem, size = 0x4, offset = 0x4, fixed_abs, tag = 'smem constant byte address 0x4 - core index']
  #allocation1 [shape = 'u32[144,128]{1,0:T(1,128)}', space=vmem, size = 0x12000, scoped, tag = 'internal scratch']
  #allocation2 [shape = 'f32[8,256]{1,0:T(8,128)}', space=vmem, size = 0x2000, scoped, tag = 'scratch operand']
  #allocation3 [shape = 'f32[8,128]{1,0:T(8,128)}', space=vmem, size = 0x1000, scoped, tag = 'scratch operand']
  %s0 = inlined_call_operand.hbm [shape: f32[8,8,512], index: 0, kind: input, shape index: {}]
  %s1 = inlined_call_operand.hbm [shape: f32[8,128,128], index: 1, kind: input, shape index: {}]
  %s2 = inlined_call_operand.hbm [shape: f32[8,128,128], index: 2, kind: input, shape index: {}]
  %s3 = inlined_call_operand.hbm [shape: f32[256,512], index: 3, kind: input, shape index: {}]
  %s4 = inlined_call_operand.hbm [shape: f32[128,128], index: 4, kind: input, shape index: {}]
  %s5 = inlined_call_operand.vmem [shape: f32[8,128], index: 5, kind: input, shape index: {}]
  %s6 = inlined_call_operand.hbm [shape: f32[8,128], index: 6, kind: input, shape index: {}]
  %s7 = inlined_call_operand.hbm [shape: f32[8,8,128], index: 7, kind: output, shape index: {}]
  %s8 = sld [smem:[#allocation0]]
  $region89: #{tpu_custom_call.1} parent=0
    _
  %s10 = ssub.s32 1, %s8
  %s11 = scalar_select 0, %s10, %s8
  $region1: #{tpu_custom_call.1} parent=0
    #allocation4 [shape = 'u8[131072]{0}', space=vmem, size = 0x20000, scoped, tag = 'input window, operand 0']
    #allocation5 [shape = 's32[2]{0}', space=sflag, size = 0x8, scoped, tag = 'scoped memory for tpu_custom_call.1']
    #allocation6 [shape = 's32[2]{0}', space=sflag, size = 0x8, scoped, tag = 'scoped memory for tpu_custom_call.1']
    #allocation7 [shape = 'u8[524288]{0}', space=vmem, size = 0x80000, scoped, tag = 'input window, operand 1, single buffered']
    #allocation8 [shape = 's32[1]{0}', space=sflag, size = 0x4, scoped, tag = 'scoped memory for tpu_custom_call.1']
    #allocation9 [shape = 'u8[524288]{0}', space=vmem, size = 0x80000, scoped, tag = 'input window, operand 2, single buffered']
    #allocation10 [shape = 'u8[524288]{0}', space=vmem, size = 0x80000, scoped, tag = 'input window, operand 3, single buffered']
    #allocation11 [shape = 's32[1]{0}', space=sflag, size = 0x4, scoped, tag = 'scoped memory for tpu_custom_call.1']
    #allocation12 [shape = 'u8[65536]{0}', space=vmem, size = 0x10000, scoped, tag = 'input window, operand 4, single buffered']
    #allocation13 [shape = 'u8[4096]{0}', space=vmem, size = 0x1000, scoped, tag = 'input window, operand 6, single buffered']
    #allocation14 [shape = 's32[1]{0}', space=sflag, size = 0x4, scoped, tag = 'scoped memory for tpu_custom_call.1']
    #allocation15 [shape = 'u8[32768]{0}', space=vmem, size = 0x8000, scoped, tag = 'output window, operand 0']
    %12 = vsyncpa [#allocation5], 0
    %s13 = scalar_lea.sflag [#allocation5], 1
    %14 = vsyncpa %s13, 0
    %15 = vsyncpa [#allocation8], 0
    %16 = vsyncpa [#allocation11], 0
    %17 = vsyncpa [#allocation14], 0
    %18 = vsyncpa [#allocation6], 0
    %s19 = scalar_lea.sflag [#allocation6], 1
    %20 = vsyncpa %s19, 0
    loop: start=0, step=1, limit=4
    $region2: #{tpu_custom_call.1} parent=1 // loop_pre_header
      _
    $region3: #{tpu_custom_call.1} parent=1 // loop_header
      %s22 = sphi 0, %s26
      %p23 = scmp.ge.s32.totalorder %s22, 4
      %s29 = sphi 0, %s41
      %s30 = sphi 0, %s37
      %s31 = sphi 0, %s29
      %s32 = sphi 0, %s30
      %s33 = sphi 0, %s31
      %s34 = sphi 0, %s32
      %s46 = sphi 0, %s48
      %s49 = sphi 0, %s46
      %s50 = sphi 0, %s49
      %s66 = sphi 0, %s50
      %s72 = sphi 0, %s74
      %s75 = sphi 0, %s72
      %s76 = sphi 0, %s75
      %s92 = sphi 0, %s76
      %s98 = sphi 0, %s100
      %s101 = sphi 0, %s98
      %s102 = sphi 0, %s101
      %s118 = sphi 0, %s102
      %s122 = sphi 0, %s122
      %s124 = sphi 0, %s122
      %s125 = sphi 0, %s124
      %s139 = sphi 0, %s125
      %s143 = sphi 0, %s143
      %s145 = sphi 0, %s143
      %s146 = sphi 0, %s145
      %s160 = sphi 0, %s146
      %s166 = sphi 0, %s168
      %s169 = sphi 0, %s166
      %s170 = sphi 0, %s169
      %s186 = sphi 0, %s170
      %s192 = sphi 0, %s194
      %s195 = sphi 0, %s192
      %s196 = sphi 0, %s195
      %s212 = sphi 0, %s196
      %s220 = sphi 0, %s222
      %s223 = sphi 0, %s220
      %s224 = sphi 0, %s223
      %s240 = sphi 0, %s224
    $region4: #{tpu_custom_call.1} parent=1 // loop_header_branch
      %25 = sbr.rel (%p23) target = $region8
    $region5: #{tpu_custom_call.1} parent=1 // loop_body
      %s27 = ssub.s32 %s22, 1
      %s28 = ssub.s32 %s22, 2
      %s35 = sadd.s32 1, %s30
      %p36 = scmp.ge.s32.totalorder %s35, 2
      %s37 = scalar_select %p36, 0, %s35
      %s38 = sadd.s32 1, %s29
      %s39 = scalar_select %p36, %s38, %s29
      %p40 = scmp.ge.s32.totalorder %s39, 1
      %s41 = scalar_select %p40, 0, %s39
      %s42 = ssub.s32 %s30, %s37
      %s43 = ssub.s32 %s29, %s41
      %s44 = sor.u32 %s42, %s43
      %p45 = scmp.eq.s32.totalorder %s44, 0
      %s47 = sadd.s32 %s46, 1
      %s48 = scalar_select %p45, %s46, %s47
      %p51 = pneg %p45
      %p52 = scmp.eq.s32.totalorder %s22, 1
      %p53 = por %p51, %p52
      %p54 = scmp.ne.s32.totalorder %s46, %s49
      %p55 = scmp.eq.s32.totalorder %s22, 0
      %p56 = por %p54, %p55
      %p57 = scmp.ne.s32.totalorder %s46, %s49
      %p58 = scmp.eq.s32.totalorder %s27, 1
      %p59 = por %p57, %p58
      %p60 = scmp.ne.s32.totalorder %s49, %s50
      %p61 = scmp.eq.s32.totalorder %s27, 0
      %p62 = por %p60, %p61
      %p63 = scmp.ne.s32.totalorder %s49, %s50
      %p64 = scmp.eq.s32.totalorder %s28, 1
      %p65 = por %p63, %p64
      %p67 = scmp.ne.s32.totalorder %s50, %s66
      %p68 = scmp.eq.s32.totalorder %s28, 0
      %p69 = por %p67, %p68
      %s70 = ssub.s32 %s29, %s41
      %p71 = scmp.eq.s32.totalorder %s70, 0
      %s73 = sadd.s32 %s72, 1
      %s74 = scalar_select %p71, %s72, %s73
      %p77 = pneg %p71
      %p78 = scmp.eq.s32.totalorder %s22, 1
      %p79 = por %p77, %p78
      %p80 = scmp.ne.s32.totalorder %s72, %s75
      %p81 = scmp.eq.s32.totalorder %s22, 0
      %p82 = por %p80, %p81
      %p83 = scmp.ne.s32.totalorder %s72, %s75
      %p84 = scmp.eq.s32.totalorder %s27, 1
      %p85 = por %p83, %p84
      %p86 = scmp.ne.s32.totalorder %s75, %s76
      %p87 = scmp.eq.s32.totalorder %s27, 0
      %p88 = por %p86, %p87
      %p89 = scmp.ne.s32.totalorder %s75, %s76
      %p90 = scmp.eq.s32.totalorder %s28, 1
      %p91 = por %p89, %p90
      %p93 = scmp.ne.s32.totalorder %s76, %s92
      %p94 = scmp.eq.s32.totalorder %s28, 0
      %p95 = por %p93, %p94
      %s96 = ssub.s32 %s29, %s41
      %p97 = scmp.eq.s32.totalorder %s96, 0
      %s99 = sadd.s32 %s98, 1
      %s100 = scalar_select %p97, %s98, %s99
      %p103 = pneg %p97
      %p104 = scmp.eq.s32.totalorder %s22, 1
      %p105 = por %p103, %p104
      %p106 = scmp.ne.s32.totalorder %s98, %s101
      %p107 = scmp.eq.s32.totalorder %s22, 0
      %p108 = por %p106, %p107
      %p109 = scmp.ne.s32.totalorder %s98, %s101
      %p110 = scmp.eq.s32.totalorder %s27, 1
      %p111 = por %p109, %p110
      %p112 = scmp.ne.s32.totalorder %s101, %s102
      %p113 = scmp.eq.s32.totalorder %s27, 0
      %p114 = por %p112, %p113
      %p115 = scmp.ne.s32.totalorder %s101, %s102
      %p116 = scmp.eq.s32.totalorder %s28, 1
      %p117 = por %p115, %p116
      %p119 = scmp.ne.s32.totalorder %s102, %s118
      %p120 = scmp.eq.s32.totalorder %s28, 0
      %p121 = por %p119, %p120
      %s123 = sadd.s32 %s122, 1
      %p126 = scmp.eq.s32.totalorder %s22, 1
      %p127 = scmp.ne.s32.totalorder %s122, %s124
      %p128 = scmp.eq.s32.totalorder %s22, 0
      %p129 = por %p127, %p128
      %p130 = scmp.ne.s32.totalorder %s122, %s124
      %p131 = scmp.eq.s32.totalorder %s27, 1
      %p132 = por %p130, %p131
      %p133 = scmp.ne.s32.totalorder %s124, %s125
      %p134 = scmp.eq.s32.totalorder %s27, 0
      %p135 = por %p133, %p134
      %p136 = scmp.ne.s32.totalorder %s124, %s125
      %p137 = scmp.eq.s32.totalorder %s28, 1
      %p138 = por %p136, %p137
      %p140 = scmp.ne.s32.totalorder %s125, %s139
      %p141 = scmp.eq.s32.totalorder %s28, 0
      %p142 = por %p140, %p141
      %s144 = sadd.s32 %s143, 1
      %p147 = scmp.eq.s32.totalorder %s22, 1
      %p148 = scmp.ne.s32.totalorder %s143, %s145
      %p149 = scmp.eq.s32.totalorder %s22, 0
      %p150 = por %p148, %p149
      %p151 = scmp.ne.s32.totalorder %s143, %s145
      %p152 = scmp.eq.s32.totalorder %s27, 1
      %p153 = por %p151, %p152
      %p154 = scmp.ne.s32.totalorder %s145, %s146
      %p155 = scmp.eq.s32.totalorder %s27, 0
      %p156 = por %p154, %p155
      %p157 = scmp.ne.s32.totalorder %s145, %s146
      %p158 = scmp.eq.s32.totalorder %s28, 1
      %p159 = por %p157, %p158
      %p161 = scmp.ne.s32.totalorder %s146, %s160
      %p162 = scmp.eq.s32.totalorder %s28, 0
      %p163 = por %p161, %p162
      %s164 = ssub.s32 %s29, %s41
      %p165 = scmp.eq.s32.totalorder %s164, 0
      %s167 = sadd.s32 %s166, 1
      %s168 = scalar_select %p165, %s166, %s167
      %p171 = pneg %p165
      %p172 = scmp.eq.s32.totalorder %s22, 1
      %p173 = por %p171, %p172
      %p174 = scmp.ne.s32.totalorder %s166, %s169
      %p175 = scmp.eq.s32.totalorder %s22, 0
      %p176 = por %p174, %p175
      %p177 = scmp.ne.s32.totalorder %s166, %s169
      %p178 = scmp.eq.s32.totalorder %s27, 1
      %p179 = por %p177, %p178
      %p180 = scmp.ne.s32.totalorder %s169, %s170
      %p181 = scmp.eq.s32.totalorder %s27, 0
      %p182 = por %p180, %p181
      %p183 = scmp.ne.s32.totalorder %s169, %s170
      %p184 = scmp.eq.s32.totalorder %s28, 1
      %p185 = por %p183, %p184
      %p187 = scmp.ne.s32.totalorder %s170, %s186
      %p188 = scmp.eq.s32.totalorder %s28, 0
      %p189 = por %p187, %p188
      %s190 = ssub.s32 %s29, %s41
      %p191 = scmp.eq.s32.totalorder %s190, 0
      %s193 = sadd.s32 %s192, 1
      %s194 = scalar_select %p191, %s192, %s193
      %p197 = pneg %p191
      %p198 = scmp.eq.s32.totalorder %s22, 1
      %p199 = por %p197, %p198
      %p200 = scmp.ne.s32.totalorder %s192, %s195
      %p201 = scmp.eq.s32.totalorder %s22, 0
      %p202 = por %p200, %p201
      %p203 = scmp.ne.s32.totalorder %s192, %s195
      %p204 = scmp.eq.s32.totalorder %s27, 1
      %p205 = por %p203, %p204
      %p206 = scmp.ne.s32.totalorder %s195, %s196
      %p207 = scmp.eq.s32.totalorder %s27, 0
      %p208 = por %p206, %p207
      %p209 = scmp.ne.s32.totalorder %s195, %s196
      %p210 = scmp.eq.s32.totalorder %s28, 1
      %p211 = por %p209, %p210
      %p213 = scmp.ne.s32.totalorder %s196, %s212
      %p214 = scmp.eq.s32.totalorder %s28, 0
      %p215 = por %p213, %p214
      %s216 = ssub.s32 %s30, %s37
      %s217 = ssub.s32 %s29, %s41
      %s218 = sor.u32 %s216, %s217
      %p219 = scmp.eq.s32.totalorder %s218, 0
      %s221 = sadd.s32 %s220, 1
      %s222 = scalar_select %p219, %s220, %s221
      %p225 = pneg %p219
      %p226 = scmp.eq.s32.totalorder %s22, 1
      %p227 = por %p225, %p226
      %p228 = scmp.ne.s32.totalorder %s220, %s223
      %p229 = scmp.eq.s32.totalorder %s22, 0
      %p230 = por %p228, %p229
      %p231 = scmp.ne.s32.totalorder %s220, %s223
      %p232 = scmp.eq.s32.totalorder %s27, 1
      %p233 = por %p231, %p232
      %p234 = scmp.ne.s32.totalorder %s223, %s224
      %p235 = scmp.eq.s32.totalorder %s27, 0
      %p236 = por %p234, %p235
      %p237 = scmp.ne.s32.totalorder %s223, %s224
      %p238 = scmp.eq.s32.totalorder %s28, 1
      %p239 = por %p237, %p238
      %p241 = scmp.ne.s32.totalorder %s224, %s240
      %p242 = scmp.eq.s32.totalorder %s28, 0
      %p243 = por %p241, %p242
      %p244 = scmp.le.s32.totalorder 1, %s22
      %p245 = scmp.lt.s32.totalorder %s22, 3
      %p246 = pnand %p244, %p245
      %p247 = pneg %p246
      // Predicated region
      $region9: #{tpu_custom_call.1} parent=5 // pred_check
        _
      $region10: #{tpu_custom_call.1} parent=5 // pred_check_branch
        %249 = sbr.rel (%p246) target = $region12
      $region11: #{tpu_custom_call.1} parent=5 // pred_region
        %s250 = ssub.s32 %s22, 1
        // Predicated region
        $region13: #{tpu_custom_call.1} parent=11 // pred_check
          %p251 = pneg %p88
        $region14: #{tpu_custom_call.1} parent=11 // pred_check_branch
          %253 = sbr.rel (%p251) target = $region16
        $region15: #{tpu_custom_call.1} parent=11 // pred_region
          %s254 = smul.u32 8, %s31
          %s256 = ssub.s32 16384, 16384
          %257 = vsyncadd [#allocation8], %s256
          %s258 = smul.addr %s254, 16
          %s259 = smul.addr %s258, 128
          %s260 = scalar_lea.hbm %s1, %s259
          %s261 = sshll.u32 [#allocation7], 4
          %s262 = int_to_ptr.vmem [resolvable:$true] %s261
          %267 = dma.hbm_to_vmem [thread:$0]  %s260, 16384, %s262, [#allocation8], 128, 128, 8
        $region16: #{tpu_custom_call.1} parent=11 // pred_fallthru
          _
        // Predicated region
        $region17: #{tpu_custom_call.1} parent=11 // pred_check
          %p268 = pneg %p114
        $region18: #{tpu_custom_call.1} parent=11 // pred_check_branch
          %270 = sbr.rel (%p268) target = $region20
        $region19: #{tpu_custom_call.1} parent=11 // pred_region
          %s271 = smul.u32 8, %s31
          %s273 = ssub.s32 16384, 16384
          %274 = vsyncadd [#allocation8], %s273
          %s275 = smul.addr %s271, 16
          %s276 = smul.addr %s275, 128
          %s277 = scalar_lea.hbm %s2, %s276
          %s278 = sshll.u32 [#allocation9], 4
          %s279 = int_to_ptr.vmem [resolvable:$true] %s278
          %284 = dma.hbm_to_vmem [thread:$0]  %s277, 16384, %s279, [#allocation8], 128, 128, 8
        $region20: #{tpu_custom_call.1} parent=11 // pred_fallthru
          _
        // Predicated region
        $region21: #{tpu_custom_call.1} parent=11 // pred_check
          %p285 = pneg %p135
        $region22: #{tpu_custom_call.1} parent=11 // pred_check_branch
          %287 = sbr.rel (%p285) target = $region24
        $region23: #{tpu_custom_call.1} parent=11 // pred_region
          %s289 = ssub.s32 16384, 16384
          %290 = vsyncadd [#allocation11], %s289
          %s291 = sshll.u32 [#allocation10], 4
          %s292 = int_to_ptr.vmem [resolvable:$true] %s291
          %297 = dma.hbm_to_vmem [thread:$0]  %s3, 16384, %s292, [#allocation11], 512, 512, 32
        $region24: #{tpu_custom_call.1} parent=11 // pred_fallthru
          _
        // Predicated region
        $region25: #{tpu_custom_call.1} parent=11 // pred_check
          %p298 = pneg %p156
        $region26: #{tpu_custom_call.1} parent=11 // pred_check_branch
          %300 = sbr.rel (%p298) target = $region28
        $region27: #{tpu_custom_call.1} parent=11 // pred_region
          %s302 = ssub.s32 2048, 2048
          %303 = vsyncadd [#allocation11], %s302
          %s304 = sshll.u32 [#allocation12], 4
          %s305 = int_to_ptr.vmem [resolvable:$true] %s304
          %310 = dma.hbm_to_vmem [thread:$0]  %s4, 2048, %s305, [#allocation11], 128, 128, 8
        $region28: #{tpu_custom_call.1} parent=11 // pred_fallthru
          _
        // Predicated region
        $region29: #{tpu_custom_call.1} parent=11 // pred_check
          %p311 = pneg %p182
        $region30: #{tpu_custom_call.1} parent=11 // pred_check_branch
          %313 = sbr.rel (%p311) target = $region32
        $region31: #{tpu_custom_call.1} parent=11 // pred_region
          %p314 = scmp.lt.s32.totalorder %s31, 0
          %s315 = scalar_select %p314, %s31, 0
          %s316 = smul.addr %s315, 8
          %s317 = scalar_lea.vmem %s5, %s316
        $region32: #{tpu_custom_call.1} parent=11 // pred_fallthru
          _
        // Predicated region
        $region33: #{tpu_custom_call.1} parent=11 // pred_check
          %p318 = pneg %p208
        $region34: #{tpu_custom_call.1} parent=11 // pred_check_branch
          %320 = sbr.rel (%p318) target = $region36
        $region35: #{tpu_custom_call.1} parent=11 // pred_region
          %s322 = ssub.s32 128, 128
          %323 = vsyncadd [#allocation14], %s322
          %s324 = smul.addr %s31, 128
          %s325 = scalar_lea.hbm %s6, %s324
          %s327 = sshll.u32 [#allocation13], 4
          %s328 = int_to_ptr.vmem [resolvable:$true] %s327
          %330 = dma.hbm_to_vmem [thread:$0]  %s325, 128, %s328, [#allocation14]
        $region36: #{tpu_custom_call.1} parent=11 // pred_fallthru
          _
      $region12: #{tpu_custom_call.1} parent=5 // pred_fallthru
        _
      %p331 = scmp.lt.s32.totalorder %s22, 2
      // Predicated region
      $region37: #{tpu_custom_call.1} parent=5 // pred_check
        %p332 = pneg %p331
      $region38: #{tpu_custom_call.1} parent=5 // pred_check_branch
        %334 = sbr.rel (%p332) target = $region40
      $region39: #{tpu_custom_call.1} parent=5 // pred_region
        // Predicated region
        $region41: #{tpu_custom_call.1} parent=39 // pred_check
          %p335 = pneg %p56
        $region42: #{tpu_custom_call.1} parent=39 // pred_check_branch
          %337 = sbr.rel (%p335) target = $region44
        $region43: #{tpu_custom_call.1} parent=39 // pred_region
          %s338 = sand.u32 %s46, 1
          %s339 = scalar_lea.sflag [#allocation5], %s338
          %s340 = sand.u32 %s46, 1
          %s341 = smul.addr %s340, 128
          %s342 = scalar_lea.vmem [#allocation4], %s341
          %s343 = smul.u32 4, %s30
          %s345 = ssub.s32 2048, 2048
          %346 = vsyncadd %s339, %s345
          %s347 = smul.addr %s29, 4
          %s348 = smul.addr %s343, 4
          %s349 = sadd.s32 %s347, %s348
          %s350 = smul.addr %s349, 128
          %s351 = scalar_lea.hbm %s0, %s350
          %s352 = sshll.u32 %s342, 4
          %s353 = int_to_ptr.vmem [resolvable:$true] %s352
          %358 = dma.hbm_to_vmem [thread:$0]  %s351, 2048, %s353, %s339, 512, 512, 32
        $region44: #{tpu_custom_call.1} parent=39 // pred_fallthru
          _
      $region40: #{tpu_custom_call.1} parent=5 // pred_fallthru
        _
      %p359 = scmp.le.s32.totalorder 1, %s22
      %p360 = scmp.lt.s32.totalorder %s22, 3
      %p361 = pnand %p359, %p360
      %p362 = pneg %p361
      // Predicated region
      $region45: #{tpu_custom_call.1} parent=5 // pred_check
        _
      $region46: #{tpu_custom_call.1} parent=5 // pred_check_branch
        %364 = sbr.rel (%p361) target = $region48
      $region47: #{tpu_custom_call.1} parent=5 // pred_region
        %s365 = ssub.s32 %s22, 1
        %s366 = sand.u32 %s49, 1
        %s367 = scalar_lea.sflag [#allocation5], %s366
        %s368 = sand.u32 %s49, 1
        %s369 = smul.addr %s368, 128
        %s370 = scalar_lea.vmem [#allocation4], %s369
        // Predicated region
        $region49: #{tpu_custom_call.1} parent=47 // pred_check
          %p371 = pneg %p62
        $region50: #{tpu_custom_call.1} parent=47 // pred_check_branch
          %373 = sbr.rel (%p371) target = $region52
        $region51: #{tpu_custom_call.1} parent=47 // pred_region
          %374 = dma.done %s367, 2048
        $region52: #{tpu_custom_call.1} parent=47 // pred_fallthru
          _
        // Predicated region
        $region53: #{tpu_custom_call.1} parent=47 // pred_check
          %p375 = pneg %p88
        $region54: #{tpu_custom_call.1} parent=47 // pred_check_branch
          %377 = sbr.rel (%p375) target = $region56
        $region55: #{tpu_custom_call.1} parent=47 // pred_region
          %378 = dma.done [#allocation8], 16384
        $region56: #{tpu_custom_call.1} parent=47 // pred_fallthru
          _
        // Predicated region
        $region57: #{tpu_custom_call.1} parent=47 // pred_check
          %p379 = pneg %p114
        $region58: #{tpu_custom_call.1} parent=47 // pred_check_branch
          %381 = sbr.rel (%p379) target = $region60
        $region59: #{tpu_custom_call.1} parent=47 // pred_region
          %382 = dma.done [#allocation8], 16384
        $region60: #{tpu_custom_call.1} parent=47 // pred_fallthru
          _
        // Predicated region
        $region61: #{tpu_custom_call.1} parent=47 // pred_check
          %p383 = pneg %p135
        $region62: #{tpu_custom_call.1} parent=47 // pred_check_branch
          %385 = sbr.rel (%p383) target = $region64
        $region63: #{tpu_custom_call.1} parent=47 // pred_region
          %386 = dma.done [#allocation11], 16384
        $region64: #{tpu_custom_call.1} parent=47 // pred_fallthru
          _
        // Predicated region
        $region65: #{tpu_custom_call.1} parent=47 // pred_check
          %p387 = pneg %p156
        $region66: #{tpu_custom_call.1} parent=47 // pred_check_branch
          %389 = sbr.rel (%p387) target = $region68
        $region67: #{tpu_custom_call.1} parent=47 // pred_region
          %390 = dma.done [#allocation11], 2048
        $region68: #{tpu_custom_call.1} parent=47 // pred_fallthru
          _
        // Predicated region
        $region69: #{tpu_custom_call.1} parent=47 // pred_check
          %p391 = pneg %p208
        $region70: #{tpu_custom_call.1} parent=47 // pred_check_branch
          %393 = sbr.rel (%p391) target = $region72
        $region71: #{tpu_custom_call.1} parent=47 // pred_region
          %394 = dma.done [#allocation14], 128
        $region72: #{tpu_custom_call.1} parent=47 // pred_fallthru
          _
        %s395 = sand.u32 %s49, 1
        %s396 = scalar_lea.sflag [#allocation5], %s395
        %s397 = sand.u32 %s49, 1
        %s398 = smul.addr %s397, 128
        %s399 = scalar_lea.vmem [#allocation4], %s398
        %p400 = pneg %p62
        %p401 = pneg %p59
        %p402 = pneg %p88
        %p403 = pneg %p85
        %p404 = pneg %p114
        %p405 = pneg %p111
        %p406 = pneg %p135
        %p407 = pneg %p132
        %p408 = pneg %p156
        %p409 = pneg %p153
        %p410 = scmp.lt.s32.totalorder %s31, 0
        %s411 = scalar_select %p410, %s31, 0
        %s412 = smul.addr %s411, 8
        %s413 = scalar_lea.vmem %s5, %s412
        %p414 = pneg %p182
        %p415 = pneg %p179
        %p416 = pneg %p208
        %p417 = pneg %p205
        %p418 = pneg %p236
        %p419 = pneg %p233
        %s420 = sand.u32 %s223, 1
        %s421 = scalar_lea.sflag [#allocation6], %s420
        %s422 = sand.u32 %s223, 1
        %s423 = smul.addr %s422, 32
        %s424 = scalar_lea.vmem [#allocation15], %s423
        %s425 = smul.u32 4, %s32
        %s426 = smul.u32 8, %s31
        %s427 = smul.u32 8, %s31
        %p428 = scmp.lt.s32.totalorder %s31, 0
        %s429 = scalar_select %p428, %s31, 0
        %s430 = smul.addr %s429, 8
        %s431 = scalar_lea.vmem %s5, %s430
        %s432 = smul.u32 4, %s32
        %p433 = scmp.eq.s32.totalorder %s32, 0
        // Predicated region
        $region73: #{tpu_custom_call.1} parent=47 // pred_check
          %p434 = pneg %p433
        $region74: #{tpu_custom_call.1} parent=47 // pred_check_branch
          %436 = sbr.rel (%p434) target = $region76
        $region75: #{tpu_custom_call.1} parent=47 // pred_region
          %437 = vst [vmem:[#allocation2] sm:$0xff] 0.0
          %v438 = vld [vmem:[%s431] sm:$0xff]
          %439 = vst [vmem:[#allocation2 + $0x8] sm:$0xff] %v438
          %v440 = vld [vmem:[#allocation13] sm:$0xff]
          %441 = vst [vmem:[#allocation3] sm:$0xff] %v440
        $region76: #{tpu_custom_call.1} parent=47 // pred_fallthru
          _
        %v442 = vld [vmem:[#allocation7] sm:$0xff]
        %v443 = vld [vmem:[#allocation7 + $0x8] sm:$0xff]
        %v444 = vld [vmem:[#allocation7 + $0x10] sm:$0xff]
        %v445 = vld [vmem:[#allocation7 + $0x18] sm:$0xff]
        %v446 = vld [vmem:[#allocation7 + $0x20] sm:$0xff]
        %v447 = vld [vmem:[#allocation7 + $0x28] sm:$0xff]
        %v448 = vld [vmem:[#allocation7 + $0x30] sm:$0xff]
        %v449 = vld [vmem:[#allocation7 + $0x38] sm:$0xff]
        %v450 = vld [vmem:[#allocation7 + $0x40] sm:$0xff]
        %v451 = vld [vmem:[#allocation7 + $0x48] sm:$0xff]
        %v452 = vld [vmem:[#allocation7 + $0x50] sm:$0xff]
        %v453 = vld [vmem:[#allocation7 + $0x58] sm:$0xff]
        %v454 = vld [vmem:[#allocation7 + $0x60] sm:$0xff]
        %v455 = vld [vmem:[#allocation7 + $0x68] sm:$0xff]
        %v456 = vld [vmem:[#allocation7 + $0x70] sm:$0xff]
        %v457 = vld [vmem:[#allocation7 + $0x78] sm:$0xff]
        %v458 = vld [vmem:[#allocation7 + $0x80] sm:$0xff]
        %v459 = vld [vmem:[#allocation7 + $0x88] sm:$0xff]
        %v460 = vld [vmem:[#allocation7 + $0x90] sm:$0xff]
        %v461 = vld [vmem:[#allocation7 + $0x98] sm:$0xff]
        %v462 = vld [vmem:[#allocation7 + $0xa0] sm:$0xff]
        %v463 = vld [vmem:[#allocation7 + $0xa8] sm:$0xff]
        %v464 = vld [vmem:[#allocation7 + $0xb0] sm:$0xff]
        %v465 = vld [vmem:[#allocation7 + $0xb8] sm:$0xff]
        %v466 = vld [vmem:[#allocation7 + $0xc0] sm:$0xff]
        %v467 = vld [vmem:[#allocation7 + $0xc8] sm:$0xff]
        %v468 = vld [vmem:[#allocation7 + $0xd0] sm:$0xff]
        %v469 = vld [vmem:[#allocation7 + $0xd8] sm:$0xff]
        %v470 = vld [vmem:[#allocation7 + $0xe0] sm:$0xff]
        %v471 = vld [vmem:[#allocation7 + $0xe8] sm:$0xff]
        %v472 = vld [vmem:[#allocation7 + $0xf0] sm:$0xff]
        %v473 = vld [vmem:[#allocation7 + $0xf8] sm:$0xff]
        %v474 = vld [vmem:[#allocation7 + $0x100] sm:$0xff]
        %v475 = vld [vmem:[#allocation7 + $0x108] sm:$0xff]
        %v476 = vld [vmem:[#allocation7 + $0x110] sm:$0xff]
        %v477 = vld [vmem:[#allocation7 + $0x118] sm:$0xff]
        %v478 = vld [vmem:[#allocation7 + $0x120] sm:$0xff]
        %v479 = vld [vmem:[#allocation7 + $0x128] sm:$0xff]
        %v480 = vld [vmem:[#allocation7 + $0x130] sm:$0xff]
        %v481 = vld [vmem:[#allocation7 + $0x138] sm:$0xff]
        %v482 = vld [vmem:[#allocation7 + $0x140] sm:$0xff]
        %v483 = vld [vmem:[#allocation7 + $0x148] sm:$0xff]
        %v484 = vld [vmem:[#allocation7 + $0x150] sm:$0xff]
        %v485 = vld [vmem:[#allocation7 + $0x158] sm:$0xff]
        %v486 = vld [vmem:[#allocation7 + $0x160] sm:$0xff]
        %v487 = vld [vmem:[#allocation7 + $0x168] sm:$0xff]
        %v488 = vld [vmem:[#allocation7 + $0x170] sm:$0xff]
        %v489 = vld [vmem:[#allocation7 + $0x178] sm:$0xff]
        %v490 = vld [vmem:[#allocation7 + $0x180] sm:$0xff]
        %v491 = vld [vmem:[#allocation7 + $0x188] sm:$0xff]
        %v492 = vld [vmem:[#allocation7 + $0x190] sm:$0xff]
        %v493 = vld [vmem:[#allocation7 + $0x198] sm:$0xff]
        %v494 = vld [vmem:[#allocation7 + $0x1a0] sm:$0xff]
        %v495 = vld [vmem:[#allocation7 + $0x1a8] sm:$0xff]
        %v496 = vld [vmem:[#allocation7 + $0x1b0] sm:$0xff]
        %v497 = vld [vmem:[#allocation7 + $0x1b8] sm:$0xff]
        %v498 = vld [vmem:[#allocation7 + $0x1c0] sm:$0xff]
        %v499 = vld [vmem:[#allocation7 + $0x1c8] sm:$0xff]
        %v500 = vld [vmem:[#allocation7 + $0x1d0] sm:$0xff]
        %v501 = vld [vmem:[#allocation7 + $0x1d8] sm:$0xff]
        %v502 = vld [vmem:[#allocation7 + $0x1e0] sm:$0xff]
        %v503 = vld [vmem:[#allocation7 + $0x1e8] sm:$0xff]
        %v504 = vld [vmem:[#allocation7 + $0x1f0] sm:$0xff]
        %v505 = vld [vmem:[#allocation7 + $0x1f8] sm:$0xff]
        %v506 = vld [vmem:[#allocation7 + $0x200] sm:$0xff]
        %v507 = vld [vmem:[#allocation7 + $0x208] sm:$0xff]
        %v508 = vld [vmem:[#allocation7 + $0x210] sm:$0xff]
        %v509 = vld [vmem:[#allocation7 + $0x218] sm:$0xff]
        %v510 = vld [vmem:[#allocation7 + $0x220] sm:$0xff]
        %v511 = vld [vmem:[#allocation7 + $0x228] sm:$0xff]
        %v512 = vld [vmem:[#allocation7 + $0x230] sm:$0xff]
        %v513 = vld [vmem:[#allocation7 + $0x238] sm:$0xff]
        %v514 = vld [vmem:[#allocation7 + $0x240] sm:$0xff]
        %v515 = vld [vmem:[#allocation7 + $0x248] sm:$0xff]
        %v516 = vld [vmem:[#allocation7 + $0x250] sm:$0xff]
        %v517 = vld [vmem:[#allocation7 + $0x258] sm:$0xff]
        %v518 = vld [vmem:[#allocation7 + $0x260] sm:$0xff]
        %v519 = vld [vmem:[#allocation7 + $0x268] sm:$0xff]
        %v520 = vld [vmem:[#allocation7 + $0x270] sm:$0xff]
        %v521 = vld [vmem:[#allocation7 + $0x278] sm:$0xff]
        %v522 = vld [vmem:[#allocation7 + $0x280] sm:$0xff]
        %v523 = vld [vmem:[#allocation7 + $0x288] sm:$0xff]
        %v524 = vld [vmem:[#allocation7 + $0x290] sm:$0xff]
        %v525 = vld [vmem:[#allocation7 + $0x298] sm:$0xff]
        %v526 = vld [vmem:[#allocation7 + $0x2a0] sm:$0xff]
        %v527 = vld [vmem:[#allocation7 + $0x2a8] sm:$0xff]
        %v528 = vld [vmem:[#allocation7 + $0x2b0] sm:$0xff]
        %v529 = vld [vmem:[#allocation7 + $0x2b8] sm:$0xff]
        %v530 = vld [vmem:[#allocation7 + $0x2c0] sm:$0xff]
        %v531 = vld [vmem:[#allocation7 + $0x2c8] sm:$0xff]
        %v532 = vld [vmem:[#allocation7 + $0x2d0] sm:$0xff]
        %v533 = vld [vmem:[#allocation7 + $0x2d8] sm:$0xff]
        %v534 = vld [vmem:[#allocation7 + $0x2e0] sm:$0xff]
        %v535 = vld [vmem:[#allocation7 + $0x2e8] sm:$0xff]
        %v536 = vld [vmem:[#allocation7 + $0x2f0] sm:$0xff]
        %v537 = vld [vmem:[#allocation7 + $0x2f8] sm:$0xff]
        %v538 = vld [vmem:[#allocation7 + $0x300] sm:$0xff]
        %v539 = vld [vmem:[#allocation7 + $0x308] sm:$0xff]
        %v540 = vld [vmem:[#allocation7 + $0x310] sm:$0xff]
        %v541 = vld [vmem:[#allocation7 + $0x318] sm:$0xff]
        %v542 = vld [vmem:[#allocation7 + $0x320] sm:$0xff]
        %v543 = vld [vmem:[#allocation7 + $0x328] sm:$0xff]
        %v544 = vld [vmem:[#allocation7 + $0x330] sm:$0xff]
        %v545 = vld [vmem:[#allocation7 + $0x338] sm:$0xff]
        %v546 = vld [vmem:[#allocation7 + $0x340] sm:$0xff]
        %v547 = vld [vmem:[#allocation7 + $0x348] sm:$0xff]
        %v548 = vld [vmem:[#allocation7 + $0x350] sm:$0xff]
        %v549 = vld [vmem:[#allocation7 + $0x358] sm:$0xff]
        %v550 = vld [vmem:[#allocation7 + $0x360] sm:$0xff]
        %v551 = vld [vmem:[#allocation7 + $0x368] sm:$0xff]
        %v552 = vld [vmem:[#allocation7 + $0x370] sm:$0xff]
        %v553 = vld [vmem:[#allocation7 + $0x378] sm:$0xff]
        %v554 = vld [vmem:[#allocation7 + $0x380] sm:$0xff]
        %v555 = vld [vmem:[#allocation7 + $0x388] sm:$0xff]
        %v556 = vld [vmem:[#allocation7 + $0x390] sm:$0xff]
        %v557 = vld [vmem:[#allocation7 + $0x398] sm:$0xff]
        %v558 = vld [vmem:[#allocation7 + $0x3a0] sm:$0xff]
        %v559 = vld [vmem:[#allocation7 + $0x3a8] sm:$0xff]
        %v560 = vld [vmem:[#allocation7 + $0x3b0] sm:$0xff]
        %v561 = vld [vmem:[#allocation7 + $0x3b8] sm:$0xff]
        %v562 = vld [vmem:[#allocation7 + $0x3c0] sm:$0xff]
        %v563 = vld [vmem:[#allocation7 + $0x3c8] sm:$0xff]
        %v564 = vld [vmem:[#allocation7 + $0x3d0] sm:$0xff]
        %v565 = vld [vmem:[#allocation7 + $0x3d8] sm:$0xff]
        %v566 = vld [vmem:[#allocation7 + $0x3e0] sm:$0xff]
        %v567 = vld [vmem:[#allocation7 + $0x3e8] sm:$0xff]
        %v568 = vld [vmem:[#allocation7 + $0x3f0] sm:$0xff]
        %v569 = vld [vmem:[#allocation7 + $0x3f8] sm:$0xff]
        %v570 = vld [vmem:[#allocation9] sm:$0xff]
        %v571 = vld [vmem:[#allocation9 + $0x8] sm:$0xff]
        %v572 = vld [vmem:[#allocation9 + $0x10] sm:$0xff]
        %v573 = vld [vmem:[#allocation9 + $0x18] sm:$0xff]
        %v574 = vld [vmem:[#allocation9 + $0x20] sm:$0xff]
        %v575 = vld [vmem:[#allocation9 + $0x28] sm:$0xff]
        %v576 = vld [vmem:[#allocation9 + $0x30] sm:$0xff]
        %v577 = vld [vmem:[#allocation9 + $0x38] sm:$0xff]
        %v578 = vld [vmem:[#allocation9 + $0x40] sm:$0xff]
        %v579 = vld [vmem:[#allocation9 + $0x48] sm:$0xff]
        %v580 = vld [vmem:[#allocation9 + $0x50] sm:$0xff]
        %v581 = vld [vmem:[#allocation9 + $0x58] sm:$0xff]
        %v582 = vld [vmem:[#allocation9 + $0x60] sm:$0xff]
        %v583 = vld [vmem:[#allocation9 + $0x68] sm:$0xff]
        %v584 = vld [vmem:[#allocation9 + $0x70] sm:$0xff]
        %v585 = vld [vmem:[#allocation9 + $0x78] sm:$0xff]
        %v586 = vld [vmem:[#allocation9 + $0x80] sm:$0xff]
        %v587 = vld [vmem:[#allocation9 + $0x88] sm:$0xff]
        %v588 = vld [vmem:[#allocation9 + $0x90] sm:$0xff]
        %v589 = vld [vmem:[#allocation9 + $0x98] sm:$0xff]
        %v590 = vld [vmem:[#allocation9 + $0xa0] sm:$0xff]
        %v591 = vld [vmem:[#allocation9 + $0xa8] sm:$0xff]
        %v592 = vld [vmem:[#allocation9 + $0xb0] sm:$0xff]
        %v593 = vld [vmem:[#allocation9 + $0xb8] sm:$0xff]
        %v594 = vld [vmem:[#allocation9 + $0xc0] sm:$0xff]
        %v595 = vld [vmem:[#allocation9 + $0xc8] sm:$0xff]
        %v596 = vld [vmem:[#allocation9 + $0xd0] sm:$0xff]
        %v597 = vld [vmem:[#allocation9 + $0xd8] sm:$0xff]
        %v598 = vld [vmem:[#allocation9 + $0xe0] sm:$0xff]
        %v599 = vld [vmem:[#allocation9 + $0xe8] sm:$0xff]
        %v600 = vld [vmem:[#allocation9 + $0xf0] sm:$0xff]
        %v601 = vld [vmem:[#allocation9 + $0xf8] sm:$0xff]
        %v602 = vld [vmem:[#allocation9 + $0x100] sm:$0xff]
        %v603 = vld [vmem:[#allocation9 + $0x108] sm:$0xff]
        %v604 = vld [vmem:[#allocation9 + $0x110] sm:$0xff]
        %v605 = vld [vmem:[#allocation9 + $0x118] sm:$0xff]
        %v606 = vld [vmem:[#allocation9 + $0x120] sm:$0xff]
        %v607 = vld [vmem:[#allocation9 + $0x128] sm:$0xff]
        %v608 = vld [vmem:[#allocation9 + $0x130] sm:$0xff]
        %v609 = vld [vmem:[#allocation9 + $0x138] sm:$0xff]
        %v610 = vld [vmem:[#allocation9 + $0x140] sm:$0xff]
        %v611 = vld [vmem:[#allocation9 + $0x148] sm:$0xff]
        %v612 = vld [vmem:[#allocation9 + $0x150] sm:$0xff]
        %v613 = vld [vmem:[#allocation9 + $0x158] sm:$0xff]
        %v614 = vld [vmem:[#allocation9 + $0x160] sm:$0xff]
        %v615 = vld [vmem:[#allocation9 + $0x168] sm:$0xff]
        %v616 = vld [vmem:[#allocation9 + $0x170] sm:$0xff]
        %v617 = vld [vmem:[#allocation9 + $0x178] sm:$0xff]
        %v618 = vld [vmem:[#allocation9 + $0x180] sm:$0xff]
        %v619 = vld [vmem:[#allocation9 + $0x188] sm:$0xff]
        %v620 = vld [vmem:[#allocation9 + $0x190] sm:$0xff]
        %v621 = vld [vmem:[#allocation9 + $0x198] sm:$0xff]
        %v622 = vld [vmem:[#allocation9 + $0x1a0] sm:$0xff]
        %v623 = vld [vmem:[#allocation9 + $0x1a8] sm:$0xff]
        %v624 = vld [vmem:[#allocation9 + $0x1b0] sm:$0xff]
        %v625 = vld [vmem:[#allocation9 + $0x1b8] sm:$0xff]
        %v626 = vld [vmem:[#allocation9 + $0x1c0] sm:$0xff]
        %v627 = vld [vmem:[#allocation9 + $0x1c8] sm:$0xff]
        %v628 = vld [vmem:[#allocation9 + $0x1d0] sm:$0xff]
        %v629 = vld [vmem:[#allocation9 + $0x1d8] sm:$0xff]
        %v630 = vld [vmem:[#allocation9 + $0x1e0] sm:$0xff]
        %v631 = vld [vmem:[#allocation9 + $0x1e8] sm:$0xff]
        %v632 = vld [vmem:[#allocation9 + $0x1f0] sm:$0xff]
        %v633 = vld [vmem:[#allocation9 + $0x1f8] sm:$0xff]
        %v634 = vld [vmem:[#allocation9 + $0x200] sm:$0xff]
        %v635 = vld [vmem:[#allocation9 + $0x208] sm:$0xff]
        %v636 = vld [vmem:[#allocation9 + $0x210] sm:$0xff]
        %v637 = vld [vmem:[#allocation9 + $0x218] sm:$0xff]
        %v638 = vld [vmem:[#allocation9 + $0x220] sm:$0xff]
        %v639 = vld [vmem:[#allocation9 + $0x228] sm:$0xff]
        %v640 = vld [vmem:[#allocation9 + $0x230] sm:$0xff]
        %v641 = vld [vmem:[#allocation9 + $0x238] sm:$0xff]
        %v642 = vld [vmem:[#allocation9 + $0x240] sm:$0xff]
        %v643 = vld [vmem:[#allocation9 + $0x248] sm:$0xff]
        %v644 = vld [vmem:[#allocation9 + $0x250] sm:$0xff]
        %v645 = vld [vmem:[#allocation9 + $0x258] sm:$0xff]
        %v646 = vld [vmem:[#allocation9 + $0x260] sm:$0xff]
        %v647 = vld [vmem:[#allocation9 + $0x268] sm:$0xff]
        %v648 = vld [vmem:[#allocation9 + $0x270] sm:$0xff]
        %v649 = vld [vmem:[#allocation9 + $0x278] sm:$0xff]
        %v650 = vld [vmem:[#allocation9 + $0x280] sm:$0xff]
        %v651 = vld [vmem:[#allocation9 + $0x288] sm:$0xff]
        %v652 = vld [vmem:[#allocation9 + $0x290] sm:$0xff]
        %v653 = vld [vmem:[#allocation9 + $0x298] sm:$0xff]
        %v654 = vld [vmem:[#allocation9 + $0x2a0] sm:$0xff]
        %v655 = vld [vmem:[#allocation9 + $0x2a8] sm:$0xff]
        %v656 = vld [vmem:[#allocation9 + $0x2b0] sm:$0xff]
        %v657 = vld [vmem:[#allocation9 + $0x2b8] sm:$0xff]
        %v658 = vld [vmem:[#allocation9 + $0x2c0] sm:$0xff]
        %v659 = vld [vmem:[#allocation9 + $0x2c8] sm:$0xff]
        %v660 = vld [vmem:[#allocation9 + $0x2d0] sm:$0xff]
        %v661 = vld [vmem:[#allocation9 + $0x2d8] sm:$0xff]
        %v662 = vld [vmem:[#allocation9 + $0x2e0] sm:$0xff]
        %v663 = vld [vmem:[#allocation9 + $0x2e8] sm:$0xff]
        %v664 = vld [vmem:[#allocation9 + $0x2f0] sm:$0xff]
        %v665 = vld [vmem:[#allocation9 + $0x2f8] sm:$0xff]
        %v666 = vld [vmem:[#allocation9 + $0x300] sm:$0xff]
        %v667 = vld [vmem:[#allocation9 + $0x308] sm:$0xff]
        %v668 = vld [vmem:[#allocation9 + $0x310] sm:$0xff]
        %v669 = vld [vmem:[#allocation9 + $0x318] sm:$0xff]
        %v670 = vld [vmem:[#allocation9 + $0x320] sm:$0xff]
        %v671 = vld [vmem:[#allocation9 + $0x328] sm:$0xff]
        %v672 = vld [vmem:[#allocation9 + $0x330] sm:$0xff]
        %v673 = vld [vmem:[#allocation9 + $0x338] sm:$0xff]
        %v674 = vld [vmem:[#allocation9 + $0x340] sm:$0xff]
        %v675 = vld [vmem:[#allocation9 + $0x348] sm:$0xff]
        %v676 = vld [vmem:[#allocation9 + $0x350] sm:$0xff]
        %v677 = vld [vmem:[#allocation9 + $0x358] sm:$0xff]
        %v678 = vld [vmem:[#allocation9 + $0x360] sm:$0xff]
        %v679 = vld [vmem:[#allocation9 + $0x368] sm:$0xff]
        %v680 = vld [vmem:[#allocation9 + $0x370] sm:$0xff]
        %v681 = vld [vmem:[#allocation9 + $0x378] sm:$0xff]
        %v682 = vld [vmem:[#allocation9 + $0x380] sm:$0xff]
        %v683 = vld [vmem:[#allocation9 + $0x388] sm:$0xff]
        %v684 = vld [vmem:[#allocation9 + $0x390] sm:$0xff]
        %v685 = vld [vmem:[#allocation9 + $0x398] sm:$0xff]
        %v686 = vld [vmem:[#allocation9 + $0x3a0] sm:$0xff]
        %v687 = vld [vmem:[#allocation9 + $0x3a8] sm:$0xff]
        %v688 = vld [vmem:[#allocation9 + $0x3b0] sm:$0xff]
        %v689 = vld [vmem:[#allocation9 + $0x3b8] sm:$0xff]
        %v690 = vld [vmem:[#allocation9 + $0x3c0] sm:$0xff]
        %v691 = vld [vmem:[#allocation9 + $0x3c8] sm:$0xff]
        %v692 = vld [vmem:[#allocation9 + $0x3d0] sm:$0xff]
        %v693 = vld [vmem:[#allocation9 + $0x3d8] sm:$0xff]
        %v694 = vld [vmem:[#allocation9 + $0x3e0] sm:$0xff]
        %v695 = vld [vmem:[#allocation9 + $0x3e8] sm:$0xff]
        %v696 = vld [vmem:[#allocation9 + $0x3f0] sm:$0xff]
        %v697 = vld [vmem:[#allocation9 + $0x3f8] sm:$0xff]
        %v698 = vlaneseq
        %v699 = vand.u32 %v698, 127
        %vm700 = vcmp.lt.s32.totalorder %v699, 10
        %v701 = vld [vmem:[#allocation2] sm:$0xff]
        %v702 = vld [vmem:[#allocation2 + $0x8] sm:$0xff]
        %v703 = vld [vmem:[#allocation3] sm:$0xff]
        %v704 = vld [vmem:[%s370] sm:$0xff]
        %v705 = vld [vmem:[%s370 + $0x8] sm:$0xff]
        %v706 = vld [vmem:[%s370 + $0x10] sm:$0xff]
        %v707 = vld [vmem:[%s370 + $0x18] sm:$0xff]
        %v708 = vld [vmem:[#allocation10] sm:$0xff]
        %v709 = vld [vmem:[#allocation10 + $0x8] sm:$0xff]
        %v710 = vld [vmem:[#allocation10 + $0x10] sm:$0xff]
        %v711 = vld [vmem:[#allocation10 + $0x18] sm:$0xff]
        %v712 = vld [vmem:[#allocation10 + $0x20] sm:$0xff]
        %v713 = vld [vmem:[#allocation10 + $0x28] sm:$0xff]
        %v714 = vld [vmem:[#allocation10 + $0x30] sm:$0xff]
        %v715 = vld [vmem:[#allocation10 + $0x38] sm:$0xff]
        %v716 = vld [vmem:[#allocation10 + $0x40] sm:$0xff]
        %v717 = vld [vmem:[#allocation10 + $0x48] sm:$0xff]
        %v718 = vld [vmem:[#allocation10 + $0x50] sm:$0xff]
        %v719 = vld [vmem:[#allocation10 + $0x58] sm:$0xff]
        %v720 = vld [vmem:[#allocation10 + $0x60] sm:$0xff]
        %v721 = vld [vmem:[#allocation10 + $0x68] sm:$0xff]
        %v722 = vld [vmem:[#allocation10 + $0x70] sm:$0xff]
        %v723 = vld [vmem:[#allocation10 + $0x78] sm:$0xff]
        %v724 = vld [vmem:[#allocation10 + $0x80] sm:$0xff]
        %v725 = vld [vmem:[#allocation10 + $0x88] sm:$0xff]
        %v726 = vld [vmem:[#allocation10 + $0x90] sm:$0xff]
        %v727 = vld [vmem:[#allocation10 + $0x98] sm:$0xff]
        %v728 = vld [vmem:[#allocation10 + $0xa0] sm:$0xff]
        %v729 = vld [vmem:[#allocation10 + $0xa8] sm:$0xff]
        %v730 = vld [vmem:[#allocation10 + $0xb0] sm:$0xff]
        %v731 = vld [vmem:[#allocation10 + $0xb8] sm:$0xff]
        %v732 = vld [vmem:[#allocation10 + $0xc0] sm:$0xff]
        %v733 = vld [vmem:[#allocation10 + $0xc8] sm:$0xff]
        %v734 = vld [vmem:[#allocation10 + $0xd0] sm:$0xff]
        %v735 = vld [vmem:[#allocation10 + $0xd8] sm:$0xff]
        %v736 = vld [vmem:[#allocation10 + $0xe0] sm:$0xff]
        %v737 = vld [vmem:[#allocation10 + $0xe8] sm:$0xff]
        %v738 = vld [vmem:[#allocation10 + $0xf0] sm:$0xff]
        %v739 = vld [vmem:[#allocation10 + $0xf8] sm:$0xff]
        %v740 = vld [vmem:[#allocation10 + $0x100] sm:$0xff]
        %v741 = vld [vmem:[#allocation10 + $0x108] sm:$0xff]
        %v742 = vld [vmem:[#allocation10 + $0x110] sm:$0xff]
        %v743 = vld [vmem:[#allocation10 + $0x118] sm:$0xff]
        %v744 = vld [vmem:[#allocation10 + $0x120] sm:$0xff]
        %v745 = vld [vmem:[#allocation10 + $0x128] sm:$0xff]
        %v746 = vld [vmem:[#allocation10 + $0x130] sm:$0xff]
        %v747 = vld [vmem:[#allocation10 + $0x138] sm:$0xff]
        %v748 = vld [vmem:[#allocation10 + $0x140] sm:$0xff]
        %v749 = vld [vmem:[#allocation10 + $0x148] sm:$0xff]
        %v750 = vld [vmem:[#allocation10 + $0x150] sm:$0xff]
        %v751 = vld [vmem:[#allocation10 + $0x158] sm:$0xff]
        %v752 = vld [vmem:[#allocation10 + $0x160] sm:$0xff]
        %v753 = vld [vmem:[#allocation10 + $0x168] sm:$0xff]
        %v754 = vld [vmem:[#allocation10 + $0x170] sm:$0xff]
        %v755 = vld [vmem:[#allocation10 + $0x178] sm:$0xff]
        %v756 = vld [vmem:[#allocation10 + $0x180] sm:$0xff]
        %v757 = vld [vmem:[#allocation10 + $0x188] sm:$0xff]
        %v758 = vld [vmem:[#allocation10 + $0x190] sm:$0xff]
        %v759 = vld [vmem:[#allocation10 + $0x198] sm:$0xff]
        %v760 = vld [vmem:[#allocation10 + $0x1a0] sm:$0xff]
        %v761 = vld [vmem:[#allocation10 + $0x1a8] sm:$0xff]
        %v762 = vld [vmem:[#allocation10 + $0x1b0] sm:$0xff]
        %v763 = vld [vmem:[#allocation10 + $0x1b8] sm:$0xff]
        %v764 = vld [vmem:[#allocation10 + $0x1c0] sm:$0xff]
        %v765 = vld [vmem:[#allocation10 + $0x1c8] sm:$0xff]
        %v766 = vld [vmem:[#allocation10 + $0x1d0] sm:$0xff]
        %v767 = vld [vmem:[#allocation10 + $0x1d8] sm:$0xff]
        %v768 = vld [vmem:[#allocation10 + $0x1e0] sm:$0xff]
        %v769 = vld [vmem:[#allocation10 + $0x1e8] sm:$0xff]
        %v770 = vld [vmem:[#allocation10 + $0x1f0] sm:$0xff]
        %v771 = vld [vmem:[#allocation10 + $0x1f8] sm:$0xff]
        %v772 = vld [vmem:[#allocation10 + $0x200] sm:$0xff]
        %v773 = vld [vmem:[#allocation10 + $0x208] sm:$0xff]
        %v774 = vld [vmem:[#allocation10 + $0x210] sm:$0xff]
        %v775 = vld [vmem:[#allocation10 + $0x218] sm:$0xff]
        %v776 = vld [vmem:[#allocation10 + $0x220] sm:$0xff]
        %v777 = vld [vmem:[#allocation10 + $0x228] sm:$0xff]
        %v778 = vld [vmem:[#allocation10 + $0x230] sm:$0xff]
        %v779 = vld [vmem:[#allocation10 + $0x238] sm:$0xff]
        %v780 = vld [vmem:[#allocation10 + $0x240] sm:$0xff]
        %v781 = vld [vmem:[#allocation10 + $0x248] sm:$0xff]
        %v782 = vld [vmem:[#allocation10 + $0x250] sm:$0xff]
        %v783 = vld [vmem:[#allocation10 + $0x258] sm:$0xff]
        %v784 = vld [vmem:[#allocation10 + $0x260] sm:$0xff]
        %v785 = vld [vmem:[#allocation10 + $0x268] sm:$0xff]
        %v786 = vld [vmem:[#allocation10 + $0x270] sm:$0xff]
        %v787 = vld [vmem:[#allocation10 + $0x278] sm:$0xff]
        %v788 = vld [vmem:[#allocation10 + $0x280] sm:$0xff]
        %v789 = vld [vmem:[#allocation10 + $0x288] sm:$0xff]
        %v790 = vld [vmem:[#allocation10 + $0x290] sm:$0xff]
        %v791 = vld [vmem:[#allocation10 + $0x298] sm:$0xff]
        %v792 = vld [vmem:[#allocation10 + $0x2a0] sm:$0xff]
        %v793 = vld [vmem:[#allocation10 + $0x2a8] sm:$0xff]
        %v794 = vld [vmem:[#allocation10 + $0x2b0] sm:$0xff]
        %v795 = vld [vmem:[#allocation10 + $0x2b8] sm:$0xff]
        %v796 = vld [vmem:[#allocation10 + $0x2c0] sm:$0xff]
        %v797 = vld [vmem:[#allocation10 + $0x2c8] sm:$0xff]
        %v798 = vld [vmem:[#allocation10 + $0x2d0] sm:$0xff]
        %v799 = vld [vmem:[#allocation10 + $0x2d8] sm:$0xff]
        %v800 = vld [vmem:[#allocation10 + $0x2e0] sm:$0xff]
        %v801 = vld [vmem:[#allocation10 + $0x2e8] sm:$0xff]
        %v802 = vld [vmem:[#allocation10 + $0x2f0] sm:$0xff]
        %v803 = vld [vmem:[#allocation10 + $0x2f8] sm:$0xff]
        %v804 = vld [vmem:[#allocation10 + $0x300] sm:$0xff]
        %v805 = vld [vmem:[#allocation10 + $0x308] sm:$0xff]
        %v806 = vld [vmem:[#allocation10 + $0x310] sm:$0xff]
        %v807 = vld [vmem:[#allocation10 + $0x318] sm:$0xff]
        %v808 = vld [vmem:[#allocation10 + $0x320] sm:$0xff]
        %v809 = vld [vmem:[#allocation10 + $0x328] sm:$0xff]
        %v810 = vld [vmem:[#allocation10 + $0x330] sm:$0xff]
        %v811 = vld [vmem:[#allocation10 + $0x338] sm:$0xff]
        %v812 = vld [vmem:[#allocation10 + $0x340] sm:$0xff]
        %v813 = vld [vmem:[#allocation10 + $0x348] sm:$0xff]
        %v814 = vld [vmem:[#allocation10 + $0x350] sm:$0xff]
        %v815 = vld [vmem:[#allocation10 + $0x358] sm:$0xff]
        %v816 = vld [vmem:[#allocation10 + $0x360] sm:$0xff]
        %v817 = vld [vmem:[#allocation10 + $0x368] sm:$0xff]
        %v818 = vld [vmem:[#allocation10 + $0x370] sm:$0xff]
        %v819 = vld [vmem:[#allocation10 + $0x378] sm:$0xff]
        %v820 = vld [vmem:[#allocation10 + $0x380] sm:$0xff]
        %v821 = vld [vmem:[#allocation10 + $0x388] sm:$0xff]
        %v822 = vld [vmem:[#allocation10 + $0x390] sm:$0xff]
        %v823 = vld [vmem:[#allocation10 + $0x398] sm:$0xff]
        %v824 = vld [vmem:[#allocation10 + $0x3a0] sm:$0xff]
        %v825 = vld [vmem:[#allocation10 + $0x3a8] sm:$0xff]
        %v826 = vld [vmem:[#allocation10 + $0x3b0] sm:$0xff]
        %v827 = vld [vmem:[#allocation10 + $0x3b8] sm:$0xff]
        %v828 = vld [vmem:[#allocation10 + $0x3c0] sm:$0xff]
        %v829 = vld [vmem:[#allocation10 + $0x3c8] sm:$0xff]
        %v830 = vld [vmem:[#allocation10 + $0x3d0] sm:$0xff]
        %v831 = vld [vmem:[#allocation10 + $0x3d8] sm:$0xff]
        %v832 = vld [vmem:[#allocation10 + $0x3e0] sm:$0xff]
        %v833 = vld [vmem:[#allocation10 + $0x3e8] sm:$0xff]
        %v834 = vld [vmem:[#allocation10 + $0x3f0] sm:$0xff]
        %v835 = vld [vmem:[#allocation10 + $0x3f8] sm:$0xff]
        %836 = vmatprep.subr.mxu0 %v769
        %837 = vmatpush1.msra.mxu0 %v768
        %838 = vmatprep.subr.mxu0 %v765
        %839 = vmatpush1.msra.mxu0 %v764
        %840 = vmatprep.subr.mxu0 %v761
        %841 = vmatpush1.msra.mxu0 %v760
        %842 = vmatprep.subr.mxu0 %v757
        %843 = vmatpush1.msra.mxu0 %v756
        %844 = vmatprep.subr.mxu0 %v753
        %845 = vmatpush1.msra.mxu0 %v752
        %846 = vmatprep.subr.mxu0 %v749
        %847 = vmatpush1.msra.mxu0 %v748
        %848 = vmatprep.subr.mxu0 %v745
        %849 = vmatpush1.msra.mxu0 %v744
        %850 = vmatprep.subr.mxu0 %v741
        %851 = vmatpush1.msra.mxu0 %v740
        %852 = vmatprep.subr.mxu0 %v737
        %853 = vmatpush1.msra.mxu0 %v736
        %854 = vmatprep.subr.mxu0 %v733
        %855 = vmatpush1.msra.mxu0 %v732
        %856 = vmatprep.subr.mxu0 %v729
        %857 = vmatpush1.msra.mxu0 %v728
        %858 = vmatprep.subr.mxu0 %v725
        %859 = vmatpush1.msra.mxu0 %v724
        %860 = vmatprep.subr.mxu0 %v721
        %861 = vmatpush1.msra.mxu0 %v720
        %862 = vmatprep.subr.mxu0 %v717
        %863 = vmatpush1.msra.mxu0 %v716
        %864 = vmatprep.subr.mxu0 %v713
        %865 = vmatpush1.msra.mxu0 %v712
        %866 = vmatprep.subr.mxu0 %v709
        %867 = vmatpush1.msra.mxu0 %v708
        %868 = vmatprep.subr.mxu0 %v833
        %869 = vmatpush2.msra.mxu0 %v832
        %870 = vmatprep.subr.mxu0 %v829
        %871 = vmatpush2.msra.mxu0 %v828
        %872 = vmatprep.subr.mxu0 %v825
        %873 = vmatpush2.msra.mxu0 %v824
        %874 = vmatprep.subr.mxu0 %v821
        %875 = vmatpush2.msra.mxu0 %v820
        %876 = vmatprep.subr.mxu0 %v817
        %877 = vmatpush2.msra.mxu0 %v816
        %878 = vmatprep.subr.mxu0 %v813
        %879 = vmatpush2.msra.mxu0 %v812
        %880 = vmatprep.subr.mxu0 %v809
        %881 = vmatpush2.msra.mxu0 %v808
        %882 = vmatprep.subr.mxu0 %v805
        %883 = vmatpush2.msra.mxu0 %v804
        %884 = vmatprep.subr.mxu0 %v801
        %885 = vmatpush2.msra.mxu0 %v800
        %886 = vmatprep.subr.mxu0 %v797
        %887 = vmatpush2.msra.mxu0 %v796
        %888 = vmatprep.subr.mxu0 %v793
        %889 = vmatpush2.msra.mxu0 %v792
        %890 = vmatprep.subr.mxu0 %v789
        %891 = vmatpush2.msra.mxu0 %v788
        %892 = vmatprep.subr.mxu0 %v785
        %893 = vmatpush2.msra.mxu0 %v784
        %894 = vmatprep.subr.mxu0 %v781
        %895 = vmatpush2.msra.mxu0 %v780
        %896 = vmatprep.subr.mxu0 %v777
        %897 = vmatpush2.msra.mxu0 %v776
        %898 = vmatprep.subr.mxu0 %v773
        %899 = vmatpush2.msra.mxu0 %v772
        %900 = vmatprep.mubr.f32.mxu0 %v702
        %901 = vmatmul.mubr.f32.gmra.mxu0 %v701
        %v902 = vpop.f32.mrf.mxu0
        %v903 = vadd.f32 0.0, %v902
        %v904 = vpop.f32.mrf.mxu0
        %v905 = vadd.f32 0.0, %v904
        %906 = vdwg.mxu0
        %907 = vmatprep.subr.mxu0 %v771
        %908 = vmatpush1.msra.mxu0 %v770
        %909 = vmatprep.subr.mxu0 %v767
        %910 = vmatpush1.msra.mxu0 %v766
        %911 = vmatprep.subr.mxu0 %v763
        %912 = vmatpush1.msra.mxu0 %v762
        %913 = vmatprep.subr.mxu0 %v759
        %914 = vmatpush1.msra.mxu0 %v758
        %915 = vmatprep.subr.mxu0 %v755
        %916 = vmatpush1.msra.mxu0 %v754
        %917 = vmatprep.subr.mxu0 %v751
        %918 = vmatpush1.msra.mxu0 %v750
        %919 = vmatprep.subr.mxu0 %v747
        %920 = vmatpush1.msra.mxu0 %v746
        %921 = vmatprep.subr.mxu0 %v743
        %922 = vmatpush1.msra.mxu0 %v742
        %923 = vmatprep.subr.mxu0 %v739
        %924 = vmatpush1.msra.mxu0 %v738
        %925 = vmatprep.subr.mxu0 %v735
        %926 = vmatpush1.msra.mxu0 %v734
        %927 = vmatprep.subr.mxu0 %v731
        %928 = vmatpush1.msra.mxu0 %v730
        %929 = vmatprep.subr.mxu0 %v727
        %930 = vmatpush1.msra.mxu0 %v726
        %931 = vmatprep.subr.mxu0 %v723
        %932 = vmatpush1.msra.mxu0 %v722
        %933 = vmatprep.subr.mxu0 %v719
        %934 = vmatpush1.msra.mxu0 %v718
        %935 = vmatprep.subr.mxu0 %v715
        %936 = vmatpush1.msra.mxu0 %v714
        %937 = vmatprep.subr.mxu0 %v711
        %938 = vmatpush1.msra.mxu0 %v710
        %939 = vmatprep.subr.mxu0 %v835
        %940 = vmatpush2.msra.mxu0 %v834
        %941 = vmatprep.subr.mxu0 %v831
        %942 = vmatpush2.msra.mxu0 %v830
        %943 = vmatprep.subr.mxu0 %v827
        %944 = vmatpush2.msra.mxu0 %v826
        %945 = vmatprep.subr.mxu0 %v823
        %946 = vmatpush2.msra.mxu0 %v822
        %947 = vmatprep.subr.mxu0 %v819
        %948 = vmatpush2.msra.mxu0 %v818
        %949 = vmatprep.subr.mxu0 %v815
        %950 = vmatpush2.msra.mxu0 %v814
        %951 = vmatprep.subr.mxu0 %v811
        %952 = vmatpush2.msra.mxu0 %v810
        %953 = vmatprep.subr.mxu0 %v807
        %954 = vmatpush2.msra.mxu0 %v806
        %955 = vmatprep.subr.mxu0 %v803
        %956 = vmatpush2.msra.mxu0 %v802
        %957 = vmatprep.subr.mxu0 %v799
        %958 = vmatpush2.msra.mxu0 %v798
        %959 = vmatprep.subr.mxu0 %v795
        %960 = vmatpush2.msra.mxu0 %v794
        %961 = vmatprep.subr.mxu0 %v791
        %962 = vmatpush2.msra.mxu0 %v790
        %963 = vmatprep.subr.mxu0 %v787
        %964 = vmatpush2.msra.mxu0 %v786
        %965 = vmatprep.subr.mxu0 %v783
        %966 = vmatpush2.msra.mxu0 %v782
        %967 = vmatprep.subr.mxu0 %v779
        %968 = vmatpush2.msra.mxu0 %v778
        %969 = vmatprep.subr.mxu0 %v775
        %970 = vmatpush2.msra.mxu0 %v774
        %971 = vmatprep.mubr.f32.mxu0 %v702
        %972 = vmatmul.mubr.f32.gmra.mxu0 %v701
        %v973 = vpop.f32.mrf.mxu0
        %v974 = vadd.f32 0.0, %v973
        %v975 = vpop.f32.mrf.mxu0
        %v976 = vadd.f32 0.0, %v975
        %977 = vdwg.mxu0
        %v978 = vadd.f32 %v704, %v903
        %v979 = vadd.f32 %v705, %v905
        %v980 = vadd.f32 %v706, %v974
        %v981 = vadd.f32 %v707, %v976
        %v982 = vxor.u32 %v978, 2147483648
        %v983 = vmul.f32 %v982, 1.442695
        %v984 = vpow.pop %v983
        %v985 = vadd.f32 %v984, 1.0
        %v986 = vrcp.pop %v985
        %v987 = vmul.f32 1.0, %v986
        %v988 = vxor.u32 %v979, 2147483648
        %v989 = vmul.f32 %v988, 1.442695
        %v990 = vpow.pop %v989
        %v991 = vadd.f32 %v990, 1.0
        %v992 = vrcp.pop %v991
        %v993 = vmul.f32 1.0, %v992
        %v994 = vtanh.pop %v980
        %v995 = vxor.u32 %v981, 2147483648
        %v996 = vmul.f32 %v995, 1.442695
        %v997 = vpow.pop %v996
        %v998 = vadd.f32 %v997, 1.0
        %v999 = vrcp.pop %v998
        %v1000 = vmul.f32 1.0, %v999
        %v1001 = vmul.f32 %v993, %v703
        %v1002 = vmul.f32 %v987, %v994
        %v1003 = vadd.f32 %v1001, %v1002
        %v1004 = vtanh.pop %v1003
        %v1005 = vmul.f32 %v1000, %v1004
        %v1006 = vlaneseq
        %v1007 = vshrl.u32 %v1006, 7
        %v1008 = vsub.s32 0, %v1007
        %v1009 = vrot.slane %v1005, %v1008
        %1011 = vbcast.lane.b32.xlu0 %v1009, 256
        %v1012 = vpop.permute.xlu0 %1011
        %s1014 = sor.u32 256, 8
        %1015 = vbcast.lane.b32.xlu0 %v1009, %s1014
        %v1016 = vpop.permute.xlu0 %1015
        %s1018 = sor.u32 256, 16
        %1019 = vbcast.lane.b32.xlu0 %v1009, %s1018
        %v1020 = vpop.permute.xlu0 %1019
        %s1022 = sor.u32 256, 24
        %1023 = vbcast.lane.b32.xlu0 %v1009, %s1022
        %v1024 = vpop.permute.xlu0 %1023
        %s1026 = sor.u32 256, 32
        %1027 = vbcast.lane.b32.xlu0 %v1009, %s1026
        %v1028 = vpop.permute.xlu0 %1027
        %s1030 = sor.u32 256, 40
        %1031 = vbcast.lane.b32.xlu0 %v1009, %s1030
        %v1032 = vpop.permute.xlu0 %1031
        %s1034 = sor.u32 256, 48
        %1035 = vbcast.lane.b32.xlu0 %v1009, %s1034
        %v1036 = vpop.permute.xlu0 %1035
        %s1038 = sor.u32 256, 56
        %1039 = vbcast.lane.b32.xlu0 %v1009, %s1038
        %v1040 = vpop.permute.xlu0 %1039
        %s1042 = sor.u32 256, 64
        %1043 = vbcast.lane.b32.xlu0 %v1009, %s1042
        %v1044 = vpop.permute.xlu0 %1043
        %s1046 = sor.u32 256, 72
        %1047 = vbcast.lane.b32.xlu0 %v1009, %s1046
        %v1048 = vpop.permute.xlu0 %1047
        %s1050 = sor.u32 256, 80
        %1051 = vbcast.lane.b32.xlu0 %v1009, %s1050
        %v1052 = vpop.permute.xlu0 %1051
        %s1054 = sor.u32 256, 88
        %1055 = vbcast.lane.b32.xlu0 %v1009, %s1054
        %v1056 = vpop.permute.xlu0 %1055
        %s1058 = sor.u32 256, 96
        %1059 = vbcast.lane.b32.xlu0 %v1009, %s1058
        %v1060 = vpop.permute.xlu0 %1059
        %s1062 = sor.u32 256, 104
        %1063 = vbcast.lane.b32.xlu0 %v1009, %s1062
        %v1064 = vpop.permute.xlu0 %1063
        %s1066 = sor.u32 256, 112
        %1067 = vbcast.lane.b32.xlu0 %v1009, %s1066
        %v1068 = vpop.permute.xlu0 %1067
        %s1070 = sor.u32 256, 120
        %1071 = vbcast.lane.b32.xlu0 %v1009, %s1070
        %v1072 = vpop.permute.xlu0 %1071
        %v1073 = vlaneseq
        %v1074 = vshrl.u32 %v1073, 7
        %v1075 = vsub.s32 1, %v1074
        %v1076 = vrot.slane %v1005, %v1075
        %1078 = vbcast.lane.b32.xlu0 %v1076, 256
        %v1079 = vpop.permute.xlu0 %1078
        %s1081 = sor.u32 256, 8
        %1082 = vbcast.lane.b32.xlu0 %v1076, %s1081
        %v1083 = vpop.permute.xlu0 %1082
        %s1085 = sor.u32 256, 16
        %1086 = vbcast.lane.b32.xlu0 %v1076, %s1085
        %v1087 = vpop.permute.xlu0 %1086
        %s1089 = sor.u32 256, 24
        %1090 = vbcast.lane.b32.xlu0 %v1076, %s1089
        %v1091 = vpop.permute.xlu0 %1090
        %s1093 = sor.u32 256, 32
        %1094 = vbcast.lane.b32.xlu0 %v1076, %s1093
        %v1095 = vpop.permute.xlu0 %1094
        %s1097 = sor.u32 256, 40
        %1098 = vbcast.lane.b32.xlu0 %v1076, %s1097
        %v1099 = vpop.permute.xlu0 %1098
        %s1101 = sor.u32 256, 48
        %1102 = vbcast.lane.b32.xlu0 %v1076, %s1101
        %v1103 = vpop.permute.xlu0 %1102
        %s1105 = sor.u32 256, 56
        %1106 = vbcast.lane.b32.xlu0 %v1076, %s1105
        %v1107 = vpop.permute.xlu0 %1106
        %s1109 = sor.u32 256, 64
        %1110 = vbcast.lane.b32.xlu0 %v1076, %s1109
        %v1111 = vpop.permute.xlu0 %1110
        %s1113 = sor.u32 256, 72
        %1114 = vbcast.lane.b32.xlu0 %v1076, %s1113
        %v1115 = vpop.permute.xlu0 %1114
        %s1117 = sor.u32 256, 80
        %1118 = vbcast.lane.b32.xlu0 %v1076, %s1117
        %v1119 = vpop.permute.xlu0 %1118
        %s1121 = sor.u32 256, 88
        %1122 = vbcast.lane.b32.xlu0 %v1076, %s1121
        %v1123 = vpop.permute.xlu0 %1122
        %s1125 = sor.u32 256, 96
        %1126 = vbcast.lane.b32.xlu0 %v1076, %s1125
        %v1127 = vpop.permute.xlu0 %1126
        %s1129 = sor.u32 256, 104
        %1130 = vbcast.lane.b32.xlu0 %v1076, %s1129
        %v1131 = vpop.permute.xlu0 %1130
        %s1133 = sor.u32 256, 112
        %1134 = vbcast.lane.b32.xlu0 %v1076, %s1133
        %v1135 = vpop.permute.xlu0 %1134
        %s1137 = sor.u32 256, 120
        %1138 = vbcast.lane.b32.xlu0 %v1076, %s1137
        %v1139 = vpop.permute.xlu0 %1138
        %v1140 = vlaneseq
        %v1141 = vshrl.u32 %v1140, 7
        %v1142 = vsub.s32 2, %v1141
        %v1143 = vrot.slane %v1005, %v1142
        %1145 = vbcast.lane.b32.xlu0 %v1143, 256
        %v1146 = vpop.permute.xlu0 %1145
        %s1148 = sor.u32 256, 8
        %1149 = vbcast.lane.b32.xlu0 %v1143, %s1148
        %v1150 = vpop.permute.xlu0 %1149
        %s1152 = sor.u32 256, 16
        %1153 = vbcast.lane.b32.xlu0 %v1143, %s1152
        %v1154 = vpop.permute.xlu0 %1153
        %s1156 = sor.u32 256, 24
        %1157 = vbcast.lane.b32.xlu0 %v1143, %s1156
        %v1158 = vpop.permute.xlu0 %1157
        %s1160 = sor.u32 256, 32
        %1161 = vbcast.lane.b32.xlu0 %v1143, %s1160
        %v1162 = vpop.permute.xlu0 %1161
        %s1164 = sor.u32 256, 40
        %1165 = vbcast.lane.b32.xlu0 %v1143, %s1164
        %v1166 = vpop.permute.xlu0 %1165
        %s1168 = sor.u32 256, 48
        %1169 = vbcast.lane.b32.xlu0 %v1143, %s1168
        %v1170 = vpop.permute.xlu0 %1169
        %s1172 = sor.u32 256, 56
        %1173 = vbcast.lane.b32.xlu0 %v1143, %s1172
        %v1174 = vpop.permute.xlu0 %1173
        %s1176 = sor.u32 256, 64
        %1177 = vbcast.lane.b32.xlu0 %v1143, %s1176
        %v1178 = vpop.permute.xlu0 %1177
        %s1180 = sor.u32 256, 72
        %1181 = vbcast.lane.b32.xlu0 %v1143, %s1180
        %v1182 = vpop.permute.xlu0 %1181
        %s1184 = sor.u32 256, 80
        %1185 = vbcast.lane.b32.xlu0 %v1143, %s1184
        %v1186 = vpop.permute.xlu0 %1185
        %s1188 = sor.u32 256, 88
        %1189 = vbcast.lane.b32.xlu0 %v1143, %s1188
        %v1190 = vpop.permute.xlu0 %1189
        %s1192 = sor.u32 256, 96
        %1193 = vbcast.lane.b32.xlu0 %v1143, %s1192
        %v1194 = vpop.permute.xlu0 %1193
        %s1196 = sor.u32 256, 104
        %1197 = vbcast.lane.b32.xlu0 %v1143, %s1196
        %v1198 = vpop.permute.xlu0 %1197
        %s1200 = sor.u32 256, 112
        %1201 = vbcast.lane.b32.xlu0 %v1143, %s1200
        %v1202 = vpop.permute.xlu0 %1201
        %s1204 = sor.u32 256, 120
        %1205 = vbcast.lane.b32.xlu0 %v1143, %s1204
        %v1206 = vpop.permute.xlu0 %1205
        %v1207 = vlaneseq
        %v1208 = vshrl.u32 %v1207, 7
        %v1209 = vsub.s32 3, %v1208
        %v1210 = vrot.slane %v1005, %v1209
        %1212 = vbcast.lane.b32.xlu0 %v1210, 256
        %v1213 = vpop.permute.xlu0 %1212
        %s1215 = sor.u32 256, 8
        %1216 = vbcast.lane.b32.xlu0 %v1210, %s1215
        %v1217 = vpop.permute.xlu0 %1216
        %s1219 = sor.u32 256, 16
        %1220 = vbcast.lane.b32.xlu0 %v1210, %s1219
        %v1221 = vpop.permute.xlu0 %1220
        %s1223 = sor.u32 256, 24
        %1224 = vbcast.lane.b32.xlu0 %v1210, %s1223
        %v1225 = vpop.permute.xlu0 %1224
        %s1227 = sor.u32 256, 32
        %1228 = vbcast.lane.b32.xlu0 %v1210, %s1227
        %v1229 = vpop.permute.xlu0 %1228
        %s1231 = sor.u32 256, 40
        %1232 = vbcast.lane.b32.xlu0 %v1210, %s1231
        %v1233 = vpop.permute.xlu0 %1232
        %s1235 = sor.u32 256, 48
        %1236 = vbcast.lane.b32.xlu0 %v1210, %s1235
        %v1237 = vpop.permute.xlu0 %1236
        %s1239 = sor.u32 256, 56
        %1240 = vbcast.lane.b32.xlu0 %v1210, %s1239
        %v1241 = vpop.permute.xlu0 %1240
        %s1243 = sor.u32 256, 64
        %1244 = vbcast.lane.b32.xlu0 %v1210, %s1243
        %v1245 = vpop.permute.xlu0 %1244
        %s1247 = sor.u32 256, 72
        %1248 = vbcast.lane.b32.xlu0 %v1210, %s1247
        %v1249 = vpop.permute.xlu0 %1248
        %s1251 = sor.u32 256, 80
        %1252 = vbcast.lane.b32.xlu0 %v1210, %s1251
        %v1253 = vpop.permute.xlu0 %1252
        %s1255 = sor.u32 256, 88
        %1256 = vbcast.lane.b32.xlu0 %v1210, %s1255
        %v1257 = vpop.permute.xlu0 %1256
        %s1259 = sor.u32 256, 96
        %1260 = vbcast.lane.b32.xlu0 %v1210, %s1259
        %v1261 = vpop.permute.xlu0 %1260
        %s1263 = sor.u32 256, 104
        %1264 = vbcast.lane.b32.xlu0 %v1210, %s1263
        %v1265 = vpop.permute.xlu0 %1264
        %s1267 = sor.u32 256, 112
        %1268 = vbcast.lane.b32.xlu0 %v1210, %s1267
        %v1269 = vpop.permute.xlu0 %1268
        %s1271 = sor.u32 256, 120
        %1272 = vbcast.lane.b32.xlu0 %v1210, %s1271
        %v1273 = vpop.permute.xlu0 %1272
        %v1274 = vlaneseq
        %v1275 = vshrl.u32 %v1274, 7
        %v1276 = vsub.s32 4, %v1275
        %v1277 = vrot.slane %v1005, %v1276
        %1279 = vbcast.lane.b32.xlu0 %v1277, 256
        %v1280 = vpop.permute.xlu0 %1279
        %s1282 = sor.u32 256, 8
        %1283 = vbcast.lane.b32.xlu0 %v1277, %s1282
        %v1284 = vpop.permute.xlu0 %1283
        %s1286 = sor.u32 256, 16
        %1287 = vbcast.lane.b32.xlu0 %v1277, %s1286
        %v1288 = vpop.permute.xlu0 %1287
        %s1290 = sor.u32 256, 24
        %1291 = vbcast.lane.b32.xlu0 %v1277, %s1290
        %v1292 = vpop.permute.xlu0 %1291
        %s1294 = sor.u32 256, 32
        %1295 = vbcast.lane.b32.xlu0 %v1277, %s1294
        %v1296 = vpop.permute.xlu0 %1295
        %s1298 = sor.u32 256, 40
        %1299 = vbcast.lane.b32.xlu0 %v1277, %s1298
        %v1300 = vpop.permute.xlu0 %1299
        %s1302 = sor.u32 256, 48
        %1303 = vbcast.lane.b32.xlu0 %v1277, %s1302
        %v1304 = vpop.permute.xlu0 %1303
        %s1306 = sor.u32 256, 56
        %1307 = vbcast.lane.b32.xlu0 %v1277, %s1306
        %v1308 = vpop.permute.xlu0 %1307
        %s1310 = sor.u32 256, 64
        %1311 = vbcast.lane.b32.xlu0 %v1277, %s1310
        %v1312 = vpop.permute.xlu0 %1311
        %s1314 = sor.u32 256, 72
        %1315 = vbcast.lane.b32.xlu0 %v1277, %s1314
        %v1316 = vpop.permute.xlu0 %1315
        %s1318 = sor.u32 256, 80
        %1319 = vbcast.lane.b32.xlu0 %v1277, %s1318
        %v1320 = vpop.permute.xlu0 %1319
        %s1322 = sor.u32 256, 88
        %1323 = vbcast.lane.b32.xlu0 %v1277, %s1322
        %v1324 = vpop.permute.xlu0 %1323
        %s1326 = sor.u32 256, 96
        %1327 = vbcast.lane.b32.xlu0 %v1277, %s1326
        %v1328 = vpop.permute.xlu0 %1327
        %s1330 = sor.u32 256, 104
        %1331 = vbcast.lane.b32.xlu0 %v1277, %s1330
        %v1332 = vpop.permute.xlu0 %1331
        %s1334 = sor.u32 256, 112
        %1335 = vbcast.lane.b32.xlu0 %v1277, %s1334
        %v1336 = vpop.permute.xlu0 %1335
        %s1338 = sor.u32 256, 120
        %1339 = vbcast.lane.b32.xlu0 %v1277, %s1338
        %v1340 = vpop.permute.xlu0 %1339
        %v1341 = vlaneseq
        %v1342 = vshrl.u32 %v1341, 7
        %v1343 = vsub.s32 5, %v1342
        %v1344 = vrot.slane %v1005, %v1343
        %1346 = vbcast.lane.b32.xlu0 %v1344, 256
        %v1347 = vpop.permute.xlu0 %1346
        %s1349 = sor.u32 256, 8
        %1350 = vbcast.lane.b32.xlu0 %v1344, %s1349
        %v1351 = vpop.permute.xlu0 %1350
        %s1353 = sor.u32 256, 16
        %1354 = vbcast.lane.b32.xlu0 %v1344, %s1353
        %v1355 = vpop.permute.xlu0 %1354
        %s1357 = sor.u32 256, 24
        %1358 = vbcast.lane.b32.xlu0 %v1344, %s1357
        %v1359 = vpop.permute.xlu0 %1358
        %s1361 = sor.u32 256, 32
        %1362 = vbcast.lane.b32.xlu0 %v1344, %s1361
        %v1363 = vpop.permute.xlu0 %1362
        %s1365 = sor.u32 256, 40
        %1366 = vbcast.lane.b32.xlu0 %v1344, %s1365
        %v1367 = vpop.permute.xlu0 %1366
        %s1369 = sor.u32 256, 48
        %1370 = vbcast.lane.b32.xlu0 %v1344, %s1369
        %v1371 = vpop.permute.xlu0 %1370
        %s1373 = sor.u32 256, 56
        %1374 = vbcast.lane.b32.xlu0 %v1344, %s1373
        %v1375 = vpop.permute.xlu0 %1374
        %s1377 = sor.u32 256, 64
        %1378 = vbcast.lane.b32.xlu0 %v1344, %s1377
        %v1379 = vpop.permute.xlu0 %1378
        %s1381 = sor.u32 256, 72
        %1382 = vbcast.lane.b32.xlu0 %v1344, %s1381
        %v1383 = vpop.permute.xlu0 %1382
        %s1385 = sor.u32 256, 80
        %1386 = vbcast.lane.b32.xlu0 %v1344, %s1385
        %v1387 = vpop.permute.xlu0 %1386
        %s1389 = sor.u32 256, 88
        %1390 = vbcast.lane.b32.xlu0 %v1344, %s1389
        %v1391 = vpop.permute.xlu0 %1390
        %s1393 = sor.u32 256, 96
        %1394 = vbcast.lane.b32.xlu0 %v1344, %s1393
        %v1395 = vpop.permute.xlu0 %1394
        %s1397 = sor.u32 256, 104
        %1398 = vbcast.lane.b32.xlu0 %v1344, %s1397
        %v1399 = vpop.permute.xlu0 %1398
        %s1401 = sor.u32 256, 112
        %1402 = vbcast.lane.b32.xlu0 %v1344, %s1401
        %v1403 = vpop.permute.xlu0 %1402
        %s1405 = sor.u32 256, 120
        %1406 = vbcast.lane.b32.xlu0 %v1344, %s1405
        %v1407 = vpop.permute.xlu0 %1406
        %v1408 = vlaneseq
        %v1409 = vshrl.u32 %v1408, 7
        %v1410 = vsub.s32 6, %v1409
        %v1411 = vrot.slane %v1005, %v1410
        %1413 = vbcast.lane.b32.xlu0 %v1411, 256
        %v1414 = vpop.permute.xlu0 %1413
        %s1416 = sor.u32 256, 8
        %1417 = vbcast.lane.b32.xlu0 %v1411, %s1416
        %v1418 = vpop.permute.xlu0 %1417
        %s1420 = sor.u32 256, 16
        %1421 = vbcast.lane.b32.xlu0 %v1411, %s1420
        %v1422 = vpop.permute.xlu0 %1421
        %s1424 = sor.u32 256, 24
        %1425 = vbcast.lane.b32.xlu0 %v1411, %s1424
        %v1426 = vpop.permute.xlu0 %1425
        %s1428 = sor.u32 256, 32
        %1429 = vbcast.lane.b32.xlu0 %v1411, %s1428
        %v1430 = vpop.permute.xlu0 %1429
        %s1432 = sor.u32 256, 40
        %1433 = vbcast.lane.b32.xlu0 %v1411, %s1432
        %v1434 = vpop.permute.xlu0 %1433
        %s1436 = sor.u32 256, 48
        %1437 = vbcast.lane.b32.xlu0 %v1411, %s1436
        %v1438 = vpop.permute.xlu0 %1437
        %s1440 = sor.u32 256, 56
        %1441 = vbcast.lane.b32.xlu0 %v1411, %s1440
        %v1442 = vpop.permute.xlu0 %1441
        %s1444 = sor.u32 256, 64
        %1445 = vbcast.lane.b32.xlu0 %v1411, %s1444
        %v1446 = vpop.permute.xlu0 %1445
        %s1448 = sor.u32 256, 72
        %1449 = vbcast.lane.b32.xlu0 %v1411, %s1448
        %v1450 = vpop.permute.xlu0 %1449
        %s1452 = sor.u32 256, 80
        %1453 = vbcast.lane.b32.xlu0 %v1411, %s1452
        %v1454 = vpop.permute.xlu0 %1453
        %s1456 = sor.u32 256, 88
        %1457 = vbcast.lane.b32.xlu0 %v1411, %s1456
        %v1458 = vpop.permute.xlu0 %1457
        %s1460 = sor.u32 256, 96
        %1461 = vbcast.lane.b32.xlu0 %v1411, %s1460
        %v1462 = vpop.permute.xlu0 %1461
        %s1464 = sor.u32 256, 104
        %1465 = vbcast.lane.b32.xlu0 %v1411, %s1464
        %v1466 = vpop.permute.xlu0 %1465
        %s1468 = sor.u32 256, 112
        %1469 = vbcast.lane.b32.xlu0 %v1411, %s1468
        %v1470 = vpop.permute.xlu0 %1469
        %s1472 = sor.u32 256, 120
        %1473 = vbcast.lane.b32.xlu0 %v1411, %s1472
        %v1474 = vpop.permute.xlu0 %1473
        %v1475 = vlaneseq
        %v1476 = vshrl.u32 %v1475, 7
        %v1477 = vsub.s32 7, %v1476
        %v1478 = vrot.slane %v1005, %v1477
        %1480 = vbcast.lane.b32.xlu0 %v1478, 256
        %v1481 = vpop.permute.xlu0 %1480
        %s1483 = sor.u32 256, 8
        %1484 = vbcast.lane.b32.xlu0 %v1478, %s1483
        %v1485 = vpop.permute.xlu0 %1484
        %s1487 = sor.u32 256, 16
        %1488 = vbcast.lane.b32.xlu0 %v1478, %s1487
        %v1489 = vpop.permute.xlu0 %1488
        %s1491 = sor.u32 256, 24
        %1492 = vbcast.lane.b32.xlu0 %v1478, %s1491
        %v1493 = vpop.permute.xlu0 %1492
        %s1495 = sor.u32 256, 32
        %1496 = vbcast.lane.b32.xlu0 %v1478, %s1495
        %v1497 = vpop.permute.xlu0 %1496
        %s1499 = sor.u32 256, 40
        %1500 = vbcast.lane.b32.xlu0 %v1478, %s1499
        %v1501 = vpop.permute.xlu0 %1500
        %s1503 = sor.u32 256, 48
        %1504 = vbcast.lane.b32.xlu0 %v1478, %s1503
        %v1505 = vpop.permute.xlu0 %1504
        %s1507 = sor.u32 256, 56
        %1508 = vbcast.lane.b32.xlu0 %v1478, %s1507
        %v1509 = vpop.permute.xlu0 %1508
        %s1511 = sor.u32 256, 64
        %1512 = vbcast.lane.b32.xlu0 %v1478, %s1511
        %v1513 = vpop.permute.xlu0 %1512
        %s1515 = sor.u32 256, 72
        %1516 = vbcast.lane.b32.xlu0 %v1478, %s1515
        %v1517 = vpop.permute.xlu0 %1516
        %s1519 = sor.u32 256, 80
        %1520 = vbcast.lane.b32.xlu0 %v1478, %s1519
        %v1521 = vpop.permute.xlu0 %1520
        %s1523 = sor.u32 256, 88
        %1524 = vbcast.lane.b32.xlu0 %v1478, %s1523
        %v1525 = vpop.permute.xlu0 %1524
        %s1527 = sor.u32 256, 96
        %1528 = vbcast.lane.b32.xlu0 %v1478, %s1527
        %v1529 = vpop.permute.xlu0 %1528
        %s1531 = sor.u32 256, 104
        %1532 = vbcast.lane.b32.xlu0 %v1478, %s1531
        %v1533 = vpop.permute.xlu0 %1532
        %s1535 = sor.u32 256, 112
        %1536 = vbcast.lane.b32.xlu0 %v1478, %s1535
        %v1537 = vpop.permute.xlu0 %1536
        %s1539 = sor.u32 256, 120
        %1540 = vbcast.lane.b32.xlu0 %v1478, %s1539
        %v1541 = vpop.permute.xlu0 %1540
        %v1542 = vmul.f32 %v442, %v1012
        %v1543 = vmul.f32 %v443, %v1016
        %v1544 = vmul.f32 %v444, %v1020
        %v1545 = vmul.f32 %v445, %v1024
        %v1546 = vmul.f32 %v446, %v1028
        %v1547 = vmul.f32 %v447, %v1032
        %v1548 = vmul.f32 %v448, %v1036
        %v1549 = vmul.f32 %v449, %v1040
        %v1550 = vmul.f32 %v450, %v1044
        %v1551 = vmul.f32 %v451, %v1048
        %v1552 = vmul.f32 %v452, %v1052
        %v1553 = vmul.f32 %v453, %v1056
        %v1554 = vmul.f32 %v454, %v1060
        %v1555 = vmul.f32 %v455, %v1064
        %v1556 = vmul.f32 %v456, %v1068
        %v1557 = vmul.f32 %v457, %v1072
        %v1558 = vmul.f32 %v458, %v1079
        %v1559 = vmul.f32 %v459, %v1083
        %v1560 = vmul.f32 %v460, %v1087
        %v1561 = vmul.f32 %v461, %v1091
        %v1562 = vmul.f32 %v462, %v1095
        %v1563 = vmul.f32 %v463, %v1099
        %v1564 = vmul.f32 %v464, %v1103
        %v1565 = vmul.f32 %v465, %v1107
        %v1566 = vmul.f32 %v466, %v1111
        %v1567 = vmul.f32 %v467, %v1115
        %v1568 = vmul.f32 %v468, %v1119
        %v1569 = vmul.f32 %v469, %v1123
        %v1570 = vmul.f32 %v470, %v1127
        %v1571 = vmul.f32 %v471, %v1131
        %v1572 = vmul.f32 %v472, %v1135
        %v1573 = vmul.f32 %v473, %v1139
        %v1574 = vmul.f32 %v474, %v1146
        %v1575 = vmul.f32 %v475, %v1150
        %v1576 = vmul.f32 %v476, %v1154
        %v1577 = vmul.f32 %v477, %v1158
        %v1578 = vmul.f32 %v478, %v1162
        %v1579 = vmul.f32 %v479, %v1166
        %v1580 = vmul.f32 %v480, %v1170
        %v1581 = vmul.f32 %v481, %v1174
        %v1582 = vmul.f32 %v482, %v1178
        %v1583 = vmul.f32 %v483, %v1182
        %v1584 = vmul.f32 %v484, %v1186
        %v1585 = vmul.f32 %v485, %v1190
        %v1586 = vmul.f32 %v486, %v1194
        %v1587 = vmul.f32 %v487, %v1198
        %v1588 = vmul.f32 %v488, %v1202
        %v1589 = vmul.f32 %v489, %v1206
        %v1590 = vmul.f32 %v490, %v1213
        %v1591 = vmul.f32 %v491, %v1217
        %v1592 = vmul.f32 %v492, %v1221
        %v1593 = vmul.f32 %v493, %v1225
        %v1594 = vmul.f32 %v494, %v1229
        %v1595 = vmul.f32 %v495, %v1233
        %v1596 = vmul.f32 %v496, %v1237
        %v1597 = vmul.f32 %v497, %v1241
        %v1598 = vmul.f32 %v498, %v1245
        %v1599 = vmul.f32 %v499, %v1249
        %v1600 = vmul.f32 %v500, %v1253
        %v1601 = vmul.f32 %v501, %v1257
        %v1602 = vmul.f32 %v502, %v1261
        %v1603 = vmul.f32 %v503, %v1265
        %v1604 = vmul.f32 %v504, %v1269
        %v1605 = vmul.f32 %v505, %v1273
        %v1606 = vmul.f32 %v506, %v1280
        %v1607 = vmul.f32 %v507, %v1284
        %v1608 = vmul.f32 %v508, %v1288
        %v1609 = vmul.f32 %v509, %v1292
        %v1610 = vmul.f32 %v510, %v1296
        %v1611 = vmul.f32 %v511, %v1300
        %v1612 = vmul.f32 %v512, %v1304
        %v1613 = vmul.f32 %v513, %v1308
        %v1614 = vmul.f32 %v514, %v1312
        %v1615 = vmul.f32 %v515, %v1316
        %v1616 = vmul.f32 %v516, %v1320
        %v1617 = vmul.f32 %v517, %v1324
        %v1618 = vmul.f32 %v518, %v1328
        %v1619 = vmul.f32 %v519, %v1332
        %v1620 = vmul.f32 %v520, %v1336
        %v1621 = vmul.f32 %v521, %v1340
        %v1622 = vmul.f32 %v522, %v1347
        %v1623 = vmul.f32 %v523, %v1351
        %v1624 = vmul.f32 %v524, %v1355
        %v1625 = vmul.f32 %v525, %v1359
        %v1626 = vmul.f32 %v526, %v1363
        %v1627 = vmul.f32 %v527, %v1367
        %v1628 = vmul.f32 %v528, %v1371
        %v1629 = vmul.f32 %v529, %v1375
        %v1630 = vmul.f32 %v530, %v1379
        %v1631 = vmul.f32 %v531, %v1383
        %v1632 = vmul.f32 %v532, %v1387
        %v1633 = vmul.f32 %v533, %v1391
        %v1634 = vmul.f32 %v534, %v1395
        %v1635 = vmul.f32 %v535, %v1399
        %v1636 = vmul.f32 %v536, %v1403
        %v1637 = vmul.f32 %v537, %v1407
        %v1638 = vmul.f32 %v538, %v1414
        %v1639 = vmul.f32 %v539, %v1418
        %v1640 = vmul.f32 %v540, %v1422
        %v1641 = vmul.f32 %v541, %v1426
        %v1642 = vmul.f32 %v542, %v1430
        %v1643 = vmul.f32 %v543, %v1434
        %v1644 = vmul.f32 %v544, %v1438
        %v1645 = vmul.f32 %v545, %v1442
        %v1646 = vmul.f32 %v546, %v1446
        %v1647 = vmul.f32 %v547, %v1450
        %v1648 = vmul.f32 %v548, %v1454
        %v1649 = vmul.f32 %v549, %v1458
        %v1650 = vmul.f32 %v550, %v1462
        %v1651 = vmul.f32 %v551, %v1466
        %v1652 = vmul.f32 %v552, %v1470
        %v1653 = vmul.f32 %v553, %v1474
        %v1654 = vmul.f32 %v554, %v1481
        %v1655 = vmul.f32 %v555, %v1485
        %v1656 = vmul.f32 %v556, %v1489
        %v1657 = vmul.f32 %v557, %v1493
        %v1658 = vmul.f32 %v558, %v1497
        %v1659 = vmul.f32 %v559, %v1501
        %v1660 = vmul.f32 %v560, %v1505
        %v1661 = vmul.f32 %v561, %v1509
        %v1662 = vmul.f32 %v562, %v1513
        %v1663 = vmul.f32 %v563, %v1517
        %v1664 = vmul.f32 %v564, %v1521
        %v1665 = vmul.f32 %v565, %v1525
        %v1666 = vmul.f32 %v566, %v1529
        %v1667 = vmul.f32 %v567, %v1533
        %v1668 = vmul.f32 %v568, %v1537
        %v1669 = vmul.f32 %v569, %v1541
        %v1670 = vadd.f32 %v1542, %v1543
        %v1671 = vadd.f32 %v1670, %v1544
        %v1672 = vadd.f32 %v1671, %v1545
        %v1673 = vadd.f32 %v1672, %v1546
        %v1674 = vadd.f32 %v1673, %v1547
        %v1675 = vadd.f32 %v1674, %v1548
        %v1676 = vadd.f32 %v1675, %v1549
        %v1677 = vadd.f32 %v1676, %v1550
        %v1678 = vadd.f32 %v1677, %v1551
        %v1679 = vadd.f32 %v1678, %v1552
        %v1680 = vadd.f32 %v1679, %v1553
        %v1681 = vadd.f32 %v1680, %v1554
        %v1682 = vadd.f32 %v1681, %v1555
        %v1683 = vadd.f32 %v1682, %v1556
        %v1684 = vadd.f32 %v1683, %v1557
        %v1685 = vrot.slane %v1684, 4
        %v1686 = vadd.f32 %v1684, %v1685
        %v1687 = vrot.slane %v1686, 2
        %v1688 = vadd.f32 %v1686, %v1687
        %v1689 = vrot.slane %v1688, 1
        %v1690 = vadd.f32 %v1688, %v1689
        %v1691 = vadd.f32 %v1558, %v1559
        %v1692 = vadd.f32 %v1691, %v1560
        %v1693 = vadd.f32 %v1692, %v1561
        %v1694 = vadd.f32 %v1693, %v1562
        %v1695 = vadd.f32 %v1694, %v1563
        %v1696 = vadd.f32 %v1695, %v1564
        %v1697 = vadd.f32 %v1696, %v1565
        %v1698 = vadd.f32 %v1697, %v1566
        %v1699 = vadd.f32 %v1698, %v1567
        %v1700 = vadd.f32 %v1699, %v1568
        %v1701 = vadd.f32 %v1700, %v1569
        %v1702 = vadd.f32 %v1701, %v1570
        %v1703 = vadd.f32 %v1702, %v1571
        %v1704 = vadd.f32 %v1703, %v1572
        %v1705 = vadd.f32 %v1704, %v1573
        %v1706 = vrot.slane %v1705, 4
        %v1707 = vadd.f32 %v1705, %v1706
        %v1708 = vrot.slane %v1707, 2
        %v1709 = vadd.f32 %v1707, %v1708
        %v1710 = vrot.slane %v1709, 1
        %v1711 = vadd.f32 %v1709, %v1710
        %v1712 = vadd.f32 %v1574, %v1575
        %v1713 = vadd.f32 %v1712, %v1576
        %v1714 = vadd.f32 %v1713, %v1577
        %v1715 = vadd.f32 %v1714, %v1578
        %v1716 = vadd.f32 %v1715, %v1579
        %v1717 = vadd.f32 %v1716, %v1580
        %v1718 = vadd.f32 %v1717, %v1581
        %v1719 = vadd.f32 %v1718, %v1582
        %v1720 = vadd.f32 %v1719, %v1583
        %v1721 = vadd.f32 %v1720, %v1584
        %v1722 = vadd.f32 %v1721, %v1585
        %v1723 = vadd.f32 %v1722, %v1586
        %v1724 = vadd.f32 %v1723, %v1587
        %v1725 = vadd.f32 %v1724, %v1588
        %v1726 = vadd.f32 %v1725, %v1589
        %v1727 = vrot.slane %v1726, 4
        %v1728 = vadd.f32 %v1726, %v1727
        %v1729 = vrot.slane %v1728, 2
        %v1730 = vadd.f32 %v1728, %v1729
        %v1731 = vrot.slane %v1730, 1
        %v1732 = vadd.f32 %v1730, %v1731
        %v1733 = vadd.f32 %v1590, %v1591
        %v1734 = vadd.f32 %v1733, %v1592
        %v1735 = vadd.f32 %v1734, %v1593
        %v1736 = vadd.f32 %v1735, %v1594
        %v1737 = vadd.f32 %v1736, %v1595
        %v1738 = vadd.f32 %v1737, %v1596
        %v1739 = vadd.f32 %v1738, %v1597
        %v1740 = vadd.f32 %v1739, %v1598
        %v1741 = vadd.f32 %v1740, %v1599
        %v1742 = vadd.f32 %v1741, %v1600
        %v1743 = vadd.f32 %v1742, %v1601
        %v1744 = vadd.f32 %v1743, %v1602
        %v1745 = vadd.f32 %v1744, %v1603
        %v1746 = vadd.f32 %v1745, %v1604
        %v1747 = vadd.f32 %v1746, %v1605
        %v1748 = vrot.slane %v1747, 4
        %v1749 = vadd.f32 %v1747, %v1748
        %v1750 = vrot.slane %v1749, 2
        %v1751 = vadd.f32 %v1749, %v1750
        %v1752 = vrot.slane %v1751, 1
        %v1753 = vadd.f32 %v1751, %v1752
        %v1754 = vadd.f32 %v1606, %v1607
        %v1755 = vadd.f32 %v1754, %v1608
        %v1756 = vadd.f32 %v1755, %v1609
        %v1757 = vadd.f32 %v1756, %v1610
        %v1758 = vadd.f32 %v1757, %v1611
        %v1759 = vadd.f32 %v1758, %v1612
        %v1760 = vadd.f32 %v1759, %v1613
        %v1761 = vadd.f32 %v1760, %v1614
        %v1762 = vadd.f32 %v1761, %v1615
        %v1763 = vadd.f32 %v1762, %v1616
        %v1764 = vadd.f32 %v1763, %v1617
        %v1765 = vadd.f32 %v1764, %v1618
        %v1766 = vadd.f32 %v1765, %v1619
        %v1767 = vadd.f32 %v1766, %v1620
        %v1768 = vadd.f32 %v1767, %v1621
        %v1769 = vrot.slane %v1768, 4
        %v1770 = vadd.f32 %v1768, %v1769
        %v1771 = vrot.slane %v1770, 2
        %v1772 = vadd.f32 %v1770, %v1771
        %v1773 = vrot.slane %v1772, 1
        %v1774 = vadd.f32 %v1772, %v1773
        %v1775 = vadd.f32 %v1622, %v1623
        %v1776 = vadd.f32 %v1775, %v1624
        %v1777 = vadd.f32 %v1776, %v1625
        %v1778 = vadd.f32 %v1777, %v1626
        %v1779 = vadd.f32 %v1778, %v1627
        %v1780 = vadd.f32 %v1779, %v1628
        %v1781 = vadd.f32 %v1780, %v1629
        %v1782 = vadd.f32 %v1781, %v1630
        %v1783 = vadd.f32 %v1782, %v1631
        %v1784 = vadd.f32 %v1783, %v1632
        %v1785 = vadd.f32 %v1784, %v1633
        %v1786 = vadd.f32 %v1785, %v1634
        %v1787 = vadd.f32 %v1786, %v1635
        %v1788 = vadd.f32 %v1787, %v1636
        %v1789 = vadd.f32 %v1788, %v1637
        %v1790 = vrot.slane %v1789, 4
        %v1791 = vadd.f32 %v1789, %v1790
        %v1792 = vrot.slane %v1791, 2
        %v1793 = vadd.f32 %v1791, %v1792
        %v1794 = vrot.slane %v1793, 1
        %v1795 = vadd.f32 %v1793, %v1794
        %v1796 = vadd.f32 %v1638, %v1639
        %v1797 = vadd.f32 %v1796, %v1640
        %v1798 = vadd.f32 %v1797, %v1641
        %v1799 = vadd.f32 %v1798, %v1642
        %v1800 = vadd.f32 %v1799, %v1643
        %v1801 = vadd.f32 %v1800, %v1644
        %v1802 = vadd.f32 %v1801, %v1645
        %v1803 = vadd.f32 %v1802, %v1646
        %v1804 = vadd.f32 %v1803, %v1647
        %v1805 = vadd.f32 %v1804, %v1648
        %v1806 = vadd.f32 %v1805, %v1649
        %v1807 = vadd.f32 %v1806, %v1650
        %v1808 = vadd.f32 %v1807, %v1651
        %v1809 = vadd.f32 %v1808, %v1652
        %v1810 = vadd.f32 %v1809, %v1653
        %v1811 = vrot.slane %v1810, 4
        %v1812 = vadd.f32 %v1810, %v1811
        %v1813 = vrot.slane %v1812, 2
        %v1814 = vadd.f32 %v1812, %v1813
        %v1815 = vrot.slane %v1814, 1
        %v1816 = vadd.f32 %v1814, %v1815
        %v1817 = vadd.f32 %v1654, %v1655
        %v1818 = vadd.f32 %v1817, %v1656
        %v1819 = vadd.f32 %v1818, %v1657
        %v1820 = vadd.f32 %v1819, %v1658
        %v1821 = vadd.f32 %v1820, %v1659
        %v1822 = vadd.f32 %v1821, %v1660
        %v1823 = vadd.f32 %v1822, %v1661
        %v1824 = vadd.f32 %v1823, %v1662
        %v1825 = vadd.f32 %v1824, %v1663
        %v1826 = vadd.f32 %v1825, %v1664
        %v1827 = vadd.f32 %v1826, %v1665
        %v1828 = vadd.f32 %v1827, %v1666
        %v1829 = vadd.f32 %v1828, %v1667
        %v1830 = vadd.f32 %v1829, %v1668
        %v1831 = vadd.f32 %v1830, %v1669
        %v1832 = vrot.slane %v1831, 4
        %v1833 = vadd.f32 %v1831, %v1832
        %v1834 = vrot.slane %v1833, 2
        %v1835 = vadd.f32 %v1833, %v1834
        %v1836 = vrot.slane %v1835, 1
        %v1837 = vadd.f32 %v1835, %v1836
        %v1838 = vsel %vm700, 1, 0
        %vm1839 = vcmp.eq.s32.totalorder %v1838, 1
        %vm1848 = vcmask 1041409
        %v1849 = vsel %vm1848, %v1711, %v1690
        %vm1850 = vcmask 1042434
        %v1851 = vsel %vm1850, %v1732, %v1849
        %vm1852 = vcmask 1043459
        %v1853 = vsel %vm1852, %v1753, %v1851
        %vm1854 = vcmask 1044484
        %v1855 = vsel %vm1854, %v1774, %v1853
        %vm1856 = vcmask 1045509
        %v1857 = vsel %vm1856, %v1795, %v1855
        %vm1858 = vcmask 1046534
        %v1859 = vsel %vm1858, %v1816, %v1857
        %vm1860 = vcmask 1047559
        %v1861 = vsel %vm1860, %v1837, %v1859
        %v1863 = vsel %vm1839, %v1861, -1e+30
        %1864 = vmax.xlane.f32.xlu0 %v1863
        %v1865 = vpop.xlane.xlu0 %1864
        %v1866 = vsub.f32 %v1863, %v1865
        %v1867 = vmul.f32 %v1866, 1.442695
        %v1868 = vpow.pop %v1867
        %1869 = vadd.xlane.f32.xlu0 %v1868
        %v1870 = vpop.xlane.xlu0 %1869
        %v1871 = vrcp.pop %v1870
        %v1872 = vmul.f32 %v1868, %v1871
        %v1873 = vlaneseq
        %v1874 = vshrl.u32 %v1873, 7
        %v1875 = vsub.s32 0, %v1874
        %v1876 = vrot.slane %v1872, %v1875
        %1878 = vbcast.lane.b32.xlu0 %v1876, 256
        %v1879 = vpop.permute.xlu0 %1878
        %s1881 = sor.u32 256, 8
        %1882 = vbcast.lane.b32.xlu0 %v1876, %s1881
        %v1883 = vpop.permute.xlu0 %1882
        %s1885 = sor.u32 256, 16
        %1886 = vbcast.lane.b32.xlu0 %v1876, %s1885
        %v1887 = vpop.permute.xlu0 %1886
        %s1889 = sor.u32 256, 24
        %1890 = vbcast.lane.b32.xlu0 %v1876, %s1889
        %v1891 = vpop.permute.xlu0 %1890
        %s1893 = sor.u32 256, 32
        %1894 = vbcast.lane.b32.xlu0 %v1876, %s1893
        %v1895 = vpop.permute.xlu0 %1894
        %s1897 = sor.u32 256, 40
        %1898 = vbcast.lane.b32.xlu0 %v1876, %s1897
        %v1899 = vpop.permute.xlu0 %1898
        %s1901 = sor.u32 256, 48
        %1902 = vbcast.lane.b32.xlu0 %v1876, %s1901
        %v1903 = vpop.permute.xlu0 %1902
        %s1905 = sor.u32 256, 56
        %1906 = vbcast.lane.b32.xlu0 %v1876, %s1905
        %v1907 = vpop.permute.xlu0 %1906
        %s1909 = sor.u32 256, 64
        %1910 = vbcast.lane.b32.xlu0 %v1876, %s1909
        %v1911 = vpop.permute.xlu0 %1910
        %s1913 = sor.u32 256, 72
        %1914 = vbcast.lane.b32.xlu0 %v1876, %s1913
        %v1915 = vpop.permute.xlu0 %1914
        %s1917 = sor.u32 256, 80
        %1918 = vbcast.lane.b32.xlu0 %v1876, %s1917
        %v1919 = vpop.permute.xlu0 %1918
        %s1921 = sor.u32 256, 88
        %1922 = vbcast.lane.b32.xlu0 %v1876, %s1921
        %v1923 = vpop.permute.xlu0 %1922
        %s1925 = sor.u32 256, 96
        %1926 = vbcast.lane.b32.xlu0 %v1876, %s1925
        %v1927 = vpop.permute.xlu0 %1926
        %s1929 = sor.u32 256, 104
        %1930 = vbcast.lane.b32.xlu0 %v1876, %s1929
        %v1931 = vpop.permute.xlu0 %1930
        %s1933 = sor.u32 256, 112
        %1934 = vbcast.lane.b32.xlu0 %v1876, %s1933
        %v1935 = vpop.permute.xlu0 %1934
        %s1937 = sor.u32 256, 120
        %1938 = vbcast.lane.b32.xlu0 %v1876, %s1937
        %v1939 = vpop.permute.xlu0 %1938
        %v1940 = vlaneseq
        %v1941 = vshrl.u32 %v1940, 7
        %v1942 = vsub.s32 1, %v1941
        %v1943 = vrot.slane %v1872, %v1942
        %1945 = vbcast.lane.b32.xlu0 %v1943, 256
        %v1946 = vpop.permute.xlu0 %1945
        %s1948 = sor.u32 256, 8
        %1949 = vbcast.lane.b32.xlu0 %v1943, %s1948
        %v1950 = vpop.permute.xlu0 %1949
        %s1952 = sor.u32 256, 16
        %1953 = vbcast.lane.b32.xlu0 %v1943, %s1952
        %v1954 = vpop.permute.xlu0 %1953
        %s1956 = sor.u32 256, 24
        %1957 = vbcast.lane.b32.xlu0 %v1943, %s1956
        %v1958 = vpop.permute.xlu0 %1957
        %s1960 = sor.u32 256, 32
        %1961 = vbcast.lane.b32.xlu0 %v1943, %s1960
        %v1962 = vpop.permute.xlu0 %1961
        %s1964 = sor.u32 256, 40
        %1965 = vbcast.lane.b32.xlu0 %v1943, %s1964
        %v1966 = vpop.permute.xlu0 %1965
        %s1968 = sor.u32 256, 48
        %1969 = vbcast.lane.b32.xlu0 %v1943, %s1968
        %v1970 = vpop.permute.xlu0 %1969
        %s1972 = sor.u32 256, 56
        %1973 = vbcast.lane.b32.xlu0 %v1943, %s1972
        %v1974 = vpop.permute.xlu0 %1973
        %s1976 = sor.u32 256, 64
        %1977 = vbcast.lane.b32.xlu0 %v1943, %s1976
        %v1978 = vpop.permute.xlu0 %1977
        %s1980 = sor.u32 256, 72
        %1981 = vbcast.lane.b32.xlu0 %v1943, %s1980
        %v1982 = vpop.permute.xlu0 %1981
        %s1984 = sor.u32 256, 80
        %1985 = vbcast.lane.b32.xlu0 %v1943, %s1984
        %v1986 = vpop.permute.xlu0 %1985
        %s1988 = sor.u32 256, 88
        %1989 = vbcast.lane.b32.xlu0 %v1943, %s1988
        %v1990 = vpop.permute.xlu0 %1989
        %s1992 = sor.u32 256, 96
        %1993 = vbcast.lane.b32.xlu0 %v1943, %s1992
        %v1994 = vpop.permute.xlu0 %1993
        %s1996 = sor.u32 256, 104
        %1997 = vbcast.lane.b32.xlu0 %v1943, %s1996
        %v1998 = vpop.permute.xlu0 %1997
        %s2000 = sor.u32 256, 112
        %2001 = vbcast.lane.b32.xlu0 %v1943, %s2000
        %v2002 = vpop.permute.xlu0 %2001
        %s2004 = sor.u32 256, 120
        %2005 = vbcast.lane.b32.xlu0 %v1943, %s2004
        %v2006 = vpop.permute.xlu0 %2005
        %v2007 = vlaneseq
        %v2008 = vshrl.u32 %v2007, 7
        %v2009 = vsub.s32 2, %v2008
        %v2010 = vrot.slane %v1872, %v2009
        %2012 = vbcast.lane.b32.xlu0 %v2010, 256
        %v2013 = vpop.permute.xlu0 %2012
        %s2015 = sor.u32 256, 8
        %2016 = vbcast.lane.b32.xlu0 %v2010, %s2015
        %v2017 = vpop.permute.xlu0 %2016
        %s2019 = sor.u32 256, 16
        %2020 = vbcast.lane.b32.xlu0 %v2010, %s2019
        %v2021 = vpop.permute.xlu0 %2020
        %s2023 = sor.u32 256, 24
        %2024 = vbcast.lane.b32.xlu0 %v2010, %s2023
        %v2025 = vpop.permute.xlu0 %2024
        %s2027 = sor.u32 256, 32
        %2028 = vbcast.lane.b32.xlu0 %v2010, %s2027
        %v2029 = vpop.permute.xlu0 %2028
        %s2031 = sor.u32 256, 40
        %2032 = vbcast.lane.b32.xlu0 %v2010, %s2031
        %v2033 = vpop.permute.xlu0 %2032
        %s2035 = sor.u32 256, 48
        %2036 = vbcast.lane.b32.xlu0 %v2010, %s2035
        %v2037 = vpop.permute.xlu0 %2036
        %s2039 = sor.u32 256, 56
        %2040 = vbcast.lane.b32.xlu0 %v2010, %s2039
        %v2041 = vpop.permute.xlu0 %2040
        %s2043 = sor.u32 256, 64
        %2044 = vbcast.lane.b32.xlu0 %v2010, %s2043
        %v2045 = vpop.permute.xlu0 %2044
        %s2047 = sor.u32 256, 72
        %2048 = vbcast.lane.b32.xlu0 %v2010, %s2047
        %v2049 = vpop.permute.xlu0 %2048
        %s2051 = sor.u32 256, 80
        %2052 = vbcast.lane.b32.xlu0 %v2010, %s2051
        %v2053 = vpop.permute.xlu0 %2052
        %s2055 = sor.u32 256, 88
        %2056 = vbcast.lane.b32.xlu0 %v2010, %s2055
        %v2057 = vpop.permute.xlu0 %2056
        %s2059 = sor.u32 256, 96
        %2060 = vbcast.lane.b32.xlu0 %v2010, %s2059
        %v2061 = vpop.permute.xlu0 %2060
        %s2063 = sor.u32 256, 104
        %2064 = vbcast.lane.b32.xlu0 %v2010, %s2063
        %v2065 = vpop.permute.xlu0 %2064
        %s2067 = sor.u32 256, 112
        %2068 = vbcast.lane.b32.xlu0 %v2010, %s2067
        %v2069 = vpop.permute.xlu0 %2068
        %s2071 = sor.u32 256, 120
        %2072 = vbcast.lane.b32.xlu0 %v2010, %s2071
        %v2073 = vpop.permute.xlu0 %2072
        %v2074 = vlaneseq
        %v2075 = vshrl.u32 %v2074, 7
        %v2076 = vsub.s32 3, %v2075
        %v2077 = vrot.slane %v1872, %v2076
        %2079 = vbcast.lane.b32.xlu0 %v2077, 256
        %v2080 = vpop.permute.xlu0 %2079
        %s2082 = sor.u32 256, 8
        %2083 = vbcast.lane.b32.xlu0 %v2077, %s2082
        %v2084 = vpop.permute.xlu0 %2083
        %s2086 = sor.u32 256, 16
        %2087 = vbcast.lane.b32.xlu0 %v2077, %s2086
        %v2088 = vpop.permute.xlu0 %2087
        %s2090 = sor.u32 256, 24
        %2091 = vbcast.lane.b32.xlu0 %v2077, %s2090
        %v2092 = vpop.permute.xlu0 %2091
        %s2094 = sor.u32 256, 32
        %2095 = vbcast.lane.b32.xlu0 %v2077, %s2094
        %v2096 = vpop.permute.xlu0 %2095
        %s2098 = sor.u32 256, 40
        %2099 = vbcast.lane.b32.xlu0 %v2077, %s2098
        %v2100 = vpop.permute.xlu0 %2099
        %s2102 = sor.u32 256, 48
        %2103 = vbcast.lane.b32.xlu0 %v2077, %s2102
        %v2104 = vpop.permute.xlu0 %2103
        %s2106 = sor.u32 256, 56
        %2107 = vbcast.lane.b32.xlu0 %v2077, %s2106
        %v2108 = vpop.permute.xlu0 %2107
        %s2110 = sor.u32 256, 64
        %2111 = vbcast.lane.b32.xlu0 %v2077, %s2110
        %v2112 = vpop.permute.xlu0 %2111
        %s2114 = sor.u32 256, 72
        %2115 = vbcast.lane.b32.xlu0 %v2077, %s2114
        %v2116 = vpop.permute.xlu0 %2115
        %s2118 = sor.u32 256, 80
        %2119 = vbcast.lane.b32.xlu0 %v2077, %s2118
        %v2120 = vpop.permute.xlu0 %2119
        %s2122 = sor.u32 256, 88
        %2123 = vbcast.lane.b32.xlu0 %v2077, %s2122
        %v2124 = vpop.permute.xlu0 %2123
        %s2126 = sor.u32 256, 96
        %2127 = vbcast.lane.b32.xlu0 %v2077, %s2126
        %v2128 = vpop.permute.xlu0 %2127
        %s2130 = sor.u32 256, 104
        %2131 = vbcast.lane.b32.xlu0 %v2077, %s2130
        %v2132 = vpop.permute.xlu0 %2131
        %s2134 = sor.u32 256, 112
        %2135 = vbcast.lane.b32.xlu0 %v2077, %s2134
        %v2136 = vpop.permute.xlu0 %2135
        %s2138 = sor.u32 256, 120
        %2139 = vbcast.lane.b32.xlu0 %v2077, %s2138
        %v2140 = vpop.permute.xlu0 %2139
        %v2141 = vlaneseq
        %v2142 = vshrl.u32 %v2141, 7
        %v2143 = vsub.s32 4, %v2142
        %v2144 = vrot.slane %v1872, %v2143
        %2146 = vbcast.lane.b32.xlu0 %v2144, 256
        %v2147 = vpop.permute.xlu0 %2146
        %s2149 = sor.u32 256, 8
        %2150 = vbcast.lane.b32.xlu0 %v2144, %s2149
        %v2151 = vpop.permute.xlu0 %2150
        %s2153 = sor.u32 256, 16
        %2154 = vbcast.lane.b32.xlu0 %v2144, %s2153
        %v2155 = vpop.permute.xlu0 %2154
        %s2157 = sor.u32 256, 24
        %2158 = vbcast.lane.b32.xlu0 %v2144, %s2157
        %v2159 = vpop.permute.xlu0 %2158
        %s2161 = sor.u32 256, 32
        %2162 = vbcast.lane.b32.xlu0 %v2144, %s2161
        %v2163 = vpop.permute.xlu0 %2162
        %s2165 = sor.u32 256, 40
        %2166 = vbcast.lane.b32.xlu0 %v2144, %s2165
        %v2167 = vpop.permute.xlu0 %2166
        %s2169 = sor.u32 256, 48
        %2170 = vbcast.lane.b32.xlu0 %v2144, %s2169
        %v2171 = vpop.permute.xlu0 %2170
        %s2173 = sor.u32 256, 56
        %2174 = vbcast.lane.b32.xlu0 %v2144, %s2173
        %v2175 = vpop.permute.xlu0 %2174
        %s2177 = sor.u32 256, 64
        %2178 = vbcast.lane.b32.xlu0 %v2144, %s2177
        %v2179 = vpop.permute.xlu0 %2178
        %s2181 = sor.u32 256, 72
        %2182 = vbcast.lane.b32.xlu0 %v2144, %s2181
        %v2183 = vpop.permute.xlu0 %2182
        %s2185 = sor.u32 256, 80
        %2186 = vbcast.lane.b32.xlu0 %v2144, %s2185
        %v2187 = vpop.permute.xlu0 %2186
        %s2189 = sor.u32 256, 88
        %2190 = vbcast.lane.b32.xlu0 %v2144, %s2189
        %v2191 = vpop.permute.xlu0 %2190
        %s2193 = sor.u32 256, 96
        %2194 = vbcast.lane.b32.xlu0 %v2144, %s2193
        %v2195 = vpop.permute.xlu0 %2194
        %s2197 = sor.u32 256, 104
        %2198 = vbcast.lane.b32.xlu0 %v2144, %s2197
        %v2199 = vpop.permute.xlu0 %2198
        %s2201 = sor.u32 256, 112
        %2202 = vbcast.lane.b32.xlu0 %v2144, %s2201
        %v2203 = vpop.permute.xlu0 %2202
        %s2205 = sor.u32 256, 120
        %2206 = vbcast.lane.b32.xlu0 %v2144, %s2205
        %v2207 = vpop.permute.xlu0 %2206
        %v2208 = vlaneseq
        %v2209 = vshrl.u32 %v2208, 7
        %v2210 = vsub.s32 5, %v2209
        %v2211 = vrot.slane %v1872, %v2210
        %2213 = vbcast.lane.b32.xlu0 %v2211, 256
        %v2214 = vpop.permute.xlu0 %2213
        %s2216 = sor.u32 256, 8
        %2217 = vbcast.lane.b32.xlu0 %v2211, %s2216
        %v2218 = vpop.permute.xlu0 %2217
        %s2220 = sor.u32 256, 16
        %2221 = vbcast.lane.b32.xlu0 %v2211, %s2220
        %v2222 = vpop.permute.xlu0 %2221
        %s2224 = sor.u32 256, 24
        %2225 = vbcast.lane.b32.xlu0 %v2211, %s2224
        %v2226 = vpop.permute.xlu0 %2225
        %s2228 = sor.u32 256, 32
        %2229 = vbcast.lane.b32.xlu0 %v2211, %s2228
        %v2230 = vpop.permute.xlu0 %2229
        %s2232 = sor.u32 256, 40
        %2233 = vbcast.lane.b32.xlu0 %v2211, %s2232
        %v2234 = vpop.permute.xlu0 %2233
        %s2236 = sor.u32 256, 48
        %2237 = vbcast.lane.b32.xlu0 %v2211, %s2236
        %v2238 = vpop.permute.xlu0 %2237
        %s2240 = sor.u32 256, 56
        %2241 = vbcast.lane.b32.xlu0 %v2211, %s2240
        %v2242 = vpop.permute.xlu0 %2241
        %s2244 = sor.u32 256, 64
        %2245 = vbcast.lane.b32.xlu0 %v2211, %s2244
        %v2246 = vpop.permute.xlu0 %2245
        %s2248 = sor.u32 256, 72
        %2249 = vbcast.lane.b32.xlu0 %v2211, %s2248
        %v2250 = vpop.permute.xlu0 %2249
        %s2252 = sor.u32 256, 80
        %2253 = vbcast.lane.b32.xlu0 %v2211, %s2252
        %v2254 = vpop.permute.xlu0 %2253
        %s2256 = sor.u32 256, 88
        %2257 = vbcast.lane.b32.xlu0 %v2211, %s2256
        %v2258 = vpop.permute.xlu0 %2257
        %s2260 = sor.u32 256, 96
        %2261 = vbcast.lane.b32.xlu0 %v2211, %s2260
        %v2262 = vpop.permute.xlu0 %2261
        %s2264 = sor.u32 256, 104
        %2265 = vbcast.lane.b32.xlu0 %v2211, %s2264
        %v2266 = vpop.permute.xlu0 %2265
        %s2268 = sor.u32 256, 112
        %2269 = vbcast.lane.b32.xlu0 %v2211, %s2268
        %v2270 = vpop.permute.xlu0 %2269
        %s2272 = sor.u32 256, 120
        %2273 = vbcast.lane.b32.xlu0 %v2211, %s2272
        %v2274 = vpop.permute.xlu0 %2273
        %v2275 = vlaneseq
        %v2276 = vshrl.u32 %v2275, 7
        %v2277 = vsub.s32 6, %v2276
        %v2278 = vrot.slane %v1872, %v2277
        %2280 = vbcast.lane.b32.xlu0 %v2278, 256
        %v2281 = vpop.permute.xlu0 %2280
        %s2283 = sor.u32 256, 8
        %2284 = vbcast.lane.b32.xlu0 %v2278, %s2283
        %v2285 = vpop.permute.xlu0 %2284
        %s2287 = sor.u32 256, 16
        %2288 = vbcast.lane.b32.xlu0 %v2278, %s2287
        %v2289 = vpop.permute.xlu0 %2288
        %s2291 = sor.u32 256, 24
        %2292 = vbcast.lane.b32.xlu0 %v2278, %s2291
        %v2293 = vpop.permute.xlu0 %2292
        %s2295 = sor.u32 256, 32
        %2296 = vbcast.lane.b32.xlu0 %v2278, %s2295
        %v2297 = vpop.permute.xlu0 %2296
        %s2299 = sor.u32 256, 40
        %2300 = vbcast.lane.b32.xlu0 %v2278, %s2299
        %v2301 = vpop.permute.xlu0 %2300
        %s2303 = sor.u32 256, 48
        %2304 = vbcast.lane.b32.xlu0 %v2278, %s2303
        %v2305 = vpop.permute.xlu0 %2304
        %s2307 = sor.u32 256, 56
        %2308 = vbcast.lane.b32.xlu0 %v2278, %s2307
        %v2309 = vpop.permute.xlu0 %2308
        %s2311 = sor.u32 256, 64
        %2312 = vbcast.lane.b32.xlu0 %v2278, %s2311
        %v2313 = vpop.permute.xlu0 %2312
        %s2315 = sor.u32 256, 72
        %2316 = vbcast.lane.b32.xlu0 %v2278, %s2315
        %v2317 = vpop.permute.xlu0 %2316
        %s2319 = sor.u32 256, 80
        %2320 = vbcast.lane.b32.xlu0 %v2278, %s2319
        %v2321 = vpop.permute.xlu0 %2320
        %s2323 = sor.u32 256, 88
        %2324 = vbcast.lane.b32.xlu0 %v2278, %s2323
        %v2325 = vpop.permute.xlu0 %2324
        %s2327 = sor.u32 256, 96
        %2328 = vbcast.lane.b32.xlu0 %v2278, %s2327
        %v2329 = vpop.permute.xlu0 %2328
        %s2331 = sor.u32 256, 104
        %2332 = vbcast.lane.b32.xlu0 %v2278, %s2331
        %v2333 = vpop.permute.xlu0 %2332
        %s2335 = sor.u32 256, 112
        %2336 = vbcast.lane.b32.xlu0 %v2278, %s2335
        %v2337 = vpop.permute.xlu0 %2336
        %s2339 = sor.u32 256, 120
        %2340 = vbcast.lane.b32.xlu0 %v2278, %s2339
        %v2341 = vpop.permute.xlu0 %2340
        %v2342 = vlaneseq
        %v2343 = vshrl.u32 %v2342, 7
        %v2344 = vsub.s32 7, %v2343
        %v2345 = vrot.slane %v1872, %v2344
        %2347 = vbcast.lane.b32.xlu0 %v2345, 256
        %v2348 = vpop.permute.xlu0 %2347
        %s2350 = sor.u32 256, 8
        %2351 = vbcast.lane.b32.xlu0 %v2345, %s2350
        %v2352 = vpop.permute.xlu0 %2351
        %s2354 = sor.u32 256, 16
        %2355 = vbcast.lane.b32.xlu0 %v2345, %s2354
        %v2356 = vpop.permute.xlu0 %2355
        %s2358 = sor.u32 256, 24
        %2359 = vbcast.lane.b32.xlu0 %v2345, %s2358
        %v2360 = vpop.permute.xlu0 %2359
        %s2362 = sor.u32 256, 32
        %2363 = vbcast.lane.b32.xlu0 %v2345, %s2362
        %v2364 = vpop.permute.xlu0 %2363
        %s2366 = sor.u32 256, 40
        %2367 = vbcast.lane.b32.xlu0 %v2345, %s2366
        %v2368 = vpop.permute.xlu0 %2367
        %s2370 = sor.u32 256, 48
        %2371 = vbcast.lane.b32.xlu0 %v2345, %s2370
        %v2372 = vpop.permute.xlu0 %2371
        %s2374 = sor.u32 256, 56
        %2375 = vbcast.lane.b32.xlu0 %v2345, %s2374
        %v2376 = vpop.permute.xlu0 %2375
        %s2378 = sor.u32 256, 64
        %2379 = vbcast.lane.b32.xlu0 %v2345, %s2378
        %v2380 = vpop.permute.xlu0 %2379
        %s2382 = sor.u32 256, 72
        %2383 = vbcast.lane.b32.xlu0 %v2345, %s2382
        %v2384 = vpop.permute.xlu0 %2383
        %s2386 = sor.u32 256, 80
        %2387 = vbcast.lane.b32.xlu0 %v2345, %s2386
        %v2388 = vpop.permute.xlu0 %2387
        %s2390 = sor.u32 256, 88
        %2391 = vbcast.lane.b32.xlu0 %v2345, %s2390
        %v2392 = vpop.permute.xlu0 %2391
        %s2394 = sor.u32 256, 96
        %2395 = vbcast.lane.b32.xlu0 %v2345, %s2394
        %v2396 = vpop.permute.xlu0 %2395
        %s2398 = sor.u32 256, 104
        %2399 = vbcast.lane.b32.xlu0 %v2345, %s2398
        %v2400 = vpop.permute.xlu0 %2399
        %s2402 = sor.u32 256, 112
        %2403 = vbcast.lane.b32.xlu0 %v2345, %s2402
        %v2404 = vpop.permute.xlu0 %2403
        %s2406 = sor.u32 256, 120
        %2407 = vbcast.lane.b32.xlu0 %v2345, %s2406
        %v2408 = vpop.permute.xlu0 %2407
        %v2409 = vmul.f32 %v570, %v1879
        %v2410 = vmul.f32 %v571, %v1883
        %v2411 = vmul.f32 %v572, %v1887
        %v2412 = vmul.f32 %v573, %v1891
        %v2413 = vmul.f32 %v574, %v1895
        %v2414 = vmul.f32 %v575, %v1899
        %v2415 = vmul.f32 %v576, %v1903
        %v2416 = vmul.f32 %v577, %v1907
        %v2417 = vmul.f32 %v578, %v1911
        %v2418 = vmul.f32 %v579, %v1915
        %v2419 = vmul.f32 %v580, %v1919
        %v2420 = vmul.f32 %v581, %v1923
        %v2421 = vmul.f32 %v582, %v1927
        %v2422 = vmul.f32 %v583, %v1931
        %v2423 = vmul.f32 %v584, %v1935
        %v2424 = vmul.f32 %v585, %v1939
        %v2425 = vmul.f32 %v586, %v1946
        %v2426 = vmul.f32 %v587, %v1950
        %v2427 = vmul.f32 %v588, %v1954
        %v2428 = vmul.f32 %v589, %v1958
        %v2429 = vmul.f32 %v590, %v1962
        %v2430 = vmul.f32 %v591, %v1966
        %v2431 = vmul.f32 %v592, %v1970
        %v2432 = vmul.f32 %v593, %v1974
        %v2433 = vmul.f32 %v594, %v1978
        %v2434 = vmul.f32 %v595, %v1982
        %v2435 = vmul.f32 %v596, %v1986
        %v2436 = vmul.f32 %v597, %v1990
        %v2437 = vmul.f32 %v598, %v1994
        %v2438 = vmul.f32 %v599, %v1998
        %v2439 = vmul.f32 %v600, %v2002
        %v2440 = vmul.f32 %v601, %v2006
        %v2441 = vmul.f32 %v602, %v2013
        %v2442 = vmul.f32 %v603, %v2017
        %v2443 = vmul.f32 %v604, %v2021
        %v2444 = vmul.f32 %v605, %v2025
        %v2445 = vmul.f32 %v606, %v2029
        %v2446 = vmul.f32 %v607, %v2033
        %v2447 = vmul.f32 %v608, %v2037
        %v2448 = vmul.f32 %v609, %v2041
        %v2449 = vmul.f32 %v610, %v2045
        %v2450 = vmul.f32 %v611, %v2049
        %v2451 = vmul.f32 %v612, %v2053
        %v2452 = vmul.f32 %v613, %v2057
        %v2453 = vmul.f32 %v614, %v2061
        %v2454 = vmul.f32 %v615, %v2065
        %v2455 = vmul.f32 %v616, %v2069
        %v2456 = vmul.f32 %v617, %v2073
        %v2457 = vmul.f32 %v618, %v2080
        %v2458 = vmul.f32 %v619, %v2084
        %v2459 = vmul.f32 %v620, %v2088
        %v2460 = vmul.f32 %v621, %v2092
        %v2461 = vmul.f32 %v622, %v2096
        %v2462 = vmul.f32 %v623, %v2100
        %v2463 = vmul.f32 %v624, %v2104
        %v2464 = vmul.f32 %v625, %v2108
        %v2465 = vmul.f32 %v626, %v2112
        %v2466 = vmul.f32 %v627, %v2116
        %v2467 = vmul.f32 %v628, %v2120
        %v2468 = vmul.f32 %v629, %v2124
        %v2469 = vmul.f32 %v630, %v2128
        %v2470 = vmul.f32 %v631, %v2132
        %v2471 = vmul.f32 %v632, %v2136
        %v2472 = vmul.f32 %v633, %v2140
        %v2473 = vmul.f32 %v634, %v2147
        %v2474 = vmul.f32 %v635, %v2151
        %v2475 = vmul.f32 %v636, %v2155
        %v2476 = vmul.f32 %v637, %v2159
        %v2477 = vmul.f32 %v638, %v2163
        %v2478 = vmul.f32 %v639, %v2167
        %v2479 = vmul.f32 %v640, %v2171
        %v2480 = vmul.f32 %v641, %v2175
        %v2481 = vmul.f32 %v642, %v2179
        %v2482 = vmul.f32 %v643, %v2183
        %v2483 = vmul.f32 %v644, %v2187
        %v2484 = vmul.f32 %v645, %v2191
        %v2485 = vmul.f32 %v646, %v2195
        %v2486 = vmul.f32 %v647, %v2199
        %v2487 = vmul.f32 %v648, %v2203
        %v2488 = vmul.f32 %v649, %v2207
        %v2489 = vmul.f32 %v650, %v2214
        %v2490 = vmul.f32 %v651, %v2218
        %v2491 = vmul.f32 %v652, %v2222
        %v2492 = vmul.f32 %v653, %v2226
        %v2493 = vmul.f32 %v654, %v2230
        %v2494 = vmul.f32 %v655, %v2234
        %v2495 = vmul.f32 %v656, %v2238
        %v2496 = vmul.f32 %v657, %v2242
        %v2497 = vmul.f32 %v658, %v2246
        %v2498 = vmul.f32 %v659, %v2250
        %v2499 = vmul.f32 %v660, %v2254
        %v2500 = vmul.f32 %v661, %v2258
        %v2501 = vmul.f32 %v662, %v2262
        %v2502 = vmul.f32 %v663, %v2266
        %v2503 = vmul.f32 %v664, %v2270
        %v2504 = vmul.f32 %v665, %v2274
        %v2505 = vmul.f32 %v666, %v2281
        %v2506 = vmul.f32 %v667, %v2285
        %v2507 = vmul.f32 %v668, %v2289
        %v2508 = vmul.f32 %v669, %v2293
        %v2509 = vmul.f32 %v670, %v2297
        %v2510 = vmul.f32 %v671, %v2301
        %v2511 = vmul.f32 %v672, %v2305
        %v2512 = vmul.f32 %v673, %v2309
        %v2513 = vmul.f32 %v674, %v2313
        %v2514 = vmul.f32 %v675, %v2317
        %v2515 = vmul.f32 %v676, %v2321
        %v2516 = vmul.f32 %v677, %v2325
        %v2517 = vmul.f32 %v678, %v2329
        %v2518 = vmul.f32 %v679, %v2333
        %v2519 = vmul.f32 %v680, %v2337
        %v2520 = vmul.f32 %v681, %v2341
        %v2521 = vmul.f32 %v682, %v2348
        %v2522 = vmul.f32 %v683, %v2352
        %v2523 = vmul.f32 %v684, %v2356
        %v2524 = vmul.f32 %v685, %v2360
        %v2525 = vmul.f32 %v686, %v2364
        %v2526 = vmul.f32 %v687, %v2368
        %v2527 = vmul.f32 %v688, %v2372
        %v2528 = vmul.f32 %v689, %v2376
        %v2529 = vmul.f32 %v690, %v2380
        %v2530 = vmul.f32 %v691, %v2384
        %v2531 = vmul.f32 %v692, %v2388
        %v2532 = vmul.f32 %v693, %v2392
        %v2533 = vmul.f32 %v694, %v2396
        %v2534 = vmul.f32 %v695, %v2400
        %v2535 = vmul.f32 %v696, %v2404
        %v2536 = vmul.f32 %v697, %v2408
        %v2537 = vadd.f32 %v2409, %v2410
        %v2538 = vadd.f32 %v2537, %v2411
        %v2539 = vadd.f32 %v2538, %v2412
        %v2540 = vadd.f32 %v2539, %v2413
        %v2541 = vadd.f32 %v2540, %v2414
        %v2542 = vadd.f32 %v2541, %v2415
        %v2543 = vadd.f32 %v2542, %v2416
        %v2544 = vadd.f32 %v2543, %v2417
        %v2545 = vadd.f32 %v2544, %v2418
        %v2546 = vadd.f32 %v2545, %v2419
        %v2547 = vadd.f32 %v2546, %v2420
        %v2548 = vadd.f32 %v2547, %v2421
        %v2549 = vadd.f32 %v2548, %v2422
        %v2550 = vadd.f32 %v2549, %v2423
        %v2551 = vadd.f32 %v2550, %v2424
        %v2552 = vrot.slane %v2551, 4
        %v2553 = vadd.f32 %v2551, %v2552
        %v2554 = vrot.slane %v2553, 2
        %v2555 = vadd.f32 %v2553, %v2554
        %v2556 = vrot.slane %v2555, 1
        %v2557 = vadd.f32 %v2555, %v2556
        %v2558 = vadd.f32 %v2425, %v2426
        %v2559 = vadd.f32 %v2558, %v2427
        %v2560 = vadd.f32 %v2559, %v2428
        %v2561 = vadd.f32 %v2560, %v2429
        %v2562 = vadd.f32 %v2561, %v2430
        %v2563 = vadd.f32 %v2562, %v2431
        %v2564 = vadd.f32 %v2563, %v2432
        %v2565 = vadd.f32 %v2564, %v2433
        %v2566 = vadd.f32 %v2565, %v2434
        %v2567 = vadd.f32 %v2566, %v2435
        %v2568 = vadd.f32 %v2567, %v2436
        %v2569 = vadd.f32 %v2568, %v2437
        %v2570 = vadd.f32 %v2569, %v2438
        %v2571 = vadd.f32 %v2570, %v2439
        %v2572 = vadd.f32 %v2571, %v2440
        %v2573 = vrot.slane %v2572, 4
        %v2574 = vadd.f32 %v2572, %v2573
        %v2575 = vrot.slane %v2574, 2
        %v2576 = vadd.f32 %v2574, %v2575
        %v2577 = vrot.slane %v2576, 1
        %v2578 = vadd.f32 %v2576, %v2577
        %v2579 = vadd.f32 %v2441, %v2442
        %v2580 = vadd.f32 %v2579, %v2443
        %v2581 = vadd.f32 %v2580, %v2444
        %v2582 = vadd.f32 %v2581, %v2445
        %v2583 = vadd.f32 %v2582, %v2446
        %v2584 = vadd.f32 %v2583, %v2447
        %v2585 = vadd.f32 %v2584, %v2448
        %v2586 = vadd.f32 %v2585, %v2449
        %v2587 = vadd.f32 %v2586, %v2450
        %v2588 = vadd.f32 %v2587, %v2451
        %v2589 = vadd.f32 %v2588, %v2452
        %v2590 = vadd.f32 %v2589, %v2453
        %v2591 = vadd.f32 %v2590, %v2454
        %v2592 = vadd.f32 %v2591, %v2455
        %v2593 = vadd.f32 %v2592, %v2456
        %v2594 = vrot.slane %v2593, 4
        %v2595 = vadd.f32 %v2593, %v2594
        %v2596 = vrot.slane %v2595, 2
        %v2597 = vadd.f32 %v2595, %v2596
        %v2598 = vrot.slane %v2597, 1
        %v2599 = vadd.f32 %v2597, %v2598
        %v2600 = vadd.f32 %v2457, %v2458
        %v2601 = vadd.f32 %v2600, %v2459
        %v2602 = vadd.f32 %v2601, %v2460
        %v2603 = vadd.f32 %v2602, %v2461
        %v2604 = vadd.f32 %v2603, %v2462
        %v2605 = vadd.f32 %v2604, %v2463
        %v2606 = vadd.f32 %v2605, %v2464
        %v2607 = vadd.f32 %v2606, %v2465
        %v2608 = vadd.f32 %v2607, %v2466
        %v2609 = vadd.f32 %v2608, %v2467
        %v2610 = vadd.f32 %v2609, %v2468
        %v2611 = vadd.f32 %v2610, %v2469
        %v2612 = vadd.f32 %v2611, %v2470
        %v2613 = vadd.f32 %v2612, %v2471
        %v2614 = vadd.f32 %v2613, %v2472
        %v2615 = vrot.slane %v2614, 4
        %v2616 = vadd.f32 %v2614, %v2615
        %v2617 = vrot.slane %v2616, 2
        %v2618 = vadd.f32 %v2616, %v2617
        %v2619 = vrot.slane %v2618, 1
        %v2620 = vadd.f32 %v2618, %v2619
        %v2621 = vadd.f32 %v2473, %v2474
        %v2622 = vadd.f32 %v2621, %v2475
        %v2623 = vadd.f32 %v2622, %v2476
        %v2624 = vadd.f32 %v2623, %v2477
        %v2625 = vadd.f32 %v2624, %v2478
        %v2626 = vadd.f32 %v2625, %v2479
        %v2627 = vadd.f32 %v2626, %v2480
        %v2628 = vadd.f32 %v2627, %v2481
        %v2629 = vadd.f32 %v2628, %v2482
        %v2630 = vadd.f32 %v2629, %v2483
        %v2631 = vadd.f32 %v2630, %v2484
        %v2632 = vadd.f32 %v2631, %v2485
        %v2633 = vadd.f32 %v2632, %v2486
        %v2634 = vadd.f32 %v2633, %v2487
        %v2635 = vadd.f32 %v2634, %v2488
        %v2636 = vrot.slane %v2635, 4
        %v2637 = vadd.f32 %v2635, %v2636
        %v2638 = vrot.slane %v2637, 2
        %v2639 = vadd.f32 %v2637, %v2638
        %v2640 = vrot.slane %v2639, 1
        %v2641 = vadd.f32 %v2639, %v2640
        %v2642 = vadd.f32 %v2489, %v2490
        %v2643 = vadd.f32 %v2642, %v2491
        %v2644 = vadd.f32 %v2643, %v2492
        %v2645 = vadd.f32 %v2644, %v2493
        %v2646 = vadd.f32 %v2645, %v2494
        %v2647 = vadd.f32 %v2646, %v2495
        %v2648 = vadd.f32 %v2647, %v2496
        %v2649 = vadd.f32 %v2648, %v2497
        %v2650 = vadd.f32 %v2649, %v2498
        %v2651 = vadd.f32 %v2650, %v2499
        %v2652 = vadd.f32 %v2651, %v2500
        %v2653 = vadd.f32 %v2652, %v2501
        %v2654 = vadd.f32 %v2653, %v2502
        %v2655 = vadd.f32 %v2654, %v2503
        %v2656 = vadd.f32 %v2655, %v2504
        %v2657 = vrot.slane %v2656, 4
        %v2658 = vadd.f32 %v2656, %v2657
        %v2659 = vrot.slane %v2658, 2
        %v2660 = vadd.f32 %v2658, %v2659
        %v2661 = vrot.slane %v2660, 1
        %v2662 = vadd.f32 %v2660, %v2661
        %v2663 = vadd.f32 %v2505, %v2506
        %v2664 = vadd.f32 %v2663, %v2507
        %v2665 = vadd.f32 %v2664, %v2508
        %v2666 = vadd.f32 %v2665, %v2509
        %v2667 = vadd.f32 %v2666, %v2510
        %v2668 = vadd.f32 %v2667, %v2511
        %v2669 = vadd.f32 %v2668, %v2512
        %v2670 = vadd.f32 %v2669, %v2513
        %v2671 = vadd.f32 %v2670, %v2514
        %v2672 = vadd.f32 %v2671, %v2515
        %v2673 = vadd.f32 %v2672, %v2516
        %v2674 = vadd.f32 %v2673, %v2517
        %v2675 = vadd.f32 %v2674, %v2518
        %v2676 = vadd.f32 %v2675, %v2519
        %v2677 = vadd.f32 %v2676, %v2520
        %v2678 = vrot.slane %v2677, 4
        %v2679 = vadd.f32 %v2677, %v2678
        %v2680 = vrot.slane %v2679, 2
        %v2681 = vadd.f32 %v2679, %v2680
        %v2682 = vrot.slane %v2681, 1
        %v2683 = vadd.f32 %v2681, %v2682
        %v2684 = vadd.f32 %v2521, %v2522
        %v2685 = vadd.f32 %v2684, %v2523
        %v2686 = vadd.f32 %v2685, %v2524
        %v2687 = vadd.f32 %v2686, %v2525
        %v2688 = vadd.f32 %v2687, %v2526
        %v2689 = vadd.f32 %v2688, %v2527
        %v2690 = vadd.f32 %v2689, %v2528
        %v2691 = vadd.f32 %v2690, %v2529
        %v2692 = vadd.f32 %v2691, %v2530
        %v2693 = vadd.f32 %v2692, %v2531
        %v2694 = vadd.f32 %v2693, %v2532
        %v2695 = vadd.f32 %v2694, %v2533
        %v2696 = vadd.f32 %v2695, %v2534
        %v2697 = vadd.f32 %v2696, %v2535
        %v2698 = vadd.f32 %v2697, %v2536
        %v2699 = vrot.slane %v2698, 4
        %v2700 = vadd.f32 %v2698, %v2699
        %v2701 = vrot.slane %v2700, 2
        %v2702 = vadd.f32 %v2700, %v2701
        %v2703 = vrot.slane %v2702, 1
        %v2704 = vadd.f32 %v2702, %v2703
        %v2705 = vld [vmem:[#allocation12] sm:$0xff]
        %v2706 = vld [vmem:[#allocation12 + $0x8] sm:$0xff]
        %v2707 = vld [vmem:[#allocation12 + $0x10] sm:$0xff]
        %v2708 = vld [vmem:[#allocation12 + $0x18] sm:$0xff]
        %v2709 = vld [vmem:[#allocation12 + $0x20] sm:$0xff]
        %v2710 = vld [vmem:[#allocation12 + $0x28] sm:$0xff]
        %v2711 = vld [vmem:[#allocation12 + $0x30] sm:$0xff]
        %v2712 = vld [vmem:[#allocation12 + $0x38] sm:$0xff]
        %v2713 = vld [vmem:[#allocation12 + $0x40] sm:$0xff]
        %v2714 = vld [vmem:[#allocation12 + $0x48] sm:$0xff]
        %v2715 = vld [vmem:[#allocation12 + $0x50] sm:$0xff]
        %v2716 = vld [vmem:[#allocation12 + $0x58] sm:$0xff]
        %v2717 = vld [vmem:[#allocation12 + $0x60] sm:$0xff]
        %v2718 = vld [vmem:[#allocation12 + $0x68] sm:$0xff]
        %v2719 = vld [vmem:[#allocation12 + $0x70] sm:$0xff]
        %v2720 = vld [vmem:[#allocation12 + $0x78] sm:$0xff]
        %v2729 = vsel %vm1848, %v2578, %v2557
        %v2730 = vsel %vm1850, %v2599, %v2729
        %v2731 = vsel %vm1852, %v2620, %v2730
        %v2732 = vsel %vm1854, %v2641, %v2731
        %v2733 = vsel %vm1856, %v2662, %v2732
        %v2734 = vsel %vm1858, %v2683, %v2733
        %v2735 = vsel %vm1860, %v2704, %v2734
        %2737 = vmatprep.subr.mxu0 0.0
        %2738 = vmatpush1.msra.mxu0 %v2720
        %2739 = vmatprep.subr.mxu0 0.0
        %2740 = vmatpush1.msra.mxu0 %v2719
        %2741 = vmatprep.subr.mxu0 0.0
        %2742 = vmatpush1.msra.mxu0 %v2718
        %2743 = vmatprep.subr.mxu0 0.0
        %2744 = vmatpush1.msra.mxu0 %v2717
        %2745 = vmatprep.subr.mxu0 0.0
        %2746 = vmatpush1.msra.mxu0 %v2716
        %2747 = vmatprep.subr.mxu0 0.0
        %2748 = vmatpush1.msra.mxu0 %v2715
        %2749 = vmatprep.subr.mxu0 0.0
        %2750 = vmatpush1.msra.mxu0 %v2714
        %2751 = vmatprep.subr.mxu0 0.0
        %2752 = vmatpush1.msra.mxu0 %v2713
        %2753 = vmatprep.subr.mxu0 0.0
        %2754 = vmatpush1.msra.mxu0 %v2712
        %2755 = vmatprep.subr.mxu0 0.0
        %2756 = vmatpush1.msra.mxu0 %v2711
        %2757 = vmatprep.subr.mxu0 0.0
        %2758 = vmatpush1.msra.mxu0 %v2710
        %2759 = vmatprep.subr.mxu0 0.0
        %2760 = vmatpush1.msra.mxu0 %v2709
        %2761 = vmatprep.subr.mxu0 0.0
        %2762 = vmatpush1.msra.mxu0 %v2708
        %2763 = vmatprep.subr.mxu0 0.0
        %2764 = vmatpush1.msra.mxu0 %v2707
        %2765 = vmatprep.subr.mxu0 0.0
        %2766 = vmatpush1.msra.mxu0 %v2706
        %2767 = vmatprep.subr.mxu0 0.0
        %2768 = vmatpush1.msra.mxu0 %v2705
        %2769 = vmatprep.subr.mxu0 0.0
        %2770 = vmatpush2.msra.mxu0 0.0
        %2771 = vmatprep.subr.mxu0 0.0
        %2772 = vmatpush2.msra.mxu0 0.0
        %2773 = vmatprep.subr.mxu0 0.0
        %2774 = vmatpush2.msra.mxu0 0.0
        %2775 = vmatprep.subr.mxu0 0.0
        %2776 = vmatpush2.msra.mxu0 0.0
        %2777 = vmatprep.subr.mxu0 0.0
        %2778 = vmatpush2.msra.mxu0 0.0
        %2779 = vmatprep.subr.mxu0 0.0
        %2780 = vmatpush2.msra.mxu0 0.0
        %2781 = vmatprep.subr.mxu0 0.0
        %2782 = vmatpush2.msra.mxu0 0.0
        %2783 = vmatprep.subr.mxu0 0.0
        %2784 = vmatpush2.msra.mxu0 0.0
        %2785 = vmatprep.subr.mxu0 0.0
        %2786 = vmatpush2.msra.mxu0 0.0
        %2787 = vmatprep.subr.mxu0 0.0
        %2788 = vmatpush2.msra.mxu0 0.0
        %2789 = vmatprep.subr.mxu0 0.0
        %2790 = vmatpush2.msra.mxu0 0.0
        %2791 = vmatprep.subr.mxu0 0.0
        %2792 = vmatpush2.msra.mxu0 0.0
        %2793 = vmatprep.subr.mxu0 0.0
        %2794 = vmatpush2.msra.mxu0 0.0
        %2795 = vmatprep.subr.mxu0 0.0
        %2796 = vmatpush2.msra.mxu0 0.0
        %2797 = vmatprep.subr.mxu0 0.0
        %2798 = vmatpush2.msra.mxu0 0.0
        %2799 = vmatprep.subr.mxu0 0.0
        %2800 = vmatpush2.msra.mxu0 0.0
        %2801 = vmatprep.mubr.f32.mxu0 0.0
        %2802 = vmatmul.mubr.f32.gmra.mxu0 %v1005
        %v2803 = vpop.f32.mrf.mxu0
        %v2804 = vadd.f32 %v2735, %v2803
        %v2805 = vpop.f32.mrf.mxu0
        %2806 = vdwg.mxu0
        %v2807 = vtanh.pop %v2804
        %2808 = vst [vmem:[%s424] sm:$0xff] %v2807
        %2809 = vst [vmem:[#allocation2] sm:$0xff] %v2807
        %2810 = vst [vmem:[#allocation2 + $0x8] sm:$0xff] %v1005
        %2811 = vst [vmem:[#allocation3] sm:$0xff] %v1003
        %v2812 = vld [vmem:[#allocation2] sm:$0xff]
        %v2813 = vld [vmem:[#allocation2 + $0x8] sm:$0xff]
        %v2814 = vld [vmem:[#allocation3] sm:$0xff]
        %s2815 = scalar_lea.vmem %s370, 32 [#allocation4]
        %v2816 = vld [vmem:[%s2815] sm:$0xff]
        %v2817 = vld [vmem:[%s2815 + $0x8] sm:$0xff]
        %v2818 = vld [vmem:[%s2815 + $0x10] sm:$0xff]
        %v2819 = vld [vmem:[%s2815 + $0x18] sm:$0xff]
        %v2820 = vld [vmem:[#allocation10] sm:$0xff]
        %v2821 = vld [vmem:[#allocation10 + $0x8] sm:$0xff]
        %v2822 = vld [vmem:[#allocation10 + $0x10] sm:$0xff]
        %v2823 = vld [vmem:[#allocation10 + $0x18] sm:$0xff]
        %v2824 = vld [vmem:[#allocation10 + $0x20] sm:$0xff]
        %v2825 = vld [vmem:[#allocation10 + $0x28] sm:$0xff]
        %v2826 = vld [vmem:[#allocation10 + $0x30] sm:$0xff]
        %v2827 = vld [vmem:[#allocation10 + $0x38] sm:$0xff]
        %v2828 = vld [vmem:[#allocation10 + $0x40] sm:$0xff]
        %v2829 = vld [vmem:[#allocation10 + $0x48] sm:$0xff]
        %v2830 = vld [vmem:[#allocation10 + $0x50] sm:$0xff]
        %v2831 = vld [vmem:[#allocation10 + $0x58] sm:$0xff]
        %v2832 = vld [vmem:[#allocation10 + $0x60] sm:$0xff]
        %v2833 = vld [vmem:[#allocation10 + $0x68] sm:$0xff]
        %v2834 = vld [vmem:[#allocation10 + $0x70] sm:$0xff]
        %v2835 = vld [vmem:[#allocation10 + $0x78] sm:$0xff]
        %v2836 = vld [vmem:[#allocation10 + $0x80] sm:$0xff]
        %v2837 = vld [vmem:[#allocation10 + $0x88] sm:$0xff]
        %v2838 = vld [vmem:[#allocation10 + $0x90] sm:$0xff]
        %v2839 = vld [vmem:[#allocation10 + $0x98] sm:$0xff]
        %v2840 = vld [vmem:[#allocation10 + $0xa0] sm:$0xff]
        %v2841 = vld [vmem:[#allocation10 + $0xa8] sm:$0xff]
        %v2842 = vld [vmem:[#allocation10 + $0xb0] sm:$0xff]
        %v2843 = vld [vmem:[#allocation10 + $0xb8] sm:$0xff]
        %v2844 = vld [vmem:[#allocation10 + $0xc0] sm:$0xff]
        %v2845 = vld [vmem:[#allocation10 + $0xc8] sm:$0xff]
        %v2846 = vld [vmem:[#allocation10 + $0xd0] sm:$0xff]
        %v2847 = vld [vmem:[#allocation10 + $0xd8] sm:$0xff]
        %v2848 = vld [vmem:[#allocation10 + $0xe0] sm:$0xff]
        %v2849 = vld [vmem:[#allocation10 + $0xe8] sm:$0xff]
        %v2850 = vld [vmem:[#allocation10 + $0xf0] sm:$0xff]
        %v2851 = vld [vmem:[#allocation10 + $0xf8] sm:$0xff]
        %v2852 = vld [vmem:[#allocation10 + $0x100] sm:$0xff]
        %v2853 = vld [vmem:[#allocation10 + $0x108] sm:$0xff]
        %v2854 = vld [vmem:[#allocation10 + $0x110] sm:$0xff]
        %v2855 = vld [vmem:[#allocation10 + $0x118] sm:$0xff]
        %v2856 = vld [vmem:[#allocation10 + $0x120] sm:$0xff]
        %v2857 = vld [vmem:[#allocation10 + $0x128] sm:$0xff]
        %v2858 = vld [vmem:[#allocation10 + $0x130] sm:$0xff]
        %v2859 = vld [vmem:[#allocation10 + $0x138] sm:$0xff]
        %v2860 = vld [vmem:[#allocation10 + $0x140] sm:$0xff]
        %v2861 = vld [vmem:[#allocation10 + $0x148] sm:$0xff]
        %v2862 = vld [vmem:[#allocation10 + $0x150] sm:$0xff]
        %v2863 = vld [vmem:[#allocation10 + $0x158] sm:$0xff]
        %v2864 = vld [vmem:[#allocation10 + $0x160] sm:$0xff]
        %v2865 = vld [vmem:[#allocation10 + $0x168] sm:$0xff]
        %v2866 = vld [vmem:[#allocation10 + $0x170] sm:$0xff]
        %v2867 = vld [vmem:[#allocation10 + $0x178] sm:$0xff]
        %v2868 = vld [vmem:[#allocation10 + $0x180] sm:$0xff]
        %v2869 = vld [vmem:[#allocation10 + $0x188] sm:$0xff]
        %v2870 = vld [vmem:[#allocation10 + $0x190] sm:$0xff]
        %v2871 = vld [vmem:[#allocation10 + $0x198] sm:$0xff]
        %v2872 = vld [vmem:[#allocation10 + $0x1a0] sm:$0xff]
        %v2873 = vld [vmem:[#allocation10 + $0x1a8] sm:$0xff]
        %v2874 = vld [vmem:[#allocation10 + $0x1b0] sm:$0xff]
        %v2875 = vld [vmem:[#allocation10 + $0x1b8] sm:$0xff]
        %v2876 = vld [vmem:[#allocation10 + $0x1c0] sm:$0xff]
        %v2877 = vld [vmem:[#allocation10 + $0x1c8] sm:$0xff]
        %v2878 = vld [vmem:[#allocation10 + $0x1d0] sm:$0xff]
        %v2879 = vld [vmem:[#allocation10 + $0x1d8] sm:$0xff]
        %v2880 = vld [vmem:[#allocation10 + $0x1e0] sm:$0xff]
        %v2881 = vld [vmem:[#allocation10 + $0x1e8] sm:$0xff]
        %v2882 = vld [vmem:[#allocation10 + $0x1f0] sm:$0xff]
        %v2883 = vld [vmem:[#allocation10 + $0x1f8] sm:$0xff]
        %v2884 = vld [vmem:[#allocation10 + $0x200] sm:$0xff]
        %v2885 = vld [vmem:[#allocation10 + $0x208] sm:$0xff]
        %v2886 = vld [vmem:[#allocation10 + $0x210] sm:$0xff]
        %v2887 = vld [vmem:[#allocation10 + $0x218] sm:$0xff]
        %v2888 = vld [vmem:[#allocation10 + $0x220] sm:$0xff]
        %v2889 = vld [vmem:[#allocation10 + $0x228] sm:$0xff]
        %v2890 = vld [vmem:[#allocation10 + $0x230] sm:$0xff]
        %v2891 = vld [vmem:[#allocation10 + $0x238] sm:$0xff]
        %v2892 = vld [vmem:[#allocation10 + $0x240] sm:$0xff]
        %v2893 = vld [vmem:[#allocation10 + $0x248] sm:$0xff]
        %v2894 = vld [vmem:[#allocation10 + $0x250] sm:$0xff]
        %v2895 = vld [vmem:[#allocation10 + $0x258] sm:$0xff]
        %v2896 = vld [vmem:[#allocation10 + $0x260] sm:$0xff]
        %v2897 = vld [vmem:[#allocation10 + $0x268] sm:$0xff]
        %v2898 = vld [vmem:[#allocation10 + $0x270] sm:$0xff]
        %v2899 = vld [vmem:[#allocation10 + $0x278] sm:$0xff]
        %v2900 = vld [vmem:[#allocation10 + $0x280] sm:$0xff]
        %v2901 = vld [vmem:[#allocation10 + $0x288] sm:$0xff]
        %v2902 = vld [vmem:[#allocation10 + $0x290] sm:$0xff]
        %v2903 = vld [vmem:[#allocation10 + $0x298] sm:$0xff]
        %v2904 = vld [vmem:[#allocation10 + $0x2a0] sm:$0xff]
        %v2905 = vld [vmem:[#allocation10 + $0x2a8] sm:$0xff]
        %v2906 = vld [vmem:[#allocation10 + $0x2b0] sm:$0xff]
        %v2907 = vld [vmem:[#allocation10 + $0x2b8] sm:$0xff]
        %v2908 = vld [vmem:[#allocation10 + $0x2c0] sm:$0xff]
        %v2909 = vld [vmem:[#allocation10 + $0x2c8] sm:$0xff]
        %v2910 = vld [vmem:[#allocation10 + $0x2d0] sm:$0xff]
        %v2911 = vld [vmem:[#allocation10 + $0x2d8] sm:$0xff]
        %v2912 = vld [vmem:[#allocation10 + $0x2e0] sm:$0xff]
        %v2913 = vld [vmem:[#allocation10 + $0x2e8] sm:$0xff]
        %v2914 = vld [vmem:[#allocation10 + $0x2f0] sm:$0xff]
        %v2915 = vld [vmem:[#allocation10 + $0x2f8] sm:$0xff]
        %v2916 = vld [vmem:[#allocation10 + $0x300] sm:$0xff]
        %v2917 = vld [vmem:[#allocation10 + $0x308] sm:$0xff]
        %v2918 = vld [vmem:[#allocation10 + $0x310] sm:$0xff]
        %v2919 = vld [vmem:[#allocation10 + $0x318] sm:$0xff]
        %v2920 = vld [vmem:[#allocation10 + $0x320] sm:$0xff]
        %v2921 = vld [vmem:[#allocation10 + $0x328] sm:$0xff]
        %v2922 = vld [vmem:[#allocation10 + $0x330] sm:$0xff]
        %v2923 = vld [vmem:[#allocation10 + $0x338] sm:$0xff]
        %v2924 = vld [vmem:[#allocation10 + $0x340] sm:$0xff]
        %v2925 = vld [vmem:[#allocation10 + $0x348] sm:$0xff]
        %v2926 = vld [vmem:[#allocation10 + $0x350] sm:$0xff]
        %v2927 = vld [vmem:[#allocation10 + $0x358] sm:$0xff]
        %v2928 = vld [vmem:[#allocation10 + $0x360] sm:$0xff]
        %v2929 = vld [vmem:[#allocation10 + $0x368] sm:$0xff]
        %v2930 = vld [vmem:[#allocation10 + $0x370] sm:$0xff]
        %v2931 = vld [vmem:[#allocation10 + $0x378] sm:$0xff]
        %v2932 = vld [vmem:[#allocation10 + $0x380] sm:$0xff]
        %v2933 = vld [vmem:[#allocation10 + $0x388] sm:$0xff]
        %v2934 = vld [vmem:[#allocation10 + $0x390] sm:$0xff]
        %v2935 = vld [vmem:[#allocation10 + $0x398] sm:$0xff]
        %v2936 = vld [vmem:[#allocation10 + $0x3a0] sm:$0xff]
        %v2937 = vld [vmem:[#allocation10 + $0x3a8] sm:$0xff]
        %v2938 = vld [vmem:[#allocation10 + $0x3b0] sm:$0xff]
        %v2939 = vld [vmem:[#allocation10 + $0x3b8] sm:$0xff]
        %v2940 = vld [vmem:[#allocation10 + $0x3c0] sm:$0xff]
        %v2941 = vld [vmem:[#allocation10 + $0x3c8] sm:$0xff]
        %v2942 = vld [vmem:[#allocation10 + $0x3d0] sm:$0xff]
        %v2943 = vld [vmem:[#allocation10 + $0x3d8] sm:$0xff]
        %v2944 = vld [vmem:[#allocation10 + $0x3e0] sm:$0xff]
        %v2945 = vld [vmem:[#allocation10 + $0x3e8] sm:$0xff]
        %v2946 = vld [vmem:[#allocation10 + $0x3f0] sm:$0xff]
        %v2947 = vld [vmem:[#allocation10 + $0x3f8] sm:$0xff]
        %2948 = vmatprep.subr.mxu0 %v2881
        %2949 = vmatpush1.msra.mxu0 %v2880
        %2950 = vmatprep.subr.mxu0 %v2877
        %2951 = vmatpush1.msra.mxu0 %v2876
        %2952 = vmatprep.subr.mxu0 %v2873
        %2953 = vmatpush1.msra.mxu0 %v2872
        %2954 = vmatprep.subr.mxu0 %v2869
        %2955 = vmatpush1.msra.mxu0 %v2868
        %2956 = vmatprep.subr.mxu0 %v2865
        %2957 = vmatpush1.msra.mxu0 %v2864
        %2958 = vmatprep.subr.mxu0 %v2861
        %2959 = vmatpush1.msra.mxu0 %v2860
        %2960 = vmatprep.subr.mxu0 %v2857
        %2961 = vmatpush1.msra.mxu0 %v2856
        %2962 = vmatprep.subr.mxu0 %v2853
        %2963 = vmatpush1.msra.mxu0 %v2852
        %2964 = vmatprep.subr.mxu0 %v2849
        %2965 = vmatpush1.msra.mxu0 %v2848
        %2966 = vmatprep.subr.mxu0 %v2845
        %2967 = vmatpush1.msra.mxu0 %v2844
        %2968 = vmatprep.subr.mxu0 %v2841
        %2969 = vmatpush1.msra.mxu0 %v2840
        %2970 = vmatprep.subr.mxu0 %v2837
        %2971 = vmatpush1.msra.mxu0 %v2836
        %2972 = vmatprep.subr.mxu0 %v2833
        %2973 = vmatpush1.msra.mxu0 %v2832
        %2974 = vmatprep.subr.mxu0 %v2829
        %2975 = vmatpush1.msra.mxu0 %v2828
        %2976 = vmatprep.subr.mxu0 %v2825
        %2977 = vmatpush1.msra.mxu0 %v2824
        %2978 = vmatprep.subr.mxu0 %v2821
        %2979 = vmatpush1.msra.mxu0 %v2820
        %2980 = vmatprep.subr.mxu0 %v2945
        %2981 = vmatpush2.msra.mxu0 %v2944
        %2982 = vmatprep.subr.mxu0 %v2941
        %2983 = vmatpush2.msra.mxu0 %v2940
        %2984 = vmatprep.subr.mxu0 %v2937
        %2985 = vmatpush2.msra.mxu0 %v2936
        %2986 = vmatprep.subr.mxu0 %v2933
        %2987 = vmatpush2.msra.mxu0 %v2932
        %2988 = vmatprep.subr.mxu0 %v2929
        %2989 = vmatpush2.msra.mxu0 %v2928
        %2990 = vmatprep.subr.mxu0 %v2925
        %2991 = vmatpush2.msra.mxu0 %v2924
        %2992 = vmatprep.subr.mxu0 %v2921
        %2993 = vmatpush2.msra.mxu0 %v2920
        %2994 = vmatprep.subr.mxu0 %v2917
        %2995 = vmatpush2.msra.mxu0 %v2916
        %2996 = vmatprep.subr.mxu0 %v2913
        %2997 = vmatpush2.msra.mxu0 %v2912
        %2998 = vmatprep.subr.mxu0 %v2909
        %2999 = vmatpush2.msra.mxu0 %v2908
        %3000 = vmatprep.subr.mxu0 %v2905
        %3001 = vmatpush2.msra.mxu0 %v2904
        %3002 = vmatprep.subr.mxu0 %v2901
        %3003 = vmatpush2.msra.mxu0 %v2900
        %3004 = vmatprep.subr.mxu0 %v2897
        %3005 = vmatpush2.msra.mxu0 %v2896
        %3006 = vmatprep.subr.mxu0 %v2893
        %3007 = vmatpush2.msra.mxu0 %v2892
        %3008 = vmatprep.subr.mxu0 %v2889
        %3009 = vmatpush2.msra.mxu0 %v2888
        %3010 = vmatprep.subr.mxu0 %v2885
        %3011 = vmatpush2.msra.mxu0 %v2884
        %3012 = vmatprep.mubr.f32.mxu0 %v2813
        %3013 = vmatmul.mubr.f32.gmra.mxu0 %v2812
        %v3014 = vpop.f32.mrf.mxu0
        %v3015 = vadd.f32 0.0, %v3014
        %v3016 = vpop.f32.mrf.mxu0
        %v3017 = vadd.f32 0.0, %v3016
        %3018 = vdwg.mxu0
        %3019 = vmatprep.subr.mxu0 %v2883
        %3020 = vmatpush1.msra.mxu0 %v2882
        %3021 = vmatprep.subr.mxu0 %v2879
        %3022 = vmatpush1.msra.mxu0 %v2878
        %3023 = vmatprep.subr.mxu0 %v2875
        %3024 = vmatpush1.msra.mxu0 %v2874
        %3025 = vmatprep.subr.mxu0 %v2871
        %3026 = vmatpush1.msra.mxu0 %v2870
        %3027 = vmatprep.subr.mxu0 %v2867
        %3028 = vmatpush1.msra.mxu0 %v2866
        %3029 = vmatprep.subr.mxu0 %v2863
        %3030 = vmatpush1.msra.mxu0 %v2862
        %3031 = vmatprep.subr.mxu0 %v2859
        %3032 = vmatpush1.msra.mxu0 %v2858
        %3033 = vmatprep.subr.mxu0 %v2855
        %3034 = vmatpush1.msra.mxu0 %v2854
        %3035 = vmatprep.subr.mxu0 %v2851
        %3036 = vmatpush1.msra.mxu0 %v2850
        %3037 = vmatprep.subr.mxu0 %v2847
        %3038 = vmatpush1.msra.mxu0 %v2846
        %3039 = vmatprep.subr.mxu0 %v2843
        %3040 = vmatpush1.msra.mxu0 %v2842
        %3041 = vmatprep.subr.mxu0 %v2839
        %3042 = vmatpush1.msra.mxu0 %v2838
        %3043 = vmatprep.subr.mxu0 %v2835
        %3044 = vmatpush1.msra.mxu0 %v2834
        %3045 = vmatprep.subr.mxu0 %v2831
        %3046 = vmatpush1.msra.mxu0 %v2830
        %3047 = vmatprep.subr.mxu0 %v2827
        %3048 = vmatpush1.msra.mxu0 %v2826
        %3049 = vmatprep.subr.mxu0 %v2823
        %3050 = vmatpush1.msra.mxu0 %v2822
        %3051 = vmatprep.subr.mxu0 %v2947
        %3052 = vmatpush2.msra.mxu0 %v2946
        %3053 = vmatprep.subr.mxu0 %v2943
        %3054 = vmatpush2.msra.mxu0 %v2942
        %3055 = vmatprep.subr.mxu0 %v2939
        %3056 = vmatpush2.msra.mxu0 %v2938
        %3057 = vmatprep.subr.mxu0 %v2935
        %3058 = vmatpush2.msra.mxu0 %v2934
        %3059 = vmatprep.subr.mxu0 %v2931
        %3060 = vmatpush2.msra.mxu0 %v2930
        %3061 = vmatprep.subr.mxu0 %v2927
        %3062 = vmatpush2.msra.mxu0 %v2926
        %3063 = vmatprep.subr.mxu0 %v2923
        %3064 = vmatpush2.msra.mxu0 %v2922
        %3065 = vmatprep.subr.mxu0 %v2919
        %3066 = vmatpush2.msra.mxu0 %v2918
        %3067 = vmatprep.subr.mxu0 %v2915
        %3068 = vmatpush2.msra.mxu0 %v2914
        %3069 = vmatprep.subr.mxu0 %v2911
        %3070 = vmatpush2.msra.mxu0 %v2910
        %3071 = vmatprep.subr.mxu0 %v2907
        %3072 = vmatpush2.msra.mxu0 %v2906
        %3073 = vmatprep.subr.mxu0 %v2903
        %3074 = vmatpush2.msra.mxu0 %v2902
        %3075 = vmatprep.subr.mxu0 %v2899
        %3076 = vmatpush2.msra.mxu0 %v2898
        %3077 = vmatprep.subr.mxu0 %v2895
        %3078 = vmatpush2.msra.mxu0 %v2894
        %3079 = vmatprep.subr.mxu0 %v2891
        %3080 = vmatpush2.msra.mxu0 %v2890
        %3081 = vmatprep.subr.mxu0 %v2887
        %3082 = vmatpush2.msra.mxu0 %v2886
        %3083 = vmatprep.mubr.f32.mxu0 %v2813
        %3084 = vmatmul.mubr.f32.gmra.mxu0 %v2812
        %v3085 = vpop.f32.mrf.mxu0
        %v3086 = vadd.f32 0.0, %v3085
        %v3087 = vpop.f32.mrf.mxu0
        %v3088 = vadd.f32 0.0, %v3087
        %3089 = vdwg.mxu0
        %v3090 = vadd.f32 %v2816, %v3015
        %v3091 = vadd.f32 %v2817, %v3017
        %v3092 = vadd.f32 %v2818, %v3086
        %v3093 = vadd.f32 %v2819, %v3088
        %v3094 = vxor.u32 %v3090, 2147483648
        %v3095 = vmul.f32 %v3094, 1.442695
        %v3096 = vpow.pop %v3095
        %v3097 = vadd.f32 %v3096, 1.0
        %v3098 = vrcp.pop %v3097
        %v3099 = vmul.f32 1.0, %v3098
        %v3100 = vxor.u32 %v3091, 2147483648
        %v3101 = vmul.f32 %v3100, 1.442695
        %v3102 = vpow.pop %v3101
        %v3103 = vadd.f32 %v3102, 1.0
        %v3104 = vrcp.pop %v3103
        %v3105 = vmul.f32 1.0, %v3104
        %v3106 = vtanh.pop %v3092
        %v3107 = vxor.u32 %v3093, 2147483648
        %v3108 = vmul.f32 %v3107, 1.442695
        %v3109 = vpow.pop %v3108
        %v3110 = vadd.f32 %v3109, 1.0
        %v3111 = vrcp.pop %v3110
        %v3112 = vmul.f32 1.0, %v3111
        %v3113 = vmul.f32 %v3105, %v2814
        %v3114 = vmul.f32 %v3099, %v3106
        %v3115 = vadd.f32 %v3113, %v3114
        %v3116 = vtanh.pop %v3115
        %v3117 = vmul.f32 %v3112, %v3116
        %v3118 = vlaneseq
        %v3119 = vshrl.u32 %v3118, 7
        %v3120 = vsub.s32 0, %v3119
        %v3121 = vrot.slane %v3117, %v3120
        %3123 = vbcast.lane.b32.xlu0 %v3121, 256
        %v3124 = vpop.permute.xlu0 %3123
        %s3126 = sor.u32 256, 8
        %3127 = vbcast.lane.b32.xlu0 %v3121, %s3126
        %v3128 = vpop.permute.xlu0 %3127
        %s3130 = sor.u32 256, 16
        %3131 = vbcast.lane.b32.xlu0 %v3121, %s3130
        %v3132 = vpop.permute.xlu0 %3131
        %s3134 = sor.u32 256, 24
        %3135 = vbcast.lane.b32.xlu0 %v3121, %s3134
        %v3136 = vpop.permute.xlu0 %3135
        %s3138 = sor.u32 256, 32
        %3139 = vbcast.lane.b32.xlu0 %v3121, %s3138
        %v3140 = vpop.permute.xlu0 %3139
        %s3142 = sor.u32 256, 40
        %3143 = vbcast.lane.b32.xlu0 %v3121, %s3142
        %v3144 = vpop.permute.xlu0 %3143
        %s3146 = sor.u32 256, 48
        %3147 = vbcast.lane.b32.xlu0 %v3121, %s3146
        %v3148 = vpop.permute.xlu0 %3147
        %s3150 = sor.u32 256, 56
        %3151 = vbcast.lane.b32.xlu0 %v3121, %s3150
        %v3152 = vpop.permute.xlu0 %3151
        %s3154 = sor.u32 256, 64
        %3155 = vbcast.lane.b32.xlu0 %v3121, %s3154
        %v3156 = vpop.permute.xlu0 %3155
        %s3158 = sor.u32 256, 72
        %3159 = vbcast.lane.b32.xlu0 %v3121, %s3158
        %v3160 = vpop.permute.xlu0 %3159
        %s3162 = sor.u32 256, 80
        %3163 = vbcast.lane.b32.xlu0 %v3121, %s3162
        %v3164 = vpop.permute.xlu0 %3163
        %s3166 = sor.u32 256, 88
        %3167 = vbcast.lane.b32.xlu0 %v3121, %s3166
        %v3168 = vpop.permute.xlu0 %3167
        %s3170 = sor.u32 256, 96
        %3171 = vbcast.lane.b32.xlu0 %v3121, %s3170
        %v3172 = vpop.permute.xlu0 %3171
        %s3174 = sor.u32 256, 104
        %3175 = vbcast.lane.b32.xlu0 %v3121, %s3174
        %v3176 = vpop.permute.xlu0 %3175
        %s3178 = sor.u32 256, 112
        %3179 = vbcast.lane.b32.xlu0 %v3121, %s3178
        %v3180 = vpop.permute.xlu0 %3179
        %s3182 = sor.u32 256, 120
        %3183 = vbcast.lane.b32.xlu0 %v3121, %s3182
        %v3184 = vpop.permute.xlu0 %3183
        %v3185 = vlaneseq
        %v3186 = vshrl.u32 %v3185, 7
        %v3187 = vsub.s32 1, %v3186
        %v3188 = vrot.slane %v3117, %v3187
        %3190 = vbcast.lane.b32.xlu0 %v3188, 256
        %v3191 = vpop.permute.xlu0 %3190
        %s3193 = sor.u32 256, 8
        %3194 = vbcast.lane.b32.xlu0 %v3188, %s3193
        %v3195 = vpop.permute.xlu0 %3194
        %s3197 = sor.u32 256, 16
        %3198 = vbcast.lane.b32.xlu0 %v3188, %s3197
        %v3199 = vpop.permute.xlu0 %3198
        %s3201 = sor.u32 256, 24
        %3202 = vbcast.lane.b32.xlu0 %v3188, %s3201
        %v3203 = vpop.permute.xlu0 %3202
        %s3205 = sor.u32 256, 32
        %3206 = vbcast.lane.b32.xlu0 %v3188, %s3205
        %v3207 = vpop.permute.xlu0 %3206
        %s3209 = sor.u32 256, 40
        %3210 = vbcast.lane.b32.xlu0 %v3188, %s3209
        %v3211 = vpop.permute.xlu0 %3210
        %s3213 = sor.u32 256, 48
        %3214 = vbcast.lane.b32.xlu0 %v3188, %s3213
        %v3215 = vpop.permute.xlu0 %3214
        %s3217 = sor.u32 256, 56
        %3218 = vbcast.lane.b32.xlu0 %v3188, %s3217
        %v3219 = vpop.permute.xlu0 %3218
        %s3221 = sor.u32 256, 64
        %3222 = vbcast.lane.b32.xlu0 %v3188, %s3221
        %v3223 = vpop.permute.xlu0 %3222
        %s3225 = sor.u32 256, 72
        %3226 = vbcast.lane.b32.xlu0 %v3188, %s3225
        %v3227 = vpop.permute.xlu0 %3226
        %s3229 = sor.u32 256, 80
        %3230 = vbcast.lane.b32.xlu0 %v3188, %s3229
        %v3231 = vpop.permute.xlu0 %3230
        %s3233 = sor.u32 256, 88
        %3234 = vbcast.lane.b32.xlu0 %v3188, %s3233
        %v3235 = vpop.permute.xlu0 %3234
        %s3237 = sor.u32 256, 96
        %3238 = vbcast.lane.b32.xlu0 %v3188, %s3237
        %v3239 = vpop.permute.xlu0 %3238
        %s3241 = sor.u32 256, 104
        %3242 = vbcast.lane.b32.xlu0 %v3188, %s3241
        %v3243 = vpop.permute.xlu0 %3242
        %s3245 = sor.u32 256, 112
        %3246 = vbcast.lane.b32.xlu0 %v3188, %s3245
        %v3247 = vpop.permute.xlu0 %3246
        %s3249 = sor.u32 256, 120
        %3250 = vbcast.lane.b32.xlu0 %v3188, %s3249
        %v3251 = vpop.permute.xlu0 %3250
        %v3252 = vlaneseq
        %v3253 = vshrl.u32 %v3252, 7
        %v3254 = vsub.s32 2, %v3253
        %v3255 = vrot.slane %v3117, %v3254
        %3257 = vbcast.lane.b32.xlu0 %v3255, 256
        %v3258 = vpop.permute.xlu0 %3257
        %s3260 = sor.u32 256, 8
        %3261 = vbcast.lane.b32.xlu0 %v3255, %s3260
        %v3262 = vpop.permute.xlu0 %3261
        %s3264 = sor.u32 256, 16
        %3265 = vbcast.lane.b32.xlu0 %v3255, %s3264
        %v3266 = vpop.permute.xlu0 %3265
        %s3268 = sor.u32 256, 24
        %3269 = vbcast.lane.b32.xlu0 %v3255, %s3268
        %v3270 = vpop.permute.xlu0 %3269
        %s3272 = sor.u32 256, 32
        %3273 = vbcast.lane.b32.xlu0 %v3255, %s3272
        %v3274 = vpop.permute.xlu0 %3273
        %s3276 = sor.u32 256, 40
        %3277 = vbcast.lane.b32.xlu0 %v3255, %s3276
        %v3278 = vpop.permute.xlu0 %3277
        %s3280 = sor.u32 256, 48
        %3281 = vbcast.lane.b32.xlu0 %v3255, %s3280
        %v3282 = vpop.permute.xlu0 %3281
        %s3284 = sor.u32 256, 56
        %3285 = vbcast.lane.b32.xlu0 %v3255, %s3284
        %v3286 = vpop.permute.xlu0 %3285
        %s3288 = sor.u32 256, 64
        %3289 = vbcast.lane.b32.xlu0 %v3255, %s3288
        %v3290 = vpop.permute.xlu0 %3289
        %s3292 = sor.u32 256, 72
        %3293 = vbcast.lane.b32.xlu0 %v3255, %s3292
        %v3294 = vpop.permute.xlu0 %3293
        %s3296 = sor.u32 256, 80
        %3297 = vbcast.lane.b32.xlu0 %v3255, %s3296
        %v3298 = vpop.permute.xlu0 %3297
        %s3300 = sor.u32 256, 88
        %3301 = vbcast.lane.b32.xlu0 %v3255, %s3300
        %v3302 = vpop.permute.xlu0 %3301
        %s3304 = sor.u32 256, 96
        %3305 = vbcast.lane.b32.xlu0 %v3255, %s3304
        %v3306 = vpop.permute.xlu0 %3305
        %s3308 = sor.u32 256, 104
        %3309 = vbcast.lane.b32.xlu0 %v3255, %s3308
        %v3310 = vpop.permute.xlu0 %3309
        %s3312 = sor.u32 256, 112
        %3313 = vbcast.lane.b32.xlu0 %v3255, %s3312
        %v3314 = vpop.permute.xlu0 %3313
        %s3316 = sor.u32 256, 120
        %3317 = vbcast.lane.b32.xlu0 %v3255, %s3316
        %v3318 = vpop.permute.xlu0 %3317
        %v3319 = vlaneseq
        %v3320 = vshrl.u32 %v3319, 7
        %v3321 = vsub.s32 3, %v3320
        %v3322 = vrot.slane %v3117, %v3321
        %3324 = vbcast.lane.b32.xlu0 %v3322, 256
        %v3325 = vpop.permute.xlu0 %3324
        %s3327 = sor.u32 256, 8
        %3328 = vbcast.lane.b32.xlu0 %v3322, %s3327
        %v3329 = vpop.permute.xlu0 %3328
        %s3331 = sor.u32 256, 16
        %3332 = vbcast.lane.b32.xlu0 %v3322, %s3331
        %v3333 = vpop.permute.xlu0 %3332
        %s3335 = sor.u32 256, 24
        %3336 = vbcast.lane.b32.xlu0 %v3322, %s3335
        %v3337 = vpop.permute.xlu0 %3336
        %s3339 = sor.u32 256, 32
        %3340 = vbcast.lane.b32.xlu0 %v3322, %s3339
        %v3341 = vpop.permute.xlu0 %3340
        %s3343 = sor.u32 256, 40
        %3344 = vbcast.lane.b32.xlu0 %v3322, %s3343
        %v3345 = vpop.permute.xlu0 %3344
        %s3347 = sor.u32 256, 48
        %3348 = vbcast.lane.b32.xlu0 %v3322, %s3347
        %v3349 = vpop.permute.xlu0 %3348
        %s3351 = sor.u32 256, 56
        %3352 = vbcast.lane.b32.xlu0 %v3322, %s3351
        %v3353 = vpop.permute.xlu0 %3352
        %s3355 = sor.u32 256, 64
        %3356 = vbcast.lane.b32.xlu0 %v3322, %s3355
        %v3357 = vpop.permute.xlu0 %3356
        %s3359 = sor.u32 256, 72
        %3360 = vbcast.lane.b32.xlu0 %v3322, %s3359
        %v3361 = vpop.permute.xlu0 %3360
        %s3363 = sor.u32 256, 80
        %3364 = vbcast.lane.b32.xlu0 %v3322, %s3363
        %v3365 = vpop.permute.xlu0 %3364
        %s3367 = sor.u32 256, 88
        %3368 = vbcast.lane.b32.xlu0 %v3322, %s3367
        %v3369 = vpop.permute.xlu0 %3368
        %s3371 = sor.u32 256, 96
        %3372 = vbcast.lane.b32.xlu0 %v3322, %s3371
        %v3373 = vpop.permute.xlu0 %3372
        %s3375 = sor.u32 256, 104
        %3376 = vbcast.lane.b32.xlu0 %v3322, %s3375
        %v3377 = vpop.permute.xlu0 %3376
        %s3379 = sor.u32 256, 112
        %3380 = vbcast.lane.b32.xlu0 %v3322, %s3379
        %v3381 = vpop.permute.xlu0 %3380
        %s3383 = sor.u32 256, 120
        %3384 = vbcast.lane.b32.xlu0 %v3322, %s3383
        %v3385 = vpop.permute.xlu0 %3384
        %v3386 = vlaneseq
        %v3387 = vshrl.u32 %v3386, 7
        %v3388 = vsub.s32 4, %v3387
        %v3389 = vrot.slane %v3117, %v3388
        %3391 = vbcast.lane.b32.xlu0 %v3389, 256
        %v3392 = vpop.permute.xlu0 %3391
        %s3394 = sor.u32 256, 8
        %3395 = vbcast.lane.b32.xlu0 %v3389, %s3394
        %v3396 = vpop.permute.xlu0 %3395
        %s3398 = sor.u32 256, 16
        %3399 = vbcast.lane.b32.xlu0 %v3389, %s3398
        %v3400 = vpop.permute.xlu0 %3399
        %s3402 = sor.u32 256, 24
        %3403 = vbcast.lane.b32.xlu0 %v3389, %s3402
        %v3404 = vpop.permute.xlu0 %3403
        %s3406 = sor.u32 256, 32
        %3407 = vbcast.lane.b32.xlu0 %v3389, %s3406
        %v3408 = vpop.permute.xlu0 %3407
        %s3410 = sor.u32 256, 40
        %3411 = vbcast.lane.b32.xlu0 %v3389, %s3410
        %v3412 = vpop.permute.xlu0 %3411
        %s3414 = sor.u32 256, 48
        %3415 = vbcast.lane.b32.xlu0 %v3389, %s3414
        %v3416 = vpop.permute.xlu0 %3415
        %s3418 = sor.u32 256, 56
        %3419 = vbcast.lane.b32.xlu0 %v3389, %s3418
        %v3420 = vpop.permute.xlu0 %3419
        %s3422 = sor.u32 256, 64
        %3423 = vbcast.lane.b32.xlu0 %v3389, %s3422
        %v3424 = vpop.permute.xlu0 %3423
        %s3426 = sor.u32 256, 72
        %3427 = vbcast.lane.b32.xlu0 %v3389, %s3426
        %v3428 = vpop.permute.xlu0 %3427
        %s3430 = sor.u32 256, 80
        %3431 = vbcast.lane.b32.xlu0 %v3389, %s3430
        %v3432 = vpop.permute.xlu0 %3431
        %s3434 = sor.u32 256, 88
        %3435 = vbcast.lane.b32.xlu0 %v3389, %s3434
        %v3436 = vpop.permute.xlu0 %3435
        %s3438 = sor.u32 256, 96
        %3439 = vbcast.lane.b32.xlu0 %v3389, %s3438
        %v3440 = vpop.permute.xlu0 %3439
        %s3442 = sor.u32 256, 104
        %3443 = vbcast.lane.b32.xlu0 %v3389, %s3442
        %v3444 = vpop.permute.xlu0 %3443
        %s3446 = sor.u32 256, 112
        %3447 = vbcast.lane.b32.xlu0 %v3389, %s3446
        %v3448 = vpop.permute.xlu0 %3447
        %s3450 = sor.u32 256, 120
        %3451 = vbcast.lane.b32.xlu0 %v3389, %s3450
        %v3452 = vpop.permute.xlu0 %3451
        %v3453 = vlaneseq
        %v3454 = vshrl.u32 %v3453, 7
        %v3455 = vsub.s32 5, %v3454
        %v3456 = vrot.slane %v3117, %v3455
        %3458 = vbcast.lane.b32.xlu0 %v3456, 256
        %v3459 = vpop.permute.xlu0 %3458
        %s3461 = sor.u32 256, 8
        %3462 = vbcast.lane.b32.xlu0 %v3456, %s3461
        %v3463 = vpop.permute.xlu0 %3462
        %s3465 = sor.u32 256, 16
        %3466 = vbcast.lane.b32.xlu0 %v3456, %s3465
        %v3467 = vpop.permute.xlu0 %3466
        %s3469 = sor.u32 256, 24
        %3470 = vbcast.lane.b32.xlu0 %v3456, %s3469
        %v3471 = vpop.permute.xlu0 %3470
        %s3473 = sor.u32 256, 32
        %3474 = vbcast.lane.b32.xlu0 %v3456, %s3473
        %v3475 = vpop.permute.xlu0 %3474
        %s3477 = sor.u32 256, 40
        %3478 = vbcast.lane.b32.xlu0 %v3456, %s3477
        %v3479 = vpop.permute.xlu0 %3478
        %s3481 = sor.u32 256, 48
        %3482 = vbcast.lane.b32.xlu0 %v3456, %s3481
        %v3483 = vpop.permute.xlu0 %3482
        %s3485 = sor.u32 256, 56
        %3486 = vbcast.lane.b32.xlu0 %v3456, %s3485
        %v3487 = vpop.permute.xlu0 %3486
        %s3489 = sor.u32 256, 64
        %3490 = vbcast.lane.b32.xlu0 %v3456, %s3489
        %v3491 = vpop.permute.xlu0 %3490
        %s3493 = sor.u32 256, 72
        %3494 = vbcast.lane.b32.xlu0 %v3456, %s3493
        %v3495 = vpop.permute.xlu0 %3494
        %s3497 = sor.u32 256, 80
        %3498 = vbcast.lane.b32.xlu0 %v3456, %s3497
        %v3499 = vpop.permute.xlu0 %3498
        %s3501 = sor.u32 256, 88
        %3502 = vbcast.lane.b32.xlu0 %v3456, %s3501
        %v3503 = vpop.permute.xlu0 %3502
        %s3505 = sor.u32 256, 96
        %3506 = vbcast.lane.b32.xlu0 %v3456, %s3505
        %v3507 = vpop.permute.xlu0 %3506
        %s3509 = sor.u32 256, 104
        %3510 = vbcast.lane.b32.xlu0 %v3456, %s3509
        %v3511 = vpop.permute.xlu0 %3510
        %s3513 = sor.u32 256, 112
        %3514 = vbcast.lane.b32.xlu0 %v3456, %s3513
        %v3515 = vpop.permute.xlu0 %3514
        %s3517 = sor.u32 256, 120
        %3518 = vbcast.lane.b32.xlu0 %v3456, %s3517
        %v3519 = vpop.permute.xlu0 %3518
        %v3520 = vlaneseq
        %v3521 = vshrl.u32 %v3520, 7
        %v3522 = vsub.s32 6, %v3521
        %v3523 = vrot.slane %v3117, %v3522
        %3525 = vbcast.lane.b32.xlu0 %v3523, 256
        %v3526 = vpop.permute.xlu0 %3525
        %s3528 = sor.u32 256, 8
        %3529 = vbcast.lane.b32.xlu0 %v3523, %s3528
        %v3530 = vpop.permute.xlu0 %3529
        %s3532 = sor.u32 256, 16
        %3533 = vbcast.lane.b32.xlu0 %v3523, %s3532
        %v3534 = vpop.permute.xlu0 %3533
        %s3536 = sor.u32 256, 24
        %3537 = vbcast.lane.b32.xlu0 %v3523, %s3536
        %v3538 = vpop.permute.xlu0 %3537
        %s3540 = sor.u32 256, 32
        %3541 = vbcast.lane.b32.xlu0 %v3523, %s3540
        %v3542 = vpop.permute.xlu0 %3541
        %s3544 = sor.u32 256, 40
        %3545 = vbcast.lane.b32.xlu0 %v3523, %s3544
        %v3546 = vpop.permute.xlu0 %3545
        %s3548 = sor.u32 256, 48
        %3549 = vbcast.lane.b32.xlu0 %v3523, %s3548
        %v3550 = vpop.permute.xlu0 %3549
        %s3552 = sor.u32 256, 56
        %3553 = vbcast.lane.b32.xlu0 %v3523, %s3552
        %v3554 = vpop.permute.xlu0 %3553
        %s3556 = sor.u32 256, 64
        %3557 = vbcast.lane.b32.xlu0 %v3523, %s3556
        %v3558 = vpop.permute.xlu0 %3557
        %s3560 = sor.u32 256, 72
        %3561 = vbcast.lane.b32.xlu0 %v3523, %s3560
        %v3562 = vpop.permute.xlu0 %3561
        %s3564 = sor.u32 256, 80
        %3565 = vbcast.lane.b32.xlu0 %v3523, %s3564
        %v3566 = vpop.permute.xlu0 %3565
        %s3568 = sor.u32 256, 88
        %3569 = vbcast.lane.b32.xlu0 %v3523, %s3568
        %v3570 = vpop.permute.xlu0 %3569
        %s3572 = sor.u32 256, 96
        %3573 = vbcast.lane.b32.xlu0 %v3523, %s3572
        %v3574 = vpop.permute.xlu0 %3573
        %s3576 = sor.u32 256, 104
        %3577 = vbcast.lane.b32.xlu0 %v3523, %s3576
        %v3578 = vpop.permute.xlu0 %3577
        %s3580 = sor.u32 256, 112
        %3581 = vbcast.lane.b32.xlu0 %v3523, %s3580
        %v3582 = vpop.permute.xlu0 %3581
        %s3584 = sor.u32 256, 120
        %3585 = vbcast.lane.b32.xlu0 %v3523, %s3584
        %v3586 = vpop.permute.xlu0 %3585
        %v3587 = vlaneseq
        %v3588 = vshrl.u32 %v3587, 7
        %v3589 = vsub.s32 7, %v3588
        %v3590 = vrot.slane %v3117, %v3589
        %3592 = vbcast.lane.b32.xlu0 %v3590, 256
        %v3593 = vpop.permute.xlu0 %3592
        %s3595 = sor.u32 256, 8
        %3596 = vbcast.lane.b32.xlu0 %v3590, %s3595
        %v3597 = vpop.permute.xlu0 %3596
        %s3599 = sor.u32 256, 16
        %3600 = vbcast.lane.b32.xlu0 %v3590, %s3599
        %v3601 = vpop.permute.xlu0 %3600
        %s3603 = sor.u32 256, 24
        %3604 = vbcast.lane.b32.xlu0 %v3590, %s3603
        %v3605 = vpop.permute.xlu0 %3604
        %s3607 = sor.u32 256, 32
        %3608 = vbcast.lane.b32.xlu0 %v3590, %s3607
        %v3609 = vpop.permute.xlu0 %3608
        %s3611 = sor.u32 256, 40
        %3612 = vbcast.lane.b32.xlu0 %v3590, %s3611
        %v3613 = vpop.permute.xlu0 %3612
        %s3615 = sor.u32 256, 48
        %3616 = vbcast.lane.b32.xlu0 %v3590, %s3615
        %v3617 = vpop.permute.xlu0 %3616
        %s3619 = sor.u32 256, 56
        %3620 = vbcast.lane.b32.xlu0 %v3590, %s3619
        %v3621 = vpop.permute.xlu0 %3620
        %s3623 = sor.u32 256, 64
        %3624 = vbcast.lane.b32.xlu0 %v3590, %s3623
        %v3625 = vpop.permute.xlu0 %3624
        %s3627 = sor.u32 256, 72
        %3628 = vbcast.lane.b32.xlu0 %v3590, %s3627
        %v3629 = vpop.permute.xlu0 %3628
        %s3631 = sor.u32 256, 80
        %3632 = vbcast.lane.b32.xlu0 %v3590, %s3631
        %v3633 = vpop.permute.xlu0 %3632
        %s3635 = sor.u32 256, 88
        %3636 = vbcast.lane.b32.xlu0 %v3590, %s3635
        %v3637 = vpop.permute.xlu0 %3636
        %s3639 = sor.u32 256, 96
        %3640 = vbcast.lane.b32.xlu0 %v3590, %s3639
        %v3641 = vpop.permute.xlu0 %3640
        %s3643 = sor.u32 256, 104
        %3644 = vbcast.lane.b32.xlu0 %v3590, %s3643
        %v3645 = vpop.permute.xlu0 %3644
        %s3647 = sor.u32 256, 112
        %3648 = vbcast.lane.b32.xlu0 %v3590, %s3647
        %v3649 = vpop.permute.xlu0 %3648
        %s3651 = sor.u32 256, 120
        %3652 = vbcast.lane.b32.xlu0 %v3590, %s3651
        %v3653 = vpop.permute.xlu0 %3652
        %v3654 = vmul.f32 %v442, %v3124
        %v3655 = vmul.f32 %v443, %v3128
        %v3656 = vmul.f32 %v444, %v3132
        %v3657 = vmul.f32 %v445, %v3136
        %v3658 = vmul.f32 %v446, %v3140
        %v3659 = vmul.f32 %v447, %v3144
        %v3660 = vmul.f32 %v448, %v3148
        %v3661 = vmul.f32 %v449, %v3152
        %v3662 = vmul.f32 %v450, %v3156
        %v3663 = vmul.f32 %v451, %v3160
        %v3664 = vmul.f32 %v452, %v3164
        %v3665 = vmul.f32 %v453, %v3168
        %v3666 = vmul.f32 %v454, %v3172
        %v3667 = vmul.f32 %v455, %v3176
        %v3668 = vmul.f32 %v456, %v3180
        %v3669 = vmul.f32 %v457, %v3184
        %v3670 = vmul.f32 %v458, %v3191
        %v3671 = vmul.f32 %v459, %v3195
        %v3672 = vmul.f32 %v460, %v3199
        %v3673 = vmul.f32 %v461, %v3203
        %v3674 = vmul.f32 %v462, %v3207
        %v3675 = vmul.f32 %v463, %v3211
        %v3676 = vmul.f32 %v464, %v3215
        %v3677 = vmul.f32 %v465, %v3219
        %v3678 = vmul.f32 %v466, %v3223
        %v3679 = vmul.f32 %v467, %v3227
        %v3680 = vmul.f32 %v468, %v3231
        %v3681 = vmul.f32 %v469, %v3235
        %v3682 = vmul.f32 %v470, %v3239
        %v3683 = vmul.f32 %v471, %v3243
        %v3684 = vmul.f32 %v472, %v3247
        %v3685 = vmul.f32 %v473, %v3251
        %v3686 = vmul.f32 %v474, %v3258
        %v3687 = vmul.f32 %v475, %v3262
        %v3688 = vmul.f32 %v476, %v3266
        %v3689 = vmul.f32 %v477, %v3270
        %v3690 = vmul.f32 %v478, %v3274
        %v3691 = vmul.f32 %v479, %v3278
        %v3692 = vmul.f32 %v480, %v3282
        %v3693 = vmul.f32 %v481, %v3286
        %v3694 = vmul.f32 %v482, %v3290
        %v3695 = vmul.f32 %v483, %v3294
        %v3696 = vmul.f32 %v484, %v3298
        %v3697 = vmul.f32 %v485, %v3302
        %v3698 = vmul.f32 %v486, %v3306
        %v3699 = vmul.f32 %v487, %v3310
        %v3700 = vmul.f32 %v488, %v3314
        %v3701 = vmul.f32 %v489, %v3318
        %v3702 = vmul.f32 %v490, %v3325
        %v3703 = vmul.f32 %v491, %v3329
        %v3704 = vmul.f32 %v492, %v3333
        %v3705 = vmul.f32 %v493, %v3337
        %v3706 = vmul.f32 %v494, %v3341
        %v3707 = vmul.f32 %v495, %v3345
        %v3708 = vmul.f32 %v496, %v3349
        %v3709 = vmul.f32 %v497, %v3353
        %v3710 = vmul.f32 %v498, %v3357
        %v3711 = vmul.f32 %v499, %v3361
        %v3712 = vmul.f32 %v500, %v3365
        %v3713 = vmul.f32 %v501, %v3369
        %v3714 = vmul.f32 %v502, %v3373
        %v3715 = vmul.f32 %v503, %v3377
        %v3716 = vmul.f32 %v504, %v3381
        %v3717 = vmul.f32 %v505, %v3385
        %v3718 = vmul.f32 %v506, %v3392
        %v3719 = vmul.f32 %v507, %v3396
        %v3720 = vmul.f32 %v508, %v3400
        %v3721 = vmul.f32 %v509, %v3404
        %v3722 = vmul.f32 %v510, %v3408
        %v3723 = vmul.f32 %v511, %v3412
        %v3724 = vmul.f32 %v512, %v3416
        %v3725 = vmul.f32 %v513, %v3420
        %v3726 = vmul.f32 %v514, %v3424
        %v3727 = vmul.f32 %v515, %v3428
        %v3728 = vmul.f32 %v516, %v3432
        %v3729 = vmul.f32 %v517, %v3436
        %v3730 = vmul.f32 %v518, %v3440
        %v3731 = vmul.f32 %v519, %v3444
        %v3732 = vmul.f32 %v520, %v3448
        %v3733 = vmul.f32 %v521, %v3452
        %v3734 = vmul.f32 %v522, %v3459
        %v3735 = vmul.f32 %v523, %v3463
        %v3736 = vmul.f32 %v524, %v3467
        %v3737 = vmul.f32 %v525, %v3471
        %v3738 = vmul.f32 %v526, %v3475
        %v3739 = vmul.f32 %v527, %v3479
        %v3740 = vmul.f32 %v528, %v3483
        %v3741 = vmul.f32 %v529, %v3487
        %v3742 = vmul.f32 %v530, %v3491
        %v3743 = vmul.f32 %v531, %v3495
        %v3744 = vmul.f32 %v532, %v3499
        %v3745 = vmul.f32 %v533, %v3503
        %v3746 = vmul.f32 %v534, %v3507
        %v3747 = vmul.f32 %v535, %v3511
        %v3748 = vmul.f32 %v536, %v3515
        %v3749 = vmul.f32 %v537, %v3519
        %v3750 = vmul.f32 %v538, %v3526
        %v3751 = vmul.f32 %v539, %v3530
        %v3752 = vmul.f32 %v540, %v3534
        %v3753 = vmul.f32 %v541, %v3538
        %v3754 = vmul.f32 %v542, %v3542
        %v3755 = vmul.f32 %v543, %v3546
        %v3756 = vmul.f32 %v544, %v3550
        %v3757 = vmul.f32 %v545, %v3554
        %v3758 = vmul.f32 %v546, %v3558
        %v3759 = vmul.f32 %v547, %v3562
        %v3760 = vmul.f32 %v548, %v3566
        %v3761 = vmul.f32 %v549, %v3570
        %v3762 = vmul.f32 %v550, %v3574
        %v3763 = vmul.f32 %v551, %v3578
        %v3764 = vmul.f32 %v552, %v3582
        %v3765 = vmul.f32 %v553, %v3586
        %v3766 = vmul.f32 %v554, %v3593
        %v3767 = vmul.f32 %v555, %v3597
        %v3768 = vmul.f32 %v556, %v3601
        %v3769 = vmul.f32 %v557, %v3605
        %v3770 = vmul.f32 %v558, %v3609
        %v3771 = vmul.f32 %v559, %v3613
        %v3772 = vmul.f32 %v560, %v3617
        %v3773 = vmul.f32 %v561, %v3621
        %v3774 = vmul.f32 %v562, %v3625
        %v3775 = vmul.f32 %v563, %v3629
        %v3776 = vmul.f32 %v564, %v3633
        %v3777 = vmul.f32 %v565, %v3637
        %v3778 = vmul.f32 %v566, %v3641
        %v3779 = vmul.f32 %v567, %v3645
        %v3780 = vmul.f32 %v568, %v3649
        %v3781 = vmul.f32 %v569, %v3653
        %v3782 = vadd.f32 %v3654, %v3655
        %v3783 = vadd.f32 %v3782, %v3656
        %v3784 = vadd.f32 %v3783, %v3657
        %v3785 = vadd.f32 %v3784, %v3658
        %v3786 = vadd.f32 %v3785, %v3659
        %v3787 = vadd.f32 %v3786, %v3660
        %v3788 = vadd.f32 %v3787, %v3661
        %v3789 = vadd.f32 %v3788, %v3662
        %v3790 = vadd.f32 %v3789, %v3663
        %v3791 = vadd.f32 %v3790, %v3664
        %v3792 = vadd.f32 %v3791, %v3665
        %v3793 = vadd.f32 %v3792, %v3666
        %v3794 = vadd.f32 %v3793, %v3667
        %v3795 = vadd.f32 %v3794, %v3668
        %v3796 = vadd.f32 %v3795, %v3669
        %v3797 = vrot.slane %v3796, 4
        %v3798 = vadd.f32 %v3796, %v3797
        %v3799 = vrot.slane %v3798, 2
        %v3800 = vadd.f32 %v3798, %v3799
        %v3801 = vrot.slane %v3800, 1
        %v3802 = vadd.f32 %v3800, %v3801
        %v3803 = vadd.f32 %v3670, %v3671
        %v3804 = vadd.f32 %v3803, %v3672
        %v3805 = vadd.f32 %v3804, %v3673
        %v3806 = vadd.f32 %v3805, %v3674
        %v3807 = vadd.f32 %v3806, %v3675
        %v3808 = vadd.f32 %v3807, %v3676
        %v3809 = vadd.f32 %v3808, %v3677
        %v3810 = vadd.f32 %v3809, %v3678
        %v3811 = vadd.f32 %v3810, %v3679
        %v3812 = vadd.f32 %v3811, %v3680
        %v3813 = vadd.f32 %v3812, %v3681
        %v3814 = vadd.f32 %v3813, %v3682
        %v3815 = vadd.f32 %v3814, %v3683
        %v3816 = vadd.f32 %v3815, %v3684
        %v3817 = vadd.f32 %v3816, %v3685
        %v3818 = vrot.slane %v3817, 4
        %v3819 = vadd.f32 %v3817, %v3818
        %v3820 = vrot.slane %v3819, 2
        %v3821 = vadd.f32 %v3819, %v3820
        %v3822 = vrot.slane %v3821, 1
        %v3823 = vadd.f32 %v3821, %v3822
        %v3824 = vadd.f32 %v3686, %v3687
        %v3825 = vadd.f32 %v3824, %v3688
        %v3826 = vadd.f32 %v3825, %v3689
        %v3827 = vadd.f32 %v3826, %v3690
        %v3828 = vadd.f32 %v3827, %v3691
        %v3829 = vadd.f32 %v3828, %v3692
        %v3830 = vadd.f32 %v3829, %v3693
        %v3831 = vadd.f32 %v3830, %v3694
        %v3832 = vadd.f32 %v3831, %v3695
        %v3833 = vadd.f32 %v3832, %v3696
        %v3834 = vadd.f32 %v3833, %v3697
        %v3835 = vadd.f32 %v3834, %v3698
        %v3836 = vadd.f32 %v3835, %v3699
        %v3837 = vadd.f32 %v3836, %v3700
        %v3838 = vadd.f32 %v3837, %v3701
        %v3839 = vrot.slane %v3838, 4
        %v3840 = vadd.f32 %v3838, %v3839
        %v3841 = vrot.slane %v3840, 2
        %v3842 = vadd.f32 %v3840, %v3841
        %v3843 = vrot.slane %v3842, 1
        %v3844 = vadd.f32 %v3842, %v3843
        %v3845 = vadd.f32 %v3702, %v3703
        %v3846 = vadd.f32 %v3845, %v3704
        %v3847 = vadd.f32 %v3846, %v3705
        %v3848 = vadd.f32 %v3847, %v3706
        %v3849 = vadd.f32 %v3848, %v3707
        %v3850 = vadd.f32 %v3849, %v3708
        %v3851 = vadd.f32 %v3850, %v3709
        %v3852 = vadd.f32 %v3851, %v3710
        %v3853 = vadd.f32 %v3852, %v3711
        %v3854 = vadd.f32 %v3853, %v3712
        %v3855 = vadd.f32 %v3854, %v3713
        %v3856 = vadd.f32 %v3855, %v3714
        %v3857 = vadd.f32 %v3856, %v3715
        %v3858 = vadd.f32 %v3857, %v3716
        %v3859 = vadd.f32 %v3858, %v3717
        %v3860 = vrot.slane %v3859, 4
        %v3861 = vadd.f32 %v3859, %v3860
        %v3862 = vrot.slane %v3861, 2
        %v3863 = vadd.f32 %v3861, %v3862
        %v3864 = vrot.slane %v3863, 1
        %v3865 = vadd.f32 %v3863, %v3864
        %v3866 = vadd.f32 %v3718, %v3719
        %v3867 = vadd.f32 %v3866, %v3720
        %v3868 = vadd.f32 %v3867, %v3721
        %v3869 = vadd.f32 %v3868, %v3722
        %v3870 = vadd.f32 %v3869, %v3723
        %v3871 = vadd.f32 %v3870, %v3724
        %v3872 = vadd.f32 %v3871, %v3725
        %v3873 = vadd.f32 %v3872, %v3726
        %v3874 = vadd.f32 %v3873, %v3727
        %v3875 = vadd.f32 %v3874, %v3728
        %v3876 = vadd.f32 %v3875, %v3729
        %v3877 = vadd.f32 %v3876, %v3730
        %v3878 = vadd.f32 %v3877, %v3731
        %v3879 = vadd.f32 %v3878, %v3732
        %v3880 = vadd.f32 %v3879, %v3733
        %v3881 = vrot.slane %v3880, 4
        %v3882 = vadd.f32 %v3880, %v3881
        %v3883 = vrot.slane %v3882, 2
        %v3884 = vadd.f32 %v3882, %v3883
        %v3885 = vrot.slane %v3884, 1
        %v3886 = vadd.f32 %v3884, %v3885
        %v3887 = vadd.f32 %v3734, %v3735
        %v3888 = vadd.f32 %v3887, %v3736
        %v3889 = vadd.f32 %v3888, %v3737
        %v3890 = vadd.f32 %v3889, %v3738
        %v3891 = vadd.f32 %v3890, %v3739
        %v3892 = vadd.f32 %v3891, %v3740
        %v3893 = vadd.f32 %v3892, %v3741
        %v3894 = vadd.f32 %v3893, %v3742
        %v3895 = vadd.f32 %v3894, %v3743
        %v3896 = vadd.f32 %v3895, %v3744
        %v3897 = vadd.f32 %v3896, %v3745
        %v3898 = vadd.f32 %v3897, %v3746
        %v3899 = vadd.f32 %v3898, %v3747
        %v3900 = vadd.f32 %v3899, %v3748
        %v3901 = vadd.f32 %v3900, %v3749
        %v3902 = vrot.slane %v3901, 4
        %v3903 = vadd.f32 %v3901, %v3902
        %v3904 = vrot.slane %v3903, 2
        %v3905 = vadd.f32 %v3903, %v3904
        %v3906 = vrot.slane %v3905, 1
        %v3907 = vadd.f32 %v3905, %v3906
        %v3908 = vadd.f32 %v3750, %v3751
        %v3909 = vadd.f32 %v3908, %v3752
        %v3910 = vadd.f32 %v3909, %v3753
        %v3911 = vadd.f32 %v3910, %v3754
        %v3912 = vadd.f32 %v3911, %v3755
        %v3913 = vadd.f32 %v3912, %v3756
        %v3914 = vadd.f32 %v3913, %v3757
        %v3915 = vadd.f32 %v3914, %v3758
        %v3916 = vadd.f32 %v3915, %v3759
        %v3917 = vadd.f32 %v3916, %v3760
        %v3918 = vadd.f32 %v3917, %v3761
        %v3919 = vadd.f32 %v3918, %v3762
        %v3920 = vadd.f32 %v3919, %v3763
        %v3921 = vadd.f32 %v3920, %v3764
        %v3922 = vadd.f32 %v3921, %v3765
        %v3923 = vrot.slane %v3922, 4
        %v3924 = vadd.f32 %v3922, %v3923
        %v3925 = vrot.slane %v3924, 2
        %v3926 = vadd.f32 %v3924, %v3925
        %v3927 = vrot.slane %v3926, 1
        %v3928 = vadd.f32 %v3926, %v3927
        %v3929 = vadd.f32 %v3766, %v3767
        %v3930 = vadd.f32 %v3929, %v3768
        %v3931 = vadd.f32 %v3930, %v3769
        %v3932 = vadd.f32 %v3931, %v3770
        %v3933 = vadd.f32 %v3932, %v3771
        %v3934 = vadd.f32 %v3933, %v3772
        %v3935 = vadd.f32 %v3934, %v3773
        %v3936 = vadd.f32 %v3935, %v3774
        %v3937 = vadd.f32 %v3936, %v3775
        %v3938 = vadd.f32 %v3937, %v3776
        %v3939 = vadd.f32 %v3938, %v3777
        %v3940 = vadd.f32 %v3939, %v3778
        %v3941 = vadd.f32 %v3940, %v3779
        %v3942 = vadd.f32 %v3941, %v3780
        %v3943 = vadd.f32 %v3942, %v3781
        %v3944 = vrot.slane %v3943, 4
        %v3945 = vadd.f32 %v3943, %v3944
        %v3946 = vrot.slane %v3945, 2
        %v3947 = vadd.f32 %v3945, %v3946
        %v3948 = vrot.slane %v3947, 1
        %v3949 = vadd.f32 %v3947, %v3948
        %v3958 = vsel %vm1848, %v3823, %v3802
        %v3959 = vsel %vm1850, %v3844, %v3958
        %v3960 = vsel %vm1852, %v3865, %v3959
        %v3961 = vsel %vm1854, %v3886, %v3960
        %v3962 = vsel %vm1856, %v3907, %v3961
        %v3963 = vsel %vm1858, %v3928, %v3962
        %v3964 = vsel %vm1860, %v3949, %v3963
        %v3966 = vsel %vm1839, %v3964, -1e+30
        %3967 = vmax.xlane.f32.xlu0 %v3966
        %v3968 = vpop.xlane.xlu0 %3967
        %v3969 = vsub.f32 %v3966, %v3968
        %v3970 = vmul.f32 %v3969, 1.442695
        %v3971 = vpow.pop %v3970
        %3972 = vadd.xlane.f32.xlu0 %v3971
        %v3973 = vpop.xlane.xlu0 %3972
        %v3974 = vrcp.pop %v3973
        %v3975 = vmul.f32 %v3971, %v3974
        %v3976 = vlaneseq
        %v3977 = vshrl.u32 %v3976, 7
        %v3978 = vsub.s32 0, %v3977
        %v3979 = vrot.slane %v3975, %v3978
        %3981 = vbcast.lane.b32.xlu0 %v3979, 256
        %v3982 = vpop.permute.xlu0 %3981
        %s3984 = sor.u32 256, 8
        %3985 = vbcast.lane.b32.xlu0 %v3979, %s3984
        %v3986 = vpop.permute.xlu0 %3985
        %s3988 = sor.u32 256, 16
        %3989 = vbcast.lane.b32.xlu0 %v3979, %s3988
        %v3990 = vpop.permute.xlu0 %3989
        %s3992 = sor.u32 256, 24
        %3993 = vbcast.lane.b32.xlu0 %v3979, %s3992
        %v3994 = vpop.permute.xlu0 %3993
        %s3996 = sor.u32 256, 32
        %3997 = vbcast.lane.b32.xlu0 %v3979, %s3996
        %v3998 = vpop.permute.xlu0 %3997
        %s4000 = sor.u32 256, 40
        %4001 = vbcast.lane.b32.xlu0 %v3979, %s4000
        %v4002 = vpop.permute.xlu0 %4001
        %s4004 = sor.u32 256, 48
        %4005 = vbcast.lane.b32.xlu0 %v3979, %s4004
        %v4006 = vpop.permute.xlu0 %4005
        %s4008 = sor.u32 256, 56
        %4009 = vbcast.lane.b32.xlu0 %v3979, %s4008
        %v4010 = vpop.permute.xlu0 %4009
        %s4012 = sor.u32 256, 64
        %4013 = vbcast.lane.b32.xlu0 %v3979, %s4012
        %v4014 = vpop.permute.xlu0 %4013
        %s4016 = sor.u32 256, 72
        %4017 = vbcast.lane.b32.xlu0 %v3979, %s4016
        %v4018 = vpop.permute.xlu0 %4017
        %s4020 = sor.u32 256, 80
        %4021 = vbcast.lane.b32.xlu0 %v3979, %s4020
        %v4022 = vpop.permute.xlu0 %4021
        %s4024 = sor.u32 256, 88
        %4025 = vbcast.lane.b32.xlu0 %v3979, %s4024
        %v4026 = vpop.permute.xlu0 %4025
        %s4028 = sor.u32 256, 96
        %4029 = vbcast.lane.b32.xlu0 %v3979, %s4028
        %v4030 = vpop.permute.xlu0 %4029
        %s4032 = sor.u32 256, 104
        %4033 = vbcast.lane.b32.xlu0 %v3979, %s4032
        %v4034 = vpop.permute.xlu0 %4033
        %s4036 = sor.u32 256, 112
        %4037 = vbcast.lane.b32.xlu0 %v3979, %s4036
        %v4038 = vpop.permute.xlu0 %4037
        %s4040 = sor.u32 256, 120
        %4041 = vbcast.lane.b32.xlu0 %v3979, %s4040
        %v4042 = vpop.permute.xlu0 %4041
        %v4043 = vlaneseq
        %v4044 = vshrl.u32 %v4043, 7
        %v4045 = vsub.s32 1, %v4044
        %v4046 = vrot.slane %v3975, %v4045
        %4048 = vbcast.lane.b32.xlu0 %v4046, 256
        %v4049 = vpop.permute.xlu0 %4048
        %s4051 = sor.u32 256, 8
        %4052 = vbcast.lane.b32.xlu0 %v4046, %s4051
        %v4053 = vpop.permute.xlu0 %4052
        %s4055 = sor.u32 256, 16
        %4056 = vbcast.lane.b32.xlu0 %v4046, %s4055
        %v4057 = vpop.permute.xlu0 %4056
        %s4059 = sor.u32 256, 24
        %4060 = vbcast.lane.b32.xlu0 %v4046, %s4059
        %v4061 = vpop.permute.xlu0 %4060
        %s4063 = sor.u32 256, 32
        %4064 = vbcast.lane.b32.xlu0 %v4046, %s4063
        %v4065 = vpop.permute.xlu0 %4064
        %s4067 = sor.u32 256, 40
        %4068 = vbcast.lane.b32.xlu0 %v4046, %s4067
        %v4069 = vpop.permute.xlu0 %4068
        %s4071 = sor.u32 256, 48
        %4072 = vbcast.lane.b32.xlu0 %v4046, %s4071
        %v4073 = vpop.permute.xlu0 %4072
        %s4075 = sor.u32 256, 56
        %4076 = vbcast.lane.b32.xlu0 %v4046, %s4075
        %v4077 = vpop.permute.xlu0 %4076
        %s4079 = sor.u32 256, 64
        %4080 = vbcast.lane.b32.xlu0 %v4046, %s4079
        %v4081 = vpop.permute.xlu0 %4080
        %s4083 = sor.u32 256, 72
        %4084 = vbcast.lane.b32.xlu0 %v4046, %s4083
        %v4085 = vpop.permute.xlu0 %4084
        %s4087 = sor.u32 256, 80
        %4088 = vbcast.lane.b32.xlu0 %v4046, %s4087
        %v4089 = vpop.permute.xlu0 %4088
        %s4091 = sor.u32 256, 88
        %4092 = vbcast.lane.b32.xlu0 %v4046, %s4091
        %v4093 = vpop.permute.xlu0 %4092
        %s4095 = sor.u32 256, 96
        %4096 = vbcast.lane.b32.xlu0 %v4046, %s4095
        %v4097 = vpop.permute.xlu0 %4096
        %s4099 = sor.u32 256, 104
        %4100 = vbcast.lane.b32.xlu0 %v4046, %s4099
        %v4101 = vpop.permute.xlu0 %4100
        %s4103 = sor.u32 256, 112
        %4104 = vbcast.lane.b32.xlu0 %v4046, %s4103
        %v4105 = vpop.permute.xlu0 %4104
        %s4107 = sor.u32 256, 120
        %4108 = vbcast.lane.b32.xlu0 %v4046, %s4107
        %v4109 = vpop.permute.xlu0 %4108
        %v4110 = vlaneseq
        %v4111 = vshrl.u32 %v4110, 7
        %v4112 = vsub.s32 2, %v4111
        %v4113 = vrot.slane %v3975, %v4112
        %4115 = vbcast.lane.b32.xlu0 %v4113, 256
        %v4116 = vpop.permute.xlu0 %4115
        %s4118 = sor.u32 256, 8
        %4119 = vbcast.lane.b32.xlu0 %v4113, %s4118
        %v4120 = vpop.permute.xlu0 %4119
        %s4122 = sor.u32 256, 16
        %4123 = vbcast.lane.b32.xlu0 %v4113, %s4122
        %v4124 = vpop.permute.xlu0 %4123
        %s4126 = sor.u32 256, 24
        %4127 = vbcast.lane.b32.xlu0 %v4113, %s4126
        %v4128 = vpop.permute.xlu0 %4127
        %s4130 = sor.u32 256, 32
        %4131 = vbcast.lane.b32.xlu0 %v4113, %s4130
        %v4132 = vpop.permute.xlu0 %4131
        %s4134 = sor.u32 256, 40
        %4135 = vbcast.lane.b32.xlu0 %v4113, %s4134
        %v4136 = vpop.permute.xlu0 %4135
        %s4138 = sor.u32 256, 48
        %4139 = vbcast.lane.b32.xlu0 %v4113, %s4138
        %v4140 = vpop.permute.xlu0 %4139
        %s4142 = sor.u32 256, 56
        %4143 = vbcast.lane.b32.xlu0 %v4113, %s4142
        %v4144 = vpop.permute.xlu0 %4143
        %s4146 = sor.u32 256, 64
        %4147 = vbcast.lane.b32.xlu0 %v4113, %s4146
        %v4148 = vpop.permute.xlu0 %4147
        %s4150 = sor.u32 256, 72
        %4151 = vbcast.lane.b32.xlu0 %v4113, %s4150
        %v4152 = vpop.permute.xlu0 %4151
        %s4154 = sor.u32 256, 80
        %4155 = vbcast.lane.b32.xlu0 %v4113, %s4154
        %v4156 = vpop.permute.xlu0 %4155
        %s4158 = sor.u32 256, 88
        %4159 = vbcast.lane.b32.xlu0 %v4113, %s4158
        %v4160 = vpop.permute.xlu0 %4159
        %s4162 = sor.u32 256, 96
        %4163 = vbcast.lane.b32.xlu0 %v4113, %s4162
        %v4164 = vpop.permute.xlu0 %4163
        %s4166 = sor.u32 256, 104
        %4167 = vbcast.lane.b32.xlu0 %v4113, %s4166
        %v4168 = vpop.permute.xlu0 %4167
        %s4170 = sor.u32 256, 112
        %4171 = vbcast.lane.b32.xlu0 %v4113, %s4170
        %v4172 = vpop.permute.xlu0 %4171
        %s4174 = sor.u32 256, 120
        %4175 = vbcast.lane.b32.xlu0 %v4113, %s4174
        %v4176 = vpop.permute.xlu0 %4175
        %v4177 = vlaneseq
        %v4178 = vshrl.u32 %v4177, 7
        %v4179 = vsub.s32 3, %v4178
        %v4180 = vrot.slane %v3975, %v4179
        %4182 = vbcast.lane.b32.xlu0 %v4180, 256
        %v4183 = vpop.permute.xlu0 %4182
        %s4185 = sor.u32 256, 8
        %4186 = vbcast.lane.b32.xlu0 %v4180, %s4185
        %v4187 = vpop.permute.xlu0 %4186
        %s4189 = sor.u32 256, 16
        %4190 = vbcast.lane.b32.xlu0 %v4180, %s4189
        %v4191 = vpop.permute.xlu0 %4190
        %s4193 = sor.u32 256, 24
        %4194 = vbcast.lane.b32.xlu0 %v4180, %s4193
        %v4195 = vpop.permute.xlu0 %4194
        %s4197 = sor.u32 256, 32
        %4198 = vbcast.lane.b32.xlu0 %v4180, %s4197
        %v4199 = vpop.permute.xlu0 %4198
        %s4201 = sor.u32 256, 40
        %4202 = vbcast.lane.b32.xlu0 %v4180, %s4201
        %v4203 = vpop.permute.xlu0 %4202
        %s4205 = sor.u32 256, 48
        %4206 = vbcast.lane.b32.xlu0 %v4180, %s4205
        %v4207 = vpop.permute.xlu0 %4206
        %s4209 = sor.u32 256, 56
        %4210 = vbcast.lane.b32.xlu0 %v4180, %s4209
        %v4211 = vpop.permute.xlu0 %4210
        %s4213 = sor.u32 256, 64
        %4214 = vbcast.lane.b32.xlu0 %v4180, %s4213
        %v4215 = vpop.permute.xlu0 %4214
        %s4217 = sor.u32 256, 72
        %4218 = vbcast.lane.b32.xlu0 %v4180, %s4217
        %v4219 = vpop.permute.xlu0 %4218
        %s4221 = sor.u32 256, 80
        %4222 = vbcast.lane.b32.xlu0 %v4180, %s4221
        %v4223 = vpop.permute.xlu0 %4222
        %s4225 = sor.u32 256, 88
        %4226 = vbcast.lane.b32.xlu0 %v4180, %s4225
        %v4227 = vpop.permute.xlu0 %4226
        %s4229 = sor.u32 256, 96
        %4230 = vbcast.lane.b32.xlu0 %v4180, %s4229
        %v4231 = vpop.permute.xlu0 %4230
        %s4233 = sor.u32 256, 104
        %4234 = vbcast.lane.b32.xlu0 %v4180, %s4233
        %v4235 = vpop.permute.xlu0 %4234
        %s4237 = sor.u32 256, 112
        %4238 = vbcast.lane.b32.xlu0 %v4180, %s4237
        %v4239 = vpop.permute.xlu0 %4238
        %s4241 = sor.u32 256, 120
        %4242 = vbcast.lane.b32.xlu0 %v4180, %s4241
        %v4243 = vpop.permute.xlu0 %4242
        %v4244 = vlaneseq
        %v4245 = vshrl.u32 %v4244, 7
        %v4246 = vsub.s32 4, %v4245
        %v4247 = vrot.slane %v3975, %v4246
        %4249 = vbcast.lane.b32.xlu0 %v4247, 256
        %v4250 = vpop.permute.xlu0 %4249
        %s4252 = sor.u32 256, 8
        %4253 = vbcast.lane.b32.xlu0 %v4247, %s4252
        %v4254 = vpop.permute.xlu0 %4253
        %s4256 = sor.u32 256, 16
        %4257 = vbcast.lane.b32.xlu0 %v4247, %s4256
        %v4258 = vpop.permute.xlu0 %4257
        %s4260 = sor.u32 256, 24
        %4261 = vbcast.lane.b32.xlu0 %v4247, %s4260
        %v4262 = vpop.permute.xlu0 %4261
        %s4264 = sor.u32 256, 32
        %4265 = vbcast.lane.b32.xlu0 %v4247, %s4264
        %v4266 = vpop.permute.xlu0 %4265
        %s4268 = sor.u32 256, 40
        %4269 = vbcast.lane.b32.xlu0 %v4247, %s4268
        %v4270 = vpop.permute.xlu0 %4269
        %s4272 = sor.u32 256, 48
        %4273 = vbcast.lane.b32.xlu0 %v4247, %s4272
        %v4274 = vpop.permute.xlu0 %4273
        %s4276 = sor.u32 256, 56
        %4277 = vbcast.lane.b32.xlu0 %v4247, %s4276
        %v4278 = vpop.permute.xlu0 %4277
        %s4280 = sor.u32 256, 64
        %4281 = vbcast.lane.b32.xlu0 %v4247, %s4280
        %v4282 = vpop.permute.xlu0 %4281
        %s4284 = sor.u32 256, 72
        %4285 = vbcast.lane.b32.xlu0 %v4247, %s4284
        %v4286 = vpop.permute.xlu0 %4285
        %s4288 = sor.u32 256, 80
        %4289 = vbcast.lane.b32.xlu0 %v4247, %s4288
        %v4290 = vpop.permute.xlu0 %4289
        %s4292 = sor.u32 256, 88
        %4293 = vbcast.lane.b32.xlu0 %v4247, %s4292
        %v4294 = vpop.permute.xlu0 %4293
        %s4296 = sor.u32 256, 96
        %4297 = vbcast.lane.b32.xlu0 %v4247, %s4296
        %v4298 = vpop.permute.xlu0 %4297
        %s4300 = sor.u32 256, 104
        %4301 = vbcast.lane.b32.xlu0 %v4247, %s4300
        %v4302 = vpop.permute.xlu0 %4301
        %s4304 = sor.u32 256, 112
        %4305 = vbcast.lane.b32.xlu0 %v4247, %s4304
        %v4306 = vpop.permute.xlu0 %4305
        %s4308 = sor.u32 256, 120
        %4309 = vbcast.lane.b32.xlu0 %v4247, %s4308
        %v4310 = vpop.permute.xlu0 %4309
        %v4311 = vlaneseq
        %v4312 = vshrl.u32 %v4311, 7
        %v4313 = vsub.s32 5, %v4312
        %v4314 = vrot.slane %v3975, %v4313
        %4316 = vbcast.lane.b32.xlu0 %v4314, 256
        %v4317 = vpop.permute.xlu0 %4316
        %s4319 = sor.u32 256, 8
        %4320 = vbcast.lane.b32.xlu0 %v4314, %s4319
        %v4321 = vpop.permute.xlu0 %4320
        %s4323 = sor.u32 256, 16
        %4324 = vbcast.lane.b32.xlu0 %v4314, %s4323
        %v4325 = vpop.permute.xlu0 %4324
        %s4327 = sor.u32 256, 24
        %4328 = vbcast.lane.b32.xlu0 %v4314, %s4327
        %v4329 = vpop.permute.xlu0 %4328
        %s4331 = sor.u32 256, 32
        %4332 = vbcast.lane.b32.xlu0 %v4314, %s4331
        %v4333 = vpop.permute.xlu0 %4332
        %s4335 = sor.u32 256, 40
        %4336 = vbcast.lane.b32.xlu0 %v4314, %s4335
        %v4337 = vpop.permute.xlu0 %4336
        %s4339 = sor.u32 256, 48
        %4340 = vbcast.lane.b32.xlu0 %v4314, %s4339
        %v4341 = vpop.permute.xlu0 %4340
        %s4343 = sor.u32 256, 56
        %4344 = vbcast.lane.b32.xlu0 %v4314, %s4343
        %v4345 = vpop.permute.xlu0 %4344
        %s4347 = sor.u32 256, 64
        %4348 = vbcast.lane.b32.xlu0 %v4314, %s4347
        %v4349 = vpop.permute.xlu0 %4348
        %s4351 = sor.u32 256, 72
        %4352 = vbcast.lane.b32.xlu0 %v4314, %s4351
        %v4353 = vpop.permute.xlu0 %4352
        %s4355 = sor.u32 256, 80
        %4356 = vbcast.lane.b32.xlu0 %v4314, %s4355
        %v4357 = vpop.permute.xlu0 %4356
        %s4359 = sor.u32 256, 88
        %4360 = vbcast.lane.b32.xlu0 %v4314, %s4359
        %v4361 = vpop.permute.xlu0 %4360
        %s4363 = sor.u32 256, 96
        %4364 = vbcast.lane.b32.xlu0 %v4314, %s4363
        %v4365 = vpop.permute.xlu0 %4364
        %s4367 = sor.u32 256, 104
        %4368 = vbcast.lane.b32.xlu0 %v4314, %s4367
        %v4369 = vpop.permute.xlu0 %4368
        %s4371 = sor.u32 256, 112
        %4372 = vbcast.lane.b32.xlu0 %v4314, %s4371
        %v4373 = vpop.permute.xlu0 %4372
        %s4375 = sor.u32 256, 120
        %4376 = vbcast.lane.b32.xlu0 %v4314, %s4375
        %v4377 = vpop.permute.xlu0 %4376
        %v4378 = vlaneseq
        %v4379 = vshrl.u32 %v4378, 7
        %v4380 = vsub.s32 6, %v4379
        %v4381 = vrot.slane %v3975, %v4380
        %4383 = vbcast.lane.b32.xlu0 %v4381, 256
        %v4384 = vpop.permute.xlu0 %4383
        %s4386 = sor.u32 256, 8
        %4387 = vbcast.lane.b32.xlu0 %v4381, %s4386
        %v4388 = vpop.permute.xlu0 %4387
        %s4390 = sor.u32 256, 16
        %4391 = vbcast.lane.b32.xlu0 %v4381, %s4390
        %v4392 = vpop.permute.xlu0 %4391
        %s4394 = sor.u32 256, 24
        %4395 = vbcast.lane.b32.xlu0 %v4381, %s4394
        %v4396 = vpop.permute.xlu0 %4395
        %s4398 = sor.u32 256, 32
        %4399 = vbcast.lane.b32.xlu0 %v4381, %s4398
        %v4400 = vpop.permute.xlu0 %4399
        %s4402 = sor.u32 256, 40
        %4403 = vbcast.lane.b32.xlu0 %v4381, %s4402
        %v4404 = vpop.permute.xlu0 %4403
        %s4406 = sor.u32 256, 48
        %4407 = vbcast.lane.b32.xlu0 %v4381, %s4406
        %v4408 = vpop.permute.xlu0 %4407
        %s4410 = sor.u32 256, 56
        %4411 = vbcast.lane.b32.xlu0 %v4381, %s4410
        %v4412 = vpop.permute.xlu0 %4411
        %s4414 = sor.u32 256, 64
        %4415 = vbcast.lane.b32.xlu0 %v4381, %s4414
        %v4416 = vpop.permute.xlu0 %4415
        %s4418 = sor.u32 256, 72
        %4419 = vbcast.lane.b32.xlu0 %v4381, %s4418
        %v4420 = vpop.permute.xlu0 %4419
        %s4422 = sor.u32 256, 80
        %4423 = vbcast.lane.b32.xlu0 %v4381, %s4422
        %v4424 = vpop.permute.xlu0 %4423
        %s4426 = sor.u32 256, 88
        %4427 = vbcast.lane.b32.xlu0 %v4381, %s4426
        %v4428 = vpop.permute.xlu0 %4427
        %s4430 = sor.u32 256, 96
        %4431 = vbcast.lane.b32.xlu0 %v4381, %s4430
        %v4432 = vpop.permute.xlu0 %4431
        %s4434 = sor.u32 256, 104
        %4435 = vbcast.lane.b32.xlu0 %v4381, %s4434
        %v4436 = vpop.permute.xlu0 %4435
        %s4438 = sor.u32 256, 112
        %4439 = vbcast.lane.b32.xlu0 %v4381, %s4438
        %v4440 = vpop.permute.xlu0 %4439
        %s4442 = sor.u32 256, 120
        %4443 = vbcast.lane.b32.xlu0 %v4381, %s4442
        %v4444 = vpop.permute.xlu0 %4443
        %v4445 = vlaneseq
        %v4446 = vshrl.u32 %v4445, 7
        %v4447 = vsub.s32 7, %v4446
        %v4448 = vrot.slane %v3975, %v4447
        %4450 = vbcast.lane.b32.xlu0 %v4448, 256
        %v4451 = vpop.permute.xlu0 %4450
        %s4453 = sor.u32 256, 8
        %4454 = vbcast.lane.b32.xlu0 %v4448, %s4453
        %v4455 = vpop.permute.xlu0 %4454
        %s4457 = sor.u32 256, 16
        %4458 = vbcast.lane.b32.xlu0 %v4448, %s4457
        %v4459 = vpop.permute.xlu0 %4458
        %s4461 = sor.u32 256, 24
        %4462 = vbcast.lane.b32.xlu0 %v4448, %s4461
        %v4463 = vpop.permute.xlu0 %4462
        %s4465 = sor.u32 256, 32
        %4466 = vbcast.lane.b32.xlu0 %v4448, %s4465
        %v4467 = vpop.permute.xlu0 %4466
        %s4469 = sor.u32 256, 40
        %4470 = vbcast.lane.b32.xlu0 %v4448, %s4469
        %v4471 = vpop.permute.xlu0 %4470
        %s4473 = sor.u32 256, 48
        %4474 = vbcast.lane.b32.xlu0 %v4448, %s4473
        %v4475 = vpop.permute.xlu0 %4474
        %s4477 = sor.u32 256, 56
        %4478 = vbcast.lane.b32.xlu0 %v4448, %s4477
        %v4479 = vpop.permute.xlu0 %4478
        %s4481 = sor.u32 256, 64
        %4482 = vbcast.lane.b32.xlu0 %v4448, %s4481
        %v4483 = vpop.permute.xlu0 %4482
        %s4485 = sor.u32 256, 72
        %4486 = vbcast.lane.b32.xlu0 %v4448, %s4485
        %v4487 = vpop.permute.xlu0 %4486
        %s4489 = sor.u32 256, 80
        %4490 = vbcast.lane.b32.xlu0 %v4448, %s4489
        %v4491 = vpop.permute.xlu0 %4490
        %s4493 = sor.u32 256, 88
        %4494 = vbcast.lane.b32.xlu0 %v4448, %s4493
        %v4495 = vpop.permute.xlu0 %4494
        %s4497 = sor.u32 256, 96
        %4498 = vbcast.lane.b32.xlu0 %v4448, %s4497
        %v4499 = vpop.permute.xlu0 %4498
        %s4501 = sor.u32 256, 104
        %4502 = vbcast.lane.b32.xlu0 %v4448, %s4501
        %v4503 = vpop.permute.xlu0 %4502
        %s4505 = sor.u32 256, 112
        %4506 = vbcast.lane.b32.xlu0 %v4448, %s4505
        %v4507 = vpop.permute.xlu0 %4506
        %s4509 = sor.u32 256, 120
        %4510 = vbcast.lane.b32.xlu0 %v4448, %s4509
        %v4511 = vpop.permute.xlu0 %4510
        %v4512 = vmul.f32 %v570, %v3982
        %v4513 = vmul.f32 %v571, %v3986
        %v4514 = vmul.f32 %v572, %v3990
        %v4515 = vmul.f32 %v573, %v3994
        %v4516 = vmul.f32 %v574, %v3998
        %v4517 = vmul.f32 %v575, %v4002
        %v4518 = vmul.f32 %v576, %v4006
        %v4519 = vmul.f32 %v577, %v4010
        %v4520 = vmul.f32 %v578, %v4014
        %v4521 = vmul.f32 %v579, %v4018
        %v4522 = vmul.f32 %v580, %v4022
        %v4523 = vmul.f32 %v581, %v4026
        %v4524 = vmul.f32 %v582, %v4030
        %v4525 = vmul.f32 %v583, %v4034
        %v4526 = vmul.f32 %v584, %v4038
        %v4527 = vmul.f32 %v585, %v4042
        %v4528 = vmul.f32 %v586, %v4049
        %v4529 = vmul.f32 %v587, %v4053
        %v4530 = vmul.f32 %v588, %v4057
        %v4531 = vmul.f32 %v589, %v4061
        %v4532 = vmul.f32 %v590, %v4065
        %v4533 = vmul.f32 %v591, %v4069
        %v4534 = vmul.f32 %v592, %v4073
        %v4535 = vmul.f32 %v593, %v4077
        %v4536 = vmul.f32 %v594, %v4081
        %v4537 = vmul.f32 %v595, %v4085
        %v4538 = vmul.f32 %v596, %v4089
        %v4539 = vmul.f32 %v597, %v4093
        %v4540 = vmul.f32 %v598, %v4097
        %v4541 = vmul.f32 %v599, %v4101
        %v4542 = vmul.f32 %v600, %v4105
        %v4543 = vmul.f32 %v601, %v4109
        %v4544 = vmul.f32 %v602, %v4116
        %v4545 = vmul.f32 %v603, %v4120
        %v4546 = vmul.f32 %v604, %v4124
        %v4547 = vmul.f32 %v605, %v4128
        %v4548 = vmul.f32 %v606, %v4132
        %v4549 = vmul.f32 %v607, %v4136
        %v4550 = vmul.f32 %v608, %v4140
        %v4551 = vmul.f32 %v609, %v4144
        %v4552 = vmul.f32 %v610, %v4148
        %v4553 = vmul.f32 %v611, %v4152
        %v4554 = vmul.f32 %v612, %v4156
        %v4555 = vmul.f32 %v613, %v4160
        %v4556 = vmul.f32 %v614, %v4164
        %v4557 = vmul.f32 %v615, %v4168
        %v4558 = vmul.f32 %v616, %v4172
        %v4559 = vmul.f32 %v617, %v4176
        %v4560 = vmul.f32 %v618, %v4183
        %v4561 = vmul.f32 %v619, %v4187
        %v4562 = vmul.f32 %v620, %v4191
        %v4563 = vmul.f32 %v621, %v4195
        %v4564 = vmul.f32 %v622, %v4199
        %v4565 = vmul.f32 %v623, %v4203
        %v4566 = vmul.f32 %v624, %v4207
        %v4567 = vmul.f32 %v625, %v4211
        %v4568 = vmul.f32 %v626, %v4215
        %v4569 = vmul.f32 %v627, %v4219
        %v4570 = vmul.f32 %v628, %v4223
        %v4571 = vmul.f32 %v629, %v4227
        %v4572 = vmul.f32 %v630, %v4231
        %v4573 = vmul.f32 %v631, %v4235
        %v4574 = vmul.f32 %v632, %v4239
        %v4575 = vmul.f32 %v633, %v4243
        %v4576 = vmul.f32 %v634, %v4250
        %v4577 = vmul.f32 %v635, %v4254
        %v4578 = vmul.f32 %v636, %v4258
        %v4579 = vmul.f32 %v637, %v4262
        %v4580 = vmul.f32 %v638, %v4266
        %v4581 = vmul.f32 %v639, %v4270
        %v4582 = vmul.f32 %v640, %v4274
        %v4583 = vmul.f32 %v641, %v4278
        %v4584 = vmul.f32 %v642, %v4282
        %v4585 = vmul.f32 %v643, %v4286
        %v4586 = vmul.f32 %v644, %v4290
        %v4587 = vmul.f32 %v645, %v4294
        %v4588 = vmul.f32 %v646, %v4298
        %v4589 = vmul.f32 %v647, %v4302
        %v4590 = vmul.f32 %v648, %v4306
        %v4591 = vmul.f32 %v649, %v4310
        %v4592 = vmul.f32 %v650, %v4317
        %v4593 = vmul.f32 %v651, %v4321
        %v4594 = vmul.f32 %v652, %v4325
        %v4595 = vmul.f32 %v653, %v4329
        %v4596 = vmul.f32 %v654, %v4333
        %v4597 = vmul.f32 %v655, %v4337
        %v4598 = vmul.f32 %v656, %v4341
        %v4599 = vmul.f32 %v657, %v4345
        %v4600 = vmul.f32 %v658, %v4349
        %v4601 = vmul.f32 %v659, %v4353
        %v4602 = vmul.f32 %v660, %v4357
        %v4603 = vmul.f32 %v661, %v4361
        %v4604 = vmul.f32 %v662, %v4365
        %v4605 = vmul.f32 %v663, %v4369
        %v4606 = vmul.f32 %v664, %v4373
        %v4607 = vmul.f32 %v665, %v4377
        %v4608 = vmul.f32 %v666, %v4384
        %v4609 = vmul.f32 %v667, %v4388
        %v4610 = vmul.f32 %v668, %v4392
        %v4611 = vmul.f32 %v669, %v4396
        %v4612 = vmul.f32 %v670, %v4400
        %v4613 = vmul.f32 %v671, %v4404
        %v4614 = vmul.f32 %v672, %v4408
        %v4615 = vmul.f32 %v673, %v4412
        %v4616 = vmul.f32 %v674, %v4416
        %v4617 = vmul.f32 %v675, %v4420
        %v4618 = vmul.f32 %v676, %v4424
        %v4619 = vmul.f32 %v677, %v4428
        %v4620 = vmul.f32 %v678, %v4432
        %v4621 = vmul.f32 %v679, %v4436
        %v4622 = vmul.f32 %v680, %v4440
        %v4623 = vmul.f32 %v681, %v4444
        %v4624 = vmul.f32 %v682, %v4451
        %v4625 = vmul.f32 %v683, %v4455
        %v4626 = vmul.f32 %v684, %v4459
        %v4627 = vmul.f32 %v685, %v4463
        %v4628 = vmul.f32 %v686, %v4467
        %v4629 = vmul.f32 %v687, %v4471
        %v4630 = vmul.f32 %v688, %v4475
        %v4631 = vmul.f32 %v689, %v4479
        %v4632 = vmul.f32 %v690, %v4483
        %v4633 = vmul.f32 %v691, %v4487
        %v4634 = vmul.f32 %v692, %v4491
        %v4635 = vmul.f32 %v693, %v4495
        %v4636 = vmul.f32 %v694, %v4499
        %v4637 = vmul.f32 %v695, %v4503
        %v4638 = vmul.f32 %v696, %v4507
        %v4639 = vmul.f32 %v697, %v4511
        %v4640 = vadd.f32 %v4512, %v4513
        %v4641 = vadd.f32 %v4640, %v4514
        %v4642 = vadd.f32 %v4641, %v4515
        %v4643 = vadd.f32 %v4642, %v4516
        %v4644 = vadd.f32 %v4643, %v4517
        %v4645 = vadd.f32 %v4644, %v4518
        %v4646 = vadd.f32 %v4645, %v4519
        %v4647 = vadd.f32 %v4646, %v4520
        %v4648 = vadd.f32 %v4647, %v4521
        %v4649 = vadd.f32 %v4648, %v4522
        %v4650 = vadd.f32 %v4649, %v4523
        %v4651 = vadd.f32 %v4650, %v4524
        %v4652 = vadd.f32 %v4651, %v4525
        %v4653 = vadd.f32 %v4652, %v4526
        %v4654 = vadd.f32 %v4653, %v4527
        %v4655 = vrot.slane %v4654, 4
        %v4656 = vadd.f32 %v4654, %v4655
        %v4657 = vrot.slane %v4656, 2
        %v4658 = vadd.f32 %v4656, %v4657
        %v4659 = vrot.slane %v4658, 1
        %v4660 = vadd.f32 %v4658, %v4659
        %v4661 = vadd.f32 %v4528, %v4529
        %v4662 = vadd.f32 %v4661, %v4530
        %v4663 = vadd.f32 %v4662, %v4531
        %v4664 = vadd.f32 %v4663, %v4532
        %v4665 = vadd.f32 %v4664, %v4533
        %v4666 = vadd.f32 %v4665, %v4534
        %v4667 = vadd.f32 %v4666, %v4535
        %v4668 = vadd.f32 %v4667, %v4536
        %v4669 = vadd.f32 %v4668, %v4537
        %v4670 = vadd.f32 %v4669, %v4538
        %v4671 = vadd.f32 %v4670, %v4539
        %v4672 = vadd.f32 %v4671, %v4540
        %v4673 = vadd.f32 %v4672, %v4541
        %v4674 = vadd.f32 %v4673, %v4542
        %v4675 = vadd.f32 %v4674, %v4543
        %v4676 = vrot.slane %v4675, 4
        %v4677 = vadd.f32 %v4675, %v4676
        %v4678 = vrot.slane %v4677, 2
        %v4679 = vadd.f32 %v4677, %v4678
        %v4680 = vrot.slane %v4679, 1
        %v4681 = vadd.f32 %v4679, %v4680
        %v4682 = vadd.f32 %v4544, %v4545
        %v4683 = vadd.f32 %v4682, %v4546
        %v4684 = vadd.f32 %v4683, %v4547
        %v4685 = vadd.f32 %v4684, %v4548
        %v4686 = vadd.f32 %v4685, %v4549
        %v4687 = vadd.f32 %v4686, %v4550
        %v4688 = vadd.f32 %v4687, %v4551
        %v4689 = vadd.f32 %v4688, %v4552
        %v4690 = vadd.f32 %v4689, %v4553
        %v4691 = vadd.f32 %v4690, %v4554
        %v4692 = vadd.f32 %v4691, %v4555
        %v4693 = vadd.f32 %v4692, %v4556
        %v4694 = vadd.f32 %v4693, %v4557
        %v4695 = vadd.f32 %v4694, %v4558
        %v4696 = vadd.f32 %v4695, %v4559
        %v4697 = vrot.slane %v4696, 4
        %v4698 = vadd.f32 %v4696, %v4697
        %v4699 = vrot.slane %v4698, 2
        %v4700 = vadd.f32 %v4698, %v4699
        %v4701 = vrot.slane %v4700, 1
        %v4702 = vadd.f32 %v4700, %v4701
        %v4703 = vadd.f32 %v4560, %v4561
        %v4704 = vadd.f32 %v4703, %v4562
        %v4705 = vadd.f32 %v4704, %v4563
        %v4706 = vadd.f32 %v4705, %v4564
        %v4707 = vadd.f32 %v4706, %v4565
        %v4708 = vadd.f32 %v4707, %v4566
        %v4709 = vadd.f32 %v4708, %v4567
        %v4710 = vadd.f32 %v4709, %v4568
        %v4711 = vadd.f32 %v4710, %v4569
        %v4712 = vadd.f32 %v4711, %v4570
        %v4713 = vadd.f32 %v4712, %v4571
        %v4714 = vadd.f32 %v4713, %v4572
        %v4715 = vadd.f32 %v4714, %v4573
        %v4716 = vadd.f32 %v4715, %v4574
        %v4717 = vadd.f32 %v4716, %v4575
        %v4718 = vrot.slane %v4717, 4
        %v4719 = vadd.f32 %v4717, %v4718
        %v4720 = vrot.slane %v4719, 2
        %v4721 = vadd.f32 %v4719, %v4720
        %v4722 = vrot.slane %v4721, 1
        %v4723 = vadd.f32 %v4721, %v4722
        %v4724 = vadd.f32 %v4576, %v4577
        %v4725 = vadd.f32 %v4724, %v4578
        %v4726 = vadd.f32 %v4725, %v4579
        %v4727 = vadd.f32 %v4726, %v4580
        %v4728 = vadd.f32 %v4727, %v4581
        %v4729 = vadd.f32 %v4728, %v4582
        %v4730 = vadd.f32 %v4729, %v4583
        %v4731 = vadd.f32 %v4730, %v4584
        %v4732 = vadd.f32 %v4731, %v4585
        %v4733 = vadd.f32 %v4732, %v4586
        %v4734 = vadd.f32 %v4733, %v4587
        %v4735 = vadd.f32 %v4734, %v4588
        %v4736 = vadd.f32 %v4735, %v4589
        %v4737 = vadd.f32 %v4736, %v4590
        %v4738 = vadd.f32 %v4737, %v4591
        %v4739 = vrot.slane %v4738, 4
        %v4740 = vadd.f32 %v4738, %v4739
        %v4741 = vrot.slane %v4740, 2
        %v4742 = vadd.f32 %v4740, %v4741
        %v4743 = vrot.slane %v4742, 1
        %v4744 = vadd.f32 %v4742, %v4743
        %v4745 = vadd.f32 %v4592, %v4593
        %v4746 = vadd.f32 %v4745, %v4594
        %v4747 = vadd.f32 %v4746, %v4595
        %v4748 = vadd.f32 %v4747, %v4596
        %v4749 = vadd.f32 %v4748, %v4597
        %v4750 = vadd.f32 %v4749, %v4598
        %v4751 = vadd.f32 %v4750, %v4599
        %v4752 = vadd.f32 %v4751, %v4600
        %v4753 = vadd.f32 %v4752, %v4601
        %v4754 = vadd.f32 %v4753, %v4602
        %v4755 = vadd.f32 %v4754, %v4603
        %v4756 = vadd.f32 %v4755, %v4604
        %v4757 = vadd.f32 %v4756, %v4605
        %v4758 = vadd.f32 %v4757, %v4606
        %v4759 = vadd.f32 %v4758, %v4607
        %v4760 = vrot.slane %v4759, 4
        %v4761 = vadd.f32 %v4759, %v4760
        %v4762 = vrot.slane %v4761, 2
        %v4763 = vadd.f32 %v4761, %v4762
        %v4764 = vrot.slane %v4763, 1
        %v4765 = vadd.f32 %v4763, %v4764
        %v4766 = vadd.f32 %v4608, %v4609
        %v4767 = vadd.f32 %v4766, %v4610
        %v4768 = vadd.f32 %v4767, %v4611
        %v4769 = vadd.f32 %v4768, %v4612
        %v4770 = vadd.f32 %v4769, %v4613
        %v4771 = vadd.f32 %v4770, %v4614
        %v4772 = vadd.f32 %v4771, %v4615
        %v4773 = vadd.f32 %v4772, %v4616
        %v4774 = vadd.f32 %v4773, %v4617
        %v4775 = vadd.f32 %v4774, %v4618
        %v4776 = vadd.f32 %v4775, %v4619
        %v4777 = vadd.f32 %v4776, %v4620
        %v4778 = vadd.f32 %v4777, %v4621
        %v4779 = vadd.f32 %v4778, %v4622
        %v4780 = vadd.f32 %v4779, %v4623
        %v4781 = vrot.slane %v4780, 4
        %v4782 = vadd.f32 %v4780, %v4781
        %v4783 = vrot.slane %v4782, 2
        %v4784 = vadd.f32 %v4782, %v4783
        %v4785 = vrot.slane %v4784, 1
        %v4786 = vadd.f32 %v4784, %v4785
        %v4787 = vadd.f32 %v4624, %v4625
        %v4788 = vadd.f32 %v4787, %v4626
        %v4789 = vadd.f32 %v4788, %v4627
        %v4790 = vadd.f32 %v4789, %v4628
        %v4791 = vadd.f32 %v4790, %v4629
        %v4792 = vadd.f32 %v4791, %v4630
        %v4793 = vadd.f32 %v4792, %v4631
        %v4794 = vadd.f32 %v4793, %v4632
        %v4795 = vadd.f32 %v4794, %v4633
        %v4796 = vadd.f32 %v4795, %v4634
        %v4797 = vadd.f32 %v4796, %v4635
        %v4798 = vadd.f32 %v4797, %v4636
        %v4799 = vadd.f32 %v4798, %v4637
        %v4800 = vadd.f32 %v4799, %v4638
        %v4801 = vadd.f32 %v4800, %v4639
        %v4802 = vrot.slane %v4801, 4
        %v4803 = vadd.f32 %v4801, %v4802
        %v4804 = vrot.slane %v4803, 2
        %v4805 = vadd.f32 %v4803, %v4804
        %v4806 = vrot.slane %v4805, 1
        %v4807 = vadd.f32 %v4805, %v4806
        %v4808 = vld [vmem:[#allocation12] sm:$0xff]
        %v4809 = vld [vmem:[#allocation12 + $0x8] sm:$0xff]
        %v4810 = vld [vmem:[#allocation12 + $0x10] sm:$0xff]
        %v4811 = vld [vmem:[#allocation12 + $0x18] sm:$0xff]
        %v4812 = vld [vmem:[#allocation12 + $0x20] sm:$0xff]
        %v4813 = vld [vmem:[#allocation12 + $0x28] sm:$0xff]
        %v4814 = vld [vmem:[#allocation12 + $0x30] sm:$0xff]
        %v4815 = vld [vmem:[#allocation12 + $0x38] sm:$0xff]
        %v4816 = vld [vmem:[#allocation12 + $0x40] sm:$0xff]
        %v4817 = vld [vmem:[#allocation12 + $0x48] sm:$0xff]
        %v4818 = vld [vmem:[#allocation12 + $0x50] sm:$0xff]
        %v4819 = vld [vmem:[#allocation12 + $0x58] sm:$0xff]
        %v4820 = vld [vmem:[#allocation12 + $0x60] sm:$0xff]
        %v4821 = vld [vmem:[#allocation12 + $0x68] sm:$0xff]
        %v4822 = vld [vmem:[#allocation12 + $0x70] sm:$0xff]
        %v4823 = vld [vmem:[#allocation12 + $0x78] sm:$0xff]
        %v4832 = vsel %vm1848, %v4681, %v4660
        %v4833 = vsel %vm1850, %v4702, %v4832
        %v4834 = vsel %vm1852, %v4723, %v4833
        %v4835 = vsel %vm1854, %v4744, %v4834
        %v4836 = vsel %vm1856, %v4765, %v4835
        %v4837 = vsel %vm1858, %v4786, %v4836
        %v4838 = vsel %vm1860, %v4807, %v4837
        %4840 = vmatprep.subr.mxu0 0.0
        %4841 = vmatpush1.msra.mxu0 %v4823
        %4842 = vmatprep.subr.mxu0 0.0
        %4843 = vmatpush1.msra.mxu0 %v4822
        %4844 = vmatprep.subr.mxu0 0.0
        %4845 = vmatpush1.msra.mxu0 %v4821
        %4846 = vmatprep.subr.mxu0 0.0
        %4847 = vmatpush1.msra.mxu0 %v4820
        %4848 = vmatprep.subr.mxu0 0.0
        %4849 = vmatpush1.msra.mxu0 %v4819
        %4850 = vmatprep.subr.mxu0 0.0
        %4851 = vmatpush1.msra.mxu0 %v4818
        %4852 = vmatprep.subr.mxu0 0.0
        %4853 = vmatpush1.msra.mxu0 %v4817
        %4854 = vmatprep.subr.mxu0 0.0
        %4855 = vmatpush1.msra.mxu0 %v4816
        %4856 = vmatprep.subr.mxu0 0.0
        %4857 = vmatpush1.msra.mxu0 %v4815
        %4858 = vmatprep.subr.mxu0 0.0
        %4859 = vmatpush1.msra.mxu0 %v4814
        %4860 = vmatprep.subr.mxu0 0.0
        %4861 = vmatpush1.msra.mxu0 %v4813
        %4862 = vmatprep.subr.mxu0 0.0
        %4863 = vmatpush1.msra.mxu0 %v4812
        %4864 = vmatprep.subr.mxu0 0.0
        %4865 = vmatpush1.msra.mxu0 %v4811
        %4866 = vmatprep.subr.mxu0 0.0
        %4867 = vmatpush1.msra.mxu0 %v4810
        %4868 = vmatprep.subr.mxu0 0.0
        %4869 = vmatpush1.msra.mxu0 %v4809
        %4870 = vmatprep.subr.mxu0 0.0
        %4871 = vmatpush1.msra.mxu0 %v4808
        %4872 = vmatprep.subr.mxu0 0.0
        %4873 = vmatpush2.msra.mxu0 0.0
        %4874 = vmatprep.subr.mxu0 0.0
        %4875 = vmatpush2.msra.mxu0 0.0
        %4876 = vmatprep.subr.mxu0 0.0
        %4877 = vmatpush2.msra.mxu0 0.0
        %4878 = vmatprep.subr.mxu0 0.0
        %4879 = vmatpush2.msra.mxu0 0.0
        %4880 = vmatprep.subr.mxu0 0.0
        %4881 = vmatpush2.msra.mxu0 0.0
        %4882 = vmatprep.subr.mxu0 0.0
        %4883 = vmatpush2.msra.mxu0 0.0
        %4884 = vmatprep.subr.mxu0 0.0
        %4885 = vmatpush2.msra.mxu0 0.0
        %4886 = vmatprep.subr.mxu0 0.0
        %4887 = vmatpush2.msra.mxu0 0.0
        %4888 = vmatprep.subr.mxu0 0.0
        %4889 = vmatpush2.msra.mxu0 0.0
        %4890 = vmatprep.subr.mxu0 0.0
        %4891 = vmatpush2.msra.mxu0 0.0
        %4892 = vmatprep.subr.mxu0 0.0
        %4893 = vmatpush2.msra.mxu0 0.0
        %4894 = vmatprep.subr.mxu0 0.0
        %4895 = vmatpush2.msra.mxu0 0.0
        %4896 = vmatprep.subr.mxu0 0.0
        %4897 = vmatpush2.msra.mxu0 0.0
        %4898 = vmatprep.subr.mxu0 0.0
        %4899 = vmatpush2.msra.mxu0 0.0
        %4900 = vmatprep.subr.mxu0 0.0
        %4901 = vmatpush2.msra.mxu0 0.0
        %4902 = vmatprep.subr.mxu0 0.0
        %4903 = vmatpush2.msra.mxu0 0.0
        %4904 = vmatprep.mubr.f32.mxu0 0.0
        %4905 = vmatmul.mubr.f32.gmra.mxu0 %v3117
        %v4906 = vpop.f32.mrf.mxu0
        %v4907 = vadd.f32 %v4838, %v4906
        %v4908 = vpop.f32.mrf.mxu0
        %4909 = vdwg.mxu0
        %v4910 = vtanh.pop %v4907
        %s4911 = scalar_lea.vmem %s424, 8 [#allocation15]
        %4912 = vst [vmem:[%s4911] sm:$0xff] %v4910
        %4913 = vst [vmem:[#allocation2] sm:$0xff] %v4910
        %4914 = vst [vmem:[#allocation2 + $0x8] sm:$0xff] %v3117
        %4915 = vst [vmem:[#allocation3] sm:$0xff] %v3115
        %v4916 = vld [vmem:[#allocation2] sm:$0xff]
        %v4917 = vld [vmem:[#allocation2 + $0x8] sm:$0xff]
        %v4918 = vld [vmem:[#allocation3] sm:$0xff]
        %s4919 = scalar_lea.vmem %s370, 64 [#allocation4]
        %v4920 = vld [vmem:[%s4919] sm:$0xff]
        %v4921 = vld [vmem:[%s4919 + $0x8] sm:$0xff]
        %v4922 = vld [vmem:[%s4919 + $0x10] sm:$0xff]
        %v4923 = vld [vmem:[%s4919 + $0x18] sm:$0xff]
        %v4924 = vld [vmem:[#allocation10] sm:$0xff]
        %v4925 = vld [vmem:[#allocation10 + $0x8] sm:$0xff]
        %v4926 = vld [vmem:[#allocation10 + $0x10] sm:$0xff]
        %v4927 = vld [vmem:[#allocation10 + $0x18] sm:$0xff]
        %v4928 = vld [vmem:[#allocation10 + $0x20] sm:$0xff]
        %v4929 = vld [vmem:[#allocation10 + $0x28] sm:$0xff]
        %v4930 = vld [vmem:[#allocation10 + $0x30] sm:$0xff]
        %v4931 = vld [vmem:[#allocation10 + $0x38] sm:$0xff]
        %v4932 = vld [vmem:[#allocation10 + $0x40] sm:$0xff]
        %v4933 = vld [vmem:[#allocation10 + $0x48] sm:$0xff]
        %v4934 = vld [vmem:[#allocation10 + $0x50] sm:$0xff]
        %v4935 = vld [vmem:[#allocation10 + $0x58] sm:$0xff]
        %v4936 = vld [vmem:[#allocation10 + $0x60] sm:$0xff]
        %v4937 = vld [vmem:[#allocation10 + $0x68] sm:$0xff]
        %v4938 = vld [vmem:[#allocation10 + $0x70] sm:$0xff]
        %v4939 = vld [vmem:[#allocation10 + $0x78] sm:$0xff]
        %v4940 = vld [vmem:[#allocation10 + $0x80] sm:$0xff]
        %v4941 = vld [vmem:[#allocation10 + $0x88] sm:$0xff]
        %v4942 = vld [vmem:[#allocation10 + $0x90] sm:$0xff]
        %v4943 = vld [vmem:[#allocation10 + $0x98] sm:$0xff]
        %v4944 = vld [vmem:[#allocation10 + $0xa0] sm:$0xff]
        %v4945 = vld [vmem:[#allocation10 + $0xa8] sm:$0xff]
        %v4946 = vld [vmem:[#allocation10 + $0xb0] sm:$0xff]
        %v4947 = vld [vmem:[#allocation10 + $0xb8] sm:$0xff]
        %v4948 = vld [vmem:[#allocation10 + $0xc0] sm:$0xff]
        %v4949 = vld [vmem:[#allocation10 + $0xc8] sm:$0xff]
        %v4950 = vld [vmem:[#allocation10 + $0xd0] sm:$0xff]
        %v4951 = vld [vmem:[#allocation10 + $0xd8] sm:$0xff]
        %v4952 = vld [vmem:[#allocation10 + $0xe0] sm:$0xff]
        %v4953 = vld [vmem:[#allocation10 + $0xe8] sm:$0xff]
        %v4954 = vld [vmem:[#allocation10 + $0xf0] sm:$0xff]
        %v4955 = vld [vmem:[#allocation10 + $0xf8] sm:$0xff]
        %v4956 = vld [vmem:[#allocation10 + $0x100] sm:$0xff]
        %v4957 = vld [vmem:[#allocation10 + $0x108] sm:$0xff]
        %v4958 = vld [vmem:[#allocation10 + $0x110] sm:$0xff]
        %v4959 = vld [vmem:[#allocation10 + $0x118] sm:$0xff]
        %v4960 = vld [vmem:[#allocation10 + $0x120] sm:$0xff]
        %v4961 = vld [vmem:[#allocation10 + $0x128] sm:$0xff]
        %v4962 = vld [vmem:[#allocation10 + $0x130] sm:$0xff]
        %v4963 = vld [vmem:[#allocation10 + $0x138] sm:$0xff]
        %v4964 = vld [vmem:[#allocation10 + $0x140] sm:$0xff]
        %v4965 = vld [vmem:[#allocation10 + $0x148] sm:$0xff]
        %v4966 = vld [vmem:[#allocation10 + $0x150] sm:$0xff]
        %v4967 = vld [vmem:[#allocation10 + $0x158] sm:$0xff]
        %v4968 = vld [vmem:[#allocation10 + $0x160] sm:$0xff]
        %v4969 = vld [vmem:[#allocation10 + $0x168] sm:$0xff]
        %v4970 = vld [vmem:[#allocation10 + $0x170] sm:$0xff]
        %v4971 = vld [vmem:[#allocation10 + $0x178] sm:$0xff]
        %v4972 = vld [vmem:[#allocation10 + $0x180] sm:$0xff]
        %v4973 = vld [vmem:[#allocation10 + $0x188] sm:$0xff]
        %v4974 = vld [vmem:[#allocation10 + $0x190] sm:$0xff]
        %v4975 = vld [vmem:[#allocation10 + $0x198] sm:$0xff]
        %v4976 = vld [vmem:[#allocation10 + $0x1a0] sm:$0xff]
        %v4977 = vld [vmem:[#allocation10 + $0x1a8] sm:$0xff]
        %v4978 = vld [vmem:[#allocation10 + $0x1b0] sm:$0xff]
        %v4979 = vld [vmem:[#allocation10 + $0x1b8] sm:$0xff]
        %v4980 = vld [vmem:[#allocation10 + $0x1c0] sm:$0xff]
        %v4981 = vld [vmem:[#allocation10 + $0x1c8] sm:$0xff]
        %v4982 = vld [vmem:[#allocation10 + $0x1d0] sm:$0xff]
        %v4983 = vld [vmem:[#allocation10 + $0x1d8] sm:$0xff]
        %v4984 = vld [vmem:[#allocation10 + $0x1e0] sm:$0xff]
        %v4985 = vld [vmem:[#allocation10 + $0x1e8] sm:$0xff]
        %v4986 = vld [vmem:[#allocation10 + $0x1f0] sm:$0xff]
        %v4987 = vld [vmem:[#allocation10 + $0x1f8] sm:$0xff]
        %v4988 = vld [vmem:[#allocation10 + $0x200] sm:$0xff]
        %v4989 = vld [vmem:[#allocation10 + $0x208] sm:$0xff]
        %v4990 = vld [vmem:[#allocation10 + $0x210] sm:$0xff]
        %v4991 = vld [vmem:[#allocation10 + $0x218] sm:$0xff]
        %v4992 = vld [vmem:[#allocation10 + $0x220] sm:$0xff]
        %v4993 = vld [vmem:[#allocation10 + $0x228] sm:$0xff]
        %v4994 = vld [vmem:[#allocation10 + $0x230] sm:$0xff]
        %v4995 = vld [vmem:[#allocation10 + $0x238] sm:$0xff]
        %v4996 = vld [vmem:[#allocation10 + $0x240] sm:$0xff]
        %v4997 = vld [vmem:[#allocation10 + $0x248] sm:$0xff]
        %v4998 = vld [vmem:[#allocation10 + $0x250] sm:$0xff]
        %v4999 = vld [vmem:[#allocation10 + $0x258] sm:$0xff]
        %v5000 = vld [vmem:[#allocation10 + $0x260] sm:$0xff]
        %v5001 = vld [vmem:[#allocation10 + $0x268] sm:$0xff]
        %v5002 = vld [vmem:[#allocation10 + $0x270] sm:$0xff]
        %v5003 = vld [vmem:[#allocation10 + $0x278] sm:$0xff]
        %v5004 = vld [vmem:[#allocation10 + $0x280] sm:$0xff]
        %v5005 = vld [vmem:[#allocation10 + $0x288] sm:$0xff]
        %v5006 = vld [vmem:[#allocation10 + $0x290] sm:$0xff]
        %v5007 = vld [vmem:[#allocation10 + $0x298] sm:$0xff]
        %v5008 = vld [vmem:[#allocation10 + $0x2a0] sm:$0xff]
        %v5009 = vld [vmem:[#allocation10 + $0x2a8] sm:$0xff]
        %v5010 = vld [vmem:[#allocation10 + $0x2b0] sm:$0xff]
        %v5011 = vld [vmem:[#allocation10 + $0x2b8] sm:$0xff]
        %v5012 = vld [vmem:[#allocation10 + $0x2c0] sm:$0xff]
        %v5013 = vld [vmem:[#allocation10 + $0x2c8] sm:$0xff]
        %v5014 = vld [vmem:[#allocation10 + $0x2d0] sm:$0xff]
        %v5015 = vld [vmem:[#allocation10 + $0x2d8] sm:$0xff]
        %v5016 = vld [vmem:[#allocation10 + $0x2e0] sm:$0xff]
        %v5017 = vld [vmem:[#allocation10 + $0x2e8] sm:$0xff]
        %v5018 = vld [vmem:[#allocation10 + $0x2f0] sm:$0xff]
        %v5019 = vld [vmem:[#allocation10 + $0x2f8] sm:$0xff]
        %v5020 = vld [vmem:[#allocation10 + $0x300] sm:$0xff]
        %v5021 = vld [vmem:[#allocation10 + $0x308] sm:$0xff]
        %v5022 = vld [vmem:[#allocation10 + $0x310] sm:$0xff]
        %v5023 = vld [vmem:[#allocation10 + $0x318] sm:$0xff]
        %v5024 = vld [vmem:[#allocation10 + $0x320] sm:$0xff]
        %v5025 = vld [vmem:[#allocation10 + $0x328] sm:$0xff]
        %v5026 = vld [vmem:[#allocation10 + $0x330] sm:$0xff]
        %v5027 = vld [vmem:[#allocation10 + $0x338] sm:$0xff]
        %v5028 = vld [vmem:[#allocation10 + $0x340] sm:$0xff]
        %v5029 = vld [vmem:[#allocation10 + $0x348] sm:$0xff]
        %v5030 = vld [vmem:[#allocation10 + $0x350] sm:$0xff]
        %v5031 = vld [vmem:[#allocation10 + $0x358] sm:$0xff]
        %v5032 = vld [vmem:[#allocation10 + $0x360] sm:$0xff]
        %v5033 = vld [vmem:[#allocation10 + $0x368] sm:$0xff]
        %v5034 = vld [vmem:[#allocation10 + $0x370] sm:$0xff]
        %v5035 = vld [vmem:[#allocation10 + $0x378] sm:$0xff]
        %v5036 = vld [vmem:[#allocation10 + $0x380] sm:$0xff]
        %v5037 = vld [vmem:[#allocation10 + $0x388] sm:$0xff]
        %v5038 = vld [vmem:[#allocation10 + $0x390] sm:$0xff]
        %v5039 = vld [vmem:[#allocation10 + $0x398] sm:$0xff]
        %v5040 = vld [vmem:[#allocation10 + $0x3a0] sm:$0xff]
        %v5041 = vld [vmem:[#allocation10 + $0x3a8] sm:$0xff]
        %v5042 = vld [vmem:[#allocation10 + $0x3b0] sm:$0xff]
        %v5043 = vld [vmem:[#allocation10 + $0x3b8] sm:$0xff]
        %v5044 = vld [vmem:[#allocation10 + $0x3c0] sm:$0xff]
        %v5045 = vld [vmem:[#allocation10 + $0x3c8] sm:$0xff]
        %v5046 = vld [vmem:[#allocation10 + $0x3d0] sm:$0xff]
        %v5047 = vld [vmem:[#allocation10 + $0x3d8] sm:$0xff]
        %v5048 = vld [vmem:[#allocation10 + $0x3e0] sm:$0xff]
        %v5049 = vld [vmem:[#allocation10 + $0x3e8] sm:$0xff]
        %v5050 = vld [vmem:[#allocation10 + $0x3f0] sm:$0xff]
        %v5051 = vld [vmem:[#allocation10 + $0x3f8] sm:$0xff]
        %5052 = vmatprep.subr.mxu0 %v4985
        %5053 = vmatpush1.msra.mxu0 %v4984
        %5054 = vmatprep.subr.mxu0 %v4981
        %5055 = vmatpush1.msra.mxu0 %v4980
        %5056 = vmatprep.subr.mxu0 %v4977
        %5057 = vmatpush1.msra.mxu0 %v4976
        %5058 = vmatprep.subr.mxu0 %v4973
        %5059 = vmatpush1.msra.mxu0 %v4972
        %5060 = vmatprep.subr.mxu0 %v4969
        %5061 = vmatpush1.msra.mxu0 %v4968
        %5062 = vmatprep.subr.mxu0 %v4965
        %5063 = vmatpush1.msra.mxu0 %v4964
        %5064 = vmatprep.subr.mxu0 %v4961
        %5065 = vmatpush1.msra.mxu0 %v4960
        %5066 = vmatprep.subr.mxu0 %v4957
        %5067 = vmatpush1.msra.mxu0 %v4956
        %5068 = vmatprep.subr.mxu0 %v4953
        %5069 = vmatpush1.msra.mxu0 %v4952
        %5070 = vmatprep.subr.mxu0 %v4949
        %5071 = vmatpush1.msra.mxu0 %v4948
        %5072 = vmatprep.subr.mxu0 %v4945
        %5073 = vmatpush1.msra.mxu0 %v4944
        %5074 = vmatprep.subr.mxu0 %v4941
        %5075 = vmatpush1.msra.mxu0 %v4940
        %5076 = vmatprep.subr.mxu0 %v4937
        %5077 = vmatpush1.msra.mxu0 %v4936
        %5078 = vmatprep.subr.mxu0 %v4933
        %5079 = vmatpush1.msra.mxu0 %v4932
        %5080 = vmatprep.subr.mxu0 %v4929
        %5081 = vmatpush1.msra.mxu0 %v4928
        %5082 = vmatprep.subr.mxu0 %v4925
        %5083 = vmatpush1.msra.mxu0 %v4924
        %5084 = vmatprep.subr.mxu0 %v5049
        %5085 = vmatpush2.msra.mxu0 %v5048
        %5086 = vmatprep.subr.mxu0 %v5045
        %5087 = vmatpush2.msra.mxu0 %v5044
        %5088 = vmatprep.subr.mxu0 %v5041
        %5089 = vmatpush2.msra.mxu0 %v5040
        %5090 = vmatprep.subr.mxu0 %v5037
        %5091 = vmatpush2.msra.mxu0 %v5036
        %5092 = vmatprep.subr.mxu0 %v5033
        %5093 = vmatpush2.msra.mxu0 %v5032
        %5094 = vmatprep.subr.mxu0 %v5029
        %5095 = vmatpush2.msra.mxu0 %v5028
        %5096 = vmatprep.subr.mxu0 %v5025
        %5097 = vmatpush2.msra.mxu0 %v5024
        %5098 = vmatprep.subr.mxu0 %v5021
        %5099 = vmatpush2.msra.mxu0 %v5020
        %5100 = vmatprep.subr.mxu0 %v5017
        %5101 = vmatpush2.msra.mxu0 %v5016
        %5102 = vmatprep.subr.mxu0 %v5013
        %5103 = vmatpush2.msra.mxu0 %v5012
        %5104 = vmatprep.subr.mxu0 %v5009
        %5105 = vmatpush2.msra.mxu0 %v5008
        %5106 = vmatprep.subr.mxu0 %v5005
        %5107 = vmatpush2.msra.mxu0 %v5004
        %5108 = vmatprep.subr.mxu0 %v5001
        %5109 = vmatpush2.msra.mxu0 %v5000
        %5110 = vmatprep.subr.mxu0 %v4997
        %5111 = vmatpush2.msra.mxu0 %v4996
        %5112 = vmatprep.subr.mxu0 %v4993
        %5113 = vmatpush2.msra.mxu0 %v4992
        %5114 = vmatprep.subr.mxu0 %v4989
        %5115 = vmatpush2.msra.mxu0 %v4988
        %5116 = vmatprep.mubr.f32.mxu0 %v4917
        %5117 = vmatmul.mubr.f32.gmra.mxu0 %v4916
        %v5118 = vpop.f32.mrf.mxu0
        %v5119 = vadd.f32 0.0, %v5118
        %v5120 = vpop.f32.mrf.mxu0
        %v5121 = vadd.f32 0.0, %v5120
        %5122 = vdwg.mxu0
        %5123 = vmatprep.subr.mxu0 %v4987
        %5124 = vmatpush1.msra.mxu0 %v4986
        %5125 = vmatprep.subr.mxu0 %v4983
        %5126 = vmatpush1.msra.mxu0 %v4982
        %5127 = vmatprep.subr.mxu0 %v4979
        %5128 = vmatpush1.msra.mxu0 %v4978
        %5129 = vmatprep.subr.mxu0 %v4975
        %5130 = vmatpush1.msra.mxu0 %v4974
        %5131 = vmatprep.subr.mxu0 %v4971
        %5132 = vmatpush1.msra.mxu0 %v4970
        %5133 = vmatprep.subr.mxu0 %v4967
        %5134 = vmatpush1.msra.mxu0 %v4966
        %5135 = vmatprep.subr.mxu0 %v4963
        %5136 = vmatpush1.msra.mxu0 %v4962
        %5137 = vmatprep.subr.mxu0 %v4959
        %5138 = vmatpush1.msra.mxu0 %v4958
        %5139 = vmatprep.subr.mxu0 %v4955
        %5140 = vmatpush1.msra.mxu0 %v4954
        %5141 = vmatprep.subr.mxu0 %v4951
        %5142 = vmatpush1.msra.mxu0 %v4950
        %5143 = vmatprep.subr.mxu0 %v4947
        %5144 = vmatpush1.msra.mxu0 %v4946
        %5145 = vmatprep.subr.mxu0 %v4943
        %5146 = vmatpush1.msra.mxu0 %v4942
        %5147 = vmatprep.subr.mxu0 %v4939
        %5148 = vmatpush1.msra.mxu0 %v4938
        %5149 = vmatprep.subr.mxu0 %v4935
        %5150 = vmatpush1.msra.mxu0 %v4934
        %5151 = vmatprep.subr.mxu0 %v4931
        %5152 = vmatpush1.msra.mxu0 %v4930
        %5153 = vmatprep.subr.mxu0 %v4927
        %5154 = vmatpush1.msra.mxu0 %v4926
        %5155 = vmatprep.subr.mxu0 %v5051
        %5156 = vmatpush2.msra.mxu0 %v5050
        %5157 = vmatprep.subr.mxu0 %v5047
        %5158 = vmatpush2.msra.mxu0 %v5046
        %5159 = vmatprep.subr.mxu0 %v5043
        %5160 = vmatpush2.msra.mxu0 %v5042
        %5161 = vmatprep.subr.mxu0 %v5039
        %5162 = vmatpush2.msra.mxu0 %v5038
        %5163 = vmatprep.subr.mxu0 %v5035
        %5164 = vmatpush2.msra.mxu0 %v5034
        %5165 = vmatprep.subr.mxu0 %v5031
        %5166 = vmatpush2.msra.mxu0 %v5030
        %5167 = vmatprep.subr.mxu0 %v5027
        %5168 = vmatpush2.msra.mxu0 %v5026
        %5169 = vmatprep.subr.mxu0 %v5023
        %5170 = vmatpush2.msra.mxu0 %v5022
        %5171 = vmatprep.subr.mxu0 %v5019
        %5172 = vmatpush2.msra.mxu0 %v5018
        %5173 = vmatprep.subr.mxu0 %v5015
        %5174 = vmatpush2.msra.mxu0 %v5014
        %5175 = vmatprep.subr.mxu0 %v5011
        %5176 = vmatpush2.msra.mxu0 %v5010
        %5177 = vmatprep.subr.mxu0 %v5007
        %5178 = vmatpush2.msra.mxu0 %v5006
        %5179 = vmatprep.subr.mxu0 %v5003
        %5180 = vmatpush2.msra.mxu0 %v5002
        %5181 = vmatprep.subr.mxu0 %v4999
        %5182 = vmatpush2.msra.mxu0 %v4998
        %5183 = vmatprep.subr.mxu0 %v4995
        %5184 = vmatpush2.msra.mxu0 %v4994
        %5185 = vmatprep.subr.mxu0 %v4991
        %5186 = vmatpush2.msra.mxu0 %v4990
        %5187 = vmatprep.mubr.f32.mxu0 %v4917
        %5188 = vmatmul.mubr.f32.gmra.mxu0 %v4916
        %v5189 = vpop.f32.mrf.mxu0
        %v5190 = vadd.f32 0.0, %v5189
        %v5191 = vpop.f32.mrf.mxu0
        %v5192 = vadd.f32 0.0, %v5191
        %5193 = vdwg.mxu0
        %v5194 = vadd.f32 %v4920, %v5119
        %v5195 = vadd.f32 %v4921, %v5121
        %v5196 = vadd.f32 %v4922, %v5190
        %v5197 = vadd.f32 %v4923, %v5192
        %v5198 = vxor.u32 %v5194, 2147483648
        %v5199 = vmul.f32 %v5198, 1.442695
        %v5200 = vpow.pop %v5199
        %v5201 = vadd.f32 %v5200, 1.0
        %v5202 = vrcp.pop %v5201
        %v5203 = vmul.f32 1.0, %v5202
        %v5204 = vxor.u32 %v5195, 2147483648
        %v5205 = vmul.f32 %v5204, 1.442695
        %v5206 = vpow.pop %v5205
        %v5207 = vadd.f32 %v5206, 1.0
        %v5208 = vrcp.pop %v5207
        %v5209 = vmul.f32 1.0, %v5208
        %v5210 = vtanh.pop %v5196
        %v5211 = vxor.u32 %v5197, 2147483648
        %v5212 = vmul.f32 %v5211, 1.442695
        %v5213 = vpow.pop %v5212
        %v5214 = vadd.f32 %v5213, 1.0
        %v5215 = vrcp.pop %v5214
        %v5216 = vmul.f32 1.0, %v5215
        %v5217 = vmul.f32 %v5209, %v4918
        %v5218 = vmul.f32 %v5203, %v5210
        %v5219 = vadd.f32 %v5217, %v5218
        %v5220 = vtanh.pop %v5219
        %v5221 = vmul.f32 %v5216, %v5220
        %v5222 = vlaneseq
        %v5223 = vshrl.u32 %v5222, 7
        %v5224 = vsub.s32 0, %v5223
        %v5225 = vrot.slane %v5221, %v5224
        %5227 = vbcast.lane.b32.xlu0 %v5225, 256
        %v5228 = vpop.permute.xlu0 %5227
        %s5230 = sor.u32 256, 8
        %5231 = vbcast.lane.b32.xlu0 %v5225, %s5230
        %v5232 = vpop.permute.xlu0 %5231
        %s5234 = sor.u32 256, 16
        %5235 = vbcast.lane.b32.xlu0 %v5225, %s5234
        %v5236 = vpop.permute.xlu0 %5235
        %s5238 = sor.u32 256, 24
        %5239 = vbcast.lane.b32.xlu0 %v5225, %s5238
        %v5240 = vpop.permute.xlu0 %5239
        %s5242 = sor.u32 256, 32
        %5243 = vbcast.lane.b32.xlu0 %v5225, %s5242
        %v5244 = vpop.permute.xlu0 %5243
        %s5246 = sor.u32 256, 40
        %5247 = vbcast.lane.b32.xlu0 %v5225, %s5246
        %v5248 = vpop.permute.xlu0 %5247
        %s5250 = sor.u32 256, 48
        %5251 = vbcast.lane.b32.xlu0 %v5225, %s5250
        %v5252 = vpop.permute.xlu0 %5251
        %s5254 = sor.u32 256, 56
        %5255 = vbcast.lane.b32.xlu0 %v5225, %s5254
        %v5256 = vpop.permute.xlu0 %5255
        %s5258 = sor.u32 256, 64
        %5259 = vbcast.lane.b32.xlu0 %v5225, %s5258
        %v5260 = vpop.permute.xlu0 %5259
        %s5262 = sor.u32 256, 72
        %5263 = vbcast.lane.b32.xlu0 %v5225, %s5262
        %v5264 = vpop.permute.xlu0 %5263
        %s5266 = sor.u32 256, 80
        %5267 = vbcast.lane.b32.xlu0 %v5225, %s5266
        %v5268 = vpop.permute.xlu0 %5267
        %s5270 = sor.u32 256, 88
        %5271 = vbcast.lane.b32.xlu0 %v5225, %s5270
        %v5272 = vpop.permute.xlu0 %5271
        %s5274 = sor.u32 256, 96
        %5275 = vbcast.lane.b32.xlu0 %v5225, %s5274
        %v5276 = vpop.permute.xlu0 %5275
        %s5278 = sor.u32 256, 104
        %5279 = vbcast.lane.b32.xlu0 %v5225, %s5278
        %v5280 = vpop.permute.xlu0 %5279
        %s5282 = sor.u32 256, 112
        %5283 = vbcast.lane.b32.xlu0 %v5225, %s5282
        %v5284 = vpop.permute.xlu0 %5283
        %s5286 = sor.u32 256, 120
        %5287 = vbcast.lane.b32.xlu0 %v5225, %s5286
        %v5288 = vpop.permute.xlu0 %5287
        %v5289 = vlaneseq
        %v5290 = vshrl.u32 %v5289, 7
        %v5291 = vsub.s32 1, %v5290
        %v5292 = vrot.slane %v5221, %v5291
        %5294 = vbcast.lane.b32.xlu0 %v5292, 256
        %v5295 = vpop.permute.xlu0 %5294
        %s5297 = sor.u32 256, 8
        %5298 = vbcast.lane.b32.xlu0 %v5292, %s5297
        %v5299 = vpop.permute.xlu0 %5298
        %s5301 = sor.u32 256, 16
        %5302 = vbcast.lane.b32.xlu0 %v5292, %s5301
        %v5303 = vpop.permute.xlu0 %5302
        %s5305 = sor.u32 256, 24
        %5306 = vbcast.lane.b32.xlu0 %v5292, %s5305
        %v5307 = vpop.permute.xlu0 %5306
        %s5309 = sor.u32 256, 32
        %5310 = vbcast.lane.b32.xlu0 %v5292, %s5309
        %v5311 = vpop.permute.xlu0 %5310
        %s5313 = sor.u32 256, 40
        %5314 = vbcast.lane.b32.xlu0 %v5292, %s5313
        %v5315 = vpop.permute.xlu0 %5314
        %s5317 = sor.u32 256, 48
        %5318 = vbcast.lane.b32.xlu0 %v5292, %s5317
        %v5319 = vpop.permute.xlu0 %5318
        %s5321 = sor.u32 256, 56
        %5322 = vbcast.lane.b32.xlu0 %v5292, %s5321
        %v5323 = vpop.permute.xlu0 %5322
        %s5325 = sor.u32 256, 64
        %5326 = vbcast.lane.b32.xlu0 %v5292, %s5325
        %v5327 = vpop.permute.xlu0 %5326
        %s5329 = sor.u32 256, 72
        %5330 = vbcast.lane.b32.xlu0 %v5292, %s5329
        %v5331 = vpop.permute.xlu0 %5330
        %s5333 = sor.u32 256, 80
        %5334 = vbcast.lane.b32.xlu0 %v5292, %s5333
        %v5335 = vpop.permute.xlu0 %5334
        %s5337 = sor.u32 256, 88
        %5338 = vbcast.lane.b32.xlu0 %v5292, %s5337
        %v5339 = vpop.permute.xlu0 %5338
        %s5341 = sor.u32 256, 96
        %5342 = vbcast.lane.b32.xlu0 %v5292, %s5341
        %v5343 = vpop.permute.xlu0 %5342
        %s5345 = sor.u32 256, 104
        %5346 = vbcast.lane.b32.xlu0 %v5292, %s5345
        %v5347 = vpop.permute.xlu0 %5346
        %s5349 = sor.u32 256, 112
        %5350 = vbcast.lane.b32.xlu0 %v5292, %s5349
        %v5351 = vpop.permute.xlu0 %5350
        %s5353 = sor.u32 256, 120
        %5354 = vbcast.lane.b32.xlu0 %v5292, %s5353
        %v5355 = vpop.permute.xlu0 %5354
        %v5356 = vlaneseq
        %v5357 = vshrl.u32 %v5356, 7
        %v5358 = vsub.s32 2, %v5357
        %v5359 = vrot.slane %v5221, %v5358
        %5361 = vbcast.lane.b32.xlu0 %v5359, 256
        %v5362 = vpop.permute.xlu0 %5361
        %s5364 = sor.u32 256, 8
        %5365 = vbcast.lane.b32.xlu0 %v5359, %s5364
        %v5366 = vpop.permute.xlu0 %5365
        %s5368 = sor.u32 256, 16
        %5369 = vbcast.lane.b32.xlu0 %v5359, %s5368
        %v5370 = vpop.permute.xlu0 %5369
        %s5372 = sor.u32 256, 24
        %5373 = vbcast.lane.b32.xlu0 %v5359, %s5372
        %v5374 = vpop.permute.xlu0 %5373
        %s5376 = sor.u32 256, 32
        %5377 = vbcast.lane.b32.xlu0 %v5359, %s5376
        %v5378 = vpop.permute.xlu0 %5377
        %s5380 = sor.u32 256, 40
        %5381 = vbcast.lane.b32.xlu0 %v5359, %s5380
        %v5382 = vpop.permute.xlu0 %5381
        %s5384 = sor.u32 256, 48
        %5385 = vbcast.lane.b32.xlu0 %v5359, %s5384
        %v5386 = vpop.permute.xlu0 %5385
        %s5388 = sor.u32 256, 56
        %5389 = vbcast.lane.b32.xlu0 %v5359, %s5388
        %v5390 = vpop.permute.xlu0 %5389
        %s5392 = sor.u32 256, 64
        %5393 = vbcast.lane.b32.xlu0 %v5359, %s5392
        %v5394 = vpop.permute.xlu0 %5393
        %s5396 = sor.u32 256, 72
        %5397 = vbcast.lane.b32.xlu0 %v5359, %s5396
        %v5398 = vpop.permute.xlu0 %5397
        %s5400 = sor.u32 256, 80
        %5401 = vbcast.lane.b32.xlu0 %v5359, %s5400
        %v5402 = vpop.permute.xlu0 %5401
        %s5404 = sor.u32 256, 88
        %5405 = vbcast.lane.b32.xlu0 %v5359, %s5404
        %v5406 = vpop.permute.xlu0 %5405
        %s5408 = sor.u32 256, 96
        %5409 = vbcast.lane.b32.xlu0 %v5359, %s5408
        %v5410 = vpop.permute.xlu0 %5409
        %s5412 = sor.u32 256, 104
        %5413 = vbcast.lane.b32.xlu0 %v5359, %s5412
        %v5414 = vpop.permute.xlu0 %5413
        %s5416 = sor.u32 256, 112
        %5417 = vbcast.lane.b32.xlu0 %v5359, %s5416
        %v5418 = vpop.permute.xlu0 %5417
        %s5420 = sor.u32 256, 120
        %5421 = vbcast.lane.b32.xlu0 %v5359, %s5420
        %v5422 = vpop.permute.xlu0 %5421
        %v5423 = vlaneseq
        %v5424 = vshrl.u32 %v5423, 7
        %v5425 = vsub.s32 3, %v5424
        %v5426 = vrot.slane %v5221, %v5425
        %5428 = vbcast.lane.b32.xlu0 %v5426, 256
        %v5429 = vpop.permute.xlu0 %5428
        %s5431 = sor.u32 256, 8
        %5432 = vbcast.lane.b32.xlu0 %v5426, %s5431
        %v5433 = vpop.permute.xlu0 %5432
        %s5435 = sor.u32 256, 16
        %5436 = vbcast.lane.b32.xlu0 %v5426, %s5435
        %v5437 = vpop.permute.xlu0 %5436
        %s5439 = sor.u32 256, 24
        %5440 = vbcast.lane.b32.xlu0 %v5426, %s5439
        %v5441 = vpop.permute.xlu0 %5440
        %s5443 = sor.u32 256, 32
        %5444 = vbcast.lane.b32.xlu0 %v5426, %s5443
        %v5445 = vpop.permute.xlu0 %5444
        %s5447 = sor.u32 256, 40
        %5448 = vbcast.lane.b32.xlu0 %v5426, %s5447
        %v5449 = vpop.permute.xlu0 %5448
        %s5451 = sor.u32 256, 48
        %5452 = vbcast.lane.b32.xlu0 %v5426, %s5451
        %v5453 = vpop.permute.xlu0 %5452
        %s5455 = sor.u32 256, 56
        %5456 = vbcast.lane.b32.xlu0 %v5426, %s5455
        %v5457 = vpop.permute.xlu0 %5456
        %s5459 = sor.u32 256, 64
        %5460 = vbcast.lane.b32.xlu0 %v5426, %s5459
        %v5461 = vpop.permute.xlu0 %5460
        %s5463 = sor.u32 256, 72
        %5464 = vbcast.lane.b32.xlu0 %v5426, %s5463
        %v5465 = vpop.permute.xlu0 %5464
        %s5467 = sor.u32 256, 80
        %5468 = vbcast.lane.b32.xlu0 %v5426, %s5467
        %v5469 = vpop.permute.xlu0 %5468
        %s5471 = sor.u32 256, 88
        %5472 = vbcast.lane.b32.xlu0 %v5426, %s5471
        %v5473 = vpop.permute.xlu0 %5472
        %s5475 = sor.u32 256, 96
        %5476 = vbcast.lane.b32.xlu0 %v5426, %s5475
        %v5477 = vpop.permute.xlu0 %5476
        %s5479 = sor.u32 256, 104
        %5480 = vbcast.lane.b32.xlu0 %v5426, %s5479
        %v5481 = vpop.permute.xlu0 %5480
        %s5483 = sor.u32 256, 112
        %5484 = vbcast.lane.b32.xlu0 %v5426, %s5483
        %v5485 = vpop.permute.xlu0 %5484
        %s5487 = sor.u32 256, 120
        %5488 = vbcast.lane.b32.xlu0 %v5426, %s5487
        %v5489 = vpop.permute.xlu0 %5488
        %v5490 = vlaneseq
        %v5491 = vshrl.u32 %v5490, 7
        %v5492 = vsub.s32 4, %v5491
        %v5493 = vrot.slane %v5221, %v5492
        %5495 = vbcast.lane.b32.xlu0 %v5493, 256
        %v5496 = vpop.permute.xlu0 %5495
        %s5498 = sor.u32 256, 8
        %5499 = vbcast.lane.b32.xlu0 %v5493, %s5498
        %v5500 = vpop.permute.xlu0 %5499
        %s5502 = sor.u32 256, 16
        %5503 = vbcast.lane.b32.xlu0 %v5493, %s5502
        %v5504 = vpop.permute.xlu0 %5503
        %s5506 = sor.u32 256, 24
        %5507 = vbcast.lane.b32.xlu0 %v5493, %s5506
        %v5508 = vpop.permute.xlu0 %5507
        %s5510 = sor.u32 256, 32
        %5511 = vbcast.lane.b32.xlu0 %v5493, %s5510
        %v5512 = vpop.permute.xlu0 %5511
        %s5514 = sor.u32 256, 40
        %5515 = vbcast.lane.b32.xlu0 %v5493, %s5514
        %v5516 = vpop.permute.xlu0 %5515
        %s5518 = sor.u32 256, 48
        %5519 = vbcast.lane.b32.xlu0 %v5493, %s5518
        %v5520 = vpop.permute.xlu0 %5519
        %s5522 = sor.u32 256, 56
        %5523 = vbcast.lane.b32.xlu0 %v5493, %s5522
        %v5524 = vpop.permute.xlu0 %5523
        %s5526 = sor.u32 256, 64
        %5527 = vbcast.lane.b32.xlu0 %v5493, %s5526
        %v5528 = vpop.permute.xlu0 %5527
        %s5530 = sor.u32 256, 72
        %5531 = vbcast.lane.b32.xlu0 %v5493, %s5530
        %v5532 = vpop.permute.xlu0 %5531
        %s5534 = sor.u32 256, 80
        %5535 = vbcast.lane.b32.xlu0 %v5493, %s5534
        %v5536 = vpop.permute.xlu0 %5535
        %s5538 = sor.u32 256, 88
        %5539 = vbcast.lane.b32.xlu0 %v5493, %s5538
        %v5540 = vpop.permute.xlu0 %5539
        %s5542 = sor.u32 256, 96
        %5543 = vbcast.lane.b32.xlu0 %v5493, %s5542
        %v5544 = vpop.permute.xlu0 %5543
        %s5546 = sor.u32 256, 104
        %5547 = vbcast.lane.b32.xlu0 %v5493, %s5546
        %v5548 = vpop.permute.xlu0 %5547
        %s5550 = sor.u32 256, 112
        %5551 = vbcast.lane.b32.xlu0 %v5493, %s5550
        %v5552 = vpop.permute.xlu0 %5551
        %s5554 = sor.u32 256, 120
        %5555 = vbcast.lane.b32.xlu0 %v5493, %s5554
        %v5556 = vpop.permute.xlu0 %5555
        %v5557 = vlaneseq
        %v5558 = vshrl.u32 %v5557, 7
        %v5559 = vsub.s32 5, %v5558
        %v5560 = vrot.slane %v5221, %v5559
        %5562 = vbcast.lane.b32.xlu0 %v5560, 256
        %v5563 = vpop.permute.xlu0 %5562
        %s5565 = sor.u32 256, 8
        %5566 = vbcast.lane.b32.xlu0 %v5560, %s5565
        %v5567 = vpop.permute.xlu0 %5566
        %s5569 = sor.u32 256, 16
        %5570 = vbcast.lane.b32.xlu0 %v5560, %s5569
        %v5571 = vpop.permute.xlu0 %5570
        %s5573 = sor.u32 256, 24
        %5574 = vbcast.lane.b32.xlu0 %v5560, %s5573
        %v5575 = vpop.permute.xlu0 %5574
        %s5577 = sor.u32 256, 32
        %5578 = vbcast.lane.b32.xlu0 %v5560, %s5577
        %v5579 = vpop.permute.xlu0 %5578
        %s5581 = sor.u32 256, 40
        %5582 = vbcast.lane.b32.xlu0 %v5560, %s5581
        %v5583 = vpop.permute.xlu0 %5582
        %s5585 = sor.u32 256, 48
        %5586 = vbcast.lane.b32.xlu0 %v5560, %s5585
        %v5587 = vpop.permute.xlu0 %5586
        %s5589 = sor.u32 256, 56
        %5590 = vbcast.lane.b32.xlu0 %v5560, %s5589
        %v5591 = vpop.permute.xlu0 %5590
        %s5593 = sor.u32 256, 64
        %5594 = vbcast.lane.b32.xlu0 %v5560, %s5593
        %v5595 = vpop.permute.xlu0 %5594
        %s5597 = sor.u32 256, 72
        %5598 = vbcast.lane.b32.xlu0 %v5560, %s5597
        %v5599 = vpop.permute.xlu0 %5598
        %s5601 = sor.u32 256, 80
        %5602 = vbcast.lane.b32.xlu0 %v5560, %s5601
        %v5603 = vpop.permute.xlu0 %5602
        %s5605 = sor.u32 256, 88
        %5606 = vbcast.lane.b32.xlu0 %v5560, %s5605
        %v5607 = vpop.permute.xlu0 %5606
        %s5609 = sor.u32 256, 96
        %5610 = vbcast.lane.b32.xlu0 %v5560, %s5609
        %v5611 = vpop.permute.xlu0 %5610
        %s5613 = sor.u32 256, 104
        %5614 = vbcast.lane.b32.xlu0 %v5560, %s5613
        %v5615 = vpop.permute.xlu0 %5614
        %s5617 = sor.u32 256, 112
        %5618 = vbcast.lane.b32.xlu0 %v5560, %s5617
        %v5619 = vpop.permute.xlu0 %5618
        %s5621 = sor.u32 256, 120
        %5622 = vbcast.lane.b32.xlu0 %v5560, %s5621
        %v5623 = vpop.permute.xlu0 %5622
        %v5624 = vlaneseq
        %v5625 = vshrl.u32 %v5624, 7
        %v5626 = vsub.s32 6, %v5625
        %v5627 = vrot.slane %v5221, %v5626
        %5629 = vbcast.lane.b32.xlu0 %v5627, 256
        %v5630 = vpop.permute.xlu0 %5629
        %s5632 = sor.u32 256, 8
        %5633 = vbcast.lane.b32.xlu0 %v5627, %s5632
        %v5634 = vpop.permute.xlu0 %5633
        %s5636 = sor.u32 256, 16
        %5637 = vbcast.lane.b32.xlu0 %v5627, %s5636
        %v5638 = vpop.permute.xlu0 %5637
        %s5640 = sor.u32 256, 24
        %5641 = vbcast.lane.b32.xlu0 %v5627, %s5640
        %v5642 = vpop.permute.xlu0 %5641
        %s5644 = sor.u32 256, 32
        %5645 = vbcast.lane.b32.xlu0 %v5627, %s5644
        %v5646 = vpop.permute.xlu0 %5645
        %s5648 = sor.u32 256, 40
        %5649 = vbcast.lane.b32.xlu0 %v5627, %s5648
        %v5650 = vpop.permute.xlu0 %5649
        %s5652 = sor.u32 256, 48
        %5653 = vbcast.lane.b32.xlu0 %v5627, %s5652
        %v5654 = vpop.permute.xlu0 %5653
        %s5656 = sor.u32 256, 56
        %5657 = vbcast.lane.b32.xlu0 %v5627, %s5656
        %v5658 = vpop.permute.xlu0 %5657
        %s5660 = sor.u32 256, 64
        %5661 = vbcast.lane.b32.xlu0 %v5627, %s5660
        %v5662 = vpop.permute.xlu0 %5661
        %s5664 = sor.u32 256, 72
        %5665 = vbcast.lane.b32.xlu0 %v5627, %s5664
        %v5666 = vpop.permute.xlu0 %5665
        %s5668 = sor.u32 256, 80
        %5669 = vbcast.lane.b32.xlu0 %v5627, %s5668
        %v5670 = vpop.permute.xlu0 %5669
        %s5672 = sor.u32 256, 88
        %5673 = vbcast.lane.b32.xlu0 %v5627, %s5672
        %v5674 = vpop.permute.xlu0 %5673
        %s5676 = sor.u32 256, 96
        %5677 = vbcast.lane.b32.xlu0 %v5627, %s5676
        %v5678 = vpop.permute.xlu0 %5677
        %s5680 = sor.u32 256, 104
        %5681 = vbcast.lane.b32.xlu0 %v5627, %s5680
        %v5682 = vpop.permute.xlu0 %5681
        %s5684 = sor.u32 256, 112
        %5685 = vbcast.lane.b32.xlu0 %v5627, %s5684
        %v5686 = vpop.permute.xlu0 %5685
        %s5688 = sor.u32 256, 120
        %5689 = vbcast.lane.b32.xlu0 %v5627, %s5688
        %v5690 = vpop.permute.xlu0 %5689
        %v5691 = vlaneseq
        %v5692 = vshrl.u32 %v5691, 7
        %v5693 = vsub.s32 7, %v5692
        %v5694 = vrot.slane %v5221, %v5693
        %5696 = vbcast.lane.b32.xlu0 %v5694, 256
        %v5697 = vpop.permute.xlu0 %5696
        %s5699 = sor.u32 256, 8
        %5700 = vbcast.lane.b32.xlu0 %v5694, %s5699
        %v5701 = vpop.permute.xlu0 %5700
        %s5703 = sor.u32 256, 16
        %5704 = vbcast.lane.b32.xlu0 %v5694, %s5703
        %v5705 = vpop.permute.xlu0 %5704
        %s5707 = sor.u32 256, 24
        %5708 = vbcast.lane.b32.xlu0 %v5694, %s5707
        %v5709 = vpop.permute.xlu0 %5708
        %s5711 = sor.u32 256, 32
        %5712 = vbcast.lane.b32.xlu0 %v5694, %s5711
        %v5713 = vpop.permute.xlu0 %5712
        %s5715 = sor.u32 256, 40
        %5716 = vbcast.lane.b32.xlu0 %v5694, %s5715
        %v5717 = vpop.permute.xlu0 %5716
        %s5719 = sor.u32 256, 48
        %5720 = vbcast.lane.b32.xlu0 %v5694, %s5719
        %v5721 = vpop.permute.xlu0 %5720
        %s5723 = sor.u32 256, 56
        %5724 = vbcast.lane.b32.xlu0 %v5694, %s5723
        %v5725 = vpop.permute.xlu0 %5724
        %s5727 = sor.u32 256, 64
        %5728 = vbcast.lane.b32.xlu0 %v5694, %s5727
        %v5729 = vpop.permute.xlu0 %5728
        %s5731 = sor.u32 256, 72
        %5732 = vbcast.lane.b32.xlu0 %v5694, %s5731
        %v5733 = vpop.permute.xlu0 %5732
        %s5735 = sor.u32 256, 80
        %5736 = vbcast.lane.b32.xlu0 %v5694, %s5735
        %v5737 = vpop.permute.xlu0 %5736
        %s5739 = sor.u32 256, 88
        %5740 = vbcast.lane.b32.xlu0 %v5694, %s5739
        %v5741 = vpop.permute.xlu0 %5740
        %s5743 = sor.u32 256, 96
        %5744 = vbcast.lane.b32.xlu0 %v5694, %s5743
        %v5745 = vpop.permute.xlu0 %5744
        %s5747 = sor.u32 256, 104
        %5748 = vbcast.lane.b32.xlu0 %v5694, %s5747
        %v5749 = vpop.permute.xlu0 %5748
        %s5751 = sor.u32 256, 112
        %5752 = vbcast.lane.b32.xlu0 %v5694, %s5751
        %v5753 = vpop.permute.xlu0 %5752
        %s5755 = sor.u32 256, 120
        %5756 = vbcast.lane.b32.xlu0 %v5694, %s5755
        %v5757 = vpop.permute.xlu0 %5756
        %v5758 = vmul.f32 %v442, %v5228
        %v5759 = vmul.f32 %v443, %v5232
        %v5760 = vmul.f32 %v444, %v5236
        %v5761 = vmul.f32 %v445, %v5240
        %v5762 = vmul.f32 %v446, %v5244
        %v5763 = vmul.f32 %v447, %v5248
        %v5764 = vmul.f32 %v448, %v5252
        %v5765 = vmul.f32 %v449, %v5256
        %v5766 = vmul.f32 %v450, %v5260
        %v5767 = vmul.f32 %v451, %v5264
        %v5768 = vmul.f32 %v452, %v5268
        %v5769 = vmul.f32 %v453, %v5272
        %v5770 = vmul.f32 %v454, %v5276
        %v5771 = vmul.f32 %v455, %v5280
        %v5772 = vmul.f32 %v456, %v5284
        %v5773 = vmul.f32 %v457, %v5288
        %v5774 = vmul.f32 %v458, %v5295
        %v5775 = vmul.f32 %v459, %v5299
        %v5776 = vmul.f32 %v460, %v5303
        %v5777 = vmul.f32 %v461, %v5307
        %v5778 = vmul.f32 %v462, %v5311
        %v5779 = vmul.f32 %v463, %v5315
        %v5780 = vmul.f32 %v464, %v5319
        %v5781 = vmul.f32 %v465, %v5323
        %v5782 = vmul.f32 %v466, %v5327
        %v5783 = vmul.f32 %v467, %v5331
        %v5784 = vmul.f32 %v468, %v5335
        %v5785 = vmul.f32 %v469, %v5339
        %v5786 = vmul.f32 %v470, %v5343
        %v5787 = vmul.f32 %v471, %v5347
        %v5788 = vmul.f32 %v472, %v5351
        %v5789 = vmul.f32 %v473, %v5355
        %v5790 = vmul.f32 %v474, %v5362
        %v5791 = vmul.f32 %v475, %v5366
        %v5792 = vmul.f32 %v476, %v5370
        %v5793 = vmul.f32 %v477, %v5374
        %v5794 = vmul.f32 %v478, %v5378
        %v5795 = vmul.f32 %v479, %v5382
        %v5796 = vmul.f32 %v480, %v5386
        %v5797 = vmul.f32 %v481, %v5390
        %v5798 = vmul.f32 %v482, %v5394
        %v5799 = vmul.f32 %v483, %v5398
        %v5800 = vmul.f32 %v484, %v5402
        %v5801 = vmul.f32 %v485, %v5406
        %v5802 = vmul.f32 %v486, %v5410
        %v5803 = vmul.f32 %v487, %v5414
        %v5804 = vmul.f32 %v488, %v5418
        %v5805 = vmul.f32 %v489, %v5422
        %v5806 = vmul.f32 %v490, %v5429
        %v5807 = vmul.f32 %v491, %v5433
        %v5808 = vmul.f32 %v492, %v5437
        %v5809 = vmul.f32 %v493, %v5441
        %v5810 = vmul.f32 %v494, %v5445
        %v5811 = vmul.f32 %v495, %v5449
        %v5812 = vmul.f32 %v496, %v5453
        %v5813 = vmul.f32 %v497, %v5457
        %v5814 = vmul.f32 %v498, %v5461
        %v5815 = vmul.f32 %v499, %v5465
        %v5816 = vmul.f32 %v500, %v5469
        %v5817 = vmul.f32 %v501, %v5473
        %v5818 = vmul.f32 %v502, %v5477
        %v5819 = vmul.f32 %v503, %v5481
        %v5820 = vmul.f32 %v504, %v5485
        %v5821 = vmul.f32 %v505, %v5489
        %v5822 = vmul.f32 %v506, %v5496
        %v5823 = vmul.f32 %v507, %v5500
        %v5824 = vmul.f32 %v508, %v5504
        %v5825 = vmul.f32 %v509, %v5508
        %v5826 = vmul.f32 %v510, %v5512
        %v5827 = vmul.f32 %v511, %v5516
        %v5828 = vmul.f32 %v512, %v5520
        %v5829 = vmul.f32 %v513, %v5524
        %v5830 = vmul.f32 %v514, %v5528
        %v5831 = vmul.f32 %v515, %v5532
        %v5832 = vmul.f32 %v516, %v5536
        %v5833 = vmul.f32 %v517, %v5540
        %v5834 = vmul.f32 %v518, %v5544
        %v5835 = vmul.f32 %v519, %v5548
        %v5836 = vmul.f32 %v520, %v5552
        %v5837 = vmul.f32 %v521, %v5556
        %v5838 = vmul.f32 %v522, %v5563
        %v5839 = vmul.f32 %v523, %v5567
        %v5840 = vmul.f32 %v524, %v5571
        %v5841 = vmul.f32 %v525, %v5575
        %v5842 = vmul.f32 %v526, %v5579
        %v5843 = vmul.f32 %v527, %v5583
        %v5844 = vmul.f32 %v528, %v5587
        %v5845 = vmul.f32 %v529, %v5591
        %v5846 = vmul.f32 %v530, %v5595
        %v5847 = vmul.f32 %v531, %v5599
        %v5848 = vmul.f32 %v532, %v5603
        %v5849 = vmul.f32 %v533, %v5607
        %v5850 = vmul.f32 %v534, %v5611
        %v5851 = vmul.f32 %v535, %v5615
        %v5852 = vmul.f32 %v536, %v5619
        %v5853 = vmul.f32 %v537, %v5623
        %v5854 = vmul.f32 %v538, %v5630
        %v5855 = vmul.f32 %v539, %v5634
        %v5856 = vmul.f32 %v540, %v5638
        %v5857 = vmul.f32 %v541, %v5642
        %v5858 = vmul.f32 %v542, %v5646
        %v5859 = vmul.f32 %v543, %v5650
        %v5860 = vmul.f32 %v544, %v5654
        %v5861 = vmul.f32 %v545, %v5658
        %v5862 = vmul.f32 %v546, %v5662
        %v5863 = vmul.f32 %v547, %v5666
        %v5864 = vmul.f32 %v548, %v5670
        %v5865 = vmul.f32 %v549, %v5674
        %v5866 = vmul.f32 %v550, %v5678
        %v5867 = vmul.f32 %v551, %v5682
        %v5868 = vmul.f32 %v552, %v5686
        %v5869 = vmul.f32 %v553, %v5690
        %v5870 = vmul.f32 %v554, %v5697
        %v5871 = vmul.f32 %v555, %v5701
        %v5872 = vmul.f32 %v556, %v5705
        %v5873 = vmul.f32 %v557, %v5709
        %v5874 = vmul.f32 %v558, %v5713
        %v5875 = vmul.f32 %v559, %v5717
        %v5876 = vmul.f32 %v560, %v5721
        %v5877 = vmul.f32 %v561, %v5725
        %v5878 = vmul.f32 %v562, %v5729
        %v5879 = vmul.f32 %v563, %v5733
        %v5880 = vmul.f32 %v564, %v5737
        %v5881 = vmul.f32 %v565, %v5741
        %v5882 = vmul.f32 %v566, %v5745
        %v5883 = vmul.f32 %v567, %v5749
        %v5884 = vmul.f32 %v568, %v5753
        %v5885 = vmul.f32 %v569, %v5757
        %v5886 = vadd.f32 %v5758, %v5759
        %v5887 = vadd.f32 %v5886, %v5760
        %v5888 = vadd.f32 %v5887, %v5761
        %v5889 = vadd.f32 %v5888, %v5762
        %v5890 = vadd.f32 %v5889, %v5763
        %v5891 = vadd.f32 %v5890, %v5764
        %v5892 = vadd.f32 %v5891, %v5765
        %v5893 = vadd.f32 %v5892, %v5766
        %v5894 = vadd.f32 %v5893, %v5767
        %v5895 = vadd.f32 %v5894, %v5768
        %v5896 = vadd.f32 %v5895, %v5769
        %v5897 = vadd.f32 %v5896, %v5770
        %v5898 = vadd.f32 %v5897, %v5771
        %v5899 = vadd.f32 %v5898, %v5772
        %v5900 = vadd.f32 %v5899, %v5773
        %v5901 = vrot.slane %v5900, 4
        %v5902 = vadd.f32 %v5900, %v5901
        %v5903 = vrot.slane %v5902, 2
        %v5904 = vadd.f32 %v5902, %v5903
        %v5905 = vrot.slane %v5904, 1
        %v5906 = vadd.f32 %v5904, %v5905
        %v5907 = vadd.f32 %v5774, %v5775
        %v5908 = vadd.f32 %v5907, %v5776
        %v5909 = vadd.f32 %v5908, %v5777
        %v5910 = vadd.f32 %v5909, %v5778
        %v5911 = vadd.f32 %v5910, %v5779
        %v5912 = vadd.f32 %v5911, %v5780
        %v5913 = vadd.f32 %v5912, %v5781
        %v5914 = vadd.f32 %v5913, %v5782
        %v5915 = vadd.f32 %v5914, %v5783
        %v5916 = vadd.f32 %v5915, %v5784
        %v5917 = vadd.f32 %v5916, %v5785
        %v5918 = vadd.f32 %v5917, %v5786
        %v5919 = vadd.f32 %v5918, %v5787
        %v5920 = vadd.f32 %v5919, %v5788
        %v5921 = vadd.f32 %v5920, %v5789
        %v5922 = vrot.slane %v5921, 4
        %v5923 = vadd.f32 %v5921, %v5922
        %v5924 = vrot.slane %v5923, 2
        %v5925 = vadd.f32 %v5923, %v5924
        %v5926 = vrot.slane %v5925, 1
        %v5927 = vadd.f32 %v5925, %v5926
        %v5928 = vadd.f32 %v5790, %v5791
        %v5929 = vadd.f32 %v5928, %v5792
        %v5930 = vadd.f32 %v5929, %v5793
        %v5931 = vadd.f32 %v5930, %v5794
        %v5932 = vadd.f32 %v5931, %v5795
        %v5933 = vadd.f32 %v5932, %v5796
        %v5934 = vadd.f32 %v5933, %v5797
        %v5935 = vadd.f32 %v5934, %v5798
        %v5936 = vadd.f32 %v5935, %v5799
        %v5937 = vadd.f32 %v5936, %v5800
        %v5938 = vadd.f32 %v5937, %v5801
        %v5939 = vadd.f32 %v5938, %v5802
        %v5940 = vadd.f32 %v5939, %v5803
        %v5941 = vadd.f32 %v5940, %v5804
        %v5942 = vadd.f32 %v5941, %v5805
        %v5943 = vrot.slane %v5942, 4
        %v5944 = vadd.f32 %v5942, %v5943
        %v5945 = vrot.slane %v5944, 2
        %v5946 = vadd.f32 %v5944, %v5945
        %v5947 = vrot.slane %v5946, 1
        %v5948 = vadd.f32 %v5946, %v5947
        %v5949 = vadd.f32 %v5806, %v5807
        %v5950 = vadd.f32 %v5949, %v5808
        %v5951 = vadd.f32 %v5950, %v5809
        %v5952 = vadd.f32 %v5951, %v5810
        %v5953 = vadd.f32 %v5952, %v5811
        %v5954 = vadd.f32 %v5953, %v5812
        %v5955 = vadd.f32 %v5954, %v5813
        %v5956 = vadd.f32 %v5955, %v5814
        %v5957 = vadd.f32 %v5956, %v5815
        %v5958 = vadd.f32 %v5957, %v5816
        %v5959 = vadd.f32 %v5958, %v5817
        %v5960 = vadd.f32 %v5959, %v5818
        %v5961 = vadd.f32 %v5960, %v5819
        %v5962 = vadd.f32 %v5961, %v5820
        %v5963 = vadd.f32 %v5962, %v5821
        %v5964 = vrot.slane %v5963, 4
        %v5965 = vadd.f32 %v5963, %v5964
        %v5966 = vrot.slane %v5965, 2
        %v5967 = vadd.f32 %v5965, %v5966
        %v5968 = vrot.slane %v5967, 1
        %v5969 = vadd.f32 %v5967, %v5968
        %v5970 = vadd.f32 %v5822, %v5823
        %v5971 = vadd.f32 %v5970, %v5824
        %v5972 = vadd.f32 %v5971, %v5825
        %v5973 = vadd.f32 %v5972, %v5826
        %v5974 = vadd.f32 %v5973, %v5827
        %v5975 = vadd.f32 %v5974, %v5828
        %v5976 = vadd.f32 %v5975, %v5829
        %v5977 = vadd.f32 %v5976, %v5830
        %v5978 = vadd.f32 %v5977, %v5831
        %v5979 = vadd.f32 %v5978, %v5832
        %v5980 = vadd.f32 %v5979, %v5833
        %v5981 = vadd.f32 %v5980, %v5834
        %v5982 = vadd.f32 %v5981, %v5835
        %v5983 = vadd.f32 %v5982, %v5836
        %v5984 = vadd.f32 %v5983, %v5837
        %v5985 = vrot.slane %v5984, 4
        %v5986 = vadd.f32 %v5984, %v5985
        %v5987 = vrot.slane %v5986, 2
        %v5988 = vadd.f32 %v5986, %v5987
        %v5989 = vrot.slane %v5988, 1
        %v5990 = vadd.f32 %v5988, %v5989
        %v5991 = vadd.f32 %v5838, %v5839
        %v5992 = vadd.f32 %v5991, %v5840
        %v5993 = vadd.f32 %v5992, %v5841
        %v5994 = vadd.f32 %v5993, %v5842
        %v5995 = vadd.f32 %v5994, %v5843
        %v5996 = vadd.f32 %v5995, %v5844
        %v5997 = vadd.f32 %v5996, %v5845
        %v5998 = vadd.f32 %v5997, %v5846
        %v5999 = vadd.f32 %v5998, %v5847
        %v6000 = vadd.f32 %v5999, %v5848
        %v6001 = vadd.f32 %v6000, %v5849
        %v6002 = vadd.f32 %v6001, %v5850
        %v6003 = vadd.f32 %v6002, %v5851
        %v6004 = vadd.f32 %v6003, %v5852
        %v6005 = vadd.f32 %v6004, %v5853
        %v6006 = vrot.slane %v6005, 4
        %v6007 = vadd.f32 %v6005, %v6006
        %v6008 = vrot.slane %v6007, 2
        %v6009 = vadd.f32 %v6007, %v6008
        %v6010 = vrot.slane %v6009, 1
        %v6011 = vadd.f32 %v6009, %v6010
        %v6012 = vadd.f32 %v5854, %v5855
        %v6013 = vadd.f32 %v6012, %v5856
        %v6014 = vadd.f32 %v6013, %v5857
        %v6015 = vadd.f32 %v6014, %v5858
        %v6016 = vadd.f32 %v6015, %v5859
        %v6017 = vadd.f32 %v6016, %v5860
        %v6018 = vadd.f32 %v6017, %v5861
        %v6019 = vadd.f32 %v6018, %v5862
        %v6020 = vadd.f32 %v6019, %v5863
        %v6021 = vadd.f32 %v6020, %v5864
        %v6022 = vadd.f32 %v6021, %v5865
        %v6023 = vadd.f32 %v6022, %v5866
        %v6024 = vadd.f32 %v6023, %v5867
        %v6025 = vadd.f32 %v6024, %v5868
        %v6026 = vadd.f32 %v6025, %v5869
        %v6027 = vrot.slane %v6026, 4
        %v6028 = vadd.f32 %v6026, %v6027
        %v6029 = vrot.slane %v6028, 2
        %v6030 = vadd.f32 %v6028, %v6029
        %v6031 = vrot.slane %v6030, 1
        %v6032 = vadd.f32 %v6030, %v6031
        %v6033 = vadd.f32 %v5870, %v5871
        %v6034 = vadd.f32 %v6033, %v5872
        %v6035 = vadd.f32 %v6034, %v5873
        %v6036 = vadd.f32 %v6035, %v5874
        %v6037 = vadd.f32 %v6036, %v5875
        %v6038 = vadd.f32 %v6037, %v5876
        %v6039 = vadd.f32 %v6038, %v5877
        %v6040 = vadd.f32 %v6039, %v5878
        %v6041 = vadd.f32 %v6040, %v5879
        %v6042 = vadd.f32 %v6041, %v5880
        %v6043 = vadd.f32 %v6042, %v5881
        %v6044 = vadd.f32 %v6043, %v5882
        %v6045 = vadd.f32 %v6044, %v5883
        %v6046 = vadd.f32 %v6045, %v5884
        %v6047 = vadd.f32 %v6046, %v5885
        %v6048 = vrot.slane %v6047, 4
        %v6049 = vadd.f32 %v6047, %v6048
        %v6050 = vrot.slane %v6049, 2
        %v6051 = vadd.f32 %v6049, %v6050
        %v6052 = vrot.slane %v6051, 1
        %v6053 = vadd.f32 %v6051, %v6052
        %v6062 = vsel %vm1848, %v5927, %v5906
        %v6063 = vsel %vm1850, %v5948, %v6062
        %v6064 = vsel %vm1852, %v5969, %v6063
        %v6065 = vsel %vm1854, %v5990, %v6064
        %v6066 = vsel %vm1856, %v6011, %v6065
        %v6067 = vsel %vm1858, %v6032, %v6066
        %v6068 = vsel %vm1860, %v6053, %v6067
        %v6070 = vsel %vm1839, %v6068, -1e+30
        %6071 = vmax.xlane.f32.xlu0 %v6070
        %v6072 = vpop.xlane.xlu0 %6071
        %v6073 = vsub.f32 %v6070, %v6072
        %v6074 = vmul.f32 %v6073, 1.442695
        %v6075 = vpow.pop %v6074
        %6076 = vadd.xlane.f32.xlu0 %v6075
        %v6077 = vpop.xlane.xlu0 %6076
        %v6078 = vrcp.pop %v6077
        %v6079 = vmul.f32 %v6075, %v6078
        %v6080 = vlaneseq
        %v6081 = vshrl.u32 %v6080, 7
        %v6082 = vsub.s32 0, %v6081
        %v6083 = vrot.slane %v6079, %v6082
        %6085 = vbcast.lane.b32.xlu0 %v6083, 256
        %v6086 = vpop.permute.xlu0 %6085
        %s6088 = sor.u32 256, 8
        %6089 = vbcast.lane.b32.xlu0 %v6083, %s6088
        %v6090 = vpop.permute.xlu0 %6089
        %s6092 = sor.u32 256, 16
        %6093 = vbcast.lane.b32.xlu0 %v6083, %s6092
        %v6094 = vpop.permute.xlu0 %6093
        %s6096 = sor.u32 256, 24
        %6097 = vbcast.lane.b32.xlu0 %v6083, %s6096
        %v6098 = vpop.permute.xlu0 %6097
        %s6100 = sor.u32 256, 32
        %6101 = vbcast.lane.b32.xlu0 %v6083, %s6100
        %v6102 = vpop.permute.xlu0 %6101
        %s6104 = sor.u32 256, 40
        %6105 = vbcast.lane.b32.xlu0 %v6083, %s6104
        %v6106 = vpop.permute.xlu0 %6105
        %s6108 = sor.u32 256, 48
        %6109 = vbcast.lane.b32.xlu0 %v6083, %s6108
        %v6110 = vpop.permute.xlu0 %6109
        %s6112 = sor.u32 256, 56
        %6113 = vbcast.lane.b32.xlu0 %v6083, %s6112
        %v6114 = vpop.permute.xlu0 %6113
        %s6116 = sor.u32 256, 64
        %6117 = vbcast.lane.b32.xlu0 %v6083, %s6116
        %v6118 = vpop.permute.xlu0 %6117
        %s6120 = sor.u32 256, 72
        %6121 = vbcast.lane.b32.xlu0 %v6083, %s6120
        %v6122 = vpop.permute.xlu0 %6121
        %s6124 = sor.u32 256, 80
        %6125 = vbcast.lane.b32.xlu0 %v6083, %s6124
        %v6126 = vpop.permute.xlu0 %6125
        %s6128 = sor.u32 256, 88
        %6129 = vbcast.lane.b32.xlu0 %v6083, %s6128
        %v6130 = vpop.permute.xlu0 %6129
        %s6132 = sor.u32 256, 96
        %6133 = vbcast.lane.b32.xlu0 %v6083, %s6132
        %v6134 = vpop.permute.xlu0 %6133
        %s6136 = sor.u32 256, 104
        %6137 = vbcast.lane.b32.xlu0 %v6083, %s6136
        %v6138 = vpop.permute.xlu0 %6137
        %s6140 = sor.u32 256, 112
        %6141 = vbcast.lane.b32.xlu0 %v6083, %s6140
        %v6142 = vpop.permute.xlu0 %6141
        %s6144 = sor.u32 256, 120
        %6145 = vbcast.lane.b32.xlu0 %v6083, %s6144
        %v6146 = vpop.permute.xlu0 %6145
        %v6147 = vlaneseq
        %v6148 = vshrl.u32 %v6147, 7
        %v6149 = vsub.s32 1, %v6148
        %v6150 = vrot.slane %v6079, %v6149
        %6152 = vbcast.lane.b32.xlu0 %v6150, 256
        %v6153 = vpop.permute.xlu0 %6152
        %s6155 = sor.u32 256, 8
        %6156 = vbcast.lane.b32.xlu0 %v6150, %s6155
        %v6157 = vpop.permute.xlu0 %6156
        %s6159 = sor.u32 256, 16
        %6160 = vbcast.lane.b32.xlu0 %v6150, %s6159
        %v6161 = vpop.permute.xlu0 %6160
        %s6163 = sor.u32 256, 24
        %6164 = vbcast.lane.b32.xlu0 %v6150, %s6163
        %v6165 = vpop.permute.xlu0 %6164
        %s6167 = sor.u32 256, 32
        %6168 = vbcast.lane.b32.xlu0 %v6150, %s6167
        %v6169 = vpop.permute.xlu0 %6168
        %s6171 = sor.u32 256, 40
        %6172 = vbcast.lane.b32.xlu0 %v6150, %s6171
        %v6173 = vpop.permute.xlu0 %6172
        %s6175 = sor.u32 256, 48
        %6176 = vbcast.lane.b32.xlu0 %v6150, %s6175
        %v6177 = vpop.permute.xlu0 %6176
        %s6179 = sor.u32 256, 56
        %6180 = vbcast.lane.b32.xlu0 %v6150, %s6179
        %v6181 = vpop.permute.xlu0 %6180
        %s6183 = sor.u32 256, 64
        %6184 = vbcast.lane.b32.xlu0 %v6150, %s6183
        %v6185 = vpop.permute.xlu0 %6184
        %s6187 = sor.u32 256, 72
        %6188 = vbcast.lane.b32.xlu0 %v6150, %s6187
        %v6189 = vpop.permute.xlu0 %6188
        %s6191 = sor.u32 256, 80
        %6192 = vbcast.lane.b32.xlu0 %v6150, %s6191
        %v6193 = vpop.permute.xlu0 %6192
        %s6195 = sor.u32 256, 88
        %6196 = vbcast.lane.b32.xlu0 %v6150, %s6195
        %v6197 = vpop.permute.xlu0 %6196
        %s6199 = sor.u32 256, 96
        %6200 = vbcast.lane.b32.xlu0 %v6150, %s6199
        %v6201 = vpop.permute.xlu0 %6200
        %s6203 = sor.u32 256, 104
        %6204 = vbcast.lane.b32.xlu0 %v6150, %s6203
        %v6205 = vpop.permute.xlu0 %6204
        %s6207 = sor.u32 256, 112
        %6208 = vbcast.lane.b32.xlu0 %v6150, %s6207
        %v6209 = vpop.permute.xlu0 %6208
        %s6211 = sor.u32 256, 120
        %6212 = vbcast.lane.b32.xlu0 %v6150, %s6211
        %v6213 = vpop.permute.xlu0 %6212
        %v6214 = vlaneseq
        %v6215 = vshrl.u32 %v6214, 7
        %v6216 = vsub.s32 2, %v6215
        %v6217 = vrot.slane %v6079, %v6216
        %6219 = vbcast.lane.b32.xlu0 %v6217, 256
        %v6220 = vpop.permute.xlu0 %6219
        %s6222 = sor.u32 256, 8
        %6223 = vbcast.lane.b32.xlu0 %v6217, %s6222
        %v6224 = vpop.permute.xlu0 %6223
        %s6226 = sor.u32 256, 16
        %6227 = vbcast.lane.b32.xlu0 %v6217, %s6226
        %v6228 = vpop.permute.xlu0 %6227
        %s6230 = sor.u32 256, 24
        %6231 = vbcast.lane.b32.xlu0 %v6217, %s6230
        %v6232 = vpop.permute.xlu0 %6231
        %s6234 = sor.u32 256, 32
        %6235 = vbcast.lane.b32.xlu0 %v6217, %s6234
        %v6236 = vpop.permute.xlu0 %6235
        %s6238 = sor.u32 256, 40
        %6239 = vbcast.lane.b32.xlu0 %v6217, %s6238
        %v6240 = vpop.permute.xlu0 %6239
        %s6242 = sor.u32 256, 48
        %6243 = vbcast.lane.b32.xlu0 %v6217, %s6242
        %v6244 = vpop.permute.xlu0 %6243
        %s6246 = sor.u32 256, 56
        %6247 = vbcast.lane.b32.xlu0 %v6217, %s6246
        %v6248 = vpop.permute.xlu0 %6247
        %s6250 = sor.u32 256, 64
        %6251 = vbcast.lane.b32.xlu0 %v6217, %s6250
        %v6252 = vpop.permute.xlu0 %6251
        %s6254 = sor.u32 256, 72
        %6255 = vbcast.lane.b32.xlu0 %v6217, %s6254
        %v6256 = vpop.permute.xlu0 %6255
        %s6258 = sor.u32 256, 80
        %6259 = vbcast.lane.b32.xlu0 %v6217, %s6258
        %v6260 = vpop.permute.xlu0 %6259
        %s6262 = sor.u32 256, 88
        %6263 = vbcast.lane.b32.xlu0 %v6217, %s6262
        %v6264 = vpop.permute.xlu0 %6263
        %s6266 = sor.u32 256, 96
        %6267 = vbcast.lane.b32.xlu0 %v6217, %s6266
        %v6268 = vpop.permute.xlu0 %6267
        %s6270 = sor.u32 256, 104
        %6271 = vbcast.lane.b32.xlu0 %v6217, %s6270
        %v6272 = vpop.permute.xlu0 %6271
        %s6274 = sor.u32 256, 112
        %6275 = vbcast.lane.b32.xlu0 %v6217, %s6274
        %v6276 = vpop.permute.xlu0 %6275
        %s6278 = sor.u32 256, 120
        %6279 = vbcast.lane.b32.xlu0 %v6217, %s6278
        %v6280 = vpop.permute.xlu0 %6279
        %v6281 = vlaneseq
        %v6282 = vshrl.u32 %v6281, 7
        %v6283 = vsub.s32 3, %v6282
        %v6284 = vrot.slane %v6079, %v6283
        %6286 = vbcast.lane.b32.xlu0 %v6284, 256
        %v6287 = vpop.permute.xlu0 %6286
        %s6289 = sor.u32 256, 8
        %6290 = vbcast.lane.b32.xlu0 %v6284, %s6289
        %v6291 = vpop.permute.xlu0 %6290
        %s6293 = sor.u32 256, 16
        %6294 = vbcast.lane.b32.xlu0 %v6284, %s6293
        %v6295 = vpop.permute.xlu0 %6294
        %s6297 = sor.u32 256, 24
        %6298 = vbcast.lane.b32.xlu0 %v6284, %s6297
        %v6299 = vpop.permute.xlu0 %6298
        %s6301 = sor.u32 256, 32
        %6302 = vbcast.lane.b32.xlu0 %v6284, %s6301
        %v6303 = vpop.permute.xlu0 %6302
        %s6305 = sor.u32 256, 40
        %6306 = vbcast.lane.b32.xlu0 %v6284, %s6305
        %v6307 = vpop.permute.xlu0 %6306
        %s6309 = sor.u32 256, 48
        %6310 = vbcast.lane.b32.xlu0 %v6284, %s6309
        %v6311 = vpop.permute.xlu0 %6310
        %s6313 = sor.u32 256, 56
        %6314 = vbcast.lane.b32.xlu0 %v6284, %s6313
        %v6315 = vpop.permute.xlu0 %6314
        %s6317 = sor.u32 256, 64
        %6318 = vbcast.lane.b32.xlu0 %v6284, %s6317
        %v6319 = vpop.permute.xlu0 %6318
        %s6321 = sor.u32 256, 72
        %6322 = vbcast.lane.b32.xlu0 %v6284, %s6321
        %v6323 = vpop.permute.xlu0 %6322
        %s6325 = sor.u32 256, 80
        %6326 = vbcast.lane.b32.xlu0 %v6284, %s6325
        %v6327 = vpop.permute.xlu0 %6326
        %s6329 = sor.u32 256, 88
        %6330 = vbcast.lane.b32.xlu0 %v6284, %s6329
        %v6331 = vpop.permute.xlu0 %6330
        %s6333 = sor.u32 256, 96
        %6334 = vbcast.lane.b32.xlu0 %v6284, %s6333
        %v6335 = vpop.permute.xlu0 %6334
        %s6337 = sor.u32 256, 104
        %6338 = vbcast.lane.b32.xlu0 %v6284, %s6337
        %v6339 = vpop.permute.xlu0 %6338
        %s6341 = sor.u32 256, 112
        %6342 = vbcast.lane.b32.xlu0 %v6284, %s6341
        %v6343 = vpop.permute.xlu0 %6342
        %s6345 = sor.u32 256, 120
        %6346 = vbcast.lane.b32.xlu0 %v6284, %s6345
        %v6347 = vpop.permute.xlu0 %6346
        %v6348 = vlaneseq
        %v6349 = vshrl.u32 %v6348, 7
        %v6350 = vsub.s32 4, %v6349
        %v6351 = vrot.slane %v6079, %v6350
        %6353 = vbcast.lane.b32.xlu0 %v6351, 256
        %v6354 = vpop.permute.xlu0 %6353
        %s6356 = sor.u32 256, 8
        %6357 = vbcast.lane.b32.xlu0 %v6351, %s6356
        %v6358 = vpop.permute.xlu0 %6357
        %s6360 = sor.u32 256, 16
        %6361 = vbcast.lane.b32.xlu0 %v6351, %s6360
        %v6362 = vpop.permute.xlu0 %6361
        %s6364 = sor.u32 256, 24
        %6365 = vbcast.lane.b32.xlu0 %v6351, %s6364
        %v6366 = vpop.permute.xlu0 %6365
        %s6368 = sor.u32 256, 32
        %6369 = vbcast.lane.b32.xlu0 %v6351, %s6368
        %v6370 = vpop.permute.xlu0 %6369
        %s6372 = sor.u32 256, 40
        %6373 = vbcast.lane.b32.xlu0 %v6351, %s6372
        %v6374 = vpop.permute.xlu0 %6373
        %s6376 = sor.u32 256, 48
        %6377 = vbcast.lane.b32.xlu0 %v6351, %s6376
        %v6378 = vpop.permute.xlu0 %6377
        %s6380 = sor.u32 256, 56
        %6381 = vbcast.lane.b32.xlu0 %v6351, %s6380
        %v6382 = vpop.permute.xlu0 %6381
        %s6384 = sor.u32 256, 64
        %6385 = vbcast.lane.b32.xlu0 %v6351, %s6384
        %v6386 = vpop.permute.xlu0 %6385
        %s6388 = sor.u32 256, 72
        %6389 = vbcast.lane.b32.xlu0 %v6351, %s6388
        %v6390 = vpop.permute.xlu0 %6389
        %s6392 = sor.u32 256, 80
        %6393 = vbcast.lane.b32.xlu0 %v6351, %s6392
        %v6394 = vpop.permute.xlu0 %6393
        %s6396 = sor.u32 256, 88
        %6397 = vbcast.lane.b32.xlu0 %v6351, %s6396
        %v6398 = vpop.permute.xlu0 %6397
        %s6400 = sor.u32 256, 96
        %6401 = vbcast.lane.b32.xlu0 %v6351, %s6400
        %v6402 = vpop.permute.xlu0 %6401
        %s6404 = sor.u32 256, 104
        %6405 = vbcast.lane.b32.xlu0 %v6351, %s6404
        %v6406 = vpop.permute.xlu0 %6405
        %s6408 = sor.u32 256, 112
        %6409 = vbcast.lane.b32.xlu0 %v6351, %s6408
        %v6410 = vpop.permute.xlu0 %6409
        %s6412 = sor.u32 256, 120
        %6413 = vbcast.lane.b32.xlu0 %v6351, %s6412
        %v6414 = vpop.permute.xlu0 %6413
        %v6415 = vlaneseq
        %v6416 = vshrl.u32 %v6415, 7
        %v6417 = vsub.s32 5, %v6416
        %v6418 = vrot.slane %v6079, %v6417
        %6420 = vbcast.lane.b32.xlu0 %v6418, 256
        %v6421 = vpop.permute.xlu0 %6420
        %s6423 = sor.u32 256, 8
        %6424 = vbcast.lane.b32.xlu0 %v6418, %s6423
        %v6425 = vpop.permute.xlu0 %6424
        %s6427 = sor.u32 256, 16
        %6428 = vbcast.lane.b32.xlu0 %v6418, %s6427
        %v6429 = vpop.permute.xlu0 %6428
        %s6431 = sor.u32 256, 24
        %6432 = vbcast.lane.b32.xlu0 %v6418, %s6431
        %v6433 = vpop.permute.xlu0 %6432
        %s6435 = sor.u32 256, 32
        %6436 = vbcast.lane.b32.xlu0 %v6418, %s6435
        %v6437 = vpop.permute.xlu0 %6436
        %s6439 = sor.u32 256, 40
        %6440 = vbcast.lane.b32.xlu0 %v6418, %s6439
        %v6441 = vpop.permute.xlu0 %6440
        %s6443 = sor.u32 256, 48
        %6444 = vbcast.lane.b32.xlu0 %v6418, %s6443
        %v6445 = vpop.permute.xlu0 %6444
        %s6447 = sor.u32 256, 56
        %6448 = vbcast.lane.b32.xlu0 %v6418, %s6447
        %v6449 = vpop.permute.xlu0 %6448
        %s6451 = sor.u32 256, 64
        %6452 = vbcast.lane.b32.xlu0 %v6418, %s6451
        %v6453 = vpop.permute.xlu0 %6452
        %s6455 = sor.u32 256, 72
        %6456 = vbcast.lane.b32.xlu0 %v6418, %s6455
        %v6457 = vpop.permute.xlu0 %6456
        %s6459 = sor.u32 256, 80
        %6460 = vbcast.lane.b32.xlu0 %v6418, %s6459
        %v6461 = vpop.permute.xlu0 %6460
        %s6463 = sor.u32 256, 88
        %6464 = vbcast.lane.b32.xlu0 %v6418, %s6463
        %v6465 = vpop.permute.xlu0 %6464
        %s6467 = sor.u32 256, 96
        %6468 = vbcast.lane.b32.xlu0 %v6418, %s6467
        %v6469 = vpop.permute.xlu0 %6468
        %s6471 = sor.u32 256, 104
        %6472 = vbcast.lane.b32.xlu0 %v6418, %s6471
        %v6473 = vpop.permute.xlu0 %6472
        %s6475 = sor.u32 256, 112
        %6476 = vbcast.lane.b32.xlu0 %v6418, %s6475
        %v6477 = vpop.permute.xlu0 %6476
        %s6479 = sor.u32 256, 120
        %6480 = vbcast.lane.b32.xlu0 %v6418, %s6479
        %v6481 = vpop.permute.xlu0 %6480
        %v6482 = vlaneseq
        %v6483 = vshrl.u32 %v6482, 7
        %v6484 = vsub.s32 6, %v6483
        %v6485 = vrot.slane %v6079, %v6484
        %6487 = vbcast.lane.b32.xlu0 %v6485, 256
        %v6488 = vpop.permute.xlu0 %6487
        %s6490 = sor.u32 256, 8
        %6491 = vbcast.lane.b32.xlu0 %v6485, %s6490
        %v6492 = vpop.permute.xlu0 %6491
        %s6494 = sor.u32 256, 16
        %6495 = vbcast.lane.b32.xlu0 %v6485, %s6494
        %v6496 = vpop.permute.xlu0 %6495
        %s6498 = sor.u32 256, 24
        %6499 = vbcast.lane.b32.xlu0 %v6485, %s6498
        %v6500 = vpop.permute.xlu0 %6499
        %s6502 = sor.u32 256, 32
        %6503 = vbcast.lane.b32.xlu0 %v6485, %s6502
        %v6504 = vpop.permute.xlu0 %6503
        %s6506 = sor.u32 256, 40
        %6507 = vbcast.lane.b32.xlu0 %v6485, %s6506
        %v6508 = vpop.permute.xlu0 %6507
        %s6510 = sor.u32 256, 48
        %6511 = vbcast.lane.b32.xlu0 %v6485, %s6510
        %v6512 = vpop.permute.xlu0 %6511
        %s6514 = sor.u32 256, 56
        %6515 = vbcast.lane.b32.xlu0 %v6485, %s6514
        %v6516 = vpop.permute.xlu0 %6515
        %s6518 = sor.u32 256, 64
        %6519 = vbcast.lane.b32.xlu0 %v6485, %s6518
        %v6520 = vpop.permute.xlu0 %6519
        %s6522 = sor.u32 256, 72
        %6523 = vbcast.lane.b32.xlu0 %v6485, %s6522
        %v6524 = vpop.permute.xlu0 %6523
        %s6526 = sor.u32 256, 80
        %6527 = vbcast.lane.b32.xlu0 %v6485, %s6526
        %v6528 = vpop.permute.xlu0 %6527
        %s6530 = sor.u32 256, 88
        %6531 = vbcast.lane.b32.xlu0 %v6485, %s6530
        %v6532 = vpop.permute.xlu0 %6531
        %s6534 = sor.u32 256, 96
        %6535 = vbcast.lane.b32.xlu0 %v6485, %s6534
        %v6536 = vpop.permute.xlu0 %6535
        %s6538 = sor.u32 256, 104
        %6539 = vbcast.lane.b32.xlu0 %v6485, %s6538
        %v6540 = vpop.permute.xlu0 %6539
        %s6542 = sor.u32 256, 112
        %6543 = vbcast.lane.b32.xlu0 %v6485, %s6542
        %v6544 = vpop.permute.xlu0 %6543
        %s6546 = sor.u32 256, 120
        %6547 = vbcast.lane.b32.xlu0 %v6485, %s6546
        %v6548 = vpop.permute.xlu0 %6547
        %v6549 = vlaneseq
        %v6550 = vshrl.u32 %v6549, 7
        %v6551 = vsub.s32 7, %v6550
        %v6552 = vrot.slane %v6079, %v6551
        %6554 = vbcast.lane.b32.xlu0 %v6552, 256
        %v6555 = vpop.permute.xlu0 %6554
        %s6557 = sor.u32 256, 8
        %6558 = vbcast.lane.b32.xlu0 %v6552, %s6557
        %v6559 = vpop.permute.xlu0 %6558
        %s6561 = sor.u32 256, 16
        %6562 = vbcast.lane.b32.xlu0 %v6552, %s6561
        %v6563 = vpop.permute.xlu0 %6562
        %s6565 = sor.u32 256, 24
        %6566 = vbcast.lane.b32.xlu0 %v6552, %s6565
        %v6567 = vpop.permute.xlu0 %6566
        %s6569 = sor.u32 256, 32
        %6570 = vbcast.lane.b32.xlu0 %v6552, %s6569
        %v6571 = vpop.permute.xlu0 %6570
        %s6573 = sor.u32 256, 40
        %6574 = vbcast.lane.b32.xlu0 %v6552, %s6573
        %v6575 = vpop.permute.xlu0 %6574
        %s6577 = sor.u32 256, 48
        %6578 = vbcast.lane.b32.xlu0 %v6552, %s6577
        %v6579 = vpop.permute.xlu0 %6578
        %s6581 = sor.u32 256, 56
        %6582 = vbcast.lane.b32.xlu0 %v6552, %s6581
        %v6583 = vpop.permute.xlu0 %6582
        %s6585 = sor.u32 256, 64
        %6586 = vbcast.lane.b32.xlu0 %v6552, %s6585
        %v6587 = vpop.permute.xlu0 %6586
        %s6589 = sor.u32 256, 72
        %6590 = vbcast.lane.b32.xlu0 %v6552, %s6589
        %v6591 = vpop.permute.xlu0 %6590
        %s6593 = sor.u32 256, 80
        %6594 = vbcast.lane.b32.xlu0 %v6552, %s6593
        %v6595 = vpop.permute.xlu0 %6594
        %s6597 = sor.u32 256, 88
        %6598 = vbcast.lane.b32.xlu0 %v6552, %s6597
        %v6599 = vpop.permute.xlu0 %6598
        %s6601 = sor.u32 256, 96
        %6602 = vbcast.lane.b32.xlu0 %v6552, %s6601
        %v6603 = vpop.permute.xlu0 %6602
        %s6605 = sor.u32 256, 104
        %6606 = vbcast.lane.b32.xlu0 %v6552, %s6605
        %v6607 = vpop.permute.xlu0 %6606
        %s6609 = sor.u32 256, 112
        %6610 = vbcast.lane.b32.xlu0 %v6552, %s6609
        %v6611 = vpop.permute.xlu0 %6610
        %s6613 = sor.u32 256, 120
        %6614 = vbcast.lane.b32.xlu0 %v6552, %s6613
        %v6615 = vpop.permute.xlu0 %6614
        %v6616 = vmul.f32 %v570, %v6086
        %v6617 = vmul.f32 %v571, %v6090
        %v6618 = vmul.f32 %v572, %v6094
        %v6619 = vmul.f32 %v573, %v6098
        %v6620 = vmul.f32 %v574, %v6102
        %v6621 = vmul.f32 %v575, %v6106
        %v6622 = vmul.f32 %v576, %v6110
        %v6623 = vmul.f32 %v577, %v6114
        %v6624 = vmul.f32 %v578, %v6118
        %v6625 = vmul.f32 %v579, %v6122
        %v6626 = vmul.f32 %v580, %v6126
        %v6627 = vmul.f32 %v581, %v6130
        %v6628 = vmul.f32 %v582, %v6134
        %v6629 = vmul.f32 %v583, %v6138
        %v6630 = vmul.f32 %v584, %v6142
        %v6631 = vmul.f32 %v585, %v6146
        %v6632 = vmul.f32 %v586, %v6153
        %v6633 = vmul.f32 %v587, %v6157
        %v6634 = vmul.f32 %v588, %v6161
        %v6635 = vmul.f32 %v589, %v6165
        %v6636 = vmul.f32 %v590, %v6169
        %v6637 = vmul.f32 %v591, %v6173
        %v6638 = vmul.f32 %v592, %v6177
        %v6639 = vmul.f32 %v593, %v6181
        %v6640 = vmul.f32 %v594, %v6185
        %v6641 = vmul.f32 %v595, %v6189
        %v6642 = vmul.f32 %v596, %v6193
        %v6643 = vmul.f32 %v597, %v6197
        %v6644 = vmul.f32 %v598, %v6201
        %v6645 = vmul.f32 %v599, %v6205
        %v6646 = vmul.f32 %v600, %v6209
        %v6647 = vmul.f32 %v601, %v6213
        %v6648 = vmul.f32 %v602, %v6220
        %v6649 = vmul.f32 %v603, %v6224
        %v6650 = vmul.f32 %v604, %v6228
        %v6651 = vmul.f32 %v605, %v6232
        %v6652 = vmul.f32 %v606, %v6236
        %v6653 = vmul.f32 %v607, %v6240
        %v6654 = vmul.f32 %v608, %v6244
        %v6655 = vmul.f32 %v609, %v6248
        %v6656 = vmul.f32 %v610, %v6252
        %v6657 = vmul.f32 %v611, %v6256
        %v6658 = vmul.f32 %v612, %v6260
        %v6659 = vmul.f32 %v613, %v6264
        %v6660 = vmul.f32 %v614, %v6268
        %v6661 = vmul.f32 %v615, %v6272
        %v6662 = vmul.f32 %v616, %v6276
        %v6663 = vmul.f32 %v617, %v6280
        %v6664 = vmul.f32 %v618, %v6287
        %v6665 = vmul.f32 %v619, %v6291
        %v6666 = vmul.f32 %v620, %v6295
        %v6667 = vmul.f32 %v621, %v6299
        %v6668 = vmul.f32 %v622, %v6303
        %v6669 = vmul.f32 %v623, %v6307
        %v6670 = vmul.f32 %v624, %v6311
        %v6671 = vmul.f32 %v625, %v6315
        %v6672 = vmul.f32 %v626, %v6319
        %v6673 = vmul.f32 %v627, %v6323
        %v6674 = vmul.f32 %v628, %v6327
        %v6675 = vmul.f32 %v629, %v6331
        %v6676 = vmul.f32 %v630, %v6335
        %v6677 = vmul.f32 %v631, %v6339
        %v6678 = vmul.f32 %v632, %v6343
        %v6679 = vmul.f32 %v633, %v6347
        %v6680 = vmul.f32 %v634, %v6354
        %v6681 = vmul.f32 %v635, %v6358
        %v6682 = vmul.f32 %v636, %v6362
        %v6683 = vmul.f32 %v637, %v6366
        %v6684 = vmul.f32 %v638, %v6370
        %v6685 = vmul.f32 %v639, %v6374
        %v6686 = vmul.f32 %v640, %v6378
        %v6687 = vmul.f32 %v641, %v6382
        %v6688 = vmul.f32 %v642, %v6386
        %v6689 = vmul.f32 %v643, %v6390
        %v6690 = vmul.f32 %v644, %v6394
        %v6691 = vmul.f32 %v645, %v6398
        %v6692 = vmul.f32 %v646, %v6402
        %v6693 = vmul.f32 %v647, %v6406
        %v6694 = vmul.f32 %v648, %v6410
        %v6695 = vmul.f32 %v649, %v6414
        %v6696 = vmul.f32 %v650, %v6421
        %v6697 = vmul.f32 %v651, %v6425
        %v6698 = vmul.f32 %v652, %v6429
        %v6699 = vmul.f32 %v653, %v6433
        %v6700 = vmul.f32 %v654, %v6437
        %v6701 = vmul.f32 %v655, %v6441
        %v6702 = vmul.f32 %v656, %v6445
        %v6703 = vmul.f32 %v657, %v6449
        %v6704 = vmul.f32 %v658, %v6453
        %v6705 = vmul.f32 %v659, %v6457
        %v6706 = vmul.f32 %v660, %v6461
        %v6707 = vmul.f32 %v661, %v6465
        %v6708 = vmul.f32 %v662, %v6469
        %v6709 = vmul.f32 %v663, %v6473
        %v6710 = vmul.f32 %v664, %v6477
        %v6711 = vmul.f32 %v665, %v6481
        %v6712 = vmul.f32 %v666, %v6488
        %v6713 = vmul.f32 %v667, %v6492
        %v6714 = vmul.f32 %v668, %v6496
        %v6715 = vmul.f32 %v669, %v6500
        %v6716 = vmul.f32 %v670, %v6504
        %v6717 = vmul.f32 %v671, %v6508
        %v6718 = vmul.f32 %v672, %v6512
        %v6719 = vmul.f32 %v673, %v6516
        %v6720 = vmul.f32 %v674, %v6520
        %v6721 = vmul.f32 %v675, %v6524
        %v6722 = vmul.f32 %v676, %v6528
        %v6723 = vmul.f32 %v677, %v6532
        %v6724 = vmul.f32 %v678, %v6536
        %v6725 = vmul.f32 %v679, %v6540
        %v6726 = vmul.f32 %v680, %v6544
        %v6727 = vmul.f32 %v681, %v6548
        %v6728 = vmul.f32 %v682, %v6555
        %v6729 = vmul.f32 %v683, %v6559
        %v6730 = vmul.f32 %v684, %v6563
        %v6731 = vmul.f32 %v685, %v6567
        %v6732 = vmul.f32 %v686, %v6571
        %v6733 = vmul.f32 %v687, %v6575
        %v6734 = vmul.f32 %v688, %v6579
        %v6735 = vmul.f32 %v689, %v6583
        %v6736 = vmul.f32 %v690, %v6587
        %v6737 = vmul.f32 %v691, %v6591
        %v6738 = vmul.f32 %v692, %v6595
        %v6739 = vmul.f32 %v693, %v6599
        %v6740 = vmul.f32 %v694, %v6603
        %v6741 = vmul.f32 %v695, %v6607
        %v6742 = vmul.f32 %v696, %v6611
        %v6743 = vmul.f32 %v697, %v6615
        %v6744 = vadd.f32 %v6616, %v6617
        %v6745 = vadd.f32 %v6744, %v6618
        %v6746 = vadd.f32 %v6745, %v6619
        %v6747 = vadd.f32 %v6746, %v6620
        %v6748 = vadd.f32 %v6747, %v6621
        %v6749 = vadd.f32 %v6748, %v6622
        %v6750 = vadd.f32 %v6749, %v6623
        %v6751 = vadd.f32 %v6750, %v6624
        %v6752 = vadd.f32 %v6751, %v6625
        %v6753 = vadd.f32 %v6752, %v6626
        %v6754 = vadd.f32 %v6753, %v6627
        %v6755 = vadd.f32 %v6754, %v6628
        %v6756 = vadd.f32 %v6755, %v6629
        %v6757 = vadd.f32 %v6756, %v6630
        %v6758 = vadd.f32 %v6757, %v6631
        %v6759 = vrot.slane %v6758, 4
        %v6760 = vadd.f32 %v6758, %v6759
        %v6761 = vrot.slane %v6760, 2
        %v6762 = vadd.f32 %v6760, %v6761
        %v6763 = vrot.slane %v6762, 1
        %v6764 = vadd.f32 %v6762, %v6763
        %v6765 = vadd.f32 %v6632, %v6633
        %v6766 = vadd.f32 %v6765, %v6634
        %v6767 = vadd.f32 %v6766, %v6635
        %v6768 = vadd.f32 %v6767, %v6636
        %v6769 = vadd.f32 %v6768, %v6637
        %v6770 = vadd.f32 %v6769, %v6638
        %v6771 = vadd.f32 %v6770, %v6639
        %v6772 = vadd.f32 %v6771, %v6640
        %v6773 = vadd.f32 %v6772, %v6641
        %v6774 = vadd.f32 %v6773, %v6642
        %v6775 = vadd.f32 %v6774, %v6643
        %v6776 = vadd.f32 %v6775, %v6644
        %v6777 = vadd.f32 %v6776, %v6645
        %v6778 = vadd.f32 %v6777, %v6646
        %v6779 = vadd.f32 %v6778, %v6647
        %v6780 = vrot.slane %v6779, 4
        %v6781 = vadd.f32 %v6779, %v6780
        %v6782 = vrot.slane %v6781, 2
        %v6783 = vadd.f32 %v6781, %v6782
        %v6784 = vrot.slane %v6783, 1
        %v6785 = vadd.f32 %v6783, %v6784
        %v6786 = vadd.f32 %v6648, %v6649
        %v6787 = vadd.f32 %v6786, %v6650
        %v6788 = vadd.f32 %v6787, %v6651
        %v6789 = vadd.f32 %v6788, %v6652
        %v6790 = vadd.f32 %v6789, %v6653
        %v6791 = vadd.f32 %v6790, %v6654
        %v6792 = vadd.f32 %v6791, %v6655
        %v6793 = vadd.f32 %v6792, %v6656
        %v6794 = vadd.f32 %v6793, %v6657
        %v6795 = vadd.f32 %v6794, %v6658
        %v6796 = vadd.f32 %v6795, %v6659
        %v6797 = vadd.f32 %v6796, %v6660
        %v6798 = vadd.f32 %v6797, %v6661
        %v6799 = vadd.f32 %v6798, %v6662
        %v6800 = vadd.f32 %v6799, %v6663
        %v6801 = vrot.slane %v6800, 4
        %v6802 = vadd.f32 %v6800, %v6801
        %v6803 = vrot.slane %v6802, 2
        %v6804 = vadd.f32 %v6802, %v6803
        %v6805 = vrot.slane %v6804, 1
        %v6806 = vadd.f32 %v6804, %v6805
        %v6807 = vadd.f32 %v6664, %v6665
        %v6808 = vadd.f32 %v6807, %v6666
        %v6809 = vadd.f32 %v6808, %v6667
        %v6810 = vadd.f32 %v6809, %v6668
        %v6811 = vadd.f32 %v6810, %v6669
        %v6812 = vadd.f32 %v6811, %v6670
        %v6813 = vadd.f32 %v6812, %v6671
        %v6814 = vadd.f32 %v6813, %v6672
        %v6815 = vadd.f32 %v6814, %v6673
        %v6816 = vadd.f32 %v6815, %v6674
        %v6817 = vadd.f32 %v6816, %v6675
        %v6818 = vadd.f32 %v6817, %v6676
        %v6819 = vadd.f32 %v6818, %v6677
        %v6820 = vadd.f32 %v6819, %v6678
        %v6821 = vadd.f32 %v6820, %v6679
        %v6822 = vrot.slane %v6821, 4
        %v6823 = vadd.f32 %v6821, %v6822
        %v6824 = vrot.slane %v6823, 2
        %v6825 = vadd.f32 %v6823, %v6824
        %v6826 = vrot.slane %v6825, 1
        %v6827 = vadd.f32 %v6825, %v6826
        %v6828 = vadd.f32 %v6680, %v6681
        %v6829 = vadd.f32 %v6828, %v6682
        %v6830 = vadd.f32 %v6829, %v6683
        %v6831 = vadd.f32 %v6830, %v6684
        %v6832 = vadd.f32 %v6831, %v6685
        %v6833 = vadd.f32 %v6832, %v6686
        %v6834 = vadd.f32 %v6833, %v6687
        %v6835 = vadd.f32 %v6834, %v6688
        %v6836 = vadd.f32 %v6835, %v6689
        %v6837 = vadd.f32 %v6836, %v6690
        %v6838 = vadd.f32 %v6837, %v6691
        %v6839 = vadd.f32 %v6838, %v6692
        %v6840 = vadd.f32 %v6839, %v6693
        %v6841 = vadd.f32 %v6840, %v6694
        %v6842 = vadd.f32 %v6841, %v6695
        %v6843 = vrot.slane %v6842, 4
        %v6844 = vadd.f32 %v6842, %v6843
        %v6845 = vrot.slane %v6844, 2
        %v6846 = vadd.f32 %v6844, %v6845
        %v6847 = vrot.slane %v6846, 1
        %v6848 = vadd.f32 %v6846, %v6847
        %v6849 = vadd.f32 %v6696, %v6697
        %v6850 = vadd.f32 %v6849, %v6698
        %v6851 = vadd.f32 %v6850, %v6699
        %v6852 = vadd.f32 %v6851, %v6700
        %v6853 = vadd.f32 %v6852, %v6701
        %v6854 = vadd.f32 %v6853, %v6702
        %v6855 = vadd.f32 %v6854, %v6703
        %v6856 = vadd.f32 %v6855, %v6704
        %v6857 = vadd.f32 %v6856, %v6705
        %v6858 = vadd.f32 %v6857, %v6706
        %v6859 = vadd.f32 %v6858, %v6707
        %v6860 = vadd.f32 %v6859, %v6708
        %v6861 = vadd.f32 %v6860, %v6709
        %v6862 = vadd.f32 %v6861, %v6710
        %v6863 = vadd.f32 %v6862, %v6711
        %v6864 = vrot.slane %v6863, 4
        %v6865 = vadd.f32 %v6863, %v6864
        %v6866 = vrot.slane %v6865, 2
        %v6867 = vadd.f32 %v6865, %v6866
        %v6868 = vrot.slane %v6867, 1
        %v6869 = vadd.f32 %v6867, %v6868
        %v6870 = vadd.f32 %v6712, %v6713
        %v6871 = vadd.f32 %v6870, %v6714
        %v6872 = vadd.f32 %v6871, %v6715
        %v6873 = vadd.f32 %v6872, %v6716
        %v6874 = vadd.f32 %v6873, %v6717
        %v6875 = vadd.f32 %v6874, %v6718
        %v6876 = vadd.f32 %v6875, %v6719
        %v6877 = vadd.f32 %v6876, %v6720
        %v6878 = vadd.f32 %v6877, %v6721
        %v6879 = vadd.f32 %v6878, %v6722
        %v6880 = vadd.f32 %v6879, %v6723
        %v6881 = vadd.f32 %v6880, %v6724
        %v6882 = vadd.f32 %v6881, %v6725
        %v6883 = vadd.f32 %v6882, %v6726
        %v6884 = vadd.f32 %v6883, %v6727
        %v6885 = vrot.slane %v6884, 4
        %v6886 = vadd.f32 %v6884, %v6885
        %v6887 = vrot.slane %v6886, 2
        %v6888 = vadd.f32 %v6886, %v6887
        %v6889 = vrot.slane %v6888, 1
        %v6890 = vadd.f32 %v6888, %v6889
        %v6891 = vadd.f32 %v6728, %v6729
        %v6892 = vadd.f32 %v6891, %v6730
        %v6893 = vadd.f32 %v6892, %v6731
        %v6894 = vadd.f32 %v6893, %v6732
        %v6895 = vadd.f32 %v6894, %v6733
        %v6896 = vadd.f32 %v6895, %v6734
        %v6897 = vadd.f32 %v6896, %v6735
        %v6898 = vadd.f32 %v6897, %v6736
        %v6899 = vadd.f32 %v6898, %v6737
        %v6900 = vadd.f32 %v6899, %v6738
        %v6901 = vadd.f32 %v6900, %v6739
        %v6902 = vadd.f32 %v6901, %v6740
        %v6903 = vadd.f32 %v6902, %v6741
        %v6904 = vadd.f32 %v6903, %v6742
        %v6905 = vadd.f32 %v6904, %v6743
        %v6906 = vrot.slane %v6905, 4
        %v6907 = vadd.f32 %v6905, %v6906
        %v6908 = vrot.slane %v6907, 2
        %v6909 = vadd.f32 %v6907, %v6908
        %v6910 = vrot.slane %v6909, 1
        %v6911 = vadd.f32 %v6909, %v6910
        %v6912 = vld [vmem:[#allocation12] sm:$0xff]
        %v6913 = vld [vmem:[#allocation12 + $0x8] sm:$0xff]
        %v6914 = vld [vmem:[#allocation12 + $0x10] sm:$0xff]
        %v6915 = vld [vmem:[#allocation12 + $0x18] sm:$0xff]
        %v6916 = vld [vmem:[#allocation12 + $0x20] sm:$0xff]
        %v6917 = vld [vmem:[#allocation12 + $0x28] sm:$0xff]
        %v6918 = vld [vmem:[#allocation12 + $0x30] sm:$0xff]
        %v6919 = vld [vmem:[#allocation12 + $0x38] sm:$0xff]
        %v6920 = vld [vmem:[#allocation12 + $0x40] sm:$0xff]
        %v6921 = vld [vmem:[#allocation12 + $0x48] sm:$0xff]
        %v6922 = vld [vmem:[#allocation12 + $0x50] sm:$0xff]
        %v6923 = vld [vmem:[#allocation12 + $0x58] sm:$0xff]
        %v6924 = vld [vmem:[#allocation12 + $0x60] sm:$0xff]
        %v6925 = vld [vmem:[#allocation12 + $0x68] sm:$0xff]
        %v6926 = vld [vmem:[#allocation12 + $0x70] sm:$0xff]
        %v6927 = vld [vmem:[#allocation12 + $0x78] sm:$0xff]
        %v6936 = vsel %vm1848, %v6785, %v6764
        %v6937 = vsel %vm1850, %v6806, %v6936
        %v6938 = vsel %vm1852, %v6827, %v6937
        %v6939 = vsel %vm1854, %v6848, %v6938
        %v6940 = vsel %vm1856, %v6869, %v6939
        %v6941 = vsel %vm1858, %v6890, %v6940
        %v6942 = vsel %vm1860, %v6911, %v6941
        %6944 = vmatprep.subr.mxu0 0.0
        %6945 = vmatpush1.msra.mxu0 %v6927
        %6946 = vmatprep.subr.mxu0 0.0
        %6947 = vmatpush1.msra.mxu0 %v6926
        %6948 = vmatprep.subr.mxu0 0.0
        %6949 = vmatpush1.msra.mxu0 %v6925
        %6950 = vmatprep.subr.mxu0 0.0
        %6951 = vmatpush1.msra.mxu0 %v6924
        %6952 = vmatprep.subr.mxu0 0.0
        %6953 = vmatpush1.msra.mxu0 %v6923
        %6954 = vmatprep.subr.mxu0 0.0
        %6955 = vmatpush1.msra.mxu0 %v6922
        %6956 = vmatprep.subr.mxu0 0.0
        %6957 = vmatpush1.msra.mxu0 %v6921
        %6958 = vmatprep.subr.mxu0 0.0
        %6959 = vmatpush1.msra.mxu0 %v6920
        %6960 = vmatprep.subr.mxu0 0.0
        %6961 = vmatpush1.msra.mxu0 %v6919
        %6962 = vmatprep.subr.mxu0 0.0
        %6963 = vmatpush1.msra.mxu0 %v6918
        %6964 = vmatprep.subr.mxu0 0.0
        %6965 = vmatpush1.msra.mxu0 %v6917
        %6966 = vmatprep.subr.mxu0 0.0
        %6967 = vmatpush1.msra.mxu0 %v6916
        %6968 = vmatprep.subr.mxu0 0.0
        %6969 = vmatpush1.msra.mxu0 %v6915
        %6970 = vmatprep.subr.mxu0 0.0
        %6971 = vmatpush1.msra.mxu0 %v6914
        %6972 = vmatprep.subr.mxu0 0.0
        %6973 = vmatpush1.msra.mxu0 %v6913
        %6974 = vmatprep.subr.mxu0 0.0
        %6975 = vmatpush1.msra.mxu0 %v6912
        %6976 = vmatprep.subr.mxu0 0.0
        %6977 = vmatpush2.msra.mxu0 0.0
        %6978 = vmatprep.subr.mxu0 0.0
        %6979 = vmatpush2.msra.mxu0 0.0
        %6980 = vmatprep.subr.mxu0 0.0
        %6981 = vmatpush2.msra.mxu0 0.0
        %6982 = vmatprep.subr.mxu0 0.0
        %6983 = vmatpush2.msra.mxu0 0.0
        %6984 = vmatprep.subr.mxu0 0.0
        %6985 = vmatpush2.msra.mxu0 0.0
        %6986 = vmatprep.subr.mxu0 0.0
        %6987 = vmatpush2.msra.mxu0 0.0
        %6988 = vmatprep.subr.mxu0 0.0
        %6989 = vmatpush2.msra.mxu0 0.0
        %6990 = vmatprep.subr.mxu0 0.0
        %6991 = vmatpush2.msra.mxu0 0.0
        %6992 = vmatprep.subr.mxu0 0.0
        %6993 = vmatpush2.msra.mxu0 0.0
        %6994 = vmatprep.subr.mxu0 0.0
        %6995 = vmatpush2.msra.mxu0 0.0
        %6996 = vmatprep.subr.mxu0 0.0
        %6997 = vmatpush2.msra.mxu0 0.0
        %6998 = vmatprep.subr.mxu0 0.0
        %6999 = vmatpush2.msra.mxu0 0.0
        %7000 = vmatprep.subr.mxu0 0.0
        %7001 = vmatpush2.msra.mxu0 0.0
        %7002 = vmatprep.subr.mxu0 0.0
        %7003 = vmatpush2.msra.mxu0 0.0
        %7004 = vmatprep.subr.mxu0 0.0
        %7005 = vmatpush2.msra.mxu0 0.0
        %7006 = vmatprep.subr.mxu0 0.0
        %7007 = vmatpush2.msra.mxu0 0.0
        %7008 = vmatprep.mubr.f32.mxu0 0.0
        %7009 = vmatmul.mubr.f32.gmra.mxu0 %v5221
        %v7010 = vpop.f32.mrf.mxu0
        %v7011 = vadd.f32 %v6942, %v7010
        %v7012 = vpop.f32.mrf.mxu0
        %7013 = vdwg.mxu0
        %v7014 = vtanh.pop %v7011
        %s7015 = scalar_lea.vmem %s424, 16 [#allocation15]
        %7016 = vst [vmem:[%s7015] sm:$0xff] %v7014
        %7017 = vst [vmem:[#allocation2] sm:$0xff] %v7014
        %7018 = vst [vmem:[#allocation2 + $0x8] sm:$0xff] %v5221
        %7019 = vst [vmem:[#allocation3] sm:$0xff] %v5219
        %v7020 = vld [vmem:[#allocation2] sm:$0xff]
        %v7021 = vld [vmem:[#allocation2 + $0x8] sm:$0xff]
        %v7022 = vld [vmem:[#allocation3] sm:$0xff]
        %s7023 = scalar_lea.vmem %s370, 96 [#allocation4]
        %v7024 = vld [vmem:[%s7023] sm:$0xff]
        %v7025 = vld [vmem:[%s7023 + $0x8] sm:$0xff]
        %v7026 = vld [vmem:[%s7023 + $0x10] sm:$0xff]
        %v7027 = vld [vmem:[%s7023 + $0x18] sm:$0xff]
        %v7028 = vld [vmem:[#allocation10] sm:$0xff]
        %v7029 = vld [vmem:[#allocation10 + $0x8] sm:$0xff]
        %v7030 = vld [vmem:[#allocation10 + $0x10] sm:$0xff]
        %v7031 = vld [vmem:[#allocation10 + $0x18] sm:$0xff]
        %v7032 = vld [vmem:[#allocation10 + $0x20] sm:$0xff]
        %v7033 = vld [vmem:[#allocation10 + $0x28] sm:$0xff]
        %v7034 = vld [vmem:[#allocation10 + $0x30] sm:$0xff]
        %v7035 = vld [vmem:[#allocation10 + $0x38] sm:$0xff]
        %v7036 = vld [vmem:[#allocation10 + $0x40] sm:$0xff]
        %v7037 = vld [vmem:[#allocation10 + $0x48] sm:$0xff]
        %v7038 = vld [vmem:[#allocation10 + $0x50] sm:$0xff]
        %v7039 = vld [vmem:[#allocation10 + $0x58] sm:$0xff]
        %v7040 = vld [vmem:[#allocation10 + $0x60] sm:$0xff]
        %v7041 = vld [vmem:[#allocation10 + $0x68] sm:$0xff]
        %v7042 = vld [vmem:[#allocation10 + $0x70] sm:$0xff]
        %v7043 = vld [vmem:[#allocation10 + $0x78] sm:$0xff]
        %v7044 = vld [vmem:[#allocation10 + $0x80] sm:$0xff]
        %v7045 = vld [vmem:[#allocation10 + $0x88] sm:$0xff]
        %v7046 = vld [vmem:[#allocation10 + $0x90] sm:$0xff]
        %v7047 = vld [vmem:[#allocation10 + $0x98] sm:$0xff]
        %v7048 = vld [vmem:[#allocation10 + $0xa0] sm:$0xff]
        %v7049 = vld [vmem:[#allocation10 + $0xa8] sm:$0xff]
        %v7050 = vld [vmem:[#allocation10 + $0xb0] sm:$0xff]
        %v7051 = vld [vmem:[#allocation10 + $0xb8] sm:$0xff]
        %v7052 = vld [vmem:[#allocation10 + $0xc0] sm:$0xff]
        %v7053 = vld [vmem:[#allocation10 + $0xc8] sm:$0xff]
        %v7054 = vld [vmem:[#allocation10 + $0xd0] sm:$0xff]
        %v7055 = vld [vmem:[#allocation10 + $0xd8] sm:$0xff]
        %v7056 = vld [vmem:[#allocation10 + $0xe0] sm:$0xff]
        %v7057 = vld [vmem:[#allocation10 + $0xe8] sm:$0xff]
        %v7058 = vld [vmem:[#allocation10 + $0xf0] sm:$0xff]
        %v7059 = vld [vmem:[#allocation10 + $0xf8] sm:$0xff]
        %v7060 = vld [vmem:[#allocation10 + $0x100] sm:$0xff]
        %v7061 = vld [vmem:[#allocation10 + $0x108] sm:$0xff]
        %v7062 = vld [vmem:[#allocation10 + $0x110] sm:$0xff]
        %v7063 = vld [vmem:[#allocation10 + $0x118] sm:$0xff]
        %v7064 = vld [vmem:[#allocation10 + $0x120] sm:$0xff]
        %v7065 = vld [vmem:[#allocation10 + $0x128] sm:$0xff]
        %v7066 = vld [vmem:[#allocation10 + $0x130] sm:$0xff]
        %v7067 = vld [vmem:[#allocation10 + $0x138] sm:$0xff]
        %v7068 = vld [vmem:[#allocation10 + $0x140] sm:$0xff]
        %v7069 = vld [vmem:[#allocation10 + $0x148] sm:$0xff]
        %v7070 = vld [vmem:[#allocation10 + $0x150] sm:$0xff]
        %v7071 = vld [vmem:[#allocation10 + $0x158] sm:$0xff]
        %v7072 = vld [vmem:[#allocation10 + $0x160] sm:$0xff]
        %v7073 = vld [vmem:[#allocation10 + $0x168] sm:$0xff]
        %v7074 = vld [vmem:[#allocation10 + $0x170] sm:$0xff]
        %v7075 = vld [vmem:[#allocation10 + $0x178] sm:$0xff]
        %v7076 = vld [vmem:[#allocation10 + $0x180] sm:$0xff]
        %v7077 = vld [vmem:[#allocation10 + $0x188] sm:$0xff]
        %v7078 = vld [vmem:[#allocation10 + $0x190] sm:$0xff]
        %v7079 = vld [vmem:[#allocation10 + $0x198] sm:$0xff]
        %v7080 = vld [vmem:[#allocation10 + $0x1a0] sm:$0xff]
        %v7081 = vld [vmem:[#allocation10 + $0x1a8] sm:$0xff]
        %v7082 = vld [vmem:[#allocation10 + $0x1b0] sm:$0xff]
        %v7083 = vld [vmem:[#allocation10 + $0x1b8] sm:$0xff]
        %v7084 = vld [vmem:[#allocation10 + $0x1c0] sm:$0xff]
        %v7085 = vld [vmem:[#allocation10 + $0x1c8] sm:$0xff]
        %v7086 = vld [vmem:[#allocation10 + $0x1d0] sm:$0xff]
        %v7087 = vld [vmem:[#allocation10 + $0x1d8] sm:$0xff]
        %v7088 = vld [vmem:[#allocation10 + $0x1e0] sm:$0xff]
        %v7089 = vld [vmem:[#allocation10 + $0x1e8] sm:$0xff]
        %v7090 = vld [vmem:[#allocation10 + $0x1f0] sm:$0xff]
        %v7091 = vld [vmem:[#allocation10 + $0x1f8] sm:$0xff]
        %v7092 = vld [vmem:[#allocation10 + $0x200] sm:$0xff]
        %v7093 = vld [vmem:[#allocation10 + $0x208] sm:$0xff]
        %v7094 = vld [vmem:[#allocation10 + $0x210] sm:$0xff]
        %v7095 = vld [vmem:[#allocation10 + $0x218] sm:$0xff]
        %v7096 = vld [vmem:[#allocation10 + $0x220] sm:$0xff]
        %v7097 = vld [vmem:[#allocation10 + $0x228] sm:$0xff]
        %v7098 = vld [vmem:[#allocation10 + $0x230] sm:$0xff]
        %v7099 = vld [vmem:[#allocation10 + $0x238] sm:$0xff]
        %v7100 = vld [vmem:[#allocation10 + $0x240] sm:$0xff]
        %v7101 = vld [vmem:[#allocation10 + $0x248] sm:$0xff]
        %v7102 = vld [vmem:[#allocation10 + $0x250] sm:$0xff]
        %v7103 = vld [vmem:[#allocation10 + $0x258] sm:$0xff]
        %v7104 = vld [vmem:[#allocation10 + $0x260] sm:$0xff]
        %v7105 = vld [vmem:[#allocation10 + $0x268] sm:$0xff]
        %v7106 = vld [vmem:[#allocation10 + $0x270] sm:$0xff]
        %v7107 = vld [vmem:[#allocation10 + $0x278] sm:$0xff]
        %v7108 = vld [vmem:[#allocation10 + $0x280] sm:$0xff]
        %v7109 = vld [vmem:[#allocation10 + $0x288] sm:$0xff]
        %v7110 = vld [vmem:[#allocation10 + $0x290] sm:$0xff]
        %v7111 = vld [vmem:[#allocation10 + $0x298] sm:$0xff]
        %v7112 = vld [vmem:[#allocation10 + $0x2a0] sm:$0xff]
        %v7113 = vld [vmem:[#allocation10 + $0x2a8] sm:$0xff]
        %v7114 = vld [vmem:[#allocation10 + $0x2b0] sm:$0xff]
        %v7115 = vld [vmem:[#allocation10 + $0x2b8] sm:$0xff]
        %v7116 = vld [vmem:[#allocation10 + $0x2c0] sm:$0xff]
        %v7117 = vld [vmem:[#allocation10 + $0x2c8] sm:$0xff]
        %v7118 = vld [vmem:[#allocation10 + $0x2d0] sm:$0xff]
        %v7119 = vld [vmem:[#allocation10 + $0x2d8] sm:$0xff]
        %v7120 = vld [vmem:[#allocation10 + $0x2e0] sm:$0xff]
        %v7121 = vld [vmem:[#allocation10 + $0x2e8] sm:$0xff]
        %v7122 = vld [vmem:[#allocation10 + $0x2f0] sm:$0xff]
        %v7123 = vld [vmem:[#allocation10 + $0x2f8] sm:$0xff]
        %v7124 = vld [vmem:[#allocation10 + $0x300] sm:$0xff]
        %v7125 = vld [vmem:[#allocation10 + $0x308] sm:$0xff]
        %v7126 = vld [vmem:[#allocation10 + $0x310] sm:$0xff]
        %v7127 = vld [vmem:[#allocation10 + $0x318] sm:$0xff]
        %v7128 = vld [vmem:[#allocation10 + $0x320] sm:$0xff]
        %v7129 = vld [vmem:[#allocation10 + $0x328] sm:$0xff]
        %v7130 = vld [vmem:[#allocation10 + $0x330] sm:$0xff]
        %v7131 = vld [vmem:[#allocation10 + $0x338] sm:$0xff]
        %v7132 = vld [vmem:[#allocation10 + $0x340] sm:$0xff]
        %v7133 = vld [vmem:[#allocation10 + $0x348] sm:$0xff]
        %v7134 = vld [vmem:[#allocation10 + $0x350] sm:$0xff]
        %v7135 = vld [vmem:[#allocation10 + $0x358] sm:$0xff]
        %v7136 = vld [vmem:[#allocation10 + $0x360] sm:$0xff]
        %v7137 = vld [vmem:[#allocation10 + $0x368] sm:$0xff]
        %v7138 = vld [vmem:[#allocation10 + $0x370] sm:$0xff]
        %v7139 = vld [vmem:[#allocation10 + $0x378] sm:$0xff]
        %v7140 = vld [vmem:[#allocation10 + $0x380] sm:$0xff]
        %v7141 = vld [vmem:[#allocation10 + $0x388] sm:$0xff]
        %v7142 = vld [vmem:[#allocation10 + $0x390] sm:$0xff]
        %v7143 = vld [vmem:[#allocation10 + $0x398] sm:$0xff]
        %v7144 = vld [vmem:[#allocation10 + $0x3a0] sm:$0xff]
        %v7145 = vld [vmem:[#allocation10 + $0x3a8] sm:$0xff]
        %v7146 = vld [vmem:[#allocation10 + $0x3b0] sm:$0xff]
        %v7147 = vld [vmem:[#allocation10 + $0x3b8] sm:$0xff]
        %v7148 = vld [vmem:[#allocation10 + $0x3c0] sm:$0xff]
        %v7149 = vld [vmem:[#allocation10 + $0x3c8] sm:$0xff]
        %v7150 = vld [vmem:[#allocation10 + $0x3d0] sm:$0xff]
        %v7151 = vld [vmem:[#allocation10 + $0x3d8] sm:$0xff]
        %v7152 = vld [vmem:[#allocation10 + $0x3e0] sm:$0xff]
        %v7153 = vld [vmem:[#allocation10 + $0x3e8] sm:$0xff]
        %v7154 = vld [vmem:[#allocation10 + $0x3f0] sm:$0xff]
        %v7155 = vld [vmem:[#allocation10 + $0x3f8] sm:$0xff]
        %7156 = vmatprep.subr.mxu0 %v7089
        %7157 = vmatpush1.msra.mxu0 %v7088
        %7158 = vmatprep.subr.mxu0 %v7085
        %7159 = vmatpush1.msra.mxu0 %v7084
        %7160 = vmatprep.subr.mxu0 %v7081
        %7161 = vmatpush1.msra.mxu0 %v7080
        %7162 = vmatprep.subr.mxu0 %v7077
        %7163 = vmatpush1.msra.mxu0 %v7076
        %7164 = vmatprep.subr.mxu0 %v7073
        %7165 = vmatpush1.msra.mxu0 %v7072
        %7166 = vmatprep.subr.mxu0 %v7069
        %7167 = vmatpush1.msra.mxu0 %v7068
        %7168 = vmatprep.subr.mxu0 %v7065
        %7169 = vmatpush1.msra.mxu0 %v7064
        %7170 = vmatprep.subr.mxu0 %v7061
        %7171 = vmatpush1.msra.mxu0 %v7060
        %7172 = vmatprep.subr.mxu0 %v7057
        %7173 = vmatpush1.msra.mxu0 %v7056
        %7174 = vmatprep.subr.mxu0 %v7053
        %7175 = vmatpush1.msra.mxu0 %v7052
        %7176 = vmatprep.subr.mxu0 %v7049
        %7177 = vmatpush1.msra.mxu0 %v7048
        %7178 = vmatprep.subr.mxu0 %v7045
        %7179 = vmatpush1.msra.mxu0 %v7044
        %7180 = vmatprep.subr.mxu0 %v7041
        %7181 = vmatpush1.msra.mxu0 %v7040
        %7182 = vmatprep.subr.mxu0 %v7037
        %7183 = vmatpush1.msra.mxu0 %v7036
        %7184 = vmatprep.subr.mxu0 %v7033
        %7185 = vmatpush1.msra.mxu0 %v7032
        %7186 = vmatprep.subr.mxu0 %v7029
        %7187 = vmatpush1.msra.mxu0 %v7028
        %7188 = vmatprep.subr.mxu0 %v7153
        %7189 = vmatpush2.msra.mxu0 %v7152
        %7190 = vmatprep.subr.mxu0 %v7149
        %7191 = vmatpush2.msra.mxu0 %v7148
        %7192 = vmatprep.subr.mxu0 %v7145
        %7193 = vmatpush2.msra.mxu0 %v7144
        %7194 = vmatprep.subr.mxu0 %v7141
        %7195 = vmatpush2.msra.mxu0 %v7140
        %7196 = vmatprep.subr.mxu0 %v7137
        %7197 = vmatpush2.msra.mxu0 %v7136
        %7198 = vmatprep.subr.mxu0 %v7133
        %7199 = vmatpush2.msra.mxu0 %v7132
        %7200 = vmatprep.subr.mxu0 %v7129
        %7201 = vmatpush2.msra.mxu0 %v7128
        %7202 = vmatprep.subr.mxu0 %v7125
        %7203 = vmatpush2.msra.mxu0 %v7124
        %7204 = vmatprep.subr.mxu0 %v7121
        %7205 = vmatpush2.msra.mxu0 %v7120
        %7206 = vmatprep.subr.mxu0 %v7117
        %7207 = vmatpush2.msra.mxu0 %v7116
        %7208 = vmatprep.subr.mxu0 %v7113
        %7209 = vmatpush2.msra.mxu0 %v7112
        %7210 = vmatprep.subr.mxu0 %v7109
        %7211 = vmatpush2.msra.mxu0 %v7108
        %7212 = vmatprep.subr.mxu0 %v7105
        %7213 = vmatpush2.msra.mxu0 %v7104
        %7214 = vmatprep.subr.mxu0 %v7101
        %7215 = vmatpush2.msra.mxu0 %v7100
        %7216 = vmatprep.subr.mxu0 %v7097
        %7217 = vmatpush2.msra.mxu0 %v7096
        %7218 = vmatprep.subr.mxu0 %v7093
        %7219 = vmatpush2.msra.mxu0 %v7092
        %7220 = vmatprep.mubr.f32.mxu0 %v7021
        %7221 = vmatmul.mubr.f32.gmra.mxu0 %v7020
        %v7222 = vpop.f32.mrf.mxu0
        %v7223 = vadd.f32 0.0, %v7222
        %v7224 = vpop.f32.mrf.mxu0
        %v7225 = vadd.f32 0.0, %v7224
        %7226 = vdwg.mxu0
        %7227 = vmatprep.subr.mxu0 %v7091
        %7228 = vmatpush1.msra.mxu0 %v7090
        %7229 = vmatprep.subr.mxu0 %v7087
        %7230 = vmatpush1.msra.mxu0 %v7086
        %7231 = vmatprep.subr.mxu0 %v7083
        %7232 = vmatpush1.msra.mxu0 %v7082
        %7233 = vmatprep.subr.mxu0 %v7079
        %7234 = vmatpush1.msra.mxu0 %v7078
        %7235 = vmatprep.subr.mxu0 %v7075
        %7236 = vmatpush1.msra.mxu0 %v7074
        %7237 = vmatprep.subr.mxu0 %v7071
        %7238 = vmatpush1.msra.mxu0 %v7070
        %7239 = vmatprep.subr.mxu0 %v7067
        %7240 = vmatpush1.msra.mxu0 %v7066
        %7241 = vmatprep.subr.mxu0 %v7063
        %7242 = vmatpush1.msra.mxu0 %v7062
        %7243 = vmatprep.subr.mxu0 %v7059
        %7244 = vmatpush1.msra.mxu0 %v7058
        %7245 = vmatprep.subr.mxu0 %v7055
        %7246 = vmatpush1.msra.mxu0 %v7054
        %7247 = vmatprep.subr.mxu0 %v7051
        %7248 = vmatpush1.msra.mxu0 %v7050
        %7249 = vmatprep.subr.mxu0 %v7047
        %7250 = vmatpush1.msra.mxu0 %v7046
        %7251 = vmatprep.subr.mxu0 %v7043
        %7252 = vmatpush1.msra.mxu0 %v7042
        %7253 = vmatprep.subr.mxu0 %v7039
        %7254 = vmatpush1.msra.mxu0 %v7038
        %7255 = vmatprep.subr.mxu0 %v7035
        %7256 = vmatpush1.msra.mxu0 %v7034
        %7257 = vmatprep.subr.mxu0 %v7031
        %7258 = vmatpush1.msra.mxu0 %v7030
        %7259 = vmatprep.subr.mxu0 %v7155
        %7260 = vmatpush2.msra.mxu0 %v7154
        %7261 = vmatprep.subr.mxu0 %v7151
        %7262 = vmatpush2.msra.mxu0 %v7150
        %7263 = vmatprep.subr.mxu0 %v7147
        %7264 = vmatpush2.msra.mxu0 %v7146
        %7265 = vmatprep.subr.mxu0 %v7143
        %7266 = vmatpush2.msra.mxu0 %v7142
        %7267 = vmatprep.subr.mxu0 %v7139
        %7268 = vmatpush2.msra.mxu0 %v7138
        %7269 = vmatprep.subr.mxu0 %v7135
        %7270 = vmatpush2.msra.mxu0 %v7134
        %7271 = vmatprep.subr.mxu0 %v7131
        %7272 = vmatpush2.msra.mxu0 %v7130
        %7273 = vmatprep.subr.mxu0 %v7127
        %7274 = vmatpush2.msra.mxu0 %v7126
        %7275 = vmatprep.subr.mxu0 %v7123
        %7276 = vmatpush2.msra.mxu0 %v7122
        %7277 = vmatprep.subr.mxu0 %v7119
        %7278 = vmatpush2.msra.mxu0 %v7118
        %7279 = vmatprep.subr.mxu0 %v7115
        %7280 = vmatpush2.msra.mxu0 %v7114
        %7281 = vmatprep.subr.mxu0 %v7111
        %7282 = vmatpush2.msra.mxu0 %v7110
        %7283 = vmatprep.subr.mxu0 %v7107
        %7284 = vmatpush2.msra.mxu0 %v7106
        %7285 = vmatprep.subr.mxu0 %v7103
        %7286 = vmatpush2.msra.mxu0 %v7102
        %7287 = vmatprep.subr.mxu0 %v7099
        %7288 = vmatpush2.msra.mxu0 %v7098
        %7289 = vmatprep.subr.mxu0 %v7095
        %7290 = vmatpush2.msra.mxu0 %v7094
        %7291 = vmatprep.mubr.f32.mxu0 %v7021
        %7292 = vmatmul.mubr.f32.gmra.mxu0 %v7020
        %v7293 = vpop.f32.mrf.mxu0
        %v7294 = vadd.f32 0.0, %v7293
        %v7295 = vpop.f32.mrf.mxu0
        %v7296 = vadd.f32 0.0, %v7295
        %7297 = vdwg.mxu0
        %v7298 = vadd.f32 %v7024, %v7223
        %v7299 = vadd.f32 %v7025, %v7225
        %v7300 = vadd.f32 %v7026, %v7294
        %v7301 = vadd.f32 %v7027, %v7296
        %v7302 = vxor.u32 %v7298, 2147483648
        %v7303 = vmul.f32 %v7302, 1.442695
        %v7304 = vpow.pop %v7303
        %v7305 = vadd.f32 %v7304, 1.0
        %v7306 = vrcp.pop %v7305
        %v7307 = vmul.f32 1.0, %v7306
        %v7308 = vxor.u32 %v7299, 2147483648
        %v7309 = vmul.f32 %v7308, 1.442695
        %v7310 = vpow.pop %v7309
        %v7311 = vadd.f32 %v7310, 1.0
        %v7312 = vrcp.pop %v7311
        %v7313 = vmul.f32 1.0, %v7312
        %v7314 = vtanh.pop %v7300
        %v7315 = vxor.u32 %v7301, 2147483648
        %v7316 = vmul.f32 %v7315, 1.442695
        %v7317 = vpow.pop %v7316
        %v7318 = vadd.f32 %v7317, 1.0
        %v7319 = vrcp.pop %v7318
        %v7320 = vmul.f32 1.0, %v7319
        %v7321 = vmul.f32 %v7313, %v7022
        %v7322 = vmul.f32 %v7307, %v7314
        %v7323 = vadd.f32 %v7321, %v7322
        %v7324 = vtanh.pop %v7323
        %v7325 = vmul.f32 %v7320, %v7324
        %v7326 = vlaneseq
        %v7327 = vshrl.u32 %v7326, 7
        %v7328 = vsub.s32 0, %v7327
        %v7329 = vrot.slane %v7325, %v7328
        %7331 = vbcast.lane.b32.xlu0 %v7329, 256
        %v7332 = vpop.permute.xlu0 %7331
        %s7334 = sor.u32 256, 8
        %7335 = vbcast.lane.b32.xlu0 %v7329, %s7334
        %v7336 = vpop.permute.xlu0 %7335
        %s7338 = sor.u32 256, 16
        %7339 = vbcast.lane.b32.xlu0 %v7329, %s7338
        %v7340 = vpop.permute.xlu0 %7339
        %s7342 = sor.u32 256, 24
        %7343 = vbcast.lane.b32.xlu0 %v7329, %s7342
        %v7344 = vpop.permute.xlu0 %7343
        %s7346 = sor.u32 256, 32
        %7347 = vbcast.lane.b32.xlu0 %v7329, %s7346
        %v7348 = vpop.permute.xlu0 %7347
        %s7350 = sor.u32 256, 40
        %7351 = vbcast.lane.b32.xlu0 %v7329, %s7350
        %v7352 = vpop.permute.xlu0 %7351
        %s7354 = sor.u32 256, 48
        %7355 = vbcast.lane.b32.xlu0 %v7329, %s7354
        %v7356 = vpop.permute.xlu0 %7355
        %s7358 = sor.u32 256, 56
        %7359 = vbcast.lane.b32.xlu0 %v7329, %s7358
        %v7360 = vpop.permute.xlu0 %7359
        %s7362 = sor.u32 256, 64
        %7363 = vbcast.lane.b32.xlu0 %v7329, %s7362
        %v7364 = vpop.permute.xlu0 %7363
        %s7366 = sor.u32 256, 72
        %7367 = vbcast.lane.b32.xlu0 %v7329, %s7366
        %v7368 = vpop.permute.xlu0 %7367
        %s7370 = sor.u32 256, 80
        %7371 = vbcast.lane.b32.xlu0 %v7329, %s7370
        %v7372 = vpop.permute.xlu0 %7371
        %s7374 = sor.u32 256, 88
        %7375 = vbcast.lane.b32.xlu0 %v7329, %s7374
        %v7376 = vpop.permute.xlu0 %7375
        %s7378 = sor.u32 256, 96
        %7379 = vbcast.lane.b32.xlu0 %v7329, %s7378
        %v7380 = vpop.permute.xlu0 %7379
        %s7382 = sor.u32 256, 104
        %7383 = vbcast.lane.b32.xlu0 %v7329, %s7382
        %v7384 = vpop.permute.xlu0 %7383
        %s7386 = sor.u32 256, 112
        %7387 = vbcast.lane.b32.xlu0 %v7329, %s7386
        %v7388 = vpop.permute.xlu0 %7387
        %s7390 = sor.u32 256, 120
        %7391 = vbcast.lane.b32.xlu0 %v7329, %s7390
        %v7392 = vpop.permute.xlu0 %7391
        %v7393 = vlaneseq
        %v7394 = vshrl.u32 %v7393, 7
        %v7395 = vsub.s32 1, %v7394
        %v7396 = vrot.slane %v7325, %v7395
        %7398 = vbcast.lane.b32.xlu0 %v7396, 256
        %v7399 = vpop.permute.xlu0 %7398
        %s7401 = sor.u32 256, 8
        %7402 = vbcast.lane.b32.xlu0 %v7396, %s7401
        %v7403 = vpop.permute.xlu0 %7402
        %s7405 = sor.u32 256, 16
        %7406 = vbcast.lane.b32.xlu0 %v7396, %s7405
        %v7407 = vpop.permute.xlu0 %7406
        %s7409 = sor.u32 256, 24
        %7410 = vbcast.lane.b32.xlu0 %v7396, %s7409
        %v7411 = vpop.permute.xlu0 %7410
        %s7413 = sor.u32 256, 32
        %7414 = vbcast.lane.b32.xlu0 %v7396, %s7413
        %v7415 = vpop.permute.xlu0 %7414
        %s7417 = sor.u32 256, 40
        %7418 = vbcast.lane.b32.xlu0 %v7396, %s7417
        %v7419 = vpop.permute.xlu0 %7418
        %s7421 = sor.u32 256, 48
        %7422 = vbcast.lane.b32.xlu0 %v7396, %s7421
        %v7423 = vpop.permute.xlu0 %7422
        %s7425 = sor.u32 256, 56
        %7426 = vbcast.lane.b32.xlu0 %v7396, %s7425
        %v7427 = vpop.permute.xlu0 %7426
        %s7429 = sor.u32 256, 64
        %7430 = vbcast.lane.b32.xlu0 %v7396, %s7429
        %v7431 = vpop.permute.xlu0 %7430
        %s7433 = sor.u32 256, 72
        %7434 = vbcast.lane.b32.xlu0 %v7396, %s7433
        %v7435 = vpop.permute.xlu0 %7434
        %s7437 = sor.u32 256, 80
        %7438 = vbcast.lane.b32.xlu0 %v7396, %s7437
        %v7439 = vpop.permute.xlu0 %7438
        %s7441 = sor.u32 256, 88
        %7442 = vbcast.lane.b32.xlu0 %v7396, %s7441
        %v7443 = vpop.permute.xlu0 %7442
        %s7445 = sor.u32 256, 96
        %7446 = vbcast.lane.b32.xlu0 %v7396, %s7445
        %v7447 = vpop.permute.xlu0 %7446
        %s7449 = sor.u32 256, 104
        %7450 = vbcast.lane.b32.xlu0 %v7396, %s7449
        %v7451 = vpop.permute.xlu0 %7450
        %s7453 = sor.u32 256, 112
        %7454 = vbcast.lane.b32.xlu0 %v7396, %s7453
        %v7455 = vpop.permute.xlu0 %7454
        %s7457 = sor.u32 256, 120
        %7458 = vbcast.lane.b32.xlu0 %v7396, %s7457
        %v7459 = vpop.permute.xlu0 %7458
        %v7460 = vlaneseq
        %v7461 = vshrl.u32 %v7460, 7
        %v7462 = vsub.s32 2, %v7461
        %v7463 = vrot.slane %v7325, %v7462
        %7465 = vbcast.lane.b32.xlu0 %v7463, 256
        %v7466 = vpop.permute.xlu0 %7465
        %s7468 = sor.u32 256, 8
        %7469 = vbcast.lane.b32.xlu0 %v7463, %s7468
        %v7470 = vpop.permute.xlu0 %7469
        %s7472 = sor.u32 256, 16
        %7473 = vbcast.lane.b32.xlu0 %v7463, %s7472
        %v7474 = vpop.permute.xlu0 %7473
        %s7476 = sor.u32 256, 24
        %7477 = vbcast.lane.b32.xlu0 %v7463, %s7476
        %v7478 = vpop.permute.xlu0 %7477
        %s7480 = sor.u32 256, 32
        %7481 = vbcast.lane.b32.xlu0 %v7463, %s7480
        %v7482 = vpop.permute.xlu0 %7481
        %s7484 = sor.u32 256, 40
        %7485 = vbcast.lane.b32.xlu0 %v7463, %s7484
        %v7486 = vpop.permute.xlu0 %7485
        %s7488 = sor.u32 256, 48
        %7489 = vbcast.lane.b32.xlu0 %v7463, %s7488
        %v7490 = vpop.permute.xlu0 %7489
        %s7492 = sor.u32 256, 56
        %7493 = vbcast.lane.b32.xlu0 %v7463, %s7492
        %v7494 = vpop.permute.xlu0 %7493
        %s7496 = sor.u32 256, 64
        %7497 = vbcast.lane.b32.xlu0 %v7463, %s7496
        %v7498 = vpop.permute.xlu0 %7497
        %s7500 = sor.u32 256, 72
        %7501 = vbcast.lane.b32.xlu0 %v7463, %s7500
        %v7502 = vpop.permute.xlu0 %7501
        %s7504 = sor.u32 256, 80
        %7505 = vbcast.lane.b32.xlu0 %v7463, %s7504
        %v7506 = vpop.permute.xlu0 %7505
        %s7508 = sor.u32 256, 88
        %7509 = vbcast.lane.b32.xlu0 %v7463, %s7508
        %v7510 = vpop.permute.xlu0 %7509
        %s7512 = sor.u32 256, 96
        %7513 = vbcast.lane.b32.xlu0 %v7463, %s7512
        %v7514 = vpop.permute.xlu0 %7513
        %s7516 = sor.u32 256, 104
        %7517 = vbcast.lane.b32.xlu0 %v7463, %s7516
        %v7518 = vpop.permute.xlu0 %7517
        %s7520 = sor.u32 256, 112
        %7521 = vbcast.lane.b32.xlu0 %v7463, %s7520
        %v7522 = vpop.permute.xlu0 %7521
        %s7524 = sor.u32 256, 120
        %7525 = vbcast.lane.b32.xlu0 %v7463, %s7524
        %v7526 = vpop.permute.xlu0 %7525
        %v7527 = vlaneseq
        %v7528 = vshrl.u32 %v7527, 7
        %v7529 = vsub.s32 3, %v7528
        %v7530 = vrot.slane %v7325, %v7529
        %7532 = vbcast.lane.b32.xlu0 %v7530, 256
        %v7533 = vpop.permute.xlu0 %7532
        %s7535 = sor.u32 256, 8
        %7536 = vbcast.lane.b32.xlu0 %v7530, %s7535
        %v7537 = vpop.permute.xlu0 %7536
        %s7539 = sor.u32 256, 16
        %7540 = vbcast.lane.b32.xlu0 %v7530, %s7539
        %v7541 = vpop.permute.xlu0 %7540
        %s7543 = sor.u32 256, 24
        %7544 = vbcast.lane.b32.xlu0 %v7530, %s7543
        %v7545 = vpop.permute.xlu0 %7544
        %s7547 = sor.u32 256, 32
        %7548 = vbcast.lane.b32.xlu0 %v7530, %s7547
        %v7549 = vpop.permute.xlu0 %7548
        %s7551 = sor.u32 256, 40
        %7552 = vbcast.lane.b32.xlu0 %v7530, %s7551
        %v7553 = vpop.permute.xlu0 %7552
        %s7555 = sor.u32 256, 48
        %7556 = vbcast.lane.b32.xlu0 %v7530, %s7555
        %v7557 = vpop.permute.xlu0 %7556
        %s7559 = sor.u32 256, 56
        %7560 = vbcast.lane.b32.xlu0 %v7530, %s7559
        %v7561 = vpop.permute.xlu0 %7560
        %s7563 = sor.u32 256, 64
        %7564 = vbcast.lane.b32.xlu0 %v7530, %s7563
        %v7565 = vpop.permute.xlu0 %7564
        %s7567 = sor.u32 256, 72
        %7568 = vbcast.lane.b32.xlu0 %v7530, %s7567
        %v7569 = vpop.permute.xlu0 %7568
        %s7571 = sor.u32 256, 80
        %7572 = vbcast.lane.b32.xlu0 %v7530, %s7571
        %v7573 = vpop.permute.xlu0 %7572
        %s7575 = sor.u32 256, 88
        %7576 = vbcast.lane.b32.xlu0 %v7530, %s7575
        %v7577 = vpop.permute.xlu0 %7576
        %s7579 = sor.u32 256, 96
        %7580 = vbcast.lane.b32.xlu0 %v7530, %s7579
        %v7581 = vpop.permute.xlu0 %7580
        %s7583 = sor.u32 256, 104
        %7584 = vbcast.lane.b32.xlu0 %v7530, %s7583
        %v7585 = vpop.permute.xlu0 %7584
        %s7587 = sor.u32 256, 112
        %7588 = vbcast.lane.b32.xlu0 %v7530, %s7587
        %v7589 = vpop.permute.xlu0 %7588
        %s7591 = sor.u32 256, 120
        %7592 = vbcast.lane.b32.xlu0 %v7530, %s7591
        %v7593 = vpop.permute.xlu0 %7592
        %v7594 = vlaneseq
        %v7595 = vshrl.u32 %v7594, 7
        %v7596 = vsub.s32 4, %v7595
        %v7597 = vrot.slane %v7325, %v7596
        %7599 = vbcast.lane.b32.xlu0 %v7597, 256
        %v7600 = vpop.permute.xlu0 %7599
        %s7602 = sor.u32 256, 8
        %7603 = vbcast.lane.b32.xlu0 %v7597, %s7602
        %v7604 = vpop.permute.xlu0 %7603
        %s7606 = sor.u32 256, 16
        %7607 = vbcast.lane.b32.xlu0 %v7597, %s7606
        %v7608 = vpop.permute.xlu0 %7607
        %s7610 = sor.u32 256, 24
        %7611 = vbcast.lane.b32.xlu0 %v7597, %s7610
        %v7612 = vpop.permute.xlu0 %7611
        %s7614 = sor.u32 256, 32
        %7615 = vbcast.lane.b32.xlu0 %v7597, %s7614
        %v7616 = vpop.permute.xlu0 %7615
        %s7618 = sor.u32 256, 40
        %7619 = vbcast.lane.b32.xlu0 %v7597, %s7618
        %v7620 = vpop.permute.xlu0 %7619
        %s7622 = sor.u32 256, 48
        %7623 = vbcast.lane.b32.xlu0 %v7597, %s7622
        %v7624 = vpop.permute.xlu0 %7623
        %s7626 = sor.u32 256, 56
        %7627 = vbcast.lane.b32.xlu0 %v7597, %s7626
        %v7628 = vpop.permute.xlu0 %7627
        %s7630 = sor.u32 256, 64
        %7631 = vbcast.lane.b32.xlu0 %v7597, %s7630
        %v7632 = vpop.permute.xlu0 %7631
        %s7634 = sor.u32 256, 72
        %7635 = vbcast.lane.b32.xlu0 %v7597, %s7634
        %v7636 = vpop.permute.xlu0 %7635
        %s7638 = sor.u32 256, 80
        %7639 = vbcast.lane.b32.xlu0 %v7597, %s7638
        %v7640 = vpop.permute.xlu0 %7639
        %s7642 = sor.u32 256, 88
        %7643 = vbcast.lane.b32.xlu0 %v7597, %s7642
        %v7644 = vpop.permute.xlu0 %7643
        %s7646 = sor.u32 256, 96
        %7647 = vbcast.lane.b32.xlu0 %v7597, %s7646
        %v7648 = vpop.permute.xlu0 %7647
        %s7650 = sor.u32 256, 104
        %7651 = vbcast.lane.b32.xlu0 %v7597, %s7650
        %v7652 = vpop.permute.xlu0 %7651
        %s7654 = sor.u32 256, 112
        %7655 = vbcast.lane.b32.xlu0 %v7597, %s7654
        %v7656 = vpop.permute.xlu0 %7655
        %s7658 = sor.u32 256, 120
        %7659 = vbcast.lane.b32.xlu0 %v7597, %s7658
        %v7660 = vpop.permute.xlu0 %7659
        %v7661 = vlaneseq
        %v7662 = vshrl.u32 %v7661, 7
        %v7663 = vsub.s32 5, %v7662
        %v7664 = vrot.slane %v7325, %v7663
        %7666 = vbcast.lane.b32.xlu0 %v7664, 256
        %v7667 = vpop.permute.xlu0 %7666
        %s7669 = sor.u32 256, 8
        %7670 = vbcast.lane.b32.xlu0 %v7664, %s7669
        %v7671 = vpop.permute.xlu0 %7670
        %s7673 = sor.u32 256, 16
        %7674 = vbcast.lane.b32.xlu0 %v7664, %s7673
        %v7675 = vpop.permute.xlu0 %7674
        %s7677 = sor.u32 256, 24
        %7678 = vbcast.lane.b32.xlu0 %v7664, %s7677
        %v7679 = vpop.permute.xlu0 %7678
        %s7681 = sor.u32 256, 32
        %7682 = vbcast.lane.b32.xlu0 %v7664, %s7681
        %v7683 = vpop.permute.xlu0 %7682
        %s7685 = sor.u32 256, 40
        %7686 = vbcast.lane.b32.xlu0 %v7664, %s7685
        %v7687 = vpop.permute.xlu0 %7686
        %s7689 = sor.u32 256, 48
        %7690 = vbcast.lane.b32.xlu0 %v7664, %s7689
        %v7691 = vpop.permute.xlu0 %7690
        %s7693 = sor.u32 256, 56
        %7694 = vbcast.lane.b32.xlu0 %v7664, %s7693
        %v7695 = vpop.permute.xlu0 %7694
        %s7697 = sor.u32 256, 64
        %7698 = vbcast.lane.b32.xlu0 %v7664, %s7697
        %v7699 = vpop.permute.xlu0 %7698
        %s7701 = sor.u32 256, 72
        %7702 = vbcast.lane.b32.xlu0 %v7664, %s7701
        %v7703 = vpop.permute.xlu0 %7702
        %s7705 = sor.u32 256, 80
        %7706 = vbcast.lane.b32.xlu0 %v7664, %s7705
        %v7707 = vpop.permute.xlu0 %7706
        %s7709 = sor.u32 256, 88
        %7710 = vbcast.lane.b32.xlu0 %v7664, %s7709
        %v7711 = vpop.permute.xlu0 %7710
        %s7713 = sor.u32 256, 96
        %7714 = vbcast.lane.b32.xlu0 %v7664, %s7713
        %v7715 = vpop.permute.xlu0 %7714
        %s7717 = sor.u32 256, 104
        %7718 = vbcast.lane.b32.xlu0 %v7664, %s7717
        %v7719 = vpop.permute.xlu0 %7718
        %s7721 = sor.u32 256, 112
        %7722 = vbcast.lane.b32.xlu0 %v7664, %s7721
        %v7723 = vpop.permute.xlu0 %7722
        %s7725 = sor.u32 256, 120
        %7726 = vbcast.lane.b32.xlu0 %v7664, %s7725
        %v7727 = vpop.permute.xlu0 %7726
        %v7728 = vlaneseq
        %v7729 = vshrl.u32 %v7728, 7
        %v7730 = vsub.s32 6, %v7729
        %v7731 = vrot.slane %v7325, %v7730
        %7733 = vbcast.lane.b32.xlu0 %v7731, 256
        %v7734 = vpop.permute.xlu0 %7733
        %s7736 = sor.u32 256, 8
        %7737 = vbcast.lane.b32.xlu0 %v7731, %s7736
        %v7738 = vpop.permute.xlu0 %7737
        %s7740 = sor.u32 256, 16
        %7741 = vbcast.lane.b32.xlu0 %v7731, %s7740
        %v7742 = vpop.permute.xlu0 %7741
        %s7744 = sor.u32 256, 24
        %7745 = vbcast.lane.b32.xlu0 %v7731, %s7744
        %v7746 = vpop.permute.xlu0 %7745
        %s7748 = sor.u32 256, 32
        %7749 = vbcast.lane.b32.xlu0 %v7731, %s7748
        %v7750 = vpop.permute.xlu0 %7749
        %s7752 = sor.u32 256, 40
        %7753 = vbcast.lane.b32.xlu0 %v7731, %s7752
        %v7754 = vpop.permute.xlu0 %7753
        %s7756 = sor.u32 256, 48
        %7757 = vbcast.lane.b32.xlu0 %v7731, %s7756
        %v7758 = vpop.permute.xlu0 %7757
        %s7760 = sor.u32 256, 56
        %7761 = vbcast.lane.b32.xlu0 %v7731, %s7760
        %v7762 = vpop.permute.xlu0 %7761
        %s7764 = sor.u32 256, 64
        %7765 = vbcast.lane.b32.xlu0 %v7731, %s7764
        %v7766 = vpop.permute.xlu0 %7765
        %s7768 = sor.u32 256, 72
        %7769 = vbcast.lane.b32.xlu0 %v7731, %s7768
        %v7770 = vpop.permute.xlu0 %7769
        %s7772 = sor.u32 256, 80
        %7773 = vbcast.lane.b32.xlu0 %v7731, %s7772
        %v7774 = vpop.permute.xlu0 %7773
        %s7776 = sor.u32 256, 88
        %7777 = vbcast.lane.b32.xlu0 %v7731, %s7776
        %v7778 = vpop.permute.xlu0 %7777
        %s7780 = sor.u32 256, 96
        %7781 = vbcast.lane.b32.xlu0 %v7731, %s7780
        %v7782 = vpop.permute.xlu0 %7781
        %s7784 = sor.u32 256, 104
        %7785 = vbcast.lane.b32.xlu0 %v7731, %s7784
        %v7786 = vpop.permute.xlu0 %7785
        %s7788 = sor.u32 256, 112
        %7789 = vbcast.lane.b32.xlu0 %v7731, %s7788
        %v7790 = vpop.permute.xlu0 %7789
        %s7792 = sor.u32 256, 120
        %7793 = vbcast.lane.b32.xlu0 %v7731, %s7792
        %v7794 = vpop.permute.xlu0 %7793
        %v7795 = vlaneseq
        %v7796 = vshrl.u32 %v7795, 7
        %v7797 = vsub.s32 7, %v7796
        %v7798 = vrot.slane %v7325, %v7797
        %7800 = vbcast.lane.b32.xlu0 %v7798, 256
        %v7801 = vpop.permute.xlu0 %7800
        %s7803 = sor.u32 256, 8
        %7804 = vbcast.lane.b32.xlu0 %v7798, %s7803
        %v7805 = vpop.permute.xlu0 %7804
        %s7807 = sor.u32 256, 16
        %7808 = vbcast.lane.b32.xlu0 %v7798, %s7807
        %v7809 = vpop.permute.xlu0 %7808
        %s7811 = sor.u32 256, 24
        %7812 = vbcast.lane.b32.xlu0 %v7798, %s7811
        %v7813 = vpop.permute.xlu0 %7812
        %s7815 = sor.u32 256, 32
        %7816 = vbcast.lane.b32.xlu0 %v7798, %s7815
        %v7817 = vpop.permute.xlu0 %7816
        %s7819 = sor.u32 256, 40
        %7820 = vbcast.lane.b32.xlu0 %v7798, %s7819
        %v7821 = vpop.permute.xlu0 %7820
        %s7823 = sor.u32 256, 48
        %7824 = vbcast.lane.b32.xlu0 %v7798, %s7823
        %v7825 = vpop.permute.xlu0 %7824
        %s7827 = sor.u32 256, 56
        %7828 = vbcast.lane.b32.xlu0 %v7798, %s7827
        %v7829 = vpop.permute.xlu0 %7828
        %s7831 = sor.u32 256, 64
        %7832 = vbcast.lane.b32.xlu0 %v7798, %s7831
        %v7833 = vpop.permute.xlu0 %7832
        %s7835 = sor.u32 256, 72
        %7836 = vbcast.lane.b32.xlu0 %v7798, %s7835
        %v7837 = vpop.permute.xlu0 %7836
        %s7839 = sor.u32 256, 80
        %7840 = vbcast.lane.b32.xlu0 %v7798, %s7839
        %v7841 = vpop.permute.xlu0 %7840
        %s7843 = sor.u32 256, 88
        %7844 = vbcast.lane.b32.xlu0 %v7798, %s7843
        %v7845 = vpop.permute.xlu0 %7844
        %s7847 = sor.u32 256, 96
        %7848 = vbcast.lane.b32.xlu0 %v7798, %s7847
        %v7849 = vpop.permute.xlu0 %7848
        %s7851 = sor.u32 256, 104
        %7852 = vbcast.lane.b32.xlu0 %v7798, %s7851
        %v7853 = vpop.permute.xlu0 %7852
        %s7855 = sor.u32 256, 112
        %7856 = vbcast.lane.b32.xlu0 %v7798, %s7855
        %v7857 = vpop.permute.xlu0 %7856
        %s7859 = sor.u32 256, 120
        %7860 = vbcast.lane.b32.xlu0 %v7798, %s7859
        %v7861 = vpop.permute.xlu0 %7860
        %v7862 = vmul.f32 %v442, %v7332
        %v7863 = vmul.f32 %v443, %v7336
        %v7864 = vmul.f32 %v444, %v7340
        %v7865 = vmul.f32 %v445, %v7344
        %v7866 = vmul.f32 %v446, %v7348
        %v7867 = vmul.f32 %v447, %v7352
        %v7868 = vmul.f32 %v448, %v7356
        %v7869 = vmul.f32 %v449, %v7360
        %v7870 = vmul.f32 %v450, %v7364
        %v7871 = vmul.f32 %v451, %v7368
        %v7872 = vmul.f32 %v452, %v7372
        %v7873 = vmul.f32 %v453, %v7376
        %v7874 = vmul.f32 %v454, %v7380
        %v7875 = vmul.f32 %v455, %v7384
        %v7876 = vmul.f32 %v456, %v7388
        %v7877 = vmul.f32 %v457, %v7392
        %v7878 = vmul.f32 %v458, %v7399
        %v7879 = vmul.f32 %v459, %v7403
        %v7880 = vmul.f32 %v460, %v7407
        %v7881 = vmul.f32 %v461, %v7411
        %v7882 = vmul.f32 %v462, %v7415
        %v7883 = vmul.f32 %v463, %v7419
        %v7884 = vmul.f32 %v464, %v7423
        %v7885 = vmul.f32 %v465, %v7427
        %v7886 = vmul.f32 %v466, %v7431
        %v7887 = vmul.f32 %v467, %v7435
        %v7888 = vmul.f32 %v468, %v7439
        %v7889 = vmul.f32 %v469, %v7443
        %v7890 = vmul.f32 %v470, %v7447
        %v7891 = vmul.f32 %v471, %v7451
        %v7892 = vmul.f32 %v472, %v7455
        %v7893 = vmul.f32 %v473, %v7459
        %v7894 = vmul.f32 %v474, %v7466
        %v7895 = vmul.f32 %v475, %v7470
        %v7896 = vmul.f32 %v476, %v7474
        %v7897 = vmul.f32 %v477, %v7478
        %v7898 = vmul.f32 %v478, %v7482
        %v7899 = vmul.f32 %v479, %v7486
        %v7900 = vmul.f32 %v480, %v7490
        %v7901 = vmul.f32 %v481, %v7494
        %v7902 = vmul.f32 %v482, %v7498
        %v7903 = vmul.f32 %v483, %v7502
        %v7904 = vmul.f32 %v484, %v7506
        %v7905 = vmul.f32 %v485, %v7510
        %v7906 = vmul.f32 %v486, %v7514
        %v7907 = vmul.f32 %v487, %v7518
        %v7908 = vmul.f32 %v488, %v7522
        %v7909 = vmul.f32 %v489, %v7526
        %v7910 = vmul.f32 %v490, %v7533
        %v7911 = vmul.f32 %v491, %v7537
        %v7912 = vmul.f32 %v492, %v7541
        %v7913 = vmul.f32 %v493, %v7545
        %v7914 = vmul.f32 %v494, %v7549
        %v7915 = vmul.f32 %v495, %v7553
        %v7916 = vmul.f32 %v496, %v7557
        %v7917 = vmul.f32 %v497, %v7561
        %v7918 = vmul.f32 %v498, %v7565
        %v7919 = vmul.f32 %v499, %v7569
        %v7920 = vmul.f32 %v500, %v7573
        %v7921 = vmul.f32 %v501, %v7577
        %v7922 = vmul.f32 %v502, %v7581
        %v7923 = vmul.f32 %v503, %v7585
        %v7924 = vmul.f32 %v504, %v7589
        %v7925 = vmul.f32 %v505, %v7593
        %v7926 = vmul.f32 %v506, %v7600
        %v7927 = vmul.f32 %v507, %v7604
        %v7928 = vmul.f32 %v508, %v7608
        %v7929 = vmul.f32 %v509, %v7612
        %v7930 = vmul.f32 %v510, %v7616
        %v7931 = vmul.f32 %v511, %v7620
        %v7932 = vmul.f32 %v512, %v7624
        %v7933 = vmul.f32 %v513, %v7628
        %v7934 = vmul.f32 %v514, %v7632
        %v7935 = vmul.f32 %v515, %v7636
        %v7936 = vmul.f32 %v516, %v7640
        %v7937 = vmul.f32 %v517, %v7644
        %v7938 = vmul.f32 %v518, %v7648
        %v7939 = vmul.f32 %v519, %v7652
        %v7940 = vmul.f32 %v520, %v7656
        %v7941 = vmul.f32 %v521, %v7660
        %v7942 = vmul.f32 %v522, %v7667
        %v7943 = vmul.f32 %v523, %v7671
        %v7944 = vmul.f32 %v524, %v7675
        %v7945 = vmul.f32 %v525, %v7679
        %v7946 = vmul.f32 %v526, %v7683
        %v7947 = vmul.f32 %v527, %v7687
        %v7948 = vmul.f32 %v528, %v7691
        %v7949 = vmul.f32 %v529, %v7695
        %v7950 = vmul.f32 %v530, %v7699
        %v7951 = vmul.f32 %v531, %v7703
        %v7952 = vmul.f32 %v532, %v7707
        %v7953 = vmul.f32 %v533, %v7711
        %v7954 = vmul.f32 %v534, %v7715
        %v7955 = vmul.f32 %v535, %v7719
        %v7956 = vmul.f32 %v536, %v7723
        %v7957 = vmul.f32 %v537, %v7727
        %v7958 = vmul.f32 %v538, %v7734
        %v7959 = vmul.f32 %v539, %v7738
        %v7960 = vmul.f32 %v540, %v7742
        %v7961 = vmul.f32 %v541, %v7746
        %v7962 = vmul.f32 %v542, %v7750
        %v7963 = vmul.f32 %v543, %v7754
        %v7964 = vmul.f32 %v544, %v7758
        %v7965 = vmul.f32 %v545, %v7762
        %v7966 = vmul.f32 %v546, %v7766
        %v7967 = vmul.f32 %v547, %v7770
        %v7968 = vmul.f32 %v548, %v7774
        %v7969 = vmul.f32 %v549, %v7778
        %v7970 = vmul.f32 %v550, %v7782
        %v7971 = vmul.f32 %v551, %v7786
        %v7972 = vmul.f32 %v552, %v7790
        %v7973 = vmul.f32 %v553, %v7794
        %v7974 = vmul.f32 %v554, %v7801
        %v7975 = vmul.f32 %v555, %v7805
        %v7976 = vmul.f32 %v556, %v7809
        %v7977 = vmul.f32 %v557, %v7813
        %v7978 = vmul.f32 %v558, %v7817
        %v7979 = vmul.f32 %v559, %v7821
        %v7980 = vmul.f32 %v560, %v7825
        %v7981 = vmul.f32 %v561, %v7829
        %v7982 = vmul.f32 %v562, %v7833
        %v7983 = vmul.f32 %v563, %v7837
        %v7984 = vmul.f32 %v564, %v7841
        %v7985 = vmul.f32 %v565, %v7845
        %v7986 = vmul.f32 %v566, %v7849
        %v7987 = vmul.f32 %v567, %v7853
        %v7988 = vmul.f32 %v568, %v7857
        %v7989 = vmul.f32 %v569, %v7861
        %v7990 = vadd.f32 %v7862, %v7863
        %v7991 = vadd.f32 %v7990, %v7864
        %v7992 = vadd.f32 %v7991, %v7865
        %v7993 = vadd.f32 %v7992, %v7866
        %v7994 = vadd.f32 %v7993, %v7867
        %v7995 = vadd.f32 %v7994, %v7868
        %v7996 = vadd.f32 %v7995, %v7869
        %v7997 = vadd.f32 %v7996, %v7870
        %v7998 = vadd.f32 %v7997, %v7871
        %v7999 = vadd.f32 %v7998, %v7872
        %v8000 = vadd.f32 %v7999, %v7873
        %v8001 = vadd.f32 %v8000, %v7874
        %v8002 = vadd.f32 %v8001, %v7875
        %v8003 = vadd.f32 %v8002, %v7876
        %v8004 = vadd.f32 %v8003, %v7877
        %v8005 = vrot.slane %v8004, 4
        %v8006 = vadd.f32 %v8004, %v8005
        %v8007 = vrot.slane %v8006, 2
        %v8008 = vadd.f32 %v8006, %v8007
        %v8009 = vrot.slane %v8008, 1
        %v8010 = vadd.f32 %v8008, %v8009
        %v8011 = vadd.f32 %v7878, %v7879
        %v8012 = vadd.f32 %v8011, %v7880
        %v8013 = vadd.f32 %v8012, %v7881
        %v8014 = vadd.f32 %v8013, %v7882
        %v8015 = vadd.f32 %v8014, %v7883
        %v8016 = vadd.f32 %v8015, %v7884
        %v8017 = vadd.f32 %v8016, %v7885
        %v8018 = vadd.f32 %v8017, %v7886
        %v8019 = vadd.f32 %v8018, %v7887
        %v8020 = vadd.f32 %v8019, %v7888
        %v8021 = vadd.f32 %v8020, %v7889
        %v8022 = vadd.f32 %v8021, %v7890
        %v8023 = vadd.f32 %v8022, %v7891
        %v8024 = vadd.f32 %v8023, %v7892
        %v8025 = vadd.f32 %v8024, %v7893
        %v8026 = vrot.slane %v8025, 4
        %v8027 = vadd.f32 %v8025, %v8026
        %v8028 = vrot.slane %v8027, 2
        %v8029 = vadd.f32 %v8027, %v8028
        %v8030 = vrot.slane %v8029, 1
        %v8031 = vadd.f32 %v8029, %v8030
        %v8032 = vadd.f32 %v7894, %v7895
        %v8033 = vadd.f32 %v8032, %v7896
        %v8034 = vadd.f32 %v8033, %v7897
        %v8035 = vadd.f32 %v8034, %v7898
        %v8036 = vadd.f32 %v8035, %v7899
        %v8037 = vadd.f32 %v8036, %v7900
        %v8038 = vadd.f32 %v8037, %v7901
        %v8039 = vadd.f32 %v8038, %v7902
        %v8040 = vadd.f32 %v8039, %v7903
        %v8041 = vadd.f32 %v8040, %v7904
        %v8042 = vadd.f32 %v8041, %v7905
        %v8043 = vadd.f32 %v8042, %v7906
        %v8044 = vadd.f32 %v8043, %v7907
        %v8045 = vadd.f32 %v8044, %v7908
        %v8046 = vadd.f32 %v8045, %v7909
        %v8047 = vrot.slane %v8046, 4
        %v8048 = vadd.f32 %v8046, %v8047
        %v8049 = vrot.slane %v8048, 2
        %v8050 = vadd.f32 %v8048, %v8049
        %v8051 = vrot.slane %v8050, 1
        %v8052 = vadd.f32 %v8050, %v8051
        %v8053 = vadd.f32 %v7910, %v7911
        %v8054 = vadd.f32 %v8053, %v7912
        %v8055 = vadd.f32 %v8054, %v7913
        %v8056 = vadd.f32 %v8055, %v7914
        %v8057 = vadd.f32 %v8056, %v7915
        %v8058 = vadd.f32 %v8057, %v7916
        %v8059 = vadd.f32 %v8058, %v7917
        %v8060 = vadd.f32 %v8059, %v7918
        %v8061 = vadd.f32 %v8060, %v7919
        %v8062 = vadd.f32 %v8061, %v7920
        %v8063 = vadd.f32 %v8062, %v7921
        %v8064 = vadd.f32 %v8063, %v7922
        %v8065 = vadd.f32 %v8064, %v7923
        %v8066 = vadd.f32 %v8065, %v7924
        %v8067 = vadd.f32 %v8066, %v7925
        %v8068 = vrot.slane %v8067, 4
        %v8069 = vadd.f32 %v8067, %v8068
        %v8070 = vrot.slane %v8069, 2
        %v8071 = vadd.f32 %v8069, %v8070
        %v8072 = vrot.slane %v8071, 1
        %v8073 = vadd.f32 %v8071, %v8072
        %v8074 = vadd.f32 %v7926, %v7927
        %v8075 = vadd.f32 %v8074, %v7928
        %v8076 = vadd.f32 %v8075, %v7929
        %v8077 = vadd.f32 %v8076, %v7930
        %v8078 = vadd.f32 %v8077, %v7931
        %v8079 = vadd.f32 %v8078, %v7932
        %v8080 = vadd.f32 %v8079, %v7933
        %v8081 = vadd.f32 %v8080, %v7934
        %v8082 = vadd.f32 %v8081, %v7935
        %v8083 = vadd.f32 %v8082, %v7936
        %v8084 = vadd.f32 %v8083, %v7937
        %v8085 = vadd.f32 %v8084, %v7938
        %v8086 = vadd.f32 %v8085, %v7939
        %v8087 = vadd.f32 %v8086, %v7940
        %v8088 = vadd.f32 %v8087, %v7941
        %v8089 = vrot.slane %v8088, 4
        %v8090 = vadd.f32 %v8088, %v8089
        %v8091 = vrot.slane %v8090, 2
        %v8092 = vadd.f32 %v8090, %v8091
        %v8093 = vrot.slane %v8092, 1
        %v8094 = vadd.f32 %v8092, %v8093
        %v8095 = vadd.f32 %v7942, %v7943
        %v8096 = vadd.f32 %v8095, %v7944
        %v8097 = vadd.f32 %v8096, %v7945
        %v8098 = vadd.f32 %v8097, %v7946
        %v8099 = vadd.f32 %v8098, %v7947
        %v8100 = vadd.f32 %v8099, %v7948
        %v8101 = vadd.f32 %v8100, %v7949
        %v8102 = vadd.f32 %v8101, %v7950
        %v8103 = vadd.f32 %v8102, %v7951
        %v8104 = vadd.f32 %v8103, %v7952
        %v8105 = vadd.f32 %v8104, %v7953
        %v8106 = vadd.f32 %v8105, %v7954
        %v8107 = vadd.f32 %v8106, %v7955
        %v8108 = vadd.f32 %v8107, %v7956
        %v8109 = vadd.f32 %v8108, %v7957
        %v8110 = vrot.slane %v8109, 4
        %v8111 = vadd.f32 %v8109, %v8110
        %v8112 = vrot.slane %v8111, 2
        %v8113 = vadd.f32 %v8111, %v8112
        %v8114 = vrot.slane %v8113, 1
        %v8115 = vadd.f32 %v8113, %v8114
        %v8116 = vadd.f32 %v7958, %v7959
        %v8117 = vadd.f32 %v8116, %v7960
        %v8118 = vadd.f32 %v8117, %v7961
        %v8119 = vadd.f32 %v8118, %v7962
        %v8120 = vadd.f32 %v8119, %v7963
        %v8121 = vadd.f32 %v8120, %v7964
        %v8122 = vadd.f32 %v8121, %v7965
        %v8123 = vadd.f32 %v8122, %v7966
        %v8124 = vadd.f32 %v8123, %v7967
        %v8125 = vadd.f32 %v8124, %v7968
        %v8126 = vadd.f32 %v8125, %v7969
        %v8127 = vadd.f32 %v8126, %v7970
        %v8128 = vadd.f32 %v8127, %v7971
        %v8129 = vadd.f32 %v8128, %v7972
        %v8130 = vadd.f32 %v8129, %v7973
        %v8131 = vrot.slane %v8130, 4
        %v8132 = vadd.f32 %v8130, %v8131
        %v8133 = vrot.slane %v8132, 2
        %v8134 = vadd.f32 %v8132, %v8133
        %v8135 = vrot.slane %v8134, 1
        %v8136 = vadd.f32 %v8134, %v8135
        %v8137 = vadd.f32 %v7974, %v7975
        %v8138 = vadd.f32 %v8137, %v7976
        %v8139 = vadd.f32 %v8138, %v7977
        %v8140 = vadd.f32 %v8139, %v7978
        %v8141 = vadd.f32 %v8140, %v7979
        %v8142 = vadd.f32 %v8141, %v7980
        %v8143 = vadd.f32 %v8142, %v7981
        %v8144 = vadd.f32 %v8143, %v7982
        %v8145 = vadd.f32 %v8144, %v7983
        %v8146 = vadd.f32 %v8145, %v7984
        %v8147 = vadd.f32 %v8146, %v7985
        %v8148 = vadd.f32 %v8147, %v7986
        %v8149 = vadd.f32 %v8148, %v7987
        %v8150 = vadd.f32 %v8149, %v7988
        %v8151 = vadd.f32 %v8150, %v7989
        %v8152 = vrot.slane %v8151, 4
        %v8153 = vadd.f32 %v8151, %v8152
        %v8154 = vrot.slane %v8153, 2
        %v8155 = vadd.f32 %v8153, %v8154
        %v8156 = vrot.slane %v8155, 1
        %v8157 = vadd.f32 %v8155, %v8156
        %v8166 = vsel %vm1848, %v8031, %v8010
        %v8167 = vsel %vm1850, %v8052, %v8166
        %v8168 = vsel %vm1852, %v8073, %v8167
        %v8169 = vsel %vm1854, %v8094, %v8168
        %v8170 = vsel %vm1856, %v8115, %v8169
        %v8171 = vsel %vm1858, %v8136, %v8170
        %v8172 = vsel %vm1860, %v8157, %v8171
        %v8174 = vsel %vm1839, %v8172, -1e+30
        %8175 = vmax.xlane.f32.xlu0 %v8174
        %v8176 = vpop.xlane.xlu0 %8175
        %v8177 = vsub.f32 %v8174, %v8176
        %v8178 = vmul.f32 %v8177, 1.442695
        %v8179 = vpow.pop %v8178
        %8180 = vadd.xlane.f32.xlu0 %v8179
        %v8181 = vpop.xlane.xlu0 %8180
        %v8182 = vrcp.pop %v8181
        %v8183 = vmul.f32 %v8179, %v8182
        %v8184 = vlaneseq
        %v8185 = vshrl.u32 %v8184, 7
        %v8186 = vsub.s32 0, %v8185
        %v8187 = vrot.slane %v8183, %v8186
        %8189 = vbcast.lane.b32.xlu0 %v8187, 256
        %v8190 = vpop.permute.xlu0 %8189
        %s8192 = sor.u32 256, 8
        %8193 = vbcast.lane.b32.xlu0 %v8187, %s8192
        %v8194 = vpop.permute.xlu0 %8193
        %s8196 = sor.u32 256, 16
        %8197 = vbcast.lane.b32.xlu0 %v8187, %s8196
        %v8198 = vpop.permute.xlu0 %8197
        %s8200 = sor.u32 256, 24
        %8201 = vbcast.lane.b32.xlu0 %v8187, %s8200
        %v8202 = vpop.permute.xlu0 %8201
        %s8204 = sor.u32 256, 32
        %8205 = vbcast.lane.b32.xlu0 %v8187, %s8204
        %v8206 = vpop.permute.xlu0 %8205
        %s8208 = sor.u32 256, 40
        %8209 = vbcast.lane.b32.xlu0 %v8187, %s8208
        %v8210 = vpop.permute.xlu0 %8209
        %s8212 = sor.u32 256, 48
        %8213 = vbcast.lane.b32.xlu0 %v8187, %s8212
        %v8214 = vpop.permute.xlu0 %8213
        %s8216 = sor.u32 256, 56
        %8217 = vbcast.lane.b32.xlu0 %v8187, %s8216
        %v8218 = vpop.permute.xlu0 %8217
        %s8220 = sor.u32 256, 64
        %8221 = vbcast.lane.b32.xlu0 %v8187, %s8220
        %v8222 = vpop.permute.xlu0 %8221
        %s8224 = sor.u32 256, 72
        %8225 = vbcast.lane.b32.xlu0 %v8187, %s8224
        %v8226 = vpop.permute.xlu0 %8225
        %s8228 = sor.u32 256, 80
        %8229 = vbcast.lane.b32.xlu0 %v8187, %s8228
        %v8230 = vpop.permute.xlu0 %8229
        %s8232 = sor.u32 256, 88
        %8233 = vbcast.lane.b32.xlu0 %v8187, %s8232
        %v8234 = vpop.permute.xlu0 %8233
        %s8236 = sor.u32 256, 96
        %8237 = vbcast.lane.b32.xlu0 %v8187, %s8236
        %v8238 = vpop.permute.xlu0 %8237
        %s8240 = sor.u32 256, 104
        %8241 = vbcast.lane.b32.xlu0 %v8187, %s8240
        %v8242 = vpop.permute.xlu0 %8241
        %s8244 = sor.u32 256, 112
        %8245 = vbcast.lane.b32.xlu0 %v8187, %s8244
        %v8246 = vpop.permute.xlu0 %8245
        %s8248 = sor.u32 256, 120
        %8249 = vbcast.lane.b32.xlu0 %v8187, %s8248
        %v8250 = vpop.permute.xlu0 %8249
        %v8251 = vlaneseq
        %v8252 = vshrl.u32 %v8251, 7
        %v8253 = vsub.s32 1, %v8252
        %v8254 = vrot.slane %v8183, %v8253
        %8256 = vbcast.lane.b32.xlu0 %v8254, 256
        %v8257 = vpop.permute.xlu0 %8256
        %s8259 = sor.u32 256, 8
        %8260 = vbcast.lane.b32.xlu0 %v8254, %s8259
        %v8261 = vpop.permute.xlu0 %8260
        %s8263 = sor.u32 256, 16
        %8264 = vbcast.lane.b32.xlu0 %v8254, %s8263
        %v8265 = vpop.permute.xlu0 %8264
        %s8267 = sor.u32 256, 24
        %8268 = vbcast.lane.b32.xlu0 %v8254, %s8267
        %v8269 = vpop.permute.xlu0 %8268
        %s8271 = sor.u32 256, 32
        %8272 = vbcast.lane.b32.xlu0 %v8254, %s8271
        %v8273 = vpop.permute.xlu0 %8272
        %s8275 = sor.u32 256, 40
        %8276 = vbcast.lane.b32.xlu0 %v8254, %s8275
        %v8277 = vpop.permute.xlu0 %8276
        %s8279 = sor.u32 256, 48
        %8280 = vbcast.lane.b32.xlu0 %v8254, %s8279
        %v8281 = vpop.permute.xlu0 %8280
        %s8283 = sor.u32 256, 56
        %8284 = vbcast.lane.b32.xlu0 %v8254, %s8283
        %v8285 = vpop.permute.xlu0 %8284
        %s8287 = sor.u32 256, 64
        %8288 = vbcast.lane.b32.xlu0 %v8254, %s8287
        %v8289 = vpop.permute.xlu0 %8288
        %s8291 = sor.u32 256, 72
        %8292 = vbcast.lane.b32.xlu0 %v8254, %s8291
        %v8293 = vpop.permute.xlu0 %8292
        %s8295 = sor.u32 256, 80
        %8296 = vbcast.lane.b32.xlu0 %v8254, %s8295
        %v8297 = vpop.permute.xlu0 %8296
        %s8299 = sor.u32 256, 88
        %8300 = vbcast.lane.b32.xlu0 %v8254, %s8299
        %v8301 = vpop.permute.xlu0 %8300
        %s8303 = sor.u32 256, 96
        %8304 = vbcast.lane.b32.xlu0 %v8254, %s8303
        %v8305 = vpop.permute.xlu0 %8304
        %s8307 = sor.u32 256, 104
        %8308 = vbcast.lane.b32.xlu0 %v8254, %s8307
        %v8309 = vpop.permute.xlu0 %8308
        %s8311 = sor.u32 256, 112
        %8312 = vbcast.lane.b32.xlu0 %v8254, %s8311
        %v8313 = vpop.permute.xlu0 %8312
        %s8315 = sor.u32 256, 120
        %8316 = vbcast.lane.b32.xlu0 %v8254, %s8315
        %v8317 = vpop.permute.xlu0 %8316
        %v8318 = vlaneseq
        %v8319 = vshrl.u32 %v8318, 7
        %v8320 = vsub.s32 2, %v8319
        %v8321 = vrot.slane %v8183, %v8320
        %8323 = vbcast.lane.b32.xlu0 %v8321, 256
        %v8324 = vpop.permute.xlu0 %8323
        %s8326 = sor.u32 256, 8
        %8327 = vbcast.lane.b32.xlu0 %v8321, %s8326
        %v8328 = vpop.permute.xlu0 %8327
        %s8330 = sor.u32 256, 16
        %8331 = vbcast.lane.b32.xlu0 %v8321, %s8330
        %v8332 = vpop.permute.xlu0 %8331
        %s8334 = sor.u32 256, 24
        %8335 = vbcast.lane.b32.xlu0 %v8321, %s8334
        %v8336 = vpop.permute.xlu0 %8335
        %s8338 = sor.u32 256, 32
        %8339 = vbcast.lane.b32.xlu0 %v8321, %s8338
        %v8340 = vpop.permute.xlu0 %8339
        %s8342 = sor.u32 256, 40
        %8343 = vbcast.lane.b32.xlu0 %v8321, %s8342
        %v8344 = vpop.permute.xlu0 %8343
        %s8346 = sor.u32 256, 48
        %8347 = vbcast.lane.b32.xlu0 %v8321, %s8346
        %v8348 = vpop.permute.xlu0 %8347
        %s8350 = sor.u32 256, 56
        %8351 = vbcast.lane.b32.xlu0 %v8321, %s8350
        %v8352 = vpop.permute.xlu0 %8351
        %s8354 = sor.u32 256, 64
        %8355 = vbcast.lane.b32.xlu0 %v8321, %s8354
        %v8356 = vpop.permute.xlu0 %8355
        %s8358 = sor.u32 256, 72
        %8359 = vbcast.lane.b32.xlu0 %v8321, %s8358
        %v8360 = vpop.permute.xlu0 %8359
        %s8362 = sor.u32 256, 80
        %8363 = vbcast.lane.b32.xlu0 %v8321, %s8362
        %v8364 = vpop.permute.xlu0 %8363
        %s8366 = sor.u32 256, 88
        %8367 = vbcast.lane.b32.xlu0 %v8321, %s8366
        %v8368 = vpop.permute.xlu0 %8367
        %s8370 = sor.u32 256, 96
        %8371 = vbcast.lane.b32.xlu0 %v8321, %s8370
        %v8372 = vpop.permute.xlu0 %8371
        %s8374 = sor.u32 256, 104
        %8375 = vbcast.lane.b32.xlu0 %v8321, %s8374
        %v8376 = vpop.permute.xlu0 %8375
        %s8378 = sor.u32 256, 112
        %8379 = vbcast.lane.b32.xlu0 %v8321, %s8378
        %v8380 = vpop.permute.xlu0 %8379
        %s8382 = sor.u32 256, 120
        %8383 = vbcast.lane.b32.xlu0 %v8321, %s8382
        %v8384 = vpop.permute.xlu0 %8383
        %v8385 = vlaneseq
        %v8386 = vshrl.u32 %v8385, 7
        %v8387 = vsub.s32 3, %v8386
        %v8388 = vrot.slane %v8183, %v8387
        %8390 = vbcast.lane.b32.xlu0 %v8388, 256
        %v8391 = vpop.permute.xlu0 %8390
        %s8393 = sor.u32 256, 8
        %8394 = vbcast.lane.b32.xlu0 %v8388, %s8393
        %v8395 = vpop.permute.xlu0 %8394
        %s8397 = sor.u32 256, 16
        %8398 = vbcast.lane.b32.xlu0 %v8388, %s8397
        %v8399 = vpop.permute.xlu0 %8398
        %s8401 = sor.u32 256, 24
        %8402 = vbcast.lane.b32.xlu0 %v8388, %s8401
        %v8403 = vpop.permute.xlu0 %8402
        %s8405 = sor.u32 256, 32
        %8406 = vbcast.lane.b32.xlu0 %v8388, %s8405
        %v8407 = vpop.permute.xlu0 %8406
        %s8409 = sor.u32 256, 40
        %8410 = vbcast.lane.b32.xlu0 %v8388, %s8409
        %v8411 = vpop.permute.xlu0 %8410
        %s8413 = sor.u32 256, 48
        %8414 = vbcast.lane.b32.xlu0 %v8388, %s8413
        %v8415 = vpop.permute.xlu0 %8414
        %s8417 = sor.u32 256, 56
        %8418 = vbcast.lane.b32.xlu0 %v8388, %s8417
        %v8419 = vpop.permute.xlu0 %8418
        %s8421 = sor.u32 256, 64
        %8422 = vbcast.lane.b32.xlu0 %v8388, %s8421
        %v8423 = vpop.permute.xlu0 %8422
        %s8425 = sor.u32 256, 72
        %8426 = vbcast.lane.b32.xlu0 %v8388, %s8425
        %v8427 = vpop.permute.xlu0 %8426
        %s8429 = sor.u32 256, 80
        %8430 = vbcast.lane.b32.xlu0 %v8388, %s8429
        %v8431 = vpop.permute.xlu0 %8430
        %s8433 = sor.u32 256, 88
        %8434 = vbcast.lane.b32.xlu0 %v8388, %s8433
        %v8435 = vpop.permute.xlu0 %8434
        %s8437 = sor.u32 256, 96
        %8438 = vbcast.lane.b32.xlu0 %v8388, %s8437
        %v8439 = vpop.permute.xlu0 %8438
        %s8441 = sor.u32 256, 104
        %8442 = vbcast.lane.b32.xlu0 %v8388, %s8441
        %v8443 = vpop.permute.xlu0 %8442
        %s8445 = sor.u32 256, 112
        %8446 = vbcast.lane.b32.xlu0 %v8388, %s8445
        %v8447 = vpop.permute.xlu0 %8446
        %s8449 = sor.u32 256, 120
        %8450 = vbcast.lane.b32.xlu0 %v8388, %s8449
        %v8451 = vpop.permute.xlu0 %8450
        %v8452 = vlaneseq
        %v8453 = vshrl.u32 %v8452, 7
        %v8454 = vsub.s32 4, %v8453
        %v8455 = vrot.slane %v8183, %v8454
        %8457 = vbcast.lane.b32.xlu0 %v8455, 256
        %v8458 = vpop.permute.xlu0 %8457
        %s8460 = sor.u32 256, 8
        %8461 = vbcast.lane.b32.xlu0 %v8455, %s8460
        %v8462 = vpop.permute.xlu0 %8461
        %s8464 = sor.u32 256, 16
        %8465 = vbcast.lane.b32.xlu0 %v8455, %s8464
        %v8466 = vpop.permute.xlu0 %8465
        %s8468 = sor.u32 256, 24
        %8469 = vbcast.lane.b32.xlu0 %v8455, %s8468
        %v8470 = vpop.permute.xlu0 %8469
        %s8472 = sor.u32 256, 32
        %8473 = vbcast.lane.b32.xlu0 %v8455, %s8472
        %v8474 = vpop.permute.xlu0 %8473
        %s8476 = sor.u32 256, 40
        %8477 = vbcast.lane.b32.xlu0 %v8455, %s8476
        %v8478 = vpop.permute.xlu0 %8477
        %s8480 = sor.u32 256, 48
        %8481 = vbcast.lane.b32.xlu0 %v8455, %s8480
        %v8482 = vpop.permute.xlu0 %8481
        %s8484 = sor.u32 256, 56
        %8485 = vbcast.lane.b32.xlu0 %v8455, %s8484
        %v8486 = vpop.permute.xlu0 %8485
        %s8488 = sor.u32 256, 64
        %8489 = vbcast.lane.b32.xlu0 %v8455, %s8488
        %v8490 = vpop.permute.xlu0 %8489
        %s8492 = sor.u32 256, 72
        %8493 = vbcast.lane.b32.xlu0 %v8455, %s8492
        %v8494 = vpop.permute.xlu0 %8493
        %s8496 = sor.u32 256, 80
        %8497 = vbcast.lane.b32.xlu0 %v8455, %s8496
        %v8498 = vpop.permute.xlu0 %8497
        %s8500 = sor.u32 256, 88
        %8501 = vbcast.lane.b32.xlu0 %v8455, %s8500
        %v8502 = vpop.permute.xlu0 %8501
        %s8504 = sor.u32 256, 96
        %8505 = vbcast.lane.b32.xlu0 %v8455, %s8504
        %v8506 = vpop.permute.xlu0 %8505
        %s8508 = sor.u32 256, 104
        %8509 = vbcast.lane.b32.xlu0 %v8455, %s8508
        %v8510 = vpop.permute.xlu0 %8509
        %s8512 = sor.u32 256, 112
        %8513 = vbcast.lane.b32.xlu0 %v8455, %s8512
        %v8514 = vpop.permute.xlu0 %8513
        %s8516 = sor.u32 256, 120
        %8517 = vbcast.lane.b32.xlu0 %v8455, %s8516
        %v8518 = vpop.permute.xlu0 %8517
        %v8519 = vlaneseq
        %v8520 = vshrl.u32 %v8519, 7
        %v8521 = vsub.s32 5, %v8520
        %v8522 = vrot.slane %v8183, %v8521
        %8524 = vbcast.lane.b32.xlu0 %v8522, 256
        %v8525 = vpop.permute.xlu0 %8524
        %s8527 = sor.u32 256, 8
        %8528 = vbcast.lane.b32.xlu0 %v8522, %s8527
        %v8529 = vpop.permute.xlu0 %8528
        %s8531 = sor.u32 256, 16
        %8532 = vbcast.lane.b32.xlu0 %v8522, %s8531
        %v8533 = vpop.permute.xlu0 %8532
        %s8535 = sor.u32 256, 24
        %8536 = vbcast.lane.b32.xlu0 %v8522, %s8535
        %v8537 = vpop.permute.xlu0 %8536
        %s8539 = sor.u32 256, 32
        %8540 = vbcast.lane.b32.xlu0 %v8522, %s8539
        %v8541 = vpop.permute.xlu0 %8540
        %s8543 = sor.u32 256, 40
        %8544 = vbcast.lane.b32.xlu0 %v8522, %s8543
        %v8545 = vpop.permute.xlu0 %8544
        %s8547 = sor.u32 256, 48
        %8548 = vbcast.lane.b32.xlu0 %v8522, %s8547
        %v8549 = vpop.permute.xlu0 %8548
        %s8551 = sor.u32 256, 56
        %8552 = vbcast.lane.b32.xlu0 %v8522, %s8551
        %v8553 = vpop.permute.xlu0 %8552
        %s8555 = sor.u32 256, 64
        %8556 = vbcast.lane.b32.xlu0 %v8522, %s8555
        %v8557 = vpop.permute.xlu0 %8556
        %s8559 = sor.u32 256, 72
        %8560 = vbcast.lane.b32.xlu0 %v8522, %s8559
        %v8561 = vpop.permute.xlu0 %8560
        %s8563 = sor.u32 256, 80
        %8564 = vbcast.lane.b32.xlu0 %v8522, %s8563
        %v8565 = vpop.permute.xlu0 %8564
        %s8567 = sor.u32 256, 88
        %8568 = vbcast.lane.b32.xlu0 %v8522, %s8567
        %v8569 = vpop.permute.xlu0 %8568
        %s8571 = sor.u32 256, 96
        %8572 = vbcast.lane.b32.xlu0 %v8522, %s8571
        %v8573 = vpop.permute.xlu0 %8572
        %s8575 = sor.u32 256, 104
        %8576 = vbcast.lane.b32.xlu0 %v8522, %s8575
        %v8577 = vpop.permute.xlu0 %8576
        %s8579 = sor.u32 256, 112
        %8580 = vbcast.lane.b32.xlu0 %v8522, %s8579
        %v8581 = vpop.permute.xlu0 %8580
        %s8583 = sor.u32 256, 120
        %8584 = vbcast.lane.b32.xlu0 %v8522, %s8583
        %v8585 = vpop.permute.xlu0 %8584
        %v8586 = vlaneseq
        %v8587 = vshrl.u32 %v8586, 7
        %v8588 = vsub.s32 6, %v8587
        %v8589 = vrot.slane %v8183, %v8588
        %8591 = vbcast.lane.b32.xlu0 %v8589, 256
        %v8592 = vpop.permute.xlu0 %8591
        %s8594 = sor.u32 256, 8
        %8595 = vbcast.lane.b32.xlu0 %v8589, %s8594
        %v8596 = vpop.permute.xlu0 %8595
        %s8598 = sor.u32 256, 16
        %8599 = vbcast.lane.b32.xlu0 %v8589, %s8598
        %v8600 = vpop.permute.xlu0 %8599
        %s8602 = sor.u32 256, 24
        %8603 = vbcast.lane.b32.xlu0 %v8589, %s8602
        %v8604 = vpop.permute.xlu0 %8603
        %s8606 = sor.u32 256, 32
        %8607 = vbcast.lane.b32.xlu0 %v8589, %s8606
        %v8608 = vpop.permute.xlu0 %8607
        %s8610 = sor.u32 256, 40
        %8611 = vbcast.lane.b32.xlu0 %v8589, %s8610
        %v8612 = vpop.permute.xlu0 %8611
        %s8614 = sor.u32 256, 48
        %8615 = vbcast.lane.b32.xlu0 %v8589, %s8614
        %v8616 = vpop.permute.xlu0 %8615
        %s8618 = sor.u32 256, 56
        %8619 = vbcast.lane.b32.xlu0 %v8589, %s8618
        %v8620 = vpop.permute.xlu0 %8619
        %s8622 = sor.u32 256, 64
        %8623 = vbcast.lane.b32.xlu0 %v8589, %s8622
        %v8624 = vpop.permute.xlu0 %8623
        %s8626 = sor.u32 256, 72
        %8627 = vbcast.lane.b32.xlu0 %v8589, %s8626
        %v8628 = vpop.permute.xlu0 %8627
        %s8630 = sor.u32 256, 80
        %8631 = vbcast.lane.b32.xlu0 %v8589, %s8630
        %v8632 = vpop.permute.xlu0 %8631
        %s8634 = sor.u32 256, 88
        %8635 = vbcast.lane.b32.xlu0 %v8589, %s8634
        %v8636 = vpop.permute.xlu0 %8635
        %s8638 = sor.u32 256, 96
        %8639 = vbcast.lane.b32.xlu0 %v8589, %s8638
        %v8640 = vpop.permute.xlu0 %8639
        %s8642 = sor.u32 256, 104
        %8643 = vbcast.lane.b32.xlu0 %v8589, %s8642
        %v8644 = vpop.permute.xlu0 %8643
        %s8646 = sor.u32 256, 112
        %8647 = vbcast.lane.b32.xlu0 %v8589, %s8646
        %v8648 = vpop.permute.xlu0 %8647
        %s8650 = sor.u32 256, 120
        %8651 = vbcast.lane.b32.xlu0 %v8589, %s8650
        %v8652 = vpop.permute.xlu0 %8651
        %v8653 = vlaneseq
        %v8654 = vshrl.u32 %v8653, 7
        %v8655 = vsub.s32 7, %v8654
        %v8656 = vrot.slane %v8183, %v8655
        %8658 = vbcast.lane.b32.xlu0 %v8656, 256
        %v8659 = vpop.permute.xlu0 %8658
        %s8661 = sor.u32 256, 8
        %8662 = vbcast.lane.b32.xlu0 %v8656, %s8661
        %v8663 = vpop.permute.xlu0 %8662
        %s8665 = sor.u32 256, 16
        %8666 = vbcast.lane.b32.xlu0 %v8656, %s8665
        %v8667 = vpop.permute.xlu0 %8666
        %s8669 = sor.u32 256, 24
        %8670 = vbcast.lane.b32.xlu0 %v8656, %s8669
        %v8671 = vpop.permute.xlu0 %8670
        %s8673 = sor.u32 256, 32
        %8674 = vbcast.lane.b32.xlu0 %v8656, %s8673
        %v8675 = vpop.permute.xlu0 %8674
        %s8677 = sor.u32 256, 40
        %8678 = vbcast.lane.b32.xlu0 %v8656, %s8677
        %v8679 = vpop.permute.xlu0 %8678
        %s8681 = sor.u32 256, 48
        %8682 = vbcast.lane.b32.xlu0 %v8656, %s8681
        %v8683 = vpop.permute.xlu0 %8682
        %s8685 = sor.u32 256, 56
        %8686 = vbcast.lane.b32.xlu0 %v8656, %s8685
        %v8687 = vpop.permute.xlu0 %8686
        %s8689 = sor.u32 256, 64
        %8690 = vbcast.lane.b32.xlu0 %v8656, %s8689
        %v8691 = vpop.permute.xlu0 %8690
        %s8693 = sor.u32 256, 72
        %8694 = vbcast.lane.b32.xlu0 %v8656, %s8693
        %v8695 = vpop.permute.xlu0 %8694
        %s8697 = sor.u32 256, 80
        %8698 = vbcast.lane.b32.xlu0 %v8656, %s8697
        %v8699 = vpop.permute.xlu0 %8698
        %s8701 = sor.u32 256, 88
        %8702 = vbcast.lane.b32.xlu0 %v8656, %s8701
        %v8703 = vpop.permute.xlu0 %8702
        %s8705 = sor.u32 256, 96
        %8706 = vbcast.lane.b32.xlu0 %v8656, %s8705
        %v8707 = vpop.permute.xlu0 %8706
        %s8709 = sor.u32 256, 104
        %8710 = vbcast.lane.b32.xlu0 %v8656, %s8709
        %v8711 = vpop.permute.xlu0 %8710
        %s8713 = sor.u32 256, 112
        %8714 = vbcast.lane.b32.xlu0 %v8656, %s8713
        %v8715 = vpop.permute.xlu0 %8714
        %s8717 = sor.u32 256, 120
        %8718 = vbcast.lane.b32.xlu0 %v8656, %s8717
        %v8719 = vpop.permute.xlu0 %8718
        %v8720 = vmul.f32 %v570, %v8190
        %v8721 = vmul.f32 %v571, %v8194
        %v8722 = vmul.f32 %v572, %v8198
        %v8723 = vmul.f32 %v573, %v8202
        %v8724 = vmul.f32 %v574, %v8206
        %v8725 = vmul.f32 %v575, %v8210
        %v8726 = vmul.f32 %v576, %v8214
        %v8727 = vmul.f32 %v577, %v8218
        %v8728 = vmul.f32 %v578, %v8222
        %v8729 = vmul.f32 %v579, %v8226
        %v8730 = vmul.f32 %v580, %v8230
        %v8731 = vmul.f32 %v581, %v8234
        %v8732 = vmul.f32 %v582, %v8238
        %v8733 = vmul.f32 %v583, %v8242
        %v8734 = vmul.f32 %v584, %v8246
        %v8735 = vmul.f32 %v585, %v8250
        %v8736 = vmul.f32 %v586, %v8257
        %v8737 = vmul.f32 %v587, %v8261
        %v8738 = vmul.f32 %v588, %v8265
        %v8739 = vmul.f32 %v589, %v8269
        %v8740 = vmul.f32 %v590, %v8273
        %v8741 = vmul.f32 %v591, %v8277
        %v8742 = vmul.f32 %v592, %v8281
        %v8743 = vmul.f32 %v593, %v8285
        %v8744 = vmul.f32 %v594, %v8289
        %v8745 = vmul.f32 %v595, %v8293
        %v8746 = vmul.f32 %v596, %v8297
        %v8747 = vmul.f32 %v597, %v8301
        %v8748 = vmul.f32 %v598, %v8305
        %v8749 = vmul.f32 %v599, %v8309
        %v8750 = vmul.f32 %v600, %v8313
        %v8751 = vmul.f32 %v601, %v8317
        %v8752 = vmul.f32 %v602, %v8324
        %v8753 = vmul.f32 %v603, %v8328
        %v8754 = vmul.f32 %v604, %v8332
        %v8755 = vmul.f32 %v605, %v8336
        %v8756 = vmul.f32 %v606, %v8340
        %v8757 = vmul.f32 %v607, %v8344
        %v8758 = vmul.f32 %v608, %v8348
        %v8759 = vmul.f32 %v609, %v8352
        %v8760 = vmul.f32 %v610, %v8356
        %v8761 = vmul.f32 %v611, %v8360
        %v8762 = vmul.f32 %v612, %v8364
        %v8763 = vmul.f32 %v613, %v8368
        %v8764 = vmul.f32 %v614, %v8372
        %v8765 = vmul.f32 %v615, %v8376
        %v8766 = vmul.f32 %v616, %v8380
        %v8767 = vmul.f32 %v617, %v8384
        %v8768 = vmul.f32 %v618, %v8391
        %v8769 = vmul.f32 %v619, %v8395
        %v8770 = vmul.f32 %v620, %v8399
        %v8771 = vmul.f32 %v621, %v8403
        %v8772 = vmul.f32 %v622, %v8407
        %v8773 = vmul.f32 %v623, %v8411
        %v8774 = vmul.f32 %v624, %v8415
        %v8775 = vmul.f32 %v625, %v8419
        %v8776 = vmul.f32 %v626, %v8423
        %v8777 = vmul.f32 %v627, %v8427
        %v8778 = vmul.f32 %v628, %v8431
        %v8779 = vmul.f32 %v629, %v8435
        %v8780 = vmul.f32 %v630, %v8439
        %v8781 = vmul.f32 %v631, %v8443
        %v8782 = vmul.f32 %v632, %v8447
        %v8783 = vmul.f32 %v633, %v8451
        %v8784 = vmul.f32 %v634, %v8458
        %v8785 = vmul.f32 %v635, %v8462
        %v8786 = vmul.f32 %v636, %v8466
        %v8787 = vmul.f32 %v637, %v8470
        %v8788 = vmul.f32 %v638, %v8474
        %v8789 = vmul.f32 %v639, %v8478
        %v8790 = vmul.f32 %v640, %v8482
        %v8791 = vmul.f32 %v641, %v8486
        %v8792 = vmul.f32 %v642, %v8490
        %v8793 = vmul.f32 %v643, %v8494
        %v8794 = vmul.f32 %v644, %v8498
        %v8795 = vmul.f32 %v645, %v8502
        %v8796 = vmul.f32 %v646, %v8506
        %v8797 = vmul.f32 %v647, %v8510
        %v8798 = vmul.f32 %v648, %v8514
        %v8799 = vmul.f32 %v649, %v8518
        %v8800 = vmul.f32 %v650, %v8525
        %v8801 = vmul.f32 %v651, %v8529
        %v8802 = vmul.f32 %v652, %v8533
        %v8803 = vmul.f32 %v653, %v8537
        %v8804 = vmul.f32 %v654, %v8541
        %v8805 = vmul.f32 %v655, %v8545
        %v8806 = vmul.f32 %v656, %v8549
        %v8807 = vmul.f32 %v657, %v8553
        %v8808 = vmul.f32 %v658, %v8557
        %v8809 = vmul.f32 %v659, %v8561
        %v8810 = vmul.f32 %v660, %v8565
        %v8811 = vmul.f32 %v661, %v8569
        %v8812 = vmul.f32 %v662, %v8573
        %v8813 = vmul.f32 %v663, %v8577
        %v8814 = vmul.f32 %v664, %v8581
        %v8815 = vmul.f32 %v665, %v8585
        %v8816 = vmul.f32 %v666, %v8592
        %v8817 = vmul.f32 %v667, %v8596
        %v8818 = vmul.f32 %v668, %v8600
        %v8819 = vmul.f32 %v669, %v8604
        %v8820 = vmul.f32 %v670, %v8608
        %v8821 = vmul.f32 %v671, %v8612
        %v8822 = vmul.f32 %v672, %v8616
        %v8823 = vmul.f32 %v673, %v8620
        %v8824 = vmul.f32 %v674, %v8624
        %v8825 = vmul.f32 %v675, %v8628
        %v8826 = vmul.f32 %v676, %v8632
        %v8827 = vmul.f32 %v677, %v8636
        %v8828 = vmul.f32 %v678, %v8640
        %v8829 = vmul.f32 %v679, %v8644
        %v8830 = vmul.f32 %v680, %v8648
        %v8831 = vmul.f32 %v681, %v8652
        %v8832 = vmul.f32 %v682, %v8659
        %v8833 = vmul.f32 %v683, %v8663
        %v8834 = vmul.f32 %v684, %v8667
        %v8835 = vmul.f32 %v685, %v8671
        %v8836 = vmul.f32 %v686, %v8675
        %v8837 = vmul.f32 %v687, %v8679
        %v8838 = vmul.f32 %v688, %v8683
        %v8839 = vmul.f32 %v689, %v8687
        %v8840 = vmul.f32 %v690, %v8691
        %v8841 = vmul.f32 %v691, %v8695
        %v8842 = vmul.f32 %v692, %v8699
        %v8843 = vmul.f32 %v693, %v8703
        %v8844 = vmul.f32 %v694, %v8707
        %v8845 = vmul.f32 %v695, %v8711
        %v8846 = vmul.f32 %v696, %v8715
        %v8847 = vmul.f32 %v697, %v8719
        %v8848 = vadd.f32 %v8720, %v8721
        %v8849 = vadd.f32 %v8848, %v8722
        %v8850 = vadd.f32 %v8849, %v8723
        %v8851 = vadd.f32 %v8850, %v8724
        %v8852 = vadd.f32 %v8851, %v8725
        %v8853 = vadd.f32 %v8852, %v8726
        %v8854 = vadd.f32 %v8853, %v8727
        %v8855 = vadd.f32 %v8854, %v8728
        %v8856 = vadd.f32 %v8855, %v8729
        %v8857 = vadd.f32 %v8856, %v8730
        %v8858 = vadd.f32 %v8857, %v8731
        %v8859 = vadd.f32 %v8858, %v8732
        %v8860 = vadd.f32 %v8859, %v8733
        %v8861 = vadd.f32 %v8860, %v8734
        %v8862 = vadd.f32 %v8861, %v8735
        %v8863 = vrot.slane %v8862, 4
        %v8864 = vadd.f32 %v8862, %v8863
        %v8865 = vrot.slane %v8864, 2
        %v8866 = vadd.f32 %v8864, %v8865
        %v8867 = vrot.slane %v8866, 1
        %v8868 = vadd.f32 %v8866, %v8867
        %v8869 = vadd.f32 %v8736, %v8737
        %v8870 = vadd.f32 %v8869, %v8738
        %v8871 = vadd.f32 %v8870, %v8739
        %v8872 = vadd.f32 %v8871, %v8740
        %v8873 = vadd.f32 %v8872, %v8741
        %v8874 = vadd.f32 %v8873, %v8742
        %v8875 = vadd.f32 %v8874, %v8743
        %v8876 = vadd.f32 %v8875, %v8744
        %v8877 = vadd.f32 %v8876, %v8745
        %v8878 = vadd.f32 %v8877, %v8746
        %v8879 = vadd.f32 %v8878, %v8747
        %v8880 = vadd.f32 %v8879, %v8748
        %v8881 = vadd.f32 %v8880, %v8749
        %v8882 = vadd.f32 %v8881, %v8750
        %v8883 = vadd.f32 %v8882, %v8751
        %v8884 = vrot.slane %v8883, 4
        %v8885 = vadd.f32 %v8883, %v8884
        %v8886 = vrot.slane %v8885, 2
        %v8887 = vadd.f32 %v8885, %v8886
        %v8888 = vrot.slane %v8887, 1
        %v8889 = vadd.f32 %v8887, %v8888
        %v8890 = vadd.f32 %v8752, %v8753
        %v8891 = vadd.f32 %v8890, %v8754
        %v8892 = vadd.f32 %v8891, %v8755
        %v8893 = vadd.f32 %v8892, %v8756
        %v8894 = vadd.f32 %v8893, %v8757
        %v8895 = vadd.f32 %v8894, %v8758
        %v8896 = vadd.f32 %v8895, %v8759
        %v8897 = vadd.f32 %v8896, %v8760
        %v8898 = vadd.f32 %v8897, %v8761
        %v8899 = vadd.f32 %v8898, %v8762
        %v8900 = vadd.f32 %v8899, %v8763
        %v8901 = vadd.f32 %v8900, %v8764
        %v8902 = vadd.f32 %v8901, %v8765
        %v8903 = vadd.f32 %v8902, %v8766
        %v8904 = vadd.f32 %v8903, %v8767
        %v8905 = vrot.slane %v8904, 4
        %v8906 = vadd.f32 %v8904, %v8905
        %v8907 = vrot.slane %v8906, 2
        %v8908 = vadd.f32 %v8906, %v8907
        %v8909 = vrot.slane %v8908, 1
        %v8910 = vadd.f32 %v8908, %v8909
        %v8911 = vadd.f32 %v8768, %v8769
        %v8912 = vadd.f32 %v8911, %v8770
        %v8913 = vadd.f32 %v8912, %v8771
        %v8914 = vadd.f32 %v8913, %v8772
        %v8915 = vadd.f32 %v8914, %v8773
        %v8916 = vadd.f32 %v8915, %v8774
        %v8917 = vadd.f32 %v8916, %v8775
        %v8918 = vadd.f32 %v8917, %v8776
        %v8919 = vadd.f32 %v8918, %v8777
        %v8920 = vadd.f32 %v8919, %v8778
        %v8921 = vadd.f32 %v8920, %v8779
        %v8922 = vadd.f32 %v8921, %v8780
        %v8923 = vadd.f32 %v8922, %v8781
        %v8924 = vadd.f32 %v8923, %v8782
        %v8925 = vadd.f32 %v8924, %v8783
        %v8926 = vrot.slane %v8925, 4
        %v8927 = vadd.f32 %v8925, %v8926
        %v8928 = vrot.slane %v8927, 2
        %v8929 = vadd.f32 %v8927, %v8928
        %v8930 = vrot.slane %v8929, 1
        %v8931 = vadd.f32 %v8929, %v8930
        %v8932 = vadd.f32 %v8784, %v8785
        %v8933 = vadd.f32 %v8932, %v8786
        %v8934 = vadd.f32 %v8933, %v8787
        %v8935 = vadd.f32 %v8934, %v8788
        %v8936 = vadd.f32 %v8935, %v8789
        %v8937 = vadd.f32 %v8936, %v8790
        %v8938 = vadd.f32 %v8937, %v8791
        %v8939 = vadd.f32 %v8938, %v8792
        %v8940 = vadd.f32 %v8939, %v8793
        %v8941 = vadd.f32 %v8940, %v8794
        %v8942 = vadd.f32 %v8941, %v8795
        %v8943 = vadd.f32 %v8942, %v8796
        %v8944 = vadd.f32 %v8943, %v8797
        %v8945 = vadd.f32 %v8944, %v8798
        %v8946 = vadd.f32 %v8945, %v8799
        %v8947 = vrot.slane %v8946, 4
        %v8948 = vadd.f32 %v8946, %v8947
        %v8949 = vrot.slane %v8948, 2
        %v8950 = vadd.f32 %v8948, %v8949
        %v8951 = vrot.slane %v8950, 1
        %v8952 = vadd.f32 %v8950, %v8951
        %v8953 = vadd.f32 %v8800, %v8801
        %v8954 = vadd.f32 %v8953, %v8802
        %v8955 = vadd.f32 %v8954, %v8803
        %v8956 = vadd.f32 %v8955, %v8804
        %v8957 = vadd.f32 %v8956, %v8805
        %v8958 = vadd.f32 %v8957, %v8806
        %v8959 = vadd.f32 %v8958, %v8807
        %v8960 = vadd.f32 %v8959, %v8808
        %v8961 = vadd.f32 %v8960, %v8809
        %v8962 = vadd.f32 %v8961, %v8810
        %v8963 = vadd.f32 %v8962, %v8811
        %v8964 = vadd.f32 %v8963, %v8812
        %v8965 = vadd.f32 %v8964, %v8813
        %v8966 = vadd.f32 %v8965, %v8814
        %v8967 = vadd.f32 %v8966, %v8815
        %v8968 = vrot.slane %v8967, 4
        %v8969 = vadd.f32 %v8967, %v8968
        %v8970 = vrot.slane %v8969, 2
        %v8971 = vadd.f32 %v8969, %v8970
        %v8972 = vrot.slane %v8971, 1
        %v8973 = vadd.f32 %v8971, %v8972
        %v8974 = vadd.f32 %v8816, %v8817
        %v8975 = vadd.f32 %v8974, %v8818
        %v8976 = vadd.f32 %v8975, %v8819
        %v8977 = vadd.f32 %v8976, %v8820
        %v8978 = vadd.f32 %v8977, %v8821
        %v8979 = vadd.f32 %v8978, %v8822
        %v8980 = vadd.f32 %v8979, %v8823
        %v8981 = vadd.f32 %v8980, %v8824
        %v8982 = vadd.f32 %v8981, %v8825
        %v8983 = vadd.f32 %v8982, %v8826
        %v8984 = vadd.f32 %v8983, %v8827
        %v8985 = vadd.f32 %v8984, %v8828
        %v8986 = vadd.f32 %v8985, %v8829
        %v8987 = vadd.f32 %v8986, %v8830
        %v8988 = vadd.f32 %v8987, %v8831
        %v8989 = vrot.slane %v8988, 4
        %v8990 = vadd.f32 %v8988, %v8989
        %v8991 = vrot.slane %v8990, 2
        %v8992 = vadd.f32 %v8990, %v8991
        %v8993 = vrot.slane %v8992, 1
        %v8994 = vadd.f32 %v8992, %v8993
        %v8995 = vadd.f32 %v8832, %v8833
        %v8996 = vadd.f32 %v8995, %v8834
        %v8997 = vadd.f32 %v8996, %v8835
        %v8998 = vadd.f32 %v8997, %v8836
        %v8999 = vadd.f32 %v8998, %v8837
        %v9000 = vadd.f32 %v8999, %v8838
        %v9001 = vadd.f32 %v9000, %v8839
        %v9002 = vadd.f32 %v9001, %v8840
        %v9003 = vadd.f32 %v9002, %v8841
        %v9004 = vadd.f32 %v9003, %v8842
        %v9005 = vadd.f32 %v9004, %v8843
        %v9006 = vadd.f32 %v9005, %v8844
        %v9007 = vadd.f32 %v9006, %v8845
        %v9008 = vadd.f32 %v9007, %v8846
        %v9009 = vadd.f32 %v9008, %v8847
        %v9010 = vrot.slane %v9009, 4
        %v9011 = vadd.f32 %v9009, %v9010
        %v9012 = vrot.slane %v9011, 2
        %v9013 = vadd.f32 %v9011, %v9012
        %v9014 = vrot.slane %v9013, 1
        %v9015 = vadd.f32 %v9013, %v9014
        %v9016 = vld [vmem:[#allocation12] sm:$0xff]
        %v9017 = vld [vmem:[#allocation12 + $0x8] sm:$0xff]
        %v9018 = vld [vmem:[#allocation12 + $0x10] sm:$0xff]
        %v9019 = vld [vmem:[#allocation12 + $0x18] sm:$0xff]
        %v9020 = vld [vmem:[#allocation12 + $0x20] sm:$0xff]
        %v9021 = vld [vmem:[#allocation12 + $0x28] sm:$0xff]
        %v9022 = vld [vmem:[#allocation12 + $0x30] sm:$0xff]
        %v9023 = vld [vmem:[#allocation12 + $0x38] sm:$0xff]
        %v9024 = vld [vmem:[#allocation12 + $0x40] sm:$0xff]
        %v9025 = vld [vmem:[#allocation12 + $0x48] sm:$0xff]
        %v9026 = vld [vmem:[#allocation12 + $0x50] sm:$0xff]
        %v9027 = vld [vmem:[#allocation12 + $0x58] sm:$0xff]
        %v9028 = vld [vmem:[#allocation12 + $0x60] sm:$0xff]
        %v9029 = vld [vmem:[#allocation12 + $0x68] sm:$0xff]
        %v9030 = vld [vmem:[#allocation12 + $0x70] sm:$0xff]
        %v9031 = vld [vmem:[#allocation12 + $0x78] sm:$0xff]
        %v9040 = vsel %vm1848, %v8889, %v8868
        %v9041 = vsel %vm1850, %v8910, %v9040
        %v9042 = vsel %vm1852, %v8931, %v9041
        %v9043 = vsel %vm1854, %v8952, %v9042
        %v9044 = vsel %vm1856, %v8973, %v9043
        %v9045 = vsel %vm1858, %v8994, %v9044
        %v9046 = vsel %vm1860, %v9015, %v9045
        %9048 = vmatprep.subr.mxu0 0.0
        %9049 = vmatpush1.msra.mxu0 %v9031
        %9050 = vmatprep.subr.mxu0 0.0
        %9051 = vmatpush1.msra.mxu0 %v9030
        %9052 = vmatprep.subr.mxu0 0.0
        %9053 = vmatpush1.msra.mxu0 %v9029
        %9054 = vmatprep.subr.mxu0 0.0
        %9055 = vmatpush1.msra.mxu0 %v9028
        %9056 = vmatprep.subr.mxu0 0.0
        %9057 = vmatpush1.msra.mxu0 %v9027
        %9058 = vmatprep.subr.mxu0 0.0
        %9059 = vmatpush1.msra.mxu0 %v9026
        %9060 = vmatprep.subr.mxu0 0.0
        %9061 = vmatpush1.msra.mxu0 %v9025
        %9062 = vmatprep.subr.mxu0 0.0
        %9063 = vmatpush1.msra.mxu0 %v9024
        %9064 = vmatprep.subr.mxu0 0.0
        %9065 = vmatpush1.msra.mxu0 %v9023
        %9066 = vmatprep.subr.mxu0 0.0
        %9067 = vmatpush1.msra.mxu0 %v9022
        %9068 = vmatprep.subr.mxu0 0.0
        %9069 = vmatpush1.msra.mxu0 %v9021
        %9070 = vmatprep.subr.mxu0 0.0
        %9071 = vmatpush1.msra.mxu0 %v9020
        %9072 = vmatprep.subr.mxu0 0.0
        %9073 = vmatpush1.msra.mxu0 %v9019
        %9074 = vmatprep.subr.mxu0 0.0
        %9075 = vmatpush1.msra.mxu0 %v9018
        %9076 = vmatprep.subr.mxu0 0.0
        %9077 = vmatpush1.msra.mxu0 %v9017
        %9078 = vmatprep.subr.mxu0 0.0
        %9079 = vmatpush1.msra.mxu0 %v9016
        %9080 = vmatprep.subr.mxu0 0.0
        %9081 = vmatpush2.msra.mxu0 0.0
        %9082 = vmatprep.subr.mxu0 0.0
        %9083 = vmatpush2.msra.mxu0 0.0
        %9084 = vmatprep.subr.mxu0 0.0
        %9085 = vmatpush2.msra.mxu0 0.0
        %9086 = vmatprep.subr.mxu0 0.0
        %9087 = vmatpush2.msra.mxu0 0.0
        %9088 = vmatprep.subr.mxu0 0.0
        %9089 = vmatpush2.msra.mxu0 0.0
        %9090 = vmatprep.subr.mxu0 0.0
        %9091 = vmatpush2.msra.mxu0 0.0
        %9092 = vmatprep.subr.mxu0 0.0
        %9093 = vmatpush2.msra.mxu0 0.0
        %9094 = vmatprep.subr.mxu0 0.0
        %9095 = vmatpush2.msra.mxu0 0.0
        %9096 = vmatprep.subr.mxu0 0.0
        %9097 = vmatpush2.msra.mxu0 0.0
        %9098 = vmatprep.subr.mxu0 0.0
        %9099 = vmatpush2.msra.mxu0 0.0
        %9100 = vmatprep.subr.mxu0 0.0
        %9101 = vmatpush2.msra.mxu0 0.0
        %9102 = vmatprep.subr.mxu0 0.0
        %9103 = vmatpush2.msra.mxu0 0.0
        %9104 = vmatprep.subr.mxu0 0.0
        %9105 = vmatpush2.msra.mxu0 0.0
        %9106 = vmatprep.subr.mxu0 0.0
        %9107 = vmatpush2.msra.mxu0 0.0
        %9108 = vmatprep.subr.mxu0 0.0
        %9109 = vmatpush2.msra.mxu0 0.0
        %9110 = vmatprep.subr.mxu0 0.0
        %9111 = vmatpush2.msra.mxu0 0.0
        %9112 = vmatprep.mubr.f32.mxu0 0.0
        %9113 = vmatmul.mubr.f32.gmra.mxu0 %v7325
        %v9114 = vpop.f32.mrf.mxu0
        %v9115 = vadd.f32 %v9046, %v9114
        %v9116 = vpop.f32.mrf.mxu0
        %9117 = vdwg.mxu0
        %v9118 = vtanh.pop %v9115
        %s9119 = scalar_lea.vmem %s424, 24 [#allocation15]
        %9120 = vst [vmem:[%s9119] sm:$0xff] %v9118
        %9121 = vst [vmem:[#allocation2] sm:$0xff] %v9118
        %9122 = vst [vmem:[#allocation2 + $0x8] sm:$0xff] %v7325
        %9123 = vst [vmem:[#allocation3] sm:$0xff] %v7323
        %s9124 = sand.u32 %s223, 1
        %s9125 = scalar_lea.sflag [#allocation6], %s9124
        %s9126 = sand.u32 %s223, 1
        %s9127 = smul.addr %s9126, 32
        %s9128 = scalar_lea.vmem [#allocation15], %s9127
        // Predicated region
        $region77: #{tpu_custom_call.1} parent=47 // pred_check
          %p9129 = pneg %p233
        $region78: #{tpu_custom_call.1} parent=47 // pred_check_branch
          %9131 = sbr.rel (%p9129) target = $region80
        $region79: #{tpu_custom_call.1} parent=47 // pred_region
          %s9132 = smul.u32 4, %s32
          %s9134 = ssub.s32 512, 512
          %9135 = vsyncadd %s9125, %s9134
          %s9136 = sadd.s32 %s31, %s9132
          %s9137 = smul.addr %s9136, 128
          %s9138 = scalar_lea.hbm %s7, %s9137
          %s9139 = sshll.u32 %s9128, 4
          %s9140 = int_to_ptr.vmem [resolvable:$true] %s9139
          %9145 = dma.vmem_to_hbm [thread:$0]  %s9140, 512, %s9138, %s9125, 128, 128, 8
        $region80: #{tpu_custom_call.1} parent=47 // pred_fallthru
          _
      $region48: #{tpu_custom_call.1} parent=5 // pred_fallthru
        _
      %p9146 = scmp.le.s32.totalorder 2, %s22
      // Predicated region
      $region81: #{tpu_custom_call.1} parent=5 // pred_check
        %p9147 = pneg %p9146
      $region82: #{tpu_custom_call.1} parent=5 // pred_check_branch
        %9149 = sbr.rel (%p9147) target = $region84
      $region83: #{tpu_custom_call.1} parent=5 // pred_region
        %s9150 = ssub.s32 %s22, 2
        // Predicated region
        $region85: #{tpu_custom_call.1} parent=83 // pred_check
          %p9151 = pneg %p239
        $region86: #{tpu_custom_call.1} parent=83 // pred_check_branch
          %9153 = sbr.rel (%p9151) target = $region88
        $region87: #{tpu_custom_call.1} parent=83 // pred_region
          %s9154 = sand.u32 %s224, 1
          %s9155 = scalar_lea.sflag [#allocation6], %s9154
          %s9156 = sand.u32 %s224, 1
          %s9157 = smul.addr %s9156, 32
          %s9158 = scalar_lea.vmem [#allocation15], %s9157
          %9159 = dma.done %s9155, 512
        $region88: #{tpu_custom_call.1} parent=83 // pred_fallthru
          _
      $region84: #{tpu_custom_call.1} parent=5 // pred_fallthru
        _
    $region6: #{tpu_custom_call.1} parent=1 // loop_footer
      %s26 = sadd.s32 1, %s22
    $region7: #{tpu_custom_call.1} parent=1 // loop_footer_branch
      %21 = sbr.rel target = $region3
    $region8: #{tpu_custom_call.1} parent=1 // loop_exit
      _
    %9160 = vsyncpa [#allocation5], 1
    %s9161 = scalar_lea.sflag [#allocation5], 1
    %9162 = vsyncpa %s9161, 1
    %9163 = vsyncpa [#allocation8], 1
    %9164 = vsyncpa [#allocation11], 1
    %9165 = vsyncpa [#allocation14], 1
    %9166 = vsyncpa [#allocation6], 1
    %s9167 = scalar_lea.sflag [#allocation6], 1
    %9168 = vsyncpa %s9167, 1

</llo_original>
